<compile_context>
chip_gen: v6e
topology: v6e:2x2x1
jax: 0.10.0
libtpu: 0.0.40
codegen_flags: <defaults>
</compile_context>

<pallas_src>
import jax
import jax.numpy as jnp
from jax import lax
from jax.experimental import pallas as pl
from jax.experimental.pallas import tpu as pltpu

D = 300        # sentence embedding dim (input to BiLSTM_2)
H = 150        # LSTM hidden size per direction (300 // 2)
HP = 256       # lane-aligned padded hidden size (multiple of 128)
G4 = 4 * HP    # padded gate width: i, f, g, o blocks of HP lanes each
NTAGS = 7      # hidden2tag output size
NT_PAD = 128   # lane-dense padded tag width


def bilstm_tag_kernel(x_ref,
                      wih_f_ref, whh_f_ref, b_f_ref,
                      wih_b_ref, whh_b_ref, b_b_ref,
                      wout_f_ref, wout_b_ref, bout_ref,
                      hsf_ref, hsb_ref, logp_ref,
                      gx_f_scr, gx_b_scr):
    T = x_ref.shape[0]

    # ---------- hoisted input projections (batched, MXU-friendly) ----------
    x_bf = x_ref[...].astype(jnp.bfloat16)
    gx_f_scr[...] = (jnp.dot(x_bf, wih_f_ref[...],
                             preferred_element_type=jnp.float32)
                     + b_f_ref[...])
    gx_b_scr[...] = (jnp.dot(x_bf, wih_b_ref[...],
                             preferred_element_type=jnp.float32)
                     + b_b_ref[...])

    whh_f = whh_f_ref[...]
    whh_b = whh_b_ref[...]

    def cell(gx_row, h, c, whh):
        # gx_row: (1, 4*HP) precomputed x@W_ih + b.  Recurrent part only here.
        gates = gx_row + jnp.dot(h.astype(jnp.bfloat16), whh,
                                 preferred_element_type=jnp.float32)
        # PyTorch gate order i, f, g, o; each block is a clean 256-lane tile.
        i = jax.nn.sigmoid(gates[:, 0 * HP:1 * HP])
        f = jax.nn.sigmoid(gates[:, 1 * HP:2 * HP])
        g = jnp.tanh(gates[:, 2 * HP:3 * HP])
        o = jax.nn.sigmoid(gates[:, 3 * HP:4 * HP])
        c_new = f * c + i * g
        h_new = o * jnp.tanh(c_new)
        return h_new, c_new

    # ---------- interleaved fwd/bwd recurrence, state in loop carries ------
    def body(s, carry):
        h_f, c_f, h_b, c_b = carry
        tb = T - 1 - s
        h_f, c_f = cell(gx_f_scr[pl.ds(s, 1), :], h_f, c_f, whh_f)
        h_b, c_b = cell(gx_b_scr[pl.ds(tb, 1), :], h_b, c_b, whh_b)
        hsf_ref[pl.ds(s, 1), :] = h_f
        hsb_ref[pl.ds(tb, 1), :] = h_b
        return (h_f, c_f, h_b, c_b)

    z = jnp.zeros((1, HP), jnp.float32)
    lax.fori_loop(0, T, body, (z, z, z, z), unroll=True)

    # ---------- hidden2tag (split weights, no concat) + log-softmax --------
    hs_f = hsf_ref[...].astype(jnp.bfloat16)
    hs_b = hsb_ref[...].astype(jnp.bfloat16)
    logits = (jnp.dot(hs_f, wout_f_ref[...], preferred_element_type=jnp.float32)
              + jnp.dot(hs_b, wout_b_ref[...], preferred_element_type=jnp.float32)
              + bout_ref[...])
    lane = lax.broadcasted_iota(jnp.int32, logits.shape, 1)
    logits = jnp.where(lane < NTAGS, logits, -1e30)       # mask padded tags
    m = jnp.max(logits, axis=-1, keepdims=True)
    lse = jnp.log(jnp.sum(jnp.exp(logits - m), axis=-1, keepdims=True)) + m
    logp_ref[...] = logits - lse


def _pad_gate_cols(w, valid, total):
    """w: (rows, 4*valid) -> (rows, 4*total); each gate block zero-padded."""
    rows = w.shape[0]
    out = jnp.zeros((rows, 4 * total), w.dtype)
    for k in range(4):
        out = out.at[:, k * total:k * total + valid].set(
            w[:, k * valid:(k + 1) * valid])
    return out


def paragraph_bilstm_forward(x, params):
    """x: (T, 300) float32 sentence embeddings (output of BiLSTM_1).
    Returns (pre_labels (T,), log_probs (T,7), sentence_embeddings_output (T,300))."""
    T = x.shape[0]
    (wih_f, whh_f, b_ih_f, b_hh_f,
     wih_b, whh_b, b_ih_b, b_hh_b,
     w_out, b_out) = params

    def prep_dir(wih, whh, b_ih, b_hh):
        wih_t = _pad_gate_cols(wih.T, H, HP).astype(jnp.bfloat16)     # (D, 4*HP)
        whh_t = _pad_gate_cols(whh.T, H, HP)                          # (H, 4*HP)
        whh_t = (jnp.zeros((HP, G4), jnp.float32)
                 .at[:H, :].set(whh_t).astype(jnp.bfloat16))          # (HP, 4*HP)
        b = _pad_gate_cols((b_ih + b_hh)[None, :].astype(jnp.float32),
                           H, HP)                                      # (1, 4*HP)
        return wih_t, whh_t, b

    wih_f_t, whh_f_t, b_f = prep_dir(wih_f, whh_f, b_ih_f, b_hh_f)
    wih_b_t, whh_b_t, b_b = prep_dir(wih_b, whh_b, b_ih_b, b_hh_b)

    w_out_t = w_out.T                                                  # (2H, 7)
    w_out_f = (jnp.zeros((HP, NT_PAD), jnp.float32)
               .at[:H, :NTAGS].set(w_out_t[:H]).astype(jnp.bfloat16))
    w_out_b = (jnp.zeros((HP, NT_PAD), jnp.float32)
               .at[:H, :NTAGS].set(w_out_t[H:]).astype(jnp.bfloat16))
    b_out_p = jnp.zeros((1, NT_PAD), jnp.float32).at[0, :NTAGS].set(b_out)

    vmem = pl.BlockSpec(memory_space=pltpu.MemorySpace.VMEM)
    hs_f, hs_b, logp_pad = pl.pallas_call(
        bilstm_tag_kernel,
        out_shape=(jax.ShapeDtypeStruct((T, HP), jnp.float32),
                   jax.ShapeDtypeStruct((T, HP), jnp.float32),
                   jax.ShapeDtypeStruct((T, NT_PAD), jnp.float32)),
        in_specs=[vmem] * 10,
        out_specs=(vmem, vmem, vmem),
        scratch_shapes=[
            pltpu.VMEM((T, G4), jnp.float32),   # hoisted forward gates  x@Wih+b
            pltpu.VMEM((T, G4), jnp.float32),   # hoisted backward gates x@Wih+b
        ],
    )(x, wih_f_t, whh_f_t, b_f, wih_b_t, whh_b_t, b_b,
      w_out_f, w_out_b, b_out_p)

    # forward || backward hidden concat, as in PyTorch bidirectional output
    hcat = jnp.concatenate([hs_f[:, :H], hs_b[:, :H]], axis=-1)        # (T, 300)
    log_probs = logp_pad[:, :NTAGS]                                    # (T, 7)
    pre_labels = jnp.argmax(log_probs, axis=-1)  # == the python argmax loop
    return pre_labels, log_probs, hcat


def init_params(key):
    """Deterministic init matching PyTorch default shapes:
    nn.LSTM(300, 150, bidirectional) + nn.Linear(300, 7)."""
    ks = jax.random.split(key, 10)
    s_lstm = 1.0 / jnp.sqrt(H)
    s_lin = 1.0 / jnp.sqrt(2.0 * H)

    def u(k, shape, s):
        return jax.random.uniform(k, shape, jnp.float32, minval=-s, maxval=s)

    wih_f = u(ks[0], (4 * H, D), s_lstm)
    whh_f = u(ks[1], (4 * H, H), s_lstm)
    b_ih_f = u(ks[2], (4 * H,), s_lstm)
    b_hh_f = u(ks[3], (4 * H,), s_lstm)
    wih_b = u(ks[4], (4 * H, D), s_lstm)
    whh_b = u(ks[5], (4 * H, H), s_lstm)
    b_ih_b = u(ks[6], (4 * H,), s_lstm)
    b_hh_b = u(ks[7], (4 * H,), s_lstm)
    w_out = u(ks[8], (NTAGS, 2 * H), s_lin)
    b_out = u(ks[9], (NTAGS,), s_lin)
    return (wih_f, whh_f, b_ih_f, b_hh_f,
            wih_b, whh_b, b_ih_b, b_hh_b,
            w_out, b_out)


if __name__ == "__main__":
    key = jax.random.PRNGKey(0)
    k_x, k_p = jax.random.split(key)

    T = 8                                   # number of sentences in paragraph
    x = jax.random.normal(k_x, (T, D), jnp.float32)   # sentence embeddings
    params = init_params(k_p)

    fwd = jax.jit(paragraph_bilstm_forward)
    pre_labels, log_probs, sent_out = jax.block_until_ready(fwd(x, params))

    assert pre_labels.shape == (T,)
    assert log_probs.shape == (T, NTAGS)
    assert sent_out.shape == (T, 2 * H)
    # LogSoftmax sanity: rows sum (in prob space) to ~1
    assert jnp.allclose(jnp.sum(jnp.exp(log_probs), axis=-1), 1.0, atol=1e-4)

    print("KERNEL_OK")
</pallas_src>

<mosaic_0001>
module attributes {stable_mosaic.version = 11 : i64} {
  func.func @bilstm_tag_kernel(%arg0: memref<8x300xf32, #tpu.memory_space<vmem>>, %arg1: memref<300x1024xbf16, #tpu.memory_space<vmem>>, %arg2: memref<256x1024xbf16, #tpu.memory_space<vmem>>, %arg3: memref<1x1024xf32, #tpu.memory_space<vmem>>, %arg4: memref<300x1024xbf16, #tpu.memory_space<vmem>>, %arg5: memref<256x1024xbf16, #tpu.memory_space<vmem>>, %arg6: memref<1x1024xf32, #tpu.memory_space<vmem>>, %arg7: memref<256x128xbf16, #tpu.memory_space<vmem>>, %arg8: memref<256x128xbf16, #tpu.memory_space<vmem>>, %arg9: memref<1x128xf32, #tpu.memory_space<vmem>>, %arg10: memref<8x256xf32, #tpu.memory_space<vmem>>, %arg11: memref<8x256xf32, #tpu.memory_space<vmem>>, %arg12: memref<8x128xf32, #tpu.memory_space<vmem>>, %arg13: memref<8x1024xf32, #tpu.memory_space<vmem>>, %arg14: memref<8x1024xf32, #tpu.memory_space<vmem>>) attributes {dimension_semantics = [], scalar_prefetch = 0 : i64, scratch_operands = 2 : i64, tpu.core_type = #tpu.core_type<tc>} {
    %c0 = arith.constant 0 : index
    %c0_0 = arith.constant 0 : index
    %0 = vector.load %arg0[%c0, %c0_0] : memref<8x300xf32, #tpu.memory_space<vmem>>, vector<8x300xf32>
    %1 = arith.truncf %0 : vector<8x300xf32> to vector<8x300xbf16>
    %c0_1 = arith.constant 0 : index
    %c0_2 = arith.constant 0 : index
    %2 = vector.load %arg1[%c0_1, %c0_2] : memref<300x1024xbf16, #tpu.memory_space<vmem>>, vector<300x1024xbf16>
    %cst = arith.constant dense<0.000000e+00> : vector<8x1024xf32>
    %3 = tpu.matmul %1, %2, %cst {dimension_numbers = #tpu.dot_dimension_numbers<[1], [0], [0], [1], [0, 0, 1, 1], [], []>} : vector<8x300xbf16>, vector<300x1024xbf16>, vector<8x1024xf32> -> vector<8x1024xf32>
    %c0_3 = arith.constant 0 : index
    %c0_4 = arith.constant 0 : index
    %4 = vector.load %arg3[%c0_3, %c0_4] : memref<1x1024xf32, #tpu.memory_space<vmem>>, vector<1x1024xf32>
    %5 = vector.broadcast %4 : vector<1x1024xf32> to vector<8x1024xf32>
    %6 = arith.addf %3, %5 : vector<8x1024xf32>
    %c0_5 = arith.constant 0 : index
    %c0_6 = arith.constant 0 : index
    %7 = vector.load %arg13[%c0_5, %c0_6] : memref<8x1024xf32, #tpu.memory_space<vmem>>, vector<8x1024xf32>
    tpu.vector_store %arg13[%c0_5, %c0_6], %6 {strides = array<i32>} : memref<8x1024xf32, #tpu.memory_space<vmem>>, vector<8x1024xf32>,
    %c0_7 = arith.constant 0 : index
    %c0_8 = arith.constant 0 : index
    %8 = vector.load %arg4[%c0_7, %c0_8] : memref<300x1024xbf16, #tpu.memory_space<vmem>>, vector<300x1024xbf16>
    %cst_9 = arith.constant dense<0.000000e+00> : vector<8x1024xf32>
    %9 = tpu.matmul %1, %8, %cst_9 {dimension_numbers = #tpu.dot_dimension_numbers<[1], [0], [0], [1], [0, 0, 1, 1], [], []>} : vector<8x300xbf16>, vector<300x1024xbf16>, vector<8x1024xf32> -> vector<8x1024xf32>
    %c0_10 = arith.constant 0 : index
    %c0_11 = arith.constant 0 : index
    %10 = vector.load %arg6[%c0_10, %c0_11] : memref<1x1024xf32, #tpu.memory_space<vmem>>, vector<1x1024xf32>
    %11 = vector.broadcast %10 : vector<1x1024xf32> to vector<8x1024xf32>
    %12 = arith.addf %9, %11 : vector<8x1024xf32>
    %c0_12 = arith.constant 0 : index
    %c0_13 = arith.constant 0 : index
    %13 = vector.load %arg14[%c0_12, %c0_13] : memref<8x1024xf32, #tpu.memory_space<vmem>>, vector<8x1024xf32>
    tpu.vector_store %arg14[%c0_12, %c0_13], %12 {strides = array<i32>} : memref<8x1024xf32, #tpu.memory_space<vmem>>, vector<8x1024xf32>,
    %c0_14 = arith.constant 0 : index
    %c0_15 = arith.constant 0 : index
    %14 = vector.load %arg2[%c0_14, %c0_15] : memref<256x1024xbf16, #tpu.memory_space<vmem>>, vector<256x1024xbf16>
    %c0_16 = arith.constant 0 : index
    %c0_17 = arith.constant 0 : index
    %15 = vector.load %arg5[%c0_16, %c0_17] : memref<256x1024xbf16, #tpu.memory_space<vmem>>, vector<256x1024xbf16>
    %cst_18 = arith.constant 0.000000e+00 : f32
    %16 = vector.broadcast %cst_18 : f32 to vector<1x256xf32>
    %c0_i32 = arith.constant 0 : i32
    %c7_i32 = arith.constant 7 : i32
    %17 = arith.subi %c7_i32, %c0_i32 : i32
    %18 = arith.index_cast %c0_i32 : i32 to index
    %c0_19 = arith.constant 0 : index
    %19 = vector.load %arg13[%18, %c0_19] : memref<8x1024xf32, #tpu.memory_space<vmem>>, vector<1x1024xf32>
    %20 = arith.truncf %16 : vector<1x256xf32> to vector<1x256xbf16>
    %cst_20 = arith.constant dense<0.000000e+00> : vector<1x1024xf32>
    %21 = tpu.matmul %20, %14, %cst_20 {dimension_numbers = #tpu.dot_dimension_numbers<[1], [0], [0], [1], [0, 0, 1, 1], [], []>} : vector<1x256xbf16>, vector<256x1024xbf16>, vector<1x1024xf32> -> vector<1x1024xf32>
    %22 = arith.addf %19, %21 : vector<1x1024xf32>
    %23 = vector.extract_strided_slice %22 {offsets = [0, 0], sizes = [1, 256], strides = [1, 1]} : vector<1x1024xf32> to vector<1x256xf32>
    %24 = arith.negf %23 : vector<1x256xf32>
    %25 = math.exp %24 : vector<1x256xf32>
    %cst_21 = arith.constant 1.000000e+00 : f32
    %26 = vector.broadcast %cst_21 : f32 to vector<1x256xf32>
    %27 = arith.addf %26, %25 : vector<1x256xf32>
    %28 = arith.divf %26, %27 : vector<1x256xf32>
    %29 = vector.extract_strided_slice %22 {offsets = [0, 256], sizes = [1, 256], strides = [1, 1]} : vector<1x1024xf32> to vector<1x256xf32>
    %30 = arith.negf %29 : vector<1x256xf32>
    %31 = math.exp %30 : vector<1x256xf32>
    %cst_22 = arith.constant 1.000000e+00 : f32
    %32 = vector.broadcast %cst_22 : f32 to vector<1x256xf32>
    %33 = arith.addf %32, %31 : vector<1x256xf32>
    %34 = arith.divf %32, %33 : vector<1x256xf32>
    %35 = vector.extract_strided_slice %22 {offsets = [0, 512], sizes = [1, 256], strides = [1, 1]} : vector<1x1024xf32> to vector<1x256xf32>
    %36 = math.tanh %35 : vector<1x256xf32>
    %37 = vector.extract_strided_slice %22 {offsets = [0, 768], sizes = [1, 256], strides = [1, 1]} : vector<1x1024xf32> to vector<1x256xf32>
    %38 = arith.negf %37 : vector<1x256xf32>
    %39 = math.exp %38 : vector<1x256xf32>
    %cst_23 = arith.constant 1.000000e+00 : f32
    %40 = vector.broadcast %cst_23 : f32 to vector<1x256xf32>
    %41 = arith.addf %40, %39 : vector<1x256xf32>
    %42 = arith.divf %40, %41 : vector<1x256xf32>
    %43 = arith.mulf %34, %16 : vector<1x256xf32>
    %44 = arith.mulf %28, %36 : vector<1x256xf32>
    %45 = arith.addf %43, %44 : vector<1x256xf32>
    %46 = math.tanh %45 : vector<1x256xf32>
    %47 = arith.mulf %42, %46 : vector<1x256xf32>
    %48 = arith.index_cast %17 : i32 to index
    %c0_24 = arith.constant 0 : index
    %49 = vector.load %arg14[%48, %c0_24] : memref<8x1024xf32, #tpu.memory_space<vmem>>, vector<1x1024xf32>
    %50 = arith.truncf %16 : vector<1x256xf32> to vector<1x256xbf16>
    %cst_25 = arith.constant dense<0.000000e+00> : vector<1x1024xf32>
    %51 = tpu.matmul %50, %15, %cst_25 {dimension_numbers = #tpu.dot_dimension_numbers<[1], [0], [0], [1], [0, 0, 1, 1], [], []>} : vector<1x256xbf16>, vector<256x1024xbf16>, vector<1x1024xf32> -> vector<1x1024xf32>
    %52 = arith.addf %49, %51 : vector<1x1024xf32>
    %53 = vector.extract_strided_slice %52 {offsets = [0, 0], sizes = [1, 256], strides = [1, 1]} : vector<1x1024xf32> to vector<1x256xf32>
    %54 = arith.negf %53 : vector<1x256xf32>
    %55 = math.exp %54 : vector<1x256xf32>
    %cst_26 = arith.constant 1.000000e+00 : f32
    %56 = vector.broadcast %cst_26 : f32 to vector<1x256xf32>
    %57 = arith.addf %56, %55 : vector<1x256xf32>
    %58 = arith.divf %56, %57 : vector<1x256xf32>
    %59 = vector.extract_strided_slice %52 {offsets = [0, 256], sizes = [1, 256], strides = [1, 1]} : vector<1x1024xf32> to vector<1x256xf32>
    %60 = arith.negf %59 : vector<1x256xf32>
    %61 = math.exp %60 : vector<1x256xf32>
    %cst_27 = arith.constant 1.000000e+00 : f32
    %62 = vector.broadcast %cst_27 : f32 to vector<1x256xf32>
    %63 = arith.addf %62, %61 : vector<1x256xf32>
    %64 = arith.divf %62, %63 : vector<1x256xf32>
    %65 = vector.extract_strided_slice %52 {offsets = [0, 512], sizes = [1, 256], strides = [1, 1]} : vector<1x1024xf32> to vector<1x256xf32>
    %66 = math.tanh %65 : vector<1x256xf32>
    %67 = vector.extract_strided_slice %52 {offsets = [0, 768], sizes = [1, 256], strides = [1, 1]} : vector<1x1024xf32> to vector<1x256xf32>
    %68 = arith.negf %67 : vector<1x256xf32>
    %69 = math.exp %68 : vector<1x256xf32>
    %cst_28 = arith.constant 1.000000e+00 : f32
    %70 = vector.broadcast %cst_28 : f32 to vector<1x256xf32>
    %71 = arith.addf %70, %69 : vector<1x256xf32>
    %72 = arith.divf %70, %71 : vector<1x256xf32>
    %73 = arith.mulf %64, %16 : vector<1x256xf32>
    %74 = arith.mulf %58, %66 : vector<1x256xf32>
    %75 = arith.addf %73, %74 : vector<1x256xf32>
    %76 = math.tanh %75 : vector<1x256xf32>
    %77 = arith.mulf %72, %76 : vector<1x256xf32>
    %78 = arith.index_cast %c0_i32 : i32 to index
    %c0_29 = arith.constant 0 : index
    %79 = vector.load %arg10[%78, %c0_29] : memref<8x256xf32, #tpu.memory_space<vmem>>, vector<1x256xf32>
    tpu.vector_store %arg10[%78, %c0_29], %47 {strides = array<i32>} : memref<8x256xf32, #tpu.memory_space<vmem>>, vector<1x256xf32>,
    %80 = arith.index_cast %17 : i32 to index
    %c0_30 = arith.constant 0 : index
    %81 = vector.load %arg11[%80, %c0_30] : memref<8x256xf32, #tpu.memory_space<vmem>>, vector<1x256xf32>
    tpu.vector_store %arg11[%80, %c0_30], %77 {strides = array<i32>} : memref<8x256xf32, #tpu.memory_space<vmem>>, vector<1x256xf32>,
    %c1_i32 = arith.constant 1 : i32
    %c7_i32_31 = arith.constant 7 : i32
    %82 = arith.subi %c7_i32_31, %c1_i32 : i32
    %83 = arith.index_cast %c1_i32 : i32 to index
    %c0_32 = arith.constant 0 : index
    %84 = vector.load %arg13[%83, %c0_32] : memref<8x1024xf32, #tpu.memory_space<vmem>>, vector<1x1024xf32>
    %85 = arith.truncf %47 : vector<1x256xf32> to vector<1x256xbf16>
    %cst_33 = arith.constant dense<0.000000e+00> : vector<1x1024xf32>
    %86 = tpu.matmul %85, %14, %cst_33 {dimension_numbers = #tpu.dot_dimension_numbers<[1], [0], [0], [1], [0, 0, 1, 1], [], []>} : vector<1x256xbf16>, vector<256x1024xbf16>, vector<1x1024xf32> -> vector<1x1024xf32>
    %87 = arith.addf %84, %86 : vector<1x1024xf32>
    %88 = vector.extract_strided_slice %87 {offsets = [0, 0], sizes = [1, 256], strides = [1, 1]} : vector<1x1024xf32> to vector<1x256xf32>
    %89 = arith.negf %88 : vector<1x256xf32>
    %90 = math.exp %89 : vector<1x256xf32>
    %cst_34 = arith.constant 1.000000e+00 : f32
    %91 = vector.broadcast %cst_34 : f32 to vector<1x256xf32>
    %92 = arith.addf %91, %90 : vector<1x256xf32>
    %93 = arith.divf %91, %92 : vector<1x256xf32>
    %94 = vector.extract_strided_slice %87 {offsets = [0, 256], sizes = [1, 256], strides = [1, 1]} : vector<1x1024xf32> to vector<1x256xf32>
    %95 = arith.negf %94 : vector<1x256xf32>
    %96 = math.exp %95 : vector<1x256xf32>
    %cst_35 = arith.constant 1.000000e+00 : f32
    %97 = vector.broadcast %cst_35 : f32 to vector<1x256xf32>
    %98 = arith.addf %97, %96 : vector<1x256xf32>
    %99 = arith.divf %97, %98 : vector<1x256xf32>
    %100 = vector.extract_strided_slice %87 {offsets = [0, 512], sizes = [1, 256], strides = [1, 1]} : vector<1x1024xf32> to vector<1x256xf32>
    %101 = math.tanh %100 : vector<1x256xf32>
    %102 = vector.extract_strided_slice %87 {offsets = [0, 768], sizes = [1, 256], strides = [1, 1]} : vector<1x1024xf32> to vector<1x256xf32>
    %103 = arith.negf %102 : vector<1x256xf32>
    %104 = math.exp %103 : vector<1x256xf32>
    %cst_36 = arith.constant 1.000000e+00 : f32
    %105 = vector.broadcast %cst_36 : f32 to vector<1x256xf32>
    %106 = arith.addf %105, %104 : vector<1x256xf32>
    %107 = arith.divf %105, %106 : vector<1x256xf32>
    %108 = arith.mulf %99, %45 : vector<1x256xf32>
    %109 = arith.mulf %93, %101 : vector<1x256xf32>
    %110 = arith.addf %108, %109 : vector<1x256xf32>
    %111 = math.tanh %110 : vector<1x256xf32>
    %112 = arith.mulf %107, %111 : vector<1x256xf32>
    %113 = arith.index_cast %82 : i32 to index
    %c0_37 = arith.constant 0 : index
    %114 = vector.load %arg14[%113, %c0_37] : memref<8x1024xf32, #tpu.memory_space<vmem>>, vector<1x1024xf32>
    %115 = arith.truncf %77 : vector<1x256xf32> to vector<1x256xbf16>
    %cst_38 = arith.constant dense<0.000000e+00> : vector<1x1024xf32>
    %116 = tpu.matmul %115, %15, %cst_38 {dimension_numbers = #tpu.dot_dimension_numbers<[1], [0], [0], [1], [0, 0, 1, 1], [], []>} : vector<1x256xbf16>, vector<256x1024xbf16>, vector<1x1024xf32> -> vector<1x1024xf32>
    %117 = arith.addf %114, %116 : vector<1x1024xf32>
    %118 = vector.extract_strided_slice %117 {offsets = [0, 0], sizes = [1, 256], strides = [1, 1]} : vector<1x1024xf32> to vector<1x256xf32>
    %119 = arith.negf %118 : vector<1x256xf32>
    %120 = math.exp %119 : vector<1x256xf32>
    %cst_39 = arith.constant 1.000000e+00 : f32
    %121 = vector.broadcast %cst_39 : f32 to vector<1x256xf32>
    %122 = arith.addf %121, %120 : vector<1x256xf32>
    %123 = arith.divf %121, %122 : vector<1x256xf32>
    %124 = vector.extract_strided_slice %117 {offsets = [0, 256], sizes = [1, 256], strides = [1, 1]} : vector<1x1024xf32> to vector<1x256xf32>
    %125 = arith.negf %124 : vector<1x256xf32>
    %126 = math.exp %125 : vector<1x256xf32>
    %cst_40 = arith.constant 1.000000e+00 : f32
    %127 = vector.broadcast %cst_40 : f32 to vector<1x256xf32>
    %128 = arith.addf %127, %126 : vector<1x256xf32>
    %129 = arith.divf %127, %128 : vector<1x256xf32>
    %130 = vector.extract_strided_slice %117 {offsets = [0, 512], sizes = [1, 256], strides = [1, 1]} : vector<1x1024xf32> to vector<1x256xf32>
    %131 = math.tanh %130 : vector<1x256xf32>
    %132 = vector.extract_strided_slice %117 {offsets = [0, 768], sizes = [1, 256], strides = [1, 1]} : vector<1x1024xf32> to vector<1x256xf32>
    %133 = arith.negf %132 : vector<1x256xf32>
    %134 = math.exp %133 : vector<1x256xf32>
    %cst_41 = arith.constant 1.000000e+00 : f32
    %135 = vector.broadcast %cst_41 : f32 to vector<1x256xf32>
    %136 = arith.addf %135, %134 : vector<1x256xf32>
    %137 = arith.divf %135, %136 : vector<1x256xf32>
    %138 = arith.mulf %129, %75 : vector<1x256xf32>
    %139 = arith.mulf %123, %131 : vector<1x256xf32>
    %140 = arith.addf %138, %139 : vector<1x256xf32>
    %141 = math.tanh %140 : vector<1x256xf32>
    %142 = arith.mulf %137, %141 : vector<1x256xf32>
    %143 = arith.index_cast %c1_i32 : i32 to index
    %c0_42 = arith.constant 0 : index
    %144 = vector.load %arg10[%143, %c0_42] : memref<8x256xf32, #tpu.memory_space<vmem>>, vector<1x256xf32>
    tpu.vector_store %arg10[%143, %c0_42], %112 {strides = array<i32>} : memref<8x256xf32, #tpu.memory_space<vmem>>, vector<1x256xf32>,
    %145 = arith.index_cast %82 : i32 to index
    %c0_43 = arith.constant 0 : index
    %146 = vector.load %arg11[%145, %c0_43] : memref<8x256xf32, #tpu.memory_space<vmem>>, vector<1x256xf32>
    tpu.vector_store %arg11[%145, %c0_43], %142 {strides = array<i32>} : memref<8x256xf32, #tpu.memory_space<vmem>>, vector<1x256xf32>,
    %c2_i32 = arith.constant 2 : i32
    %c7_i32_44 = arith.constant 7 : i32
    %147 = arith.subi %c7_i32_44, %c2_i32 : i32
    %148 = arith.index_cast %c2_i32 : i32 to index
    %c0_45 = arith.constant 0 : index
    %149 = vector.load %arg13[%148, %c0_45] : memref<8x1024xf32, #tpu.memory_space<vmem>>, vector<1x1024xf32>
    %150 = arith.truncf %112 : vector<1x256xf32> to vector<1x256xbf16>
    %cst_46 = arith.constant dense<0.000000e+00> : vector<1x1024xf32>
    %151 = tpu.matmul %150, %14, %cst_46 {dimension_numbers = #tpu.dot_dimension_numbers<[1], [0], [0], [1], [0, 0, 1, 1], [], []>} : vector<1x256xbf16>, vector<256x1024xbf16>, vector<1x1024xf32> -> vector<1x1024xf32>
    %152 = arith.addf %149, %151 : vector<1x1024xf32>
    %153 = vector.extract_strided_slice %152 {offsets = [0, 0], sizes = [1, 256], strides = [1, 1]} : vector<1x1024xf32> to vector<1x256xf32>
    %154 = arith.negf %153 : vector<1x256xf32>
    %155 = math.exp %154 : vector<1x256xf32>
    %cst_47 = arith.constant 1.000000e+00 : f32
    %156 = vector.broadcast %cst_47 : f32 to vector<1x256xf32>
    %157 = arith.addf %156, %155 : vector<1x256xf32>
    %158 = arith.divf %156, %157 : vector<1x256xf32>
    %159 = vector.extract_strided_slice %152 {offsets = [0, 256], sizes = [1, 256], strides = [1, 1]} : vector<1x1024xf32> to vector<1x256xf32>
    %160 = arith.negf %159 : vector<1x256xf32>
    %161 = math.exp %160 : vector<1x256xf32>
    %cst_48 = arith.constant 1.000000e+00 : f32
    %162 = vector.broadcast %cst_48 : f32 to vector<1x256xf32>
    %163 = arith.addf %162, %161 : vector<1x256xf32>
    %164 = arith.divf %162, %163 : vector<1x256xf32>
    %165 = vector.extract_strided_slice %152 {offsets = [0, 512], sizes = [1, 256], strides = [1, 1]} : vector<1x1024xf32> to vector<1x256xf32>
    %166 = math.tanh %165 : vector<1x256xf32>
    %167 = vector.extract_strided_slice %152 {offsets = [0, 768], sizes = [1, 256], strides = [1, 1]} : vector<1x1024xf32> to vector<1x256xf32>
    %168 = arith.negf %167 : vector<1x256xf32>
    %169 = math.exp %168 : vector<1x256xf32>
    %cst_49 = arith.constant 1.000000e+00 : f32
    %170 = vector.broadcast %cst_49 : f32 to vector<1x256xf32>
    %171 = arith.addf %170, %169 : vector<1x256xf32>
    %172 = arith.divf %170, %171 : vector<1x256xf32>
    %173 = arith.mulf %164, %110 : vector<1x256xf32>
    %174 = arith.mulf %158, %166 : vector<1x256xf32>
    %175 = arith.addf %173, %174 : vector<1x256xf32>
    %176 = math.tanh %175 : vector<1x256xf32>
    %177 = arith.mulf %172, %176 : vector<1x256xf32>
    %178 = arith.index_cast %147 : i32 to index
    %c0_50 = arith.constant 0 : index
    %179 = vector.load %arg14[%178, %c0_50] : memref<8x1024xf32, #tpu.memory_space<vmem>>, vector<1x1024xf32>
    %180 = arith.truncf %142 : vector<1x256xf32> to vector<1x256xbf16>
    %cst_51 = arith.constant dense<0.000000e+00> : vector<1x1024xf32>
    %181 = tpu.matmul %180, %15, %cst_51 {dimension_numbers = #tpu.dot_dimension_numbers<[1], [0], [0], [1], [0, 0, 1, 1], [], []>} : vector<1x256xbf16>, vector<256x1024xbf16>, vector<1x1024xf32> -> vector<1x1024xf32>
    %182 = arith.addf %179, %181 : vector<1x1024xf32>
    %183 = vector.extract_strided_slice %182 {offsets = [0, 0], sizes = [1, 256], strides = [1, 1]} : vector<1x1024xf32> to vector<1x256xf32>
    %184 = arith.negf %183 : vector<1x256xf32>
    %185 = math.exp %184 : vector<1x256xf32>
    %cst_52 = arith.constant 1.000000e+00 : f32
    %186 = vector.broadcast %cst_52 : f32 to vector<1x256xf32>
    %187 = arith.addf %186, %185 : vector<1x256xf32>
    %188 = arith.divf %186, %187 : vector<1x256xf32>
    %189 = vector.extract_strided_slice %182 {offsets = [0, 256], sizes = [1, 256], strides = [1, 1]} : vector<1x1024xf32> to vector<1x256xf32>
    %190 = arith.negf %189 : vector<1x256xf32>
    %191 = math.exp %190 : vector<1x256xf32>
    %cst_53 = arith.constant 1.000000e+00 : f32
    %192 = vector.broadcast %cst_53 : f32 to vector<1x256xf32>
    %193 = arith.addf %192, %191 : vector<1x256xf32>
    %194 = arith.divf %192, %193 : vector<1x256xf32>
    %195 = vector.extract_strided_slice %182 {offsets = [0, 512], sizes = [1, 256], strides = [1, 1]} : vector<1x1024xf32> to vector<1x256xf32>
    %196 = math.tanh %195 : vector<1x256xf32>
    %197 = vector.extract_strided_slice %182 {offsets = [0, 768], sizes = [1, 256], strides = [1, 1]} : vector<1x1024xf32> to vector<1x256xf32>
    %198 = arith.negf %197 : vector<1x256xf32>
    %199 = math.exp %198 : vector<1x256xf32>
    %cst_54 = arith.constant 1.000000e+00 : f32
    %200 = vector.broadcast %cst_54 : f32 to vector<1x256xf32>
    %201 = arith.addf %200, %199 : vector<1x256xf32>
    %202 = arith.divf %200, %201 : vector<1x256xf32>
    %203 = arith.mulf %194, %140 : vector<1x256xf32>
    %204 = arith.mulf %188, %196 : vector<1x256xf32>
    %205 = arith.addf %203, %204 : vector<1x256xf32>
    %206 = math.tanh %205 : vector<1x256xf32>
    %207 = arith.mulf %202, %206 : vector<1x256xf32>
    %208 = arith.index_cast %c2_i32 : i32 to index
    %c0_55 = arith.constant 0 : index
    %209 = vector.load %arg10[%208, %c0_55] : memref<8x256xf32, #tpu.memory_space<vmem>>, vector<1x256xf32>
    tpu.vector_store %arg10[%208, %c0_55], %177 {strides = array<i32>} : memref<8x256xf32, #tpu.memory_space<vmem>>, vector<1x256xf32>,
    %210 = arith.index_cast %147 : i32 to index
    %c0_56 = arith.constant 0 : index
    %211 = vector.load %arg11[%210, %c0_56] : memref<8x256xf32, #tpu.memory_space<vmem>>, vector<1x256xf32>
    tpu.vector_store %arg11[%210, %c0_56], %207 {strides = array<i32>} : memref<8x256xf32, #tpu.memory_space<vmem>>, vector<1x256xf32>,
    %c3_i32 = arith.constant 3 : i32
    %c7_i32_57 = arith.constant 7 : i32
    %212 = arith.subi %c7_i32_57, %c3_i32 : i32
    %213 = arith.index_cast %c3_i32 : i32 to index
    %c0_58 = arith.constant 0 : index
    %214 = vector.load %arg13[%213, %c0_58] : memref<8x1024xf32, #tpu.memory_space<vmem>>, vector<1x1024xf32>
    %215 = arith.truncf %177 : vector<1x256xf32> to vector<1x256xbf16>
    %cst_59 = arith.constant dense<0.000000e+00> : vector<1x1024xf32>
    %216 = tpu.matmul %215, %14, %cst_59 {dimension_numbers = #tpu.dot_dimension_numbers<[1], [0], [0], [1], [0, 0, 1, 1], [], []>} : vector<1x256xbf16>, vector<256x1024xbf16>, vector<1x1024xf32> -> vector<1x1024xf32>
    %217 = arith.addf %214, %216 : vector<1x1024xf32>
    %218 = vector.extract_strided_slice %217 {offsets = [0, 0], sizes = [1, 256], strides = [1, 1]} : vector<1x1024xf32> to vector<1x256xf32>
    %219 = arith.negf %218 : vector<1x256xf32>
    %220 = math.exp %219 : vector<1x256xf32>
    %cst_60 = arith.constant 1.000000e+00 : f32
    %221 = vector.broadcast %cst_60 : f32 to vector<1x256xf32>
    %222 = arith.addf %221, %220 : vector<1x256xf32>
    %223 = arith.divf %221, %222 : vector<1x256xf32>
    %224 = vector.extract_strided_slice %217 {offsets = [0, 256], sizes = [1, 256], strides = [1, 1]} : vector<1x1024xf32> to vector<1x256xf32>
    %225 = arith.negf %224 : vector<1x256xf32>
    %226 = math.exp %225 : vector<1x256xf32>
    %cst_61 = arith.constant 1.000000e+00 : f32
    %227 = vector.broadcast %cst_61 : f32 to vector<1x256xf32>
    %228 = arith.addf %227, %226 : vector<1x256xf32>
    %229 = arith.divf %227, %228 : vector<1x256xf32>
    %230 = vector.extract_strided_slice %217 {offsets = [0, 512], sizes = [1, 256], strides = [1, 1]} : vector<1x1024xf32> to vector<1x256xf32>
    %231 = math.tanh %230 : vector<1x256xf32>
    %232 = vector.extract_strided_slice %217 {offsets = [0, 768], sizes = [1, 256], strides = [1, 1]} : vector<1x1024xf32> to vector<1x256xf32>
    %233 = arith.negf %232 : vector<1x256xf32>
    %234 = math.exp %233 : vector<1x256xf32>
    %cst_62 = arith.constant 1.000000e+00 : f32
    %235 = vector.broadcast %cst_62 : f32 to vector<1x256xf32>
    %236 = arith.addf %235, %234 : vector<1x256xf32>
    %237 = arith.divf %235, %236 : vector<1x256xf32>
    %238 = arith.mulf %229, %175 : vector<1x256xf32>
    %239 = arith.mulf %223, %231 : vector<1x256xf32>
    %240 = arith.addf %238, %239 : vector<1x256xf32>
    %241 = math.tanh %240 : vector<1x256xf32>
    %242 = arith.mulf %237, %241 : vector<1x256xf32>
    %243 = arith.index_cast %212 : i32 to index
    %c0_63 = arith.constant 0 : index
    %244 = vector.load %arg14[%243, %c0_63] : memref<8x1024xf32, #tpu.memory_space<vmem>>, vector<1x1024xf32>
    %245 = arith.truncf %207 : vector<1x256xf32> to vector<1x256xbf16>
    %cst_64 = arith.constant dense<0.000000e+00> : vector<1x1024xf32>
    %246 = tpu.matmul %245, %15, %cst_64 {dimension_numbers = #tpu.dot_dimension_numbers<[1], [0], [0], [1], [0, 0, 1, 1], [], []>} : vector<1x256xbf16>, vector<256x1024xbf16>, vector<1x1024xf32> -> vector<1x1024xf32>
    %247 = arith.addf %244, %246 : vector<1x1024xf32>
    %248 = vector.extract_strided_slice %247 {offsets = [0, 0], sizes = [1, 256], strides = [1, 1]} : vector<1x1024xf32> to vector<1x256xf32>
    %249 = arith.negf %248 : vector<1x256xf32>
    %250 = math.exp %249 : vector<1x256xf32>
    %cst_65 = arith.constant 1.000000e+00 : f32
    %251 = vector.broadcast %cst_65 : f32 to vector<1x256xf32>
    %252 = arith.addf %251, %250 : vector<1x256xf32>
    %253 = arith.divf %251, %252 : vector<1x256xf32>
    %254 = vector.extract_strided_slice %247 {offsets = [0, 256], sizes = [1, 256], strides = [1, 1]} : vector<1x1024xf32> to vector<1x256xf32>
    %255 = arith.negf %254 : vector<1x256xf32>
    %256 = math.exp %255 : vector<1x256xf32>
    %cst_66 = arith.constant 1.000000e+00 : f32
    %257 = vector.broadcast %cst_66 : f32 to vector<1x256xf32>
    %258 = arith.addf %257, %256 : vector<1x256xf32>
    %259 = arith.divf %257, %258 : vector<1x256xf32>
    %260 = vector.extract_strided_slice %247 {offsets = [0, 512], sizes = [1, 256], strides = [1, 1]} : vector<1x1024xf32> to vector<1x256xf32>
    %261 = math.tanh %260 : vector<1x256xf32>
    %262 = vector.extract_strided_slice %247 {offsets = [0, 768], sizes = [1, 256], strides = [1, 1]} : vector<1x1024xf32> to vector<1x256xf32>
    %263 = arith.negf %262 : vector<1x256xf32>
    %264 = math.exp %263 : vector<1x256xf32>
    %cst_67 = arith.constant 1.000000e+00 : f32
    %265 = vector.broadcast %cst_67 : f32 to vector<1x256xf32>
    %266 = arith.addf %265, %264 : vector<1x256xf32>
    %267 = arith.divf %265, %266 : vector<1x256xf32>
    %268 = arith.mulf %259, %205 : vector<1x256xf32>
    %269 = arith.mulf %253, %261 : vector<1x256xf32>
    %270 = arith.addf %268, %269 : vector<1x256xf32>
    %271 = math.tanh %270 : vector<1x256xf32>
    %272 = arith.mulf %267, %271 : vector<1x256xf32>
    %273 = arith.index_cast %c3_i32 : i32 to index
    %c0_68 = arith.constant 0 : index
    %274 = vector.load %arg10[%273, %c0_68] : memref<8x256xf32, #tpu.memory_space<vmem>>, vector<1x256xf32>
    tpu.vector_store %arg10[%273, %c0_68], %242 {strides = array<i32>} : memref<8x256xf32, #tpu.memory_space<vmem>>, vector<1x256xf32>,
    %275 = arith.index_cast %212 : i32 to index
    %c0_69 = arith.constant 0 : index
    %276 = vector.load %arg11[%275, %c0_69] : memref<8x256xf32, #tpu.memory_space<vmem>>, vector<1x256xf32>
    tpu.vector_store %arg11[%275, %c0_69], %272 {strides = array<i32>} : memref<8x256xf32, #tpu.memory_space<vmem>>, vector<1x256xf32>,
    %c4_i32 = arith.constant 4 : i32
    %c7_i32_70 = arith.constant 7 : i32
    %277 = arith.subi %c7_i32_70, %c4_i32 : i32
    %278 = arith.index_cast %c4_i32 : i32 to index
    %c0_71 = arith.constant 0 : index
    %279 = vector.load %arg13[%278, %c0_71] : memref<8x1024xf32, #tpu.memory_space<vmem>>, vector<1x1024xf32>
    %280 = arith.truncf %242 : vector<1x256xf32> to vector<1x256xbf16>
    %cst_72 = arith.constant dense<0.000000e+00> : vector<1x1024xf32>
    %281 = tpu.matmul %280, %14, %cst_72 {dimension_numbers = #tpu.dot_dimension_numbers<[1], [0], [0], [1], [0, 0, 1, 1], [], []>} : vector<1x256xbf16>, vector<256x1024xbf16>, vector<1x1024xf32> -> vector<1x1024xf32>
    %282 = arith.addf %279, %281 : vector<1x1024xf32>
    %283 = vector.extract_strided_slice %282 {offsets = [0, 0], sizes = [1, 256], strides = [1, 1]} : vector<1x1024xf32> to vector<1x256xf32>
    %284 = arith.negf %283 : vector<1x256xf32>
    %285 = math.exp %284 : vector<1x256xf32>
    %cst_73 = arith.constant 1.000000e+00 : f32
    %286 = vector.broadcast %cst_73 : f32 to vector<1x256xf32>
    %287 = arith.addf %286, %285 : vector<1x256xf32>
    %288 = arith.divf %286, %287 : vector<1x256xf32>
    %289 = vector.extract_strided_slice %282 {offsets = [0, 256], sizes = [1, 256], strides = [1, 1]} : vector<1x1024xf32> to vector<1x256xf32>
    %290 = arith.negf %289 : vector<1x256xf32>
    %291 = math.exp %290 : vector<1x256xf32>
    %cst_74 = arith.constant 1.000000e+00 : f32
    %292 = vector.broadcast %cst_74 : f32 to vector<1x256xf32>
    %293 = arith.addf %292, %291 : vector<1x256xf32>
    %294 = arith.divf %292, %293 : vector<1x256xf32>
    %295 = vector.extract_strided_slice %282 {offsets = [0, 512], sizes = [1, 256], strides = [1, 1]} : vector<1x1024xf32> to vector<1x256xf32>
    %296 = math.tanh %295 : vector<1x256xf32>
    %297 = vector.extract_strided_slice %282 {offsets = [0, 768], sizes = [1, 256], strides = [1, 1]} : vector<1x1024xf32> to vector<1x256xf32>
    %298 = arith.negf %297 : vector<1x256xf32>
    %299 = math.exp %298 : vector<1x256xf32>
    %cst_75 = arith.constant 1.000000e+00 : f32
    %300 = vector.broadcast %cst_75 : f32 to vector<1x256xf32>
    %301 = arith.addf %300, %299 : vector<1x256xf32>
    %302 = arith.divf %300, %301 : vector<1x256xf32>
    %303 = arith.mulf %294, %240 : vector<1x256xf32>
    %304 = arith.mulf %288, %296 : vector<1x256xf32>
    %305 = arith.addf %303, %304 : vector<1x256xf32>
    %306 = math.tanh %305 : vector<1x256xf32>
    %307 = arith.mulf %302, %306 : vector<1x256xf32>
    %308 = arith.index_cast %277 : i32 to index
    %c0_76 = arith.constant 0 : index
    %309 = vector.load %arg14[%308, %c0_76] : memref<8x1024xf32, #tpu.memory_space<vmem>>, vector<1x1024xf32>
    %310 = arith.truncf %272 : vector<1x256xf32> to vector<1x256xbf16>
    %cst_77 = arith.constant dense<0.000000e+00> : vector<1x1024xf32>
    %311 = tpu.matmul %310, %15, %cst_77 {dimension_numbers = #tpu.dot_dimension_numbers<[1], [0], [0], [1], [0, 0, 1, 1], [], []>} : vector<1x256xbf16>, vector<256x1024xbf16>, vector<1x1024xf32> -> vector<1x1024xf32>
    %312 = arith.addf %309, %311 : vector<1x1024xf32>
    %313 = vector.extract_strided_slice %312 {offsets = [0, 0], sizes = [1, 256], strides = [1, 1]} : vector<1x1024xf32> to vector<1x256xf32>
    %314 = arith.negf %313 : vector<1x256xf32>
    %315 = math.exp %314 : vector<1x256xf32>
    %cst_78 = arith.constant 1.000000e+00 : f32
    %316 = vector.broadcast %cst_78 : f32 to vector<1x256xf32>
    %317 = arith.addf %316, %315 : vector<1x256xf32>
    %318 = arith.divf %316, %317 : vector<1x256xf32>
    %319 = vector.extract_strided_slice %312 {offsets = [0, 256], sizes = [1, 256], strides = [1, 1]} : vector<1x1024xf32> to vector<1x256xf32>
    %320 = arith.negf %319 : vector<1x256xf32>
    %321 = math.exp %320 : vector<1x256xf32>
    %cst_79 = arith.constant 1.000000e+00 : f32
    %322 = vector.broadcast %cst_79 : f32 to vector<1x256xf32>
    %323 = arith.addf %322, %321 : vector<1x256xf32>
    %324 = arith.divf %322, %323 : vector<1x256xf32>
    %325 = vector.extract_strided_slice %312 {offsets = [0, 512], sizes = [1, 256], strides = [1, 1]} : vector<1x1024xf32> to vector<1x256xf32>
    %326 = math.tanh %325 : vector<1x256xf32>
    %327 = vector.extract_strided_slice %312 {offsets = [0, 768], sizes = [1, 256], strides = [1, 1]} : vector<1x1024xf32> to vector<1x256xf32>
    %328 = arith.negf %327 : vector<1x256xf32>
    %329 = math.exp %328 : vector<1x256xf32>
    %cst_80 = arith.constant 1.000000e+00 : f32
    %330 = vector.broadcast %cst_80 : f32 to vector<1x256xf32>
    %331 = arith.addf %330, %329 : vector<1x256xf32>
    %332 = arith.divf %330, %331 : vector<1x256xf32>
    %333 = arith.mulf %324, %270 : vector<1x256xf32>
    %334 = arith.mulf %318, %326 : vector<1x256xf32>
    %335 = arith.addf %333, %334 : vector<1x256xf32>
    %336 = math.tanh %335 : vector<1x256xf32>
    %337 = arith.mulf %332, %336 : vector<1x256xf32>
    %338 = arith.index_cast %c4_i32 : i32 to index
    %c0_81 = arith.constant 0 : index
    %339 = vector.load %arg10[%338, %c0_81] : memref<8x256xf32, #tpu.memory_space<vmem>>, vector<1x256xf32>
    tpu.vector_store %arg10[%338, %c0_81], %307 {strides = array<i32>} : memref<8x256xf32, #tpu.memory_space<vmem>>, vector<1x256xf32>,
    %340 = arith.index_cast %277 : i32 to index
    %c0_82 = arith.constant 0 : index
    %341 = vector.load %arg11[%340, %c0_82] : memref<8x256xf32, #tpu.memory_space<vmem>>, vector<1x256xf32>
    tpu.vector_store %arg11[%340, %c0_82], %337 {strides = array<i32>} : memref<8x256xf32, #tpu.memory_space<vmem>>, vector<1x256xf32>,
    %c5_i32 = arith.constant 5 : i32
    %c7_i32_83 = arith.constant 7 : i32
    %342 = arith.subi %c7_i32_83, %c5_i32 : i32
    %343 = arith.index_cast %c5_i32 : i32 to index
    %c0_84 = arith.constant 0 : index
    %344 = vector.load %arg13[%343, %c0_84] : memref<8x1024xf32, #tpu.memory_space<vmem>>, vector<1x1024xf32>
    %345 = arith.truncf %307 : vector<1x256xf32> to vector<1x256xbf16>
    %cst_85 = arith.constant dense<0.000000e+00> : vector<1x1024xf32>
    %346 = tpu.matmul %345, %14, %cst_85 {dimension_numbers = #tpu.dot_dimension_numbers<[1], [0], [0], [1], [0, 0, 1, 1], [], []>} : vector<1x256xbf16>, vector<256x1024xbf16>, vector<1x1024xf32> -> vector<1x1024xf32>
    %347 = arith.addf %344, %346 : vector<1x1024xf32>
    %348 = vector.extract_strided_slice %347 {offsets = [0, 0], sizes = [1, 256], strides = [1, 1]} : vector<1x1024xf32> to vector<1x256xf32>
    %349 = arith.negf %348 : vector<1x256xf32>
    %350 = math.exp %349 : vector<1x256xf32>
    %cst_86 = arith.constant 1.000000e+00 : f32
    %351 = vector.broadcast %cst_86 : f32 to vector<1x256xf32>
    %352 = arith.addf %351, %350 : vector<1x256xf32>
    %353 = arith.divf %351, %352 : vector<1x256xf32>
    %354 = vector.extract_strided_slice %347 {offsets = [0, 256], sizes = [1, 256], strides = [1, 1]} : vector<1x1024xf32> to vector<1x256xf32>
    %355 = arith.negf %354 : vector<1x256xf32>
    %356 = math.exp %355 : vector<1x256xf32>
    %cst_87 = arith.constant 1.000000e+00 : f32
    %357 = vector.broadcast %cst_87 : f32 to vector<1x256xf32>
    %358 = arith.addf %357, %356 : vector<1x256xf32>
    %359 = arith.divf %357, %358 : vector<1x256xf32>
    %360 = vector.extract_strided_slice %347 {offsets = [0, 512], sizes = [1, 256], strides = [1, 1]} : vector<1x1024xf32> to vector<1x256xf32>
    %361 = math.tanh %360 : vector<1x256xf32>
    %362 = vector.extract_strided_slice %347 {offsets = [0, 768], sizes = [1, 256], strides = [1, 1]} : vector<1x1024xf32> to vector<1x256xf32>
    %363 = arith.negf %362 : vector<1x256xf32>
    %364 = math.exp %363 : vector<1x256xf32>
    %cst_88 = arith.constant 1.000000e+00 : f32
    %365 = vector.broadcast %cst_88 : f32 to vector<1x256xf32>
    %366 = arith.addf %365, %364 : vector<1x256xf32>
    %367 = arith.divf %365, %366 : vector<1x256xf32>
    %368 = arith.mulf %359, %305 : vector<1x256xf32>
    %369 = arith.mulf %353, %361 : vector<1x256xf32>
    %370 = arith.addf %368, %369 : vector<1x256xf32>
    %371 = math.tanh %370 : vector<1x256xf32>
    %372 = arith.mulf %367, %371 : vector<1x256xf32>
    %373 = arith.index_cast %342 : i32 to index
    %c0_89 = arith.constant 0 : index
    %374 = vector.load %arg14[%373, %c0_89] : memref<8x1024xf32, #tpu.memory_space<vmem>>, vector<1x1024xf32>
    %375 = arith.truncf %337 : vector<1x256xf32> to vector<1x256xbf16>
    %cst_90 = arith.constant dense<0.000000e+00> : vector<1x1024xf32>
    %376 = tpu.matmul %375, %15, %cst_90 {dimension_numbers = #tpu.dot_dimension_numbers<[1], [0], [0], [1], [0, 0, 1, 1], [], []>} : vector<1x256xbf16>, vector<256x1024xbf16>, vector<1x1024xf32> -> vector<1x1024xf32>
    %377 = arith.addf %374, %376 : vector<1x1024xf32>
    %378 = vector.extract_strided_slice %377 {offsets = [0, 0], sizes = [1, 256], strides = [1, 1]} : vector<1x1024xf32> to vector<1x256xf32>
    %379 = arith.negf %378 : vector<1x256xf32>
    %380 = math.exp %379 : vector<1x256xf32>
    %cst_91 = arith.constant 1.000000e+00 : f32
    %381 = vector.broadcast %cst_91 : f32 to vector<1x256xf32>
    %382 = arith.addf %381, %380 : vector<1x256xf32>
    %383 = arith.divf %381, %382 : vector<1x256xf32>
    %384 = vector.extract_strided_slice %377 {offsets = [0, 256], sizes = [1, 256], strides = [1, 1]} : vector<1x1024xf32> to vector<1x256xf32>
    %385 = arith.negf %384 : vector<1x256xf32>
    %386 = math.exp %385 : vector<1x256xf32>
    %cst_92 = arith.constant 1.000000e+00 : f32
    %387 = vector.broadcast %cst_92 : f32 to vector<1x256xf32>
    %388 = arith.addf %387, %386 : vector<1x256xf32>
    %389 = arith.divf %387, %388 : vector<1x256xf32>
    %390 = vector.extract_strided_slice %377 {offsets = [0, 512], sizes = [1, 256], strides = [1, 1]} : vector<1x1024xf32> to vector<1x256xf32>
    %391 = math.tanh %390 : vector<1x256xf32>
    %392 = vector.extract_strided_slice %377 {offsets = [0, 768], sizes = [1, 256], strides = [1, 1]} : vector<1x1024xf32> to vector<1x256xf32>
    %393 = arith.negf %392 : vector<1x256xf32>
    %394 = math.exp %393 : vector<1x256xf32>
    %cst_93 = arith.constant 1.000000e+00 : f32
    %395 = vector.broadcast %cst_93 : f32 to vector<1x256xf32>
    %396 = arith.addf %395, %394 : vector<1x256xf32>
    %397 = arith.divf %395, %396 : vector<1x256xf32>
    %398 = arith.mulf %389, %335 : vector<1x256xf32>
    %399 = arith.mulf %383, %391 : vector<1x256xf32>
    %400 = arith.addf %398, %399 : vector<1x256xf32>
    %401 = math.tanh %400 : vector<1x256xf32>
    %402 = arith.mulf %397, %401 : vector<1x256xf32>
    %403 = arith.index_cast %c5_i32 : i32 to index
    %c0_94 = arith.constant 0 : index
    %404 = vector.load %arg10[%403, %c0_94] : memref<8x256xf32, #tpu.memory_space<vmem>>, vector<1x256xf32>
    tpu.vector_store %arg10[%403, %c0_94], %372 {strides = array<i32>} : memref<8x256xf32, #tpu.memory_space<vmem>>, vector<1x256xf32>,
    %405 = arith.index_cast %342 : i32 to index
    %c0_95 = arith.constant 0 : index
    %406 = vector.load %arg11[%405, %c0_95] : memref<8x256xf32, #tpu.memory_space<vmem>>, vector<1x256xf32>
    tpu.vector_store %arg11[%405, %c0_95], %402 {strides = array<i32>} : memref<8x256xf32, #tpu.memory_space<vmem>>, vector<1x256xf32>,
    %c6_i32 = arith.constant 6 : i32
    %c7_i32_96 = arith.constant 7 : i32
    %407 = arith.subi %c7_i32_96, %c6_i32 : i32
    %408 = arith.index_cast %c6_i32 : i32 to index
    %c0_97 = arith.constant 0 : index
    %409 = vector.load %arg13[%408, %c0_97] : memref<8x1024xf32, #tpu.memory_space<vmem>>, vector<1x1024xf32>
    %410 = arith.truncf %372 : vector<1x256xf32> to vector<1x256xbf16>
    %cst_98 = arith.constant dense<0.000000e+00> : vector<1x1024xf32>
    %411 = tpu.matmul %410, %14, %cst_98 {dimension_numbers = #tpu.dot_dimension_numbers<[1], [0], [0], [1], [0, 0, 1, 1], [], []>} : vector<1x256xbf16>, vector<256x1024xbf16>, vector<1x1024xf32> -> vector<1x1024xf32>
    %412 = arith.addf %409, %411 : vector<1x1024xf32>
    %413 = vector.extract_strided_slice %412 {offsets = [0, 0], sizes = [1, 256], strides = [1, 1]} : vector<1x1024xf32> to vector<1x256xf32>
    %414 = arith.negf %413 : vector<1x256xf32>
    %415 = math.exp %414 : vector<1x256xf32>
    %cst_99 = arith.constant 1.000000e+00 : f32
    %416 = vector.broadcast %cst_99 : f32 to vector<1x256xf32>
    %417 = arith.addf %416, %415 : vector<1x256xf32>
    %418 = arith.divf %416, %417 : vector<1x256xf32>
    %419 = vector.extract_strided_slice %412 {offsets = [0, 256], sizes = [1, 256], strides = [1, 1]} : vector<1x1024xf32> to vector<1x256xf32>
    %420 = arith.negf %419 : vector<1x256xf32>
    %421 = math.exp %420 : vector<1x256xf32>
    %cst_100 = arith.constant 1.000000e+00 : f32
    %422 = vector.broadcast %cst_100 : f32 to vector<1x256xf32>
    %423 = arith.addf %422, %421 : vector<1x256xf32>
    %424 = arith.divf %422, %423 : vector<1x256xf32>
    %425 = vector.extract_strided_slice %412 {offsets = [0, 512], sizes = [1, 256], strides = [1, 1]} : vector<1x1024xf32> to vector<1x256xf32>
    %426 = math.tanh %425 : vector<1x256xf32>
    %427 = vector.extract_strided_slice %412 {offsets = [0, 768], sizes = [1, 256], strides = [1, 1]} : vector<1x1024xf32> to vector<1x256xf32>
    %428 = arith.negf %427 : vector<1x256xf32>
    %429 = math.exp %428 : vector<1x256xf32>
    %cst_101 = arith.constant 1.000000e+00 : f32
    %430 = vector.broadcast %cst_101 : f32 to vector<1x256xf32>
    %431 = arith.addf %430, %429 : vector<1x256xf32>
    %432 = arith.divf %430, %431 : vector<1x256xf32>
    %433 = arith.mulf %424, %370 : vector<1x256xf32>
    %434 = arith.mulf %418, %426 : vector<1x256xf32>
    %435 = arith.addf %433, %434 : vector<1x256xf32>
    %436 = math.tanh %435 : vector<1x256xf32>
    %437 = arith.mulf %432, %436 : vector<1x256xf32>
    %438 = arith.index_cast %407 : i32 to index
    %c0_102 = arith.constant 0 : index
    %439 = vector.load %arg14[%438, %c0_102] : memref<8x1024xf32, #tpu.memory_space<vmem>>, vector<1x1024xf32>
    %440 = arith.truncf %402 : vector<1x256xf32> to vector<1x256xbf16>
    %cst_103 = arith.constant dense<0.000000e+00> : vector<1x1024xf32>
    %441 = tpu.matmul %440, %15, %cst_103 {dimension_numbers = #tpu.dot_dimension_numbers<[1], [0], [0], [1], [0, 0, 1, 1], [], []>} : vector<1x256xbf16>, vector<256x1024xbf16>, vector<1x1024xf32> -> vector<1x1024xf32>
    %442 = arith.addf %439, %441 : vector<1x1024xf32>
    %443 = vector.extract_strided_slice %442 {offsets = [0, 0], sizes = [1, 256], strides = [1, 1]} : vector<1x1024xf32> to vector<1x256xf32>
    %444 = arith.negf %443 : vector<1x256xf32>
    %445 = math.exp %444 : vector<1x256xf32>
    %cst_104 = arith.constant 1.000000e+00 : f32
    %446 = vector.broadcast %cst_104 : f32 to vector<1x256xf32>
    %447 = arith.addf %446, %445 : vector<1x256xf32>
    %448 = arith.divf %446, %447 : vector<1x256xf32>
    %449 = vector.extract_strided_slice %442 {offsets = [0, 256], sizes = [1, 256], strides = [1, 1]} : vector<1x1024xf32> to vector<1x256xf32>
    %450 = arith.negf %449 : vector<1x256xf32>
    %451 = math.exp %450 : vector<1x256xf32>
    %cst_105 = arith.constant 1.000000e+00 : f32
    %452 = vector.broadcast %cst_105 : f32 to vector<1x256xf32>
    %453 = arith.addf %452, %451 : vector<1x256xf32>
    %454 = arith.divf %452, %453 : vector<1x256xf32>
    %455 = vector.extract_strided_slice %442 {offsets = [0, 512], sizes = [1, 256], strides = [1, 1]} : vector<1x1024xf32> to vector<1x256xf32>
    %456 = math.tanh %455 : vector<1x256xf32>
    %457 = vector.extract_strided_slice %442 {offsets = [0, 768], sizes = [1, 256], strides = [1, 1]} : vector<1x1024xf32> to vector<1x256xf32>
    %458 = arith.negf %457 : vector<1x256xf32>
    %459 = math.exp %458 : vector<1x256xf32>
    %cst_106 = arith.constant 1.000000e+00 : f32
    %460 = vector.broadcast %cst_106 : f32 to vector<1x256xf32>
    %461 = arith.addf %460, %459 : vector<1x256xf32>
    %462 = arith.divf %460, %461 : vector<1x256xf32>
    %463 = arith.mulf %454, %400 : vector<1x256xf32>
    %464 = arith.mulf %448, %456 : vector<1x256xf32>
    %465 = arith.addf %463, %464 : vector<1x256xf32>
    %466 = math.tanh %465 : vector<1x256xf32>
    %467 = arith.mulf %462, %466 : vector<1x256xf32>
    %468 = arith.index_cast %c6_i32 : i32 to index
    %c0_107 = arith.constant 0 : index
    %469 = vector.load %arg10[%468, %c0_107] : memref<8x256xf32, #tpu.memory_space<vmem>>, vector<1x256xf32>
    tpu.vector_store %arg10[%468, %c0_107], %437 {strides = array<i32>} : memref<8x256xf32, #tpu.memory_space<vmem>>, vector<1x256xf32>,
    %470 = arith.index_cast %407 : i32 to index
    %c0_108 = arith.constant 0 : index
    %471 = vector.load %arg11[%470, %c0_108] : memref<8x256xf32, #tpu.memory_space<vmem>>, vector<1x256xf32>
    tpu.vector_store %arg11[%470, %c0_108], %467 {strides = array<i32>} : memref<8x256xf32, #tpu.memory_space<vmem>>, vector<1x256xf32>,
    %c7_i32_109 = arith.constant 7 : i32
    %c7_i32_110 = arith.constant 7 : i32
    %472 = arith.subi %c7_i32_110, %c7_i32_109 : i32
    %473 = arith.index_cast %c7_i32_109 : i32 to index
    %c0_111 = arith.constant 0 : index
    %474 = vector.load %arg13[%473, %c0_111] : memref<8x1024xf32, #tpu.memory_space<vmem>>, vector<1x1024xf32>
    %475 = arith.truncf %437 : vector<1x256xf32> to vector<1x256xbf16>
    %cst_112 = arith.constant dense<0.000000e+00> : vector<1x1024xf32>
    %476 = tpu.matmul %475, %14, %cst_112 {dimension_numbers = #tpu.dot_dimension_numbers<[1], [0], [0], [1], [0, 0, 1, 1], [], []>} : vector<1x256xbf16>, vector<256x1024xbf16>, vector<1x1024xf32> -> vector<1x1024xf32>
    %477 = arith.addf %474, %476 : vector<1x1024xf32>
    %478 = vector.extract_strided_slice %477 {offsets = [0, 0], sizes = [1, 256], strides = [1, 1]} : vector<1x1024xf32> to vector<1x256xf32>
    %479 = arith.negf %478 : vector<1x256xf32>
    %480 = math.exp %479 : vector<1x256xf32>
    %cst_113 = arith.constant 1.000000e+00 : f32
    %481 = vector.broadcast %cst_113 : f32 to vector<1x256xf32>
    %482 = arith.addf %481, %480 : vector<1x256xf32>
    %483 = arith.divf %481, %482 : vector<1x256xf32>
    %484 = vector.extract_strided_slice %477 {offsets = [0, 256], sizes = [1, 256], strides = [1, 1]} : vector<1x1024xf32> to vector<1x256xf32>
    %485 = arith.negf %484 : vector<1x256xf32>
    %486 = math.exp %485 : vector<1x256xf32>
    %cst_114 = arith.constant 1.000000e+00 : f32
    %487 = vector.broadcast %cst_114 : f32 to vector<1x256xf32>
    %488 = arith.addf %487, %486 : vector<1x256xf32>
    %489 = arith.divf %487, %488 : vector<1x256xf32>
    %490 = vector.extract_strided_slice %477 {offsets = [0, 512], sizes = [1, 256], strides = [1, 1]} : vector<1x1024xf32> to vector<1x256xf32>
    %491 = math.tanh %490 : vector<1x256xf32>
    %492 = vector.extract_strided_slice %477 {offsets = [0, 768], sizes = [1, 256], strides = [1, 1]} : vector<1x1024xf32> to vector<1x256xf32>
    %493 = arith.negf %492 : vector<1x256xf32>
    %494 = math.exp %493 : vector<1x256xf32>
    %cst_115 = arith.constant 1.000000e+00 : f32
    %495 = vector.broadcast %cst_115 : f32 to vector<1x256xf32>
    %496 = arith.addf %495, %494 : vector<1x256xf32>
    %497 = arith.divf %495, %496 : vector<1x256xf32>
    %498 = arith.mulf %489, %435 : vector<1x256xf32>
    %499 = arith.mulf %483, %491 : vector<1x256xf32>
    %500 = arith.addf %498, %499 : vector<1x256xf32>
    %501 = math.tanh %500 : vector<1x256xf32>
    %502 = arith.mulf %497, %501 : vector<1x256xf32>
    %503 = arith.index_cast %472 : i32 to index
    %c0_116 = arith.constant 0 : index
    %504 = vector.load %arg14[%503, %c0_116] : memref<8x1024xf32, #tpu.memory_space<vmem>>, vector<1x1024xf32>
    %505 = arith.truncf %467 : vector<1x256xf32> to vector<1x256xbf16>
    %cst_117 = arith.constant dense<0.000000e+00> : vector<1x1024xf32>
    %506 = tpu.matmul %505, %15, %cst_117 {dimension_numbers = #tpu.dot_dimension_numbers<[1], [0], [0], [1], [0, 0, 1, 1], [], []>} : vector<1x256xbf16>, vector<256x1024xbf16>, vector<1x1024xf32> -> vector<1x1024xf32>
    %507 = arith.addf %504, %506 : vector<1x1024xf32>
    %508 = vector.extract_strided_slice %507 {offsets = [0, 0], sizes = [1, 256], strides = [1, 1]} : vector<1x1024xf32> to vector<1x256xf32>
    %509 = arith.negf %508 : vector<1x256xf32>
    %510 = math.exp %509 : vector<1x256xf32>
    %cst_118 = arith.constant 1.000000e+00 : f32
    %511 = vector.broadcast %cst_118 : f32 to vector<1x256xf32>
    %512 = arith.addf %511, %510 : vector<1x256xf32>
    %513 = arith.divf %511, %512 : vector<1x256xf32>
    %514 = vector.extract_strided_slice %507 {offsets = [0, 256], sizes = [1, 256], strides = [1, 1]} : vector<1x1024xf32> to vector<1x256xf32>
    %515 = arith.negf %514 : vector<1x256xf32>
    %516 = math.exp %515 : vector<1x256xf32>
    %cst_119 = arith.constant 1.000000e+00 : f32
    %517 = vector.broadcast %cst_119 : f32 to vector<1x256xf32>
    %518 = arith.addf %517, %516 : vector<1x256xf32>
    %519 = arith.divf %517, %518 : vector<1x256xf32>
    %520 = vector.extract_strided_slice %507 {offsets = [0, 512], sizes = [1, 256], strides = [1, 1]} : vector<1x1024xf32> to vector<1x256xf32>
    %521 = math.tanh %520 : vector<1x256xf32>
    %522 = vector.extract_strided_slice %507 {offsets = [0, 768], sizes = [1, 256], strides = [1, 1]} : vector<1x1024xf32> to vector<1x256xf32>
    %523 = arith.negf %522 : vector<1x256xf32>
    %524 = math.exp %523 : vector<1x256xf32>
    %cst_120 = arith.constant 1.000000e+00 : f32
    %525 = vector.broadcast %cst_120 : f32 to vector<1x256xf32>
    %526 = arith.addf %525, %524 : vector<1x256xf32>
    %527 = arith.divf %525, %526 : vector<1x256xf32>
    %528 = arith.mulf %519, %465 : vector<1x256xf32>
    %529 = arith.mulf %513, %521 : vector<1x256xf32>
    %530 = arith.addf %528, %529 : vector<1x256xf32>
    %531 = math.tanh %530 : vector<1x256xf32>
    %532 = arith.mulf %527, %531 : vector<1x256xf32>
    %533 = arith.index_cast %c7_i32_109 : i32 to index
    %c0_121 = arith.constant 0 : index
    %534 = vector.load %arg10[%533, %c0_121] : memref<8x256xf32, #tpu.memory_space<vmem>>, vector<1x256xf32>
    tpu.vector_store %arg10[%533, %c0_121], %502 {strides = array<i32>} : memref<8x256xf32, #tpu.memory_space<vmem>>, vector<1x256xf32>,
    %535 = arith.index_cast %472 : i32 to index
    %c0_122 = arith.constant 0 : index
    %536 = vector.load %arg11[%535, %c0_122] : memref<8x256xf32, #tpu.memory_space<vmem>>, vector<1x256xf32>
    tpu.vector_store %arg11[%535, %c0_122], %532 {strides = array<i32>} : memref<8x256xf32, #tpu.memory_space<vmem>>, vector<1x256xf32>,
    %c8_i32 = arith.constant 8 : i32
    %c0_123 = arith.constant 0 : index
    %c0_124 = arith.constant 0 : index
    %537 = vector.load %arg10[%c0_123, %c0_124] : memref<8x256xf32, #tpu.memory_space<vmem>>, vector<8x256xf32>
    %538 = arith.truncf %537 : vector<8x256xf32> to vector<8x256xbf16>
    %c0_125 = arith.constant 0 : index
    %c0_126 = arith.constant 0 : index
    %539 = vector.load %arg11[%c0_125, %c0_126] : memref<8x256xf32, #tpu.memory_space<vmem>>, vector<8x256xf32>
    %540 = arith.truncf %539 : vector<8x256xf32> to vector<8x256xbf16>
    %c0_127 = arith.constant 0 : index
    %c0_128 = arith.constant 0 : index
    %541 = vector.load %arg7[%c0_127, %c0_128] : memref<256x128xbf16, #tpu.memory_space<vmem>>, vector<256x128xbf16>
    %cst_129 = arith.constant dense<0.000000e+00> : vector<8x128xf32>
    %542 = tpu.matmul %538, %541, %cst_129 {dimension_numbers = #tpu.dot_dimension_numbers<[1], [0], [0], [1], [0, 0, 1, 1], [], []>} : vector<8x256xbf16>, vector<256x128xbf16>, vector<8x128xf32> -> vector<8x128xf32>
    %c0_130 = arith.constant 0 : index
    %c0_131 = arith.constant 0 : index
    %543 = vector.load %arg8[%c0_130, %c0_131] : memref<256x128xbf16, #tpu.memory_space<vmem>>, vector<256x128xbf16>
    %cst_132 = arith.constant dense<0.000000e+00> : vector<8x128xf32>
    %544 = tpu.matmul %540, %543, %cst_132 {dimension_numbers = #tpu.dot_dimension_numbers<[1], [0], [0], [1], [0, 0, 1, 1], [], []>} : vector<8x256xbf16>, vector<256x128xbf16>, vector<8x128xf32> -> vector<8x128xf32>
    %545 = arith.addf %542, %544 : vector<8x128xf32>
    %c0_133 = arith.constant 0 : index
    %c0_134 = arith.constant 0 : index
    %546 = vector.load %arg9[%c0_133, %c0_134] : memref<1x128xf32, #tpu.memory_space<vmem>>, vector<1x128xf32>
    %547 = vector.broadcast %546 : vector<1x128xf32> to vector<8x128xf32>
    %548 = arith.addf %545, %547 : vector<8x128xf32>
    %549 = tpu.iota {dimensions = array<i32: 1>} : vector<8x128xi32>
    %c7_i32_135 = arith.constant 7 : i32
    %550 = vector.broadcast %c7_i32_135 : i32 to vector<8x128xi32>
    %551 = arith.cmpi slt, %549, %550 : vector<8x128xi32>
    %cst_136 = arith.constant -1.000000e+30 : f32
    %552 = vector.broadcast %cst_136 : f32 to vector<8x128xf32>
    %553 = arith.select %551, %548, %552 : vector<8x128xi1>, vector<8x128xf32>
    %cst_137 = arith.constant dense<0xFF800000> : vector<8xf32>
    %554 = vector.multi_reduction <maximumf>, %553, %cst_137 [1] : vector<8x128xf32> to vector<8xf32>
    %555 = vector.shape_cast %554 : vector<8xf32> to vector<8x1xf32>
    %556 = vector.broadcast %555 : vector<8x1xf32> to vector<8x128xf32>
    %557 = arith.subf %553, %556 : vector<8x128xf32>
    %558 = math.exp %557 : vector<8x128xf32>
    %cst_138 = arith.constant dense<0.000000e+00> : vector<8xf32>
    %559 = vector.multi_reduction <add>, %558, %cst_138 [1] : vector<8x128xf32> to vector<8xf32>
    %560 = vector.shape_cast %559 : vector<8xf32> to vector<8x1xf32>
    %561 = math.log %560 : vector<8x1xf32>
    %562 = arith.addf %561, %555 : vector<8x1xf32>
    %563 = vector.broadcast %562 : vector<8x1xf32> to vector<8x128xf32>
    %564 = arith.subf %553, %563 : vector<8x128xf32>
    %c0_139 = arith.constant 0 : index
    %c0_140 = arith.constant 0 : index
    %565 = vector.load %arg12[%c0_139, %c0_140] : memref<8x128xf32, #tpu.memory_space<vmem>>, vector<8x128xf32>
    tpu.vector_store %arg12[%c0_139, %c0_140], %564 {strides = array<i32>} : memref<8x128xf32, #tpu.memory_space<vmem>>, vector<8x128xf32>,
    return
  }
}

</mosaic_0001>

<llo_original>
// kernel: paragraph_bilstm_forward.1
$region0: #{paragraph_bilstm_forward.1}
  #allocation0 [shape = 'u32[]', space=smem, size = 0x4, offset = 0x4, fixed_abs, tag = 'smem constant byte address 0x4 - core index']
  #allocation1 [shape = 'u32[144,128]{1,0:T(1,128)}', space=vmem, size = 0x12000, scoped, tag = 'internal scratch']
  #allocation2 [shape = 'f32[8,1024]{1,0:T(8,128)}', space=vmem, size = 0x8000, scoped, tag = 'scratch operand']
  #allocation3 [shape = 'f32[8,1024]{1,0:T(8,128)}', space=vmem, size = 0x8000, scoped, tag = 'scratch operand']
  %s0 = inlined_call_operand.vmem [shape: f32[8,300], index: 0, kind: input, shape index: {}]
  %s1 = inlined_call_operand.vmem [shape: bf16[300,1024], index: 1, kind: input, shape index: {}]
  %s2 = inlined_call_operand.vmem [shape: bf16[256,1024], index: 2, kind: input, shape index: {}]
  %s3 = inlined_call_operand.vmem [shape: f32[1,1024], index: 3, kind: input, shape index: {}]
  %s4 = inlined_call_operand.vmem [shape: bf16[300,1024], index: 4, kind: input, shape index: {}]
  %s5 = inlined_call_operand.vmem [shape: bf16[256,1024], index: 5, kind: input, shape index: {}]
  %s6 = inlined_call_operand.vmem [shape: f32[1,1024], index: 6, kind: input, shape index: {}]
  %s7 = inlined_call_operand.vmem [shape: bf16[256,128], index: 7, kind: input, shape index: {}]
  %s8 = inlined_call_operand.vmem [shape: bf16[256,128], index: 8, kind: input, shape index: {}]
  %s9 = inlined_call_operand.vmem [shape: f32[1,128], index: 9, kind: input, shape index: {}]
  %s10 = inlined_call_operand.vmem [shape: f32[8,256], index: 10, kind: output, shape index: {0}]
  %s11 = inlined_call_operand.vmem [shape: f32[8,256], index: 11, kind: output, shape index: {1}]
  %s12 = inlined_call_operand.vmem [shape: f32[8,128], index: 12, kind: output, shape index: {2}]
  %13 = xla_tuple %s10, %s11, %s12
  %s14 = sld [smem:[#allocation0]]
  $region66: #{paragraph_bilstm_forward.1} parent=0
    _
  %s16 = ssub.s32 1, %s14
  %s17 = scalar_select 0, %s16, %s14
  // Predicated region
  $region2: #{paragraph_bilstm_forward.1} parent=0 // pred_check
    _
  $region3: #{paragraph_bilstm_forward.1} parent=0 // pred_check_branch
    %19 = sbr.rel (0) target = $region5
  $region4: #{paragraph_bilstm_forward.1} parent=0 // pred_region
    _
  $region5: #{paragraph_bilstm_forward.1} parent=0 // pred_fallthru
    _
  // Predicated region
  $region6: #{paragraph_bilstm_forward.1} parent=0 // pred_check
    _
  $region7: #{paragraph_bilstm_forward.1} parent=0 // pred_check_branch
    %21 = sbr.rel (0) target = $region9
  $region8: #{paragraph_bilstm_forward.1} parent=0 // pred_region
    _
  $region9: #{paragraph_bilstm_forward.1} parent=0 // pred_fallthru
    _
  // Predicated region
  $region10: #{paragraph_bilstm_forward.1} parent=0 // pred_check
    _
  $region11: #{paragraph_bilstm_forward.1} parent=0 // pred_check_branch
    %23 = sbr.rel (0) target = $region13
  $region12: #{paragraph_bilstm_forward.1} parent=0 // pred_region
    _
  $region13: #{paragraph_bilstm_forward.1} parent=0 // pred_fallthru
    _
  // Predicated region
  $region14: #{paragraph_bilstm_forward.1} parent=0 // pred_check
    _
  $region15: #{paragraph_bilstm_forward.1} parent=0 // pred_check_branch
    %25 = sbr.rel (0) target = $region17
  $region16: #{paragraph_bilstm_forward.1} parent=0 // pred_region
    _
  $region17: #{paragraph_bilstm_forward.1} parent=0 // pred_fallthru
    _
  // Predicated region
  $region18: #{paragraph_bilstm_forward.1} parent=0 // pred_check
    _
  $region19: #{paragraph_bilstm_forward.1} parent=0 // pred_check_branch
    %27 = sbr.rel (0) target = $region21
  $region20: #{paragraph_bilstm_forward.1} parent=0 // pred_region
    _
  $region21: #{paragraph_bilstm_forward.1} parent=0 // pred_fallthru
    _
  // Predicated region
  $region22: #{paragraph_bilstm_forward.1} parent=0 // pred_check
    _
  $region23: #{paragraph_bilstm_forward.1} parent=0 // pred_check_branch
    %29 = sbr.rel (0) target = $region25
  $region24: #{paragraph_bilstm_forward.1} parent=0 // pred_region
    _
  $region25: #{paragraph_bilstm_forward.1} parent=0 // pred_fallthru
    _
  // Predicated region
  $region26: #{paragraph_bilstm_forward.1} parent=0 // pred_check
    _
  $region27: #{paragraph_bilstm_forward.1} parent=0 // pred_check_branch
    %31 = sbr.rel (0) target = $region29
  $region28: #{paragraph_bilstm_forward.1} parent=0 // pred_region
    _
  $region29: #{paragraph_bilstm_forward.1} parent=0 // pred_fallthru
    _
  // Predicated region
  $region30: #{paragraph_bilstm_forward.1} parent=0 // pred_check
    _
  $region31: #{paragraph_bilstm_forward.1} parent=0 // pred_check_branch
    %33 = sbr.rel (0) target = $region33
  $region32: #{paragraph_bilstm_forward.1} parent=0 // pred_region
    _
  $region33: #{paragraph_bilstm_forward.1} parent=0 // pred_fallthru
    _
  // Predicated region
  $region34: #{paragraph_bilstm_forward.1} parent=0 // pred_check
    _
  $region35: #{paragraph_bilstm_forward.1} parent=0 // pred_check_branch
    %35 = sbr.rel (0) target = $region37
  $region36: #{paragraph_bilstm_forward.1} parent=0 // pred_region
    _
  $region37: #{paragraph_bilstm_forward.1} parent=0 // pred_fallthru
    _
  // Predicated region
  $region38: #{paragraph_bilstm_forward.1} parent=0 // pred_check
    _
  $region39: #{paragraph_bilstm_forward.1} parent=0 // pred_check_branch
    %37 = sbr.rel (0) target = $region41
  $region40: #{paragraph_bilstm_forward.1} parent=0 // pred_region
    _
  $region41: #{paragraph_bilstm_forward.1} parent=0 // pred_fallthru
    _
  %v39 = vld [vmem:[%s0] sm:$0xff]
  %v40 = vld [vmem:[%s0 + $0x8] sm:$0xff]
  %v41 = vld [vmem:[%s0 + $0x10] sm:$0xff]
  %v42 = vpack.c.bf16 %v39, %v39
  %v43 = vpack.c.bf16 %v40, %v40
  %v44 = vpack.c.bf16 %v41, %v41
  %v45 = vld [vmem:[%s1] sm:$0xff]
  %v46 = vld [vmem:[%s1 + $0x8] sm:$0xff]
  %v47 = vld [vmem:[%s1 + $0x10] sm:$0xff]
  %v48 = vld [vmem:[%s1 + $0x18] sm:$0xff]
  %v49 = vld [vmem:[%s1 + $0x20] sm:$0xff]
  %v50 = vld [vmem:[%s1 + $0x28] sm:$0xff]
  %v51 = vld [vmem:[%s1 + $0x30] sm:$0xff]
  %v52 = vld [vmem:[%s1 + $0x38] sm:$0xff]
  %v53 = vld [vmem:[%s1 + $0x40] sm:$0xff]
  %v54 = vld [vmem:[%s1 + $0x48] sm:$0xff]
  %v55 = vld [vmem:[%s1 + $0x50] sm:$0xff]
  %v56 = vld [vmem:[%s1 + $0x58] sm:$0xff]
  %v57 = vld [vmem:[%s1 + $0x60] sm:$0xff]
  %v58 = vld [vmem:[%s1 + $0x68] sm:$0xff]
  %v59 = vld [vmem:[%s1 + $0x70] sm:$0xff]
  %v60 = vld [vmem:[%s1 + $0x78] sm:$0xff]
  %v61 = vld [vmem:[%s1 + $0x80] sm:$0xff]
  %v62 = vld [vmem:[%s1 + $0x88] sm:$0xff]
  %v63 = vld [vmem:[%s1 + $0x90] sm:$0xff]
  %v64 = vld [vmem:[%s1 + $0x98] sm:$0xff]
  %v65 = vld [vmem:[%s1 + $0xa0] sm:$0xff]
  %v66 = vld [vmem:[%s1 + $0xa8] sm:$0xff]
  %v67 = vld [vmem:[%s1 + $0xb0] sm:$0xff]
  %v68 = vld [vmem:[%s1 + $0xb8] sm:$0xff]
  %v69 = vld [vmem:[%s1 + $0xc0] sm:$0xff]
  %v70 = vld [vmem:[%s1 + $0xc8] sm:$0xff]
  %v71 = vld [vmem:[%s1 + $0xd0] sm:$0xff]
  %v72 = vld [vmem:[%s1 + $0xd8] sm:$0xff]
  %v73 = vld [vmem:[%s1 + $0xe0] sm:$0xff]
  %v74 = vld [vmem:[%s1 + $0xe8] sm:$0xff]
  %v75 = vld [vmem:[%s1 + $0xf0] sm:$0xff]
  %v76 = vld [vmem:[%s1 + $0xf8] sm:$0xff]
  %v77 = vld [vmem:[%s1 + $0x100] sm:$0xff]
  %v78 = vld [vmem:[%s1 + $0x108] sm:$0xff]
  %v79 = vld [vmem:[%s1 + $0x110] sm:$0xff]
  %v80 = vld [vmem:[%s1 + $0x118] sm:$0xff]
  %v81 = vld [vmem:[%s1 + $0x120] sm:$0xff]
  %v82 = vld [vmem:[%s1 + $0x128] sm:$0xff]
  %v83 = vld [vmem:[%s1 + $0x130] sm:$0xff]
  %v84 = vld [vmem:[%s1 + $0x138] sm:$0xff]
  %v85 = vld [vmem:[%s1 + $0x140] sm:$0xff]
  %v86 = vld [vmem:[%s1 + $0x148] sm:$0xff]
  %v87 = vld [vmem:[%s1 + $0x150] sm:$0xff]
  %v88 = vld [vmem:[%s1 + $0x158] sm:$0xff]
  %v89 = vld [vmem:[%s1 + $0x160] sm:$0xff]
  %v90 = vld [vmem:[%s1 + $0x168] sm:$0xff]
  %v91 = vld [vmem:[%s1 + $0x170] sm:$0xff]
  %v92 = vld [vmem:[%s1 + $0x178] sm:$0xff]
  %v93 = vld [vmem:[%s1 + $0x180] sm:$0xff]
  %v94 = vld [vmem:[%s1 + $0x188] sm:$0xff]
  %v95 = vld [vmem:[%s1 + $0x190] sm:$0xff]
  %v96 = vld [vmem:[%s1 + $0x198] sm:$0xff]
  %v97 = vld [vmem:[%s1 + $0x1a0] sm:$0xff]
  %v98 = vld [vmem:[%s1 + $0x1a8] sm:$0xff]
  %v99 = vld [vmem:[%s1 + $0x1b0] sm:$0xff]
  %v100 = vld [vmem:[%s1 + $0x1b8] sm:$0xff]
  %v101 = vld [vmem:[%s1 + $0x1c0] sm:$0xff]
  %v102 = vld [vmem:[%s1 + $0x1c8] sm:$0xff]
  %v103 = vld [vmem:[%s1 + $0x1d0] sm:$0xff]
  %v104 = vld [vmem:[%s1 + $0x1d8] sm:$0xff]
  %v105 = vld [vmem:[%s1 + $0x1e0] sm:$0xff]
  %v106 = vld [vmem:[%s1 + $0x1e8] sm:$0xff]
  %v107 = vld [vmem:[%s1 + $0x1f0] sm:$0xff]
  %v108 = vld [vmem:[%s1 + $0x1f8] sm:$0xff]
  %v109 = vld [vmem:[%s1 + $0x200] sm:$0xff]
  %v110 = vld [vmem:[%s1 + $0x208] sm:$0xff]
  %v111 = vld [vmem:[%s1 + $0x210] sm:$0xff]
  %v112 = vld [vmem:[%s1 + $0x218] sm:$0xff]
  %v113 = vld [vmem:[%s1 + $0x220] sm:$0xff]
  %v114 = vld [vmem:[%s1 + $0x228] sm:$0xff]
  %v115 = vld [vmem:[%s1 + $0x230] sm:$0xff]
  %v116 = vld [vmem:[%s1 + $0x238] sm:$0xff]
  %v117 = vld [vmem:[%s1 + $0x240] sm:$0xff]
  %v118 = vld [vmem:[%s1 + $0x248] sm:$0xff]
  %v119 = vld [vmem:[%s1 + $0x250] sm:$0xff]
  %v120 = vld [vmem:[%s1 + $0x258] sm:$0xff]
  %v121 = vld [vmem:[%s1 + $0x260] sm:$0xff]
  %v122 = vld [vmem:[%s1 + $0x268] sm:$0xff]
  %v123 = vld [vmem:[%s1 + $0x270] sm:$0xff]
  %v124 = vld [vmem:[%s1 + $0x278] sm:$0xff]
  %v125 = vld [vmem:[%s1 + $0x280] sm:$0xff]
  %v126 = vld [vmem:[%s1 + $0x288] sm:$0xff]
  %v127 = vld [vmem:[%s1 + $0x290] sm:$0xff]
  %v128 = vld [vmem:[%s1 + $0x298] sm:$0xff]
  %v129 = vld [vmem:[%s1 + $0x2a0] sm:$0xff]
  %v130 = vld [vmem:[%s1 + $0x2a8] sm:$0xff]
  %v131 = vld [vmem:[%s1 + $0x2b0] sm:$0xff]
  %v132 = vld [vmem:[%s1 + $0x2b8] sm:$0xff]
  %v133 = vld [vmem:[%s1 + $0x2c0] sm:$0xff]
  %v134 = vld [vmem:[%s1 + $0x2c8] sm:$0xff]
  %v135 = vld [vmem:[%s1 + $0x2d0] sm:$0xff]
  %v136 = vld [vmem:[%s1 + $0x2d8] sm:$0xff]
  %v137 = vld [vmem:[%s1 + $0x2e0] sm:$0xff]
  %v138 = vld [vmem:[%s1 + $0x2e8] sm:$0xff]
  %v139 = vld [vmem:[%s1 + $0x2f0] sm:$0xff]
  %v140 = vld [vmem:[%s1 + $0x2f8] sm:$0xff]
  %v141 = vld [vmem:[%s1 + $0x300] sm:$0xff]
  %v142 = vld [vmem:[%s1 + $0x308] sm:$0xff]
  %v143 = vld [vmem:[%s1 + $0x310] sm:$0xff]
  %v144 = vld [vmem:[%s1 + $0x318] sm:$0xff]
  %v145 = vld [vmem:[%s1 + $0x320] sm:$0xff]
  %v146 = vld [vmem:[%s1 + $0x328] sm:$0xff]
  %v147 = vld [vmem:[%s1 + $0x330] sm:$0xff]
  %v148 = vld [vmem:[%s1 + $0x338] sm:$0xff]
  %v149 = vld [vmem:[%s1 + $0x340] sm:$0xff]
  %v150 = vld [vmem:[%s1 + $0x348] sm:$0xff]
  %v151 = vld [vmem:[%s1 + $0x350] sm:$0xff]
  %v152 = vld [vmem:[%s1 + $0x358] sm:$0xff]
  %v153 = vld [vmem:[%s1 + $0x360] sm:$0xff]
  %v154 = vld [vmem:[%s1 + $0x368] sm:$0xff]
  %v155 = vld [vmem:[%s1 + $0x370] sm:$0xff]
  %v156 = vld [vmem:[%s1 + $0x378] sm:$0xff]
  %v157 = vld [vmem:[%s1 + $0x380] sm:$0xff]
  %v158 = vld [vmem:[%s1 + $0x388] sm:$0xff]
  %v159 = vld [vmem:[%s1 + $0x390] sm:$0xff]
  %v160 = vld [vmem:[%s1 + $0x398] sm:$0xff]
  %v161 = vld [vmem:[%s1 + $0x3a0] sm:$0xff]
  %v162 = vld [vmem:[%s1 + $0x3a8] sm:$0xff]
  %v163 = vld [vmem:[%s1 + $0x3b0] sm:$0xff]
  %v164 = vld [vmem:[%s1 + $0x3b8] sm:$0xff]
  %v165 = vld [vmem:[%s1 + $0x3c0] sm:$0xff]
  %v166 = vld [vmem:[%s1 + $0x3c8] sm:$0xff]
  %v167 = vld [vmem:[%s1 + $0x3d0] sm:$0xff]
  %v168 = vld [vmem:[%s1 + $0x3d8] sm:$0xff]
  %v169 = vld [vmem:[%s1 + $0x3e0] sm:$0xff]
  %v170 = vld [vmem:[%s1 + $0x3e8] sm:$0xff]
  %v171 = vld [vmem:[%s1 + $0x3f0] sm:$0xff]
  %v172 = vld [vmem:[%s1 + $0x3f8] sm:$0xff]
  %v173 = vld [vmem:[%s1 + $0x400] sm:$0xff]
  %v174 = vld [vmem:[%s1 + $0x408] sm:$0xff]
  %v175 = vld [vmem:[%s1 + $0x410] sm:$0xff]
  %v176 = vld [vmem:[%s1 + $0x418] sm:$0xff]
  %v177 = vld [vmem:[%s1 + $0x420] sm:$0xff]
  %v178 = vld [vmem:[%s1 + $0x428] sm:$0xff]
  %v179 = vld [vmem:[%s1 + $0x430] sm:$0xff]
  %v180 = vld [vmem:[%s1 + $0x438] sm:$0xff]
  %v181 = vld [vmem:[%s1 + $0x440] sm:$0xff]
  %v182 = vld [vmem:[%s1 + $0x448] sm:$0xff]
  %v183 = vld [vmem:[%s1 + $0x450] sm:$0xff]
  %v184 = vld [vmem:[%s1 + $0x458] sm:$0xff]
  %v185 = vld [vmem:[%s1 + $0x460] sm:$0xff]
  %v186 = vld [vmem:[%s1 + $0x468] sm:$0xff]
  %v187 = vld [vmem:[%s1 + $0x470] sm:$0xff]
  %v188 = vld [vmem:[%s1 + $0x478] sm:$0xff]
  %v189 = vld [vmem:[%s1 + $0x480] sm:$0xff]
  %v190 = vld [vmem:[%s1 + $0x488] sm:$0xff]
  %v191 = vld [vmem:[%s1 + $0x490] sm:$0xff]
  %v192 = vld [vmem:[%s1 + $0x498] sm:$0xff]
  %v193 = vld [vmem:[%s1 + $0x4a0] sm:$0x33]
  %v194 = vld [vmem:[%s1 + $0x4a8] sm:$0x33]
  %v195 = vld [vmem:[%s1 + $0x4b0] sm:$0x33]
  %v196 = vld [vmem:[%s1 + $0x4b8] sm:$0x33]
  %v197 = vld [vmem:[%s3] sm:$0xff]
  %v199 = vlaneseq
  %v200 = vshrl.u32 %v199, 7
  %v201 = vsub.s32 0, %v200
  %v202 = vrot.slane %v197, %v201
  %v203 = vlaneseq
  %v204 = vshrl.u32 %v203, 7
  %v205 = vsub.s32 1, %v204
  %v206 = vrot.slane %v197, %v205
  %v207 = vlaneseq
  %v208 = vshrl.u32 %v207, 7
  %v209 = vsub.s32 2, %v208
  %v210 = vrot.slane %v197, %v209
  %v211 = vlaneseq
  %v212 = vshrl.u32 %v211, 7
  %v213 = vsub.s32 3, %v212
  %v214 = vrot.slane %v197, %v213
  %v215 = vlaneseq
  %v216 = vshrl.u32 %v215, 7
  %v217 = vsub.s32 4, %v216
  %v218 = vrot.slane %v197, %v217
  %v219 = vlaneseq
  %v220 = vshrl.u32 %v219, 7
  %v221 = vsub.s32 5, %v220
  %v222 = vrot.slane %v197, %v221
  %v223 = vlaneseq
  %v224 = vshrl.u32 %v223, 7
  %v225 = vsub.s32 6, %v224
  %v226 = vrot.slane %v197, %v225
  %v227 = vlaneseq
  %v228 = vshrl.u32 %v227, 7
  %v229 = vsub.s32 7, %v228
  %v230 = vrot.slane %v197, %v229
  %v391 = vunpack.c.l.b16 %v45
  %v392 = vunpack.c.h.b16 %v45
  %v393 = vunpack.c.l.b16 %v46
  %v394 = vunpack.c.h.b16 %v46
  %v395 = vunpack.c.l.b16 %v47
  %v396 = vunpack.c.h.b16 %v47
  %v397 = vunpack.c.l.b16 %v48
  %v398 = vunpack.c.h.b16 %v48
  %v399 = vunpack.c.l.b16 %v49
  %v400 = vunpack.c.h.b16 %v49
  %v401 = vunpack.c.l.b16 %v50
  %v402 = vunpack.c.h.b16 %v50
  %v403 = vunpack.c.l.b16 %v51
  %v404 = vunpack.c.h.b16 %v51
  %v405 = vunpack.c.l.b16 %v52
  %v406 = vunpack.c.h.b16 %v52
  %v407 = vunpack.c.l.b16 %v53
  %v408 = vunpack.c.h.b16 %v53
  %v409 = vunpack.c.l.b16 %v54
  %v410 = vunpack.c.h.b16 %v54
  %v411 = vunpack.c.l.b16 %v55
  %v412 = vunpack.c.h.b16 %v55
  %v413 = vunpack.c.l.b16 %v56
  %v414 = vunpack.c.h.b16 %v56
  %v415 = vunpack.c.l.b16 %v57
  %v416 = vunpack.c.h.b16 %v57
  %v417 = vunpack.c.l.b16 %v58
  %v418 = vunpack.c.h.b16 %v58
  %v419 = vunpack.c.l.b16 %v59
  %v420 = vunpack.c.h.b16 %v59
  %v421 = vunpack.c.l.b16 %v60
  %v422 = vunpack.c.h.b16 %v60
  %v423 = vunpack.c.l.b16 %v61
  %v424 = vunpack.c.h.b16 %v61
  %v425 = vunpack.c.l.b16 %v62
  %v426 = vunpack.c.h.b16 %v62
  %v427 = vunpack.c.l.b16 %v63
  %v428 = vunpack.c.h.b16 %v63
  %v429 = vunpack.c.l.b16 %v64
  %v430 = vunpack.c.h.b16 %v64
  %v431 = vunpack.c.l.b16 %v65
  %v432 = vunpack.c.h.b16 %v65
  %v433 = vunpack.c.l.b16 %v66
  %v434 = vunpack.c.h.b16 %v66
  %v435 = vunpack.c.l.b16 %v67
  %v436 = vunpack.c.h.b16 %v67
  %v437 = vunpack.c.l.b16 %v68
  %v438 = vunpack.c.h.b16 %v68
  %v439 = vunpack.c.l.b16 %v69
  %v440 = vunpack.c.h.b16 %v69
  %v441 = vunpack.c.l.b16 %v70
  %v442 = vunpack.c.h.b16 %v70
  %v443 = vunpack.c.l.b16 %v71
  %v444 = vunpack.c.h.b16 %v71
  %v445 = vunpack.c.l.b16 %v72
  %v446 = vunpack.c.h.b16 %v72
  %v447 = vunpack.c.l.b16 %v73
  %v448 = vunpack.c.h.b16 %v73
  %v449 = vunpack.c.l.b16 %v74
  %v450 = vunpack.c.h.b16 %v74
  %v451 = vunpack.c.l.b16 %v75
  %v452 = vunpack.c.h.b16 %v75
  %v453 = vunpack.c.l.b16 %v76
  %v454 = vunpack.c.h.b16 %v76
  %v455 = vunpack.c.l.b16 %v77
  %v456 = vunpack.c.h.b16 %v77
  %v457 = vunpack.c.l.b16 %v78
  %v458 = vunpack.c.h.b16 %v78
  %v459 = vunpack.c.l.b16 %v79
  %v460 = vunpack.c.h.b16 %v79
  %v461 = vunpack.c.l.b16 %v80
  %v462 = vunpack.c.h.b16 %v80
  %v463 = vunpack.c.l.b16 %v81
  %v464 = vunpack.c.h.b16 %v81
  %v465 = vunpack.c.l.b16 %v82
  %v466 = vunpack.c.h.b16 %v82
  %v467 = vunpack.c.l.b16 %v83
  %v468 = vunpack.c.h.b16 %v83
  %v469 = vunpack.c.l.b16 %v84
  %v470 = vunpack.c.h.b16 %v84
  %v471 = vunpack.c.l.b16 %v85
  %v472 = vunpack.c.h.b16 %v85
  %v473 = vunpack.c.l.b16 %v86
  %v474 = vunpack.c.h.b16 %v86
  %v475 = vunpack.c.l.b16 %v87
  %v476 = vunpack.c.h.b16 %v87
  %v477 = vunpack.c.l.b16 %v88
  %v478 = vunpack.c.h.b16 %v88
  %v479 = vunpack.c.l.b16 %v89
  %v480 = vunpack.c.h.b16 %v89
  %v481 = vunpack.c.l.b16 %v90
  %v482 = vunpack.c.h.b16 %v90
  %v483 = vunpack.c.l.b16 %v91
  %v484 = vunpack.c.h.b16 %v91
  %v485 = vunpack.c.l.b16 %v92
  %v486 = vunpack.c.h.b16 %v92
  %v487 = vunpack.c.l.b16 %v93
  %v488 = vunpack.c.h.b16 %v93
  %v489 = vunpack.c.l.b16 %v94
  %v490 = vunpack.c.h.b16 %v94
  %v491 = vunpack.c.l.b16 %v95
  %v492 = vunpack.c.h.b16 %v95
  %v493 = vunpack.c.l.b16 %v96
  %v494 = vunpack.c.h.b16 %v96
  %v495 = vunpack.c.l.b16 %v97
  %v496 = vunpack.c.h.b16 %v97
  %v497 = vunpack.c.l.b16 %v98
  %v498 = vunpack.c.h.b16 %v98
  %v499 = vunpack.c.l.b16 %v99
  %v500 = vunpack.c.h.b16 %v99
  %v501 = vunpack.c.l.b16 %v100
  %v502 = vunpack.c.h.b16 %v100
  %v503 = vunpack.c.l.b16 %v101
  %v504 = vunpack.c.h.b16 %v101
  %v505 = vunpack.c.l.b16 %v102
  %v506 = vunpack.c.h.b16 %v102
  %v507 = vunpack.c.l.b16 %v103
  %v508 = vunpack.c.h.b16 %v103
  %v509 = vunpack.c.l.b16 %v104
  %v510 = vunpack.c.h.b16 %v104
  %v511 = vunpack.c.l.b16 %v105
  %v512 = vunpack.c.h.b16 %v105
  %v513 = vunpack.c.l.b16 %v106
  %v514 = vunpack.c.h.b16 %v106
  %v515 = vunpack.c.l.b16 %v107
  %v516 = vunpack.c.h.b16 %v107
  %v517 = vunpack.c.l.b16 %v108
  %v518 = vunpack.c.h.b16 %v108
  %v519 = vunpack.c.l.b16 %v109
  %v520 = vunpack.c.h.b16 %v109
  %v521 = vunpack.c.l.b16 %v110
  %v522 = vunpack.c.h.b16 %v110
  %v523 = vunpack.c.l.b16 %v111
  %v524 = vunpack.c.h.b16 %v111
  %v525 = vunpack.c.l.b16 %v112
  %v526 = vunpack.c.h.b16 %v112
  %v527 = vunpack.c.l.b16 %v113
  %v528 = vunpack.c.h.b16 %v113
  %v529 = vunpack.c.l.b16 %v114
  %v530 = vunpack.c.h.b16 %v114
  %v531 = vunpack.c.l.b16 %v115
  %v532 = vunpack.c.h.b16 %v115
  %v533 = vunpack.c.l.b16 %v116
  %v534 = vunpack.c.h.b16 %v116
  %v535 = vunpack.c.l.b16 %v117
  %v536 = vunpack.c.h.b16 %v117
  %v537 = vunpack.c.l.b16 %v118
  %v538 = vunpack.c.h.b16 %v118
  %v539 = vunpack.c.l.b16 %v119
  %v540 = vunpack.c.h.b16 %v119
  %v541 = vunpack.c.l.b16 %v120
  %v542 = vunpack.c.h.b16 %v120
  %v543 = vunpack.c.l.b16 %v121
  %v544 = vunpack.c.h.b16 %v121
  %v545 = vunpack.c.l.b16 %v122
  %v546 = vunpack.c.h.b16 %v122
  %v547 = vunpack.c.l.b16 %v123
  %v548 = vunpack.c.h.b16 %v123
  %v549 = vunpack.c.l.b16 %v124
  %v550 = vunpack.c.h.b16 %v124
  %v551 = vunpack.c.l.b16 %v125
  %v552 = vunpack.c.h.b16 %v125
  %v553 = vunpack.c.l.b16 %v126
  %v554 = vunpack.c.h.b16 %v126
  %v555 = vunpack.c.l.b16 %v127
  %v556 = vunpack.c.h.b16 %v127
  %v557 = vunpack.c.l.b16 %v128
  %v558 = vunpack.c.h.b16 %v128
  %v559 = vunpack.c.l.b16 %v129
  %v560 = vunpack.c.h.b16 %v129
  %v561 = vunpack.c.l.b16 %v130
  %v562 = vunpack.c.h.b16 %v130
  %v563 = vunpack.c.l.b16 %v131
  %v564 = vunpack.c.h.b16 %v131
  %v565 = vunpack.c.l.b16 %v132
  %v566 = vunpack.c.h.b16 %v132
  %v567 = vunpack.c.l.b16 %v133
  %v568 = vunpack.c.h.b16 %v133
  %v569 = vunpack.c.l.b16 %v134
  %v570 = vunpack.c.h.b16 %v134
  %v571 = vunpack.c.l.b16 %v135
  %v572 = vunpack.c.h.b16 %v135
  %v573 = vunpack.c.l.b16 %v136
  %v574 = vunpack.c.h.b16 %v136
  %v575 = vunpack.c.l.b16 %v137
  %v576 = vunpack.c.h.b16 %v137
  %v577 = vunpack.c.l.b16 %v138
  %v578 = vunpack.c.h.b16 %v138
  %v579 = vunpack.c.l.b16 %v139
  %v580 = vunpack.c.h.b16 %v139
  %v581 = vunpack.c.l.b16 %v140
  %v582 = vunpack.c.h.b16 %v140
  %v583 = vunpack.c.l.b16 %v141
  %v584 = vunpack.c.h.b16 %v141
  %v585 = vunpack.c.l.b16 %v142
  %v586 = vunpack.c.h.b16 %v142
  %v587 = vunpack.c.l.b16 %v143
  %v588 = vunpack.c.h.b16 %v143
  %v589 = vunpack.c.l.b16 %v144
  %v590 = vunpack.c.h.b16 %v144
  %v591 = vunpack.c.l.b16 %v145
  %v592 = vunpack.c.h.b16 %v145
  %v593 = vunpack.c.l.b16 %v146
  %v594 = vunpack.c.h.b16 %v146
  %v595 = vunpack.c.l.b16 %v147
  %v596 = vunpack.c.h.b16 %v147
  %v597 = vunpack.c.l.b16 %v148
  %v598 = vunpack.c.h.b16 %v148
  %v599 = vunpack.c.l.b16 %v149
  %v600 = vunpack.c.h.b16 %v149
  %v601 = vunpack.c.l.b16 %v150
  %v602 = vunpack.c.h.b16 %v150
  %v603 = vunpack.c.l.b16 %v151
  %v604 = vunpack.c.h.b16 %v151
  %v605 = vunpack.c.l.b16 %v152
  %v606 = vunpack.c.h.b16 %v152
  %v607 = vunpack.c.l.b16 %v153
  %v608 = vunpack.c.h.b16 %v153
  %v609 = vunpack.c.l.b16 %v154
  %v610 = vunpack.c.h.b16 %v154
  %v611 = vunpack.c.l.b16 %v155
  %v612 = vunpack.c.h.b16 %v155
  %v613 = vunpack.c.l.b16 %v156
  %v614 = vunpack.c.h.b16 %v156
  %v615 = vunpack.c.l.b16 %v157
  %v616 = vunpack.c.h.b16 %v157
  %v617 = vunpack.c.l.b16 %v158
  %v618 = vunpack.c.h.b16 %v158
  %v619 = vunpack.c.l.b16 %v159
  %v620 = vunpack.c.h.b16 %v159
  %v621 = vunpack.c.l.b16 %v160
  %v622 = vunpack.c.h.b16 %v160
  %v623 = vunpack.c.l.b16 %v161
  %v624 = vunpack.c.h.b16 %v161
  %v625 = vunpack.c.l.b16 %v162
  %v626 = vunpack.c.h.b16 %v162
  %v627 = vunpack.c.l.b16 %v163
  %v628 = vunpack.c.h.b16 %v163
  %v629 = vunpack.c.l.b16 %v164
  %v630 = vunpack.c.h.b16 %v164
  %v631 = vunpack.c.l.b16 %v165
  %v632 = vunpack.c.h.b16 %v165
  %v633 = vunpack.c.l.b16 %v166
  %v634 = vunpack.c.h.b16 %v166
  %v635 = vunpack.c.l.b16 %v167
  %v636 = vunpack.c.h.b16 %v167
  %v637 = vunpack.c.l.b16 %v168
  %v638 = vunpack.c.h.b16 %v168
  %v639 = vunpack.c.l.b16 %v169
  %v640 = vunpack.c.h.b16 %v169
  %v641 = vunpack.c.l.b16 %v170
  %v642 = vunpack.c.h.b16 %v170
  %v643 = vunpack.c.l.b16 %v171
  %v644 = vunpack.c.h.b16 %v171
  %v645 = vunpack.c.l.b16 %v172
  %v646 = vunpack.c.h.b16 %v172
  %v647 = vunpack.c.l.b16 %v173
  %v648 = vunpack.c.h.b16 %v173
  %v649 = vunpack.c.l.b16 %v174
  %v650 = vunpack.c.h.b16 %v174
  %v651 = vunpack.c.l.b16 %v175
  %v652 = vunpack.c.h.b16 %v175
  %v653 = vunpack.c.l.b16 %v176
  %v654 = vunpack.c.h.b16 %v176
  %v655 = vunpack.c.l.b16 %v177
  %v656 = vunpack.c.h.b16 %v177
  %v657 = vunpack.c.l.b16 %v178
  %v658 = vunpack.c.h.b16 %v178
  %v659 = vunpack.c.l.b16 %v179
  %v660 = vunpack.c.h.b16 %v179
  %v661 = vunpack.c.l.b16 %v180
  %v662 = vunpack.c.h.b16 %v180
  %v663 = vunpack.c.l.b16 %v181
  %v664 = vunpack.c.h.b16 %v181
  %v665 = vunpack.c.l.b16 %v182
  %v666 = vunpack.c.h.b16 %v182
  %v667 = vunpack.c.l.b16 %v183
  %v668 = vunpack.c.h.b16 %v183
  %v669 = vunpack.c.l.b16 %v184
  %v670 = vunpack.c.h.b16 %v184
  %v671 = vunpack.c.l.b16 %v185
  %v672 = vunpack.c.h.b16 %v185
  %v673 = vunpack.c.l.b16 %v186
  %v674 = vunpack.c.h.b16 %v186
  %v675 = vunpack.c.l.b16 %v187
  %v676 = vunpack.c.h.b16 %v187
  %v677 = vunpack.c.l.b16 %v188
  %v678 = vunpack.c.h.b16 %v188
  %v679 = vunpack.c.l.b16 %v189
  %v680 = vunpack.c.h.b16 %v189
  %v681 = vunpack.c.l.b16 %v190
  %v682 = vunpack.c.h.b16 %v190
  %v683 = vunpack.c.l.b16 %v191
  %v684 = vunpack.c.h.b16 %v191
  %v685 = vunpack.c.l.b16 %v192
  %v686 = vunpack.c.h.b16 %v192
  %v687 = vunpack.c.l.b16 %v193
  %v688 = vunpack.c.h.b16 %v193
  %v689 = vunpack.c.l.b16 %v194
  %v690 = vunpack.c.h.b16 %v194
  %v691 = vunpack.c.l.b16 %v195
  %v692 = vunpack.c.h.b16 %v195
  %v693 = vunpack.c.l.b16 %v196
  %v694 = vunpack.c.h.b16 %v196
  %v695 = vpack.c.b16 %v399, %v391
  %v696 = vpack.c.b16 %v400, %v392
  %v697 = vpack.c.b16 %v401, %v393
  %v698 = vpack.c.b16 %v402, %v394
  %v699 = vpack.c.b16 %v403, %v395
  %v700 = vpack.c.b16 %v404, %v396
  %v701 = vpack.c.b16 %v405, %v397
  %v702 = vpack.c.b16 %v406, %v398
  %v703 = vpack.c.b16 %v415, %v407
  %v704 = vpack.c.b16 %v416, %v408
  %v705 = vpack.c.b16 %v417, %v409
  %v706 = vpack.c.b16 %v418, %v410
  %v707 = vpack.c.b16 %v419, %v411
  %v708 = vpack.c.b16 %v420, %v412
  %v709 = vpack.c.b16 %v421, %v413
  %v710 = vpack.c.b16 %v422, %v414
  %v711 = vpack.c.b16 %v431, %v423
  %v712 = vpack.c.b16 %v432, %v424
  %v713 = vpack.c.b16 %v433, %v425
  %v714 = vpack.c.b16 %v434, %v426
  %v715 = vpack.c.b16 %v435, %v427
  %v716 = vpack.c.b16 %v436, %v428
  %v717 = vpack.c.b16 %v437, %v429
  %v718 = vpack.c.b16 %v438, %v430
  %v719 = vpack.c.b16 %v447, %v439
  %v720 = vpack.c.b16 %v448, %v440
  %v721 = vpack.c.b16 %v449, %v441
  %v722 = vpack.c.b16 %v450, %v442
  %v723 = vpack.c.b16 %v451, %v443
  %v724 = vpack.c.b16 %v452, %v444
  %v725 = vpack.c.b16 %v453, %v445
  %v726 = vpack.c.b16 %v454, %v446
  %v727 = vpack.c.b16 %v463, %v455
  %v728 = vpack.c.b16 %v464, %v456
  %v729 = vpack.c.b16 %v465, %v457
  %v730 = vpack.c.b16 %v466, %v458
  %v731 = vpack.c.b16 %v467, %v459
  %v732 = vpack.c.b16 %v468, %v460
  %v733 = vpack.c.b16 %v469, %v461
  %v734 = vpack.c.b16 %v470, %v462
  %v735 = vpack.c.b16 %v479, %v471
  %v736 = vpack.c.b16 %v480, %v472
  %v737 = vpack.c.b16 %v481, %v473
  %v738 = vpack.c.b16 %v482, %v474
  %v739 = vpack.c.b16 %v483, %v475
  %v740 = vpack.c.b16 %v484, %v476
  %v741 = vpack.c.b16 %v485, %v477
  %v742 = vpack.c.b16 %v486, %v478
  %v743 = vpack.c.b16 %v495, %v487
  %v744 = vpack.c.b16 %v496, %v488
  %v745 = vpack.c.b16 %v497, %v489
  %v746 = vpack.c.b16 %v498, %v490
  %v747 = vpack.c.b16 %v499, %v491
  %v748 = vpack.c.b16 %v500, %v492
  %v749 = vpack.c.b16 %v501, %v493
  %v750 = vpack.c.b16 %v502, %v494
  %v751 = vpack.c.b16 %v511, %v503
  %v752 = vpack.c.b16 %v512, %v504
  %v753 = vpack.c.b16 %v513, %v505
  %v754 = vpack.c.b16 %v514, %v506
  %v755 = vpack.c.b16 %v515, %v507
  %v756 = vpack.c.b16 %v516, %v508
  %v757 = vpack.c.b16 %v517, %v509
  %v758 = vpack.c.b16 %v518, %v510
  %v759 = vpack.c.b16 %v527, %v519
  %v760 = vpack.c.b16 %v528, %v520
  %v761 = vpack.c.b16 %v529, %v521
  %v762 = vpack.c.b16 %v530, %v522
  %v763 = vpack.c.b16 %v531, %v523
  %v764 = vpack.c.b16 %v532, %v524
  %v765 = vpack.c.b16 %v533, %v525
  %v766 = vpack.c.b16 %v534, %v526
  %v767 = vpack.c.b16 %v543, %v535
  %v768 = vpack.c.b16 %v544, %v536
  %v769 = vpack.c.b16 %v545, %v537
  %v770 = vpack.c.b16 %v546, %v538
  %v771 = vpack.c.b16 %v547, %v539
  %v772 = vpack.c.b16 %v548, %v540
  %v773 = vpack.c.b16 %v549, %v541
  %v774 = vpack.c.b16 %v550, %v542
  %v775 = vpack.c.b16 %v559, %v551
  %v776 = vpack.c.b16 %v560, %v552
  %v777 = vpack.c.b16 %v561, %v553
  %v778 = vpack.c.b16 %v562, %v554
  %v779 = vpack.c.b16 %v563, %v555
  %v780 = vpack.c.b16 %v564, %v556
  %v781 = vpack.c.b16 %v565, %v557
  %v782 = vpack.c.b16 %v566, %v558
  %v783 = vpack.c.b16 %v575, %v567
  %v784 = vpack.c.b16 %v576, %v568
  %v785 = vpack.c.b16 %v577, %v569
  %v786 = vpack.c.b16 %v578, %v570
  %v787 = vpack.c.b16 %v579, %v571
  %v788 = vpack.c.b16 %v580, %v572
  %v789 = vpack.c.b16 %v581, %v573
  %v790 = vpack.c.b16 %v582, %v574
  %v791 = vpack.c.b16 %v591, %v583
  %v792 = vpack.c.b16 %v592, %v584
  %v793 = vpack.c.b16 %v593, %v585
  %v794 = vpack.c.b16 %v594, %v586
  %v795 = vpack.c.b16 %v595, %v587
  %v796 = vpack.c.b16 %v596, %v588
  %v797 = vpack.c.b16 %v597, %v589
  %v798 = vpack.c.b16 %v598, %v590
  %v799 = vpack.c.b16 %v607, %v599
  %v800 = vpack.c.b16 %v608, %v600
  %v801 = vpack.c.b16 %v609, %v601
  %v802 = vpack.c.b16 %v610, %v602
  %v803 = vpack.c.b16 %v611, %v603
  %v804 = vpack.c.b16 %v612, %v604
  %v805 = vpack.c.b16 %v613, %v605
  %v806 = vpack.c.b16 %v614, %v606
  %v807 = vpack.c.b16 %v623, %v615
  %v808 = vpack.c.b16 %v624, %v616
  %v809 = vpack.c.b16 %v625, %v617
  %v810 = vpack.c.b16 %v626, %v618
  %v811 = vpack.c.b16 %v627, %v619
  %v812 = vpack.c.b16 %v628, %v620
  %v813 = vpack.c.b16 %v629, %v621
  %v814 = vpack.c.b16 %v630, %v622
  %v815 = vpack.c.b16 %v639, %v631
  %v816 = vpack.c.b16 %v640, %v632
  %v817 = vpack.c.b16 %v641, %v633
  %v818 = vpack.c.b16 %v642, %v634
  %v819 = vpack.c.b16 %v643, %v635
  %v820 = vpack.c.b16 %v644, %v636
  %v821 = vpack.c.b16 %v645, %v637
  %v822 = vpack.c.b16 %v646, %v638
  %v823 = vpack.c.b16 %v655, %v647
  %v824 = vpack.c.b16 %v656, %v648
  %v825 = vpack.c.b16 %v657, %v649
  %v826 = vpack.c.b16 %v658, %v650
  %v827 = vpack.c.b16 %v659, %v651
  %v828 = vpack.c.b16 %v660, %v652
  %v829 = vpack.c.b16 %v661, %v653
  %v830 = vpack.c.b16 %v662, %v654
  %v831 = vpack.c.b16 %v671, %v663
  %v832 = vpack.c.b16 %v672, %v664
  %v833 = vpack.c.b16 %v673, %v665
  %v834 = vpack.c.b16 %v674, %v666
  %v835 = vpack.c.b16 %v675, %v667
  %v836 = vpack.c.b16 %v676, %v668
  %v837 = vpack.c.b16 %v677, %v669
  %v838 = vpack.c.b16 %v678, %v670
  %v839 = vpack.c.b16 %v687, %v679
  %v840 = vpack.c.b16 %v688, %v680
  %v841 = vpack.c.b16 %v689, %v681
  %v842 = vpack.c.b16 %v690, %v682
  %v843 = vpack.c.b16 %v691, %v683
  %v844 = vpack.c.b16 %v692, %v684
  %v845 = vpack.c.b16 %v693, %v685
  %v846 = vpack.c.b16 %v694, %v686
  %vm991 = vcmask 359424
  %v993 = vsel %vm991, %v44, 0
  %vm995 = vcmask 1045504
  %v997 = vsel %vm995, %v839, 0
  %v1000 = vsel %vm995, %v840, 0
  %v1003 = vsel %vm995, %v841, 0
  %v1006 = vsel %vm995, %v842, 0
  %v1009 = vsel %vm995, %v843, 0
  %v1012 = vsel %vm995, %v844, 0
  %v1015 = vsel %vm995, %v845, 0
  %v1018 = vsel %vm995, %v846, 0
  %1020 = vmatprep.subr.bf16.mxu0 %v752
  %1021 = vmatpush1.bf16.msra.mxu0 %v751
  %1022 = vmatprep.subr.bf16.mxu0 %v744
  %1023 = vmatpush1.bf16.msra.mxu0 %v743
  %1024 = vmatprep.subr.bf16.mxu0 %v736
  %1025 = vmatpush1.bf16.msra.mxu0 %v735
  %1026 = vmatprep.subr.bf16.mxu0 %v728
  %1027 = vmatpush1.bf16.msra.mxu0 %v727
  %1028 = vmatprep.subr.bf16.mxu0 %v720
  %1029 = vmatpush1.bf16.msra.mxu0 %v719
  %1030 = vmatprep.subr.bf16.mxu0 %v712
  %1031 = vmatpush1.bf16.msra.mxu0 %v711
  %1032 = vmatprep.subr.bf16.mxu0 %v704
  %1033 = vmatpush1.bf16.msra.mxu0 %v703
  %1034 = vmatprep.subr.bf16.mxu0 %v696
  %1035 = vmatpush1.bf16.msra.mxu0 %v695
  %1036 = vmatprep.subr.bf16.mxu0 %v816
  %1037 = vmatpush2.bf16.msra.mxu0 %v815
  %1038 = vmatprep.subr.bf16.mxu0 %v808
  %1039 = vmatpush2.bf16.msra.mxu0 %v807
  %1040 = vmatprep.subr.bf16.mxu0 %v800
  %1041 = vmatpush2.bf16.msra.mxu0 %v799
  %1042 = vmatprep.subr.bf16.mxu0 %v792
  %1043 = vmatpush2.bf16.msra.mxu0 %v791
  %1044 = vmatprep.subr.bf16.mxu0 %v784
  %1045 = vmatpush2.bf16.msra.mxu0 %v783
  %1046 = vmatprep.subr.bf16.mxu0 %v776
  %1047 = vmatpush2.bf16.msra.mxu0 %v775
  %1048 = vmatprep.subr.bf16.mxu0 %v768
  %1049 = vmatpush2.bf16.msra.mxu0 %v767
  %1050 = vmatprep.subr.bf16.mxu0 %v760
  %1051 = vmatpush2.bf16.msra.mxu0 %v759
  %1052 = vmatprep.mubr.bf16.mxu0 %v43
  %1053 = vmatmul.mubr.bf16.gmra.mxu0 %v42
  %v1054 = vpop.f32.mrf.mxu0
  %v1055 = vadd.f32 %v202, %v1054
  %v1056 = vpop.f32.mrf.mxu0
  %v1057 = vadd.f32 %v206, %v1056
  %v1058 = vpop.f32.mrf.mxu0
  %v1059 = vpop.f32.mrf.mxu0
  %1060 = vdwg.mxu0
  %1061 = vmatprep.subr.bf16.mxu0 0
  %1062 = vmatpush1.bf16.msra.mxu0 0
  %1063 = vmatprep.subr.bf16.mxu0 0
  %1064 = vmatpush1.bf16.msra.mxu0 0
  %1065 = vmatprep.subr.bf16.mxu0 0
  %1066 = vmatpush1.bf16.msra.mxu0 0
  %1067 = vmatprep.subr.bf16.mxu0 0
  %1068 = vmatpush1.bf16.msra.mxu0 0
  %1069 = vmatprep.subr.bf16.mxu0 0
  %1070 = vmatpush1.bf16.msra.mxu0 0
  %1071 = vmatprep.subr.bf16.mxu0 %v1000
  %1072 = vmatpush1.bf16.msra.mxu0 %v997
  %1073 = vmatprep.subr.bf16.mxu0 %v832
  %1074 = vmatpush1.bf16.msra.mxu0 %v831
  %1075 = vmatprep.subr.bf16.mxu0 %v824
  %1076 = vmatpush1.bf16.msra.mxu0 %v823
  %1077 = vmatprep.subr.bf16.mxu0 0
  %1078 = vmatpush2.bf16.msra.mxu0 0
  %1079 = vmatprep.subr.bf16.mxu0 0
  %1080 = vmatpush2.bf16.msra.mxu0 0
  %1081 = vmatprep.subr.bf16.mxu0 0
  %1082 = vmatpush2.bf16.msra.mxu0 0
  %1083 = vmatprep.subr.bf16.mxu0 0
  %1084 = vmatpush2.bf16.msra.mxu0 0
  %1085 = vmatprep.subr.bf16.mxu0 0
  %1086 = vmatpush2.bf16.msra.mxu0 0
  %1087 = vmatprep.subr.bf16.mxu0 0
  %1088 = vmatpush2.bf16.msra.mxu0 0
  %1089 = vmatprep.subr.bf16.mxu0 0
  %1090 = vmatpush2.bf16.msra.mxu0 0
  %1091 = vmatprep.subr.bf16.mxu0 0
  %1092 = vmatpush2.bf16.msra.mxu0 0
  %1093 = vmatprep.mubr.bf16.mxu0 0
  %1094 = vmatmul.mubr.bf16.gmra.mxu0 %v993
  %v1095 = vpop.f32.mrf.mxu0
  %v1096 = vadd.f32 %v1055, %v1095
  %v1097 = vpop.f32.mrf.mxu0
  %v1098 = vadd.f32 %v1057, %v1097
  %v1099 = vpop.f32.mrf.mxu0
  %v1100 = vpop.f32.mrf.mxu0
  %1101 = vdwg.mxu0
  %1102 = vmatprep.subr.bf16.mxu0 %v754
  %1103 = vmatpush1.bf16.msra.mxu0 %v753
  %1104 = vmatprep.subr.bf16.mxu0 %v746
  %1105 = vmatpush1.bf16.msra.mxu0 %v745
  %1106 = vmatprep.subr.bf16.mxu0 %v738
  %1107 = vmatpush1.bf16.msra.mxu0 %v737
  %1108 = vmatprep.subr.bf16.mxu0 %v730
  %1109 = vmatpush1.bf16.msra.mxu0 %v729
  %1110 = vmatprep.subr.bf16.mxu0 %v722
  %1111 = vmatpush1.bf16.msra.mxu0 %v721
  %1112 = vmatprep.subr.bf16.mxu0 %v714
  %1113 = vmatpush1.bf16.msra.mxu0 %v713
  %1114 = vmatprep.subr.bf16.mxu0 %v706
  %1115 = vmatpush1.bf16.msra.mxu0 %v705
  %1116 = vmatprep.subr.bf16.mxu0 %v698
  %1117 = vmatpush1.bf16.msra.mxu0 %v697
  %1118 = vmatprep.subr.bf16.mxu0 %v818
  %1119 = vmatpush2.bf16.msra.mxu0 %v817
  %1120 = vmatprep.subr.bf16.mxu0 %v810
  %1121 = vmatpush2.bf16.msra.mxu0 %v809
  %1122 = vmatprep.subr.bf16.mxu0 %v802
  %1123 = vmatpush2.bf16.msra.mxu0 %v801
  %1124 = vmatprep.subr.bf16.mxu0 %v794
  %1125 = vmatpush2.bf16.msra.mxu0 %v793
  %1126 = vmatprep.subr.bf16.mxu0 %v786
  %1127 = vmatpush2.bf16.msra.mxu0 %v785
  %1128 = vmatprep.subr.bf16.mxu0 %v778
  %1129 = vmatpush2.bf16.msra.mxu0 %v777
  %1130 = vmatprep.subr.bf16.mxu0 %v770
  %1131 = vmatpush2.bf16.msra.mxu0 %v769
  %1132 = vmatprep.subr.bf16.mxu0 %v762
  %1133 = vmatpush2.bf16.msra.mxu0 %v761
  %1134 = vmatprep.mubr.bf16.mxu0 %v43
  %1135 = vmatmul.mubr.bf16.gmra.mxu0 %v42
  %v1136 = vpop.f32.mrf.mxu0
  %v1137 = vadd.f32 %v210, %v1136
  %v1138 = vpop.f32.mrf.mxu0
  %v1139 = vadd.f32 %v214, %v1138
  %v1140 = vpop.f32.mrf.mxu0
  %v1141 = vpop.f32.mrf.mxu0
  %1142 = vdwg.mxu0
  %1143 = vmatprep.subr.bf16.mxu0 0
  %1144 = vmatpush1.bf16.msra.mxu0 0
  %1145 = vmatprep.subr.bf16.mxu0 0
  %1146 = vmatpush1.bf16.msra.mxu0 0
  %1147 = vmatprep.subr.bf16.mxu0 0
  %1148 = vmatpush1.bf16.msra.mxu0 0
  %1149 = vmatprep.subr.bf16.mxu0 0
  %1150 = vmatpush1.bf16.msra.mxu0 0
  %1151 = vmatprep.subr.bf16.mxu0 0
  %1152 = vmatpush1.bf16.msra.mxu0 0
  %1153 = vmatprep.subr.bf16.mxu0 %v1006
  %1154 = vmatpush1.bf16.msra.mxu0 %v1003
  %1155 = vmatprep.subr.bf16.mxu0 %v834
  %1156 = vmatpush1.bf16.msra.mxu0 %v833
  %1157 = vmatprep.subr.bf16.mxu0 %v826
  %1158 = vmatpush1.bf16.msra.mxu0 %v825
  %1159 = vmatprep.subr.bf16.mxu0 0
  %1160 = vmatpush2.bf16.msra.mxu0 0
  %1161 = vmatprep.subr.bf16.mxu0 0
  %1162 = vmatpush2.bf16.msra.mxu0 0
  %1163 = vmatprep.subr.bf16.mxu0 0
  %1164 = vmatpush2.bf16.msra.mxu0 0
  %1165 = vmatprep.subr.bf16.mxu0 0
  %1166 = vmatpush2.bf16.msra.mxu0 0
  %1167 = vmatprep.subr.bf16.mxu0 0
  %1168 = vmatpush2.bf16.msra.mxu0 0
  %1169 = vmatprep.subr.bf16.mxu0 0
  %1170 = vmatpush2.bf16.msra.mxu0 0
  %1171 = vmatprep.subr.bf16.mxu0 0
  %1172 = vmatpush2.bf16.msra.mxu0 0
  %1173 = vmatprep.subr.bf16.mxu0 0
  %1174 = vmatpush2.bf16.msra.mxu0 0
  %1175 = vmatprep.mubr.bf16.mxu0 0
  %1176 = vmatmul.mubr.bf16.gmra.mxu0 %v993
  %v1177 = vpop.f32.mrf.mxu0
  %v1178 = vadd.f32 %v1137, %v1177
  %v1179 = vpop.f32.mrf.mxu0
  %v1180 = vadd.f32 %v1139, %v1179
  %v1181 = vpop.f32.mrf.mxu0
  %v1182 = vpop.f32.mrf.mxu0
  %1183 = vdwg.mxu0
  %1184 = vmatprep.subr.bf16.mxu0 %v756
  %1185 = vmatpush1.bf16.msra.mxu0 %v755
  %1186 = vmatprep.subr.bf16.mxu0 %v748
  %1187 = vmatpush1.bf16.msra.mxu0 %v747
  %1188 = vmatprep.subr.bf16.mxu0 %v740
  %1189 = vmatpush1.bf16.msra.mxu0 %v739
  %1190 = vmatprep.subr.bf16.mxu0 %v732
  %1191 = vmatpush1.bf16.msra.mxu0 %v731
  %1192 = vmatprep.subr.bf16.mxu0 %v724
  %1193 = vmatpush1.bf16.msra.mxu0 %v723
  %1194 = vmatprep.subr.bf16.mxu0 %v716
  %1195 = vmatpush1.bf16.msra.mxu0 %v715
  %1196 = vmatprep.subr.bf16.mxu0 %v708
  %1197 = vmatpush1.bf16.msra.mxu0 %v707
  %1198 = vmatprep.subr.bf16.mxu0 %v700
  %1199 = vmatpush1.bf16.msra.mxu0 %v699
  %1200 = vmatprep.subr.bf16.mxu0 %v820
  %1201 = vmatpush2.bf16.msra.mxu0 %v819
  %1202 = vmatprep.subr.bf16.mxu0 %v812
  %1203 = vmatpush2.bf16.msra.mxu0 %v811
  %1204 = vmatprep.subr.bf16.mxu0 %v804
  %1205 = vmatpush2.bf16.msra.mxu0 %v803
  %1206 = vmatprep.subr.bf16.mxu0 %v796
  %1207 = vmatpush2.bf16.msra.mxu0 %v795
  %1208 = vmatprep.subr.bf16.mxu0 %v788
  %1209 = vmatpush2.bf16.msra.mxu0 %v787
  %1210 = vmatprep.subr.bf16.mxu0 %v780
  %1211 = vmatpush2.bf16.msra.mxu0 %v779
  %1212 = vmatprep.subr.bf16.mxu0 %v772
  %1213 = vmatpush2.bf16.msra.mxu0 %v771
  %1214 = vmatprep.subr.bf16.mxu0 %v764
  %1215 = vmatpush2.bf16.msra.mxu0 %v763
  %1216 = vmatprep.mubr.bf16.mxu0 %v43
  %1217 = vmatmul.mubr.bf16.gmra.mxu0 %v42
  %v1218 = vpop.f32.mrf.mxu0
  %v1219 = vadd.f32 %v218, %v1218
  %v1220 = vpop.f32.mrf.mxu0
  %v1221 = vadd.f32 %v222, %v1220
  %v1222 = vpop.f32.mrf.mxu0
  %v1223 = vpop.f32.mrf.mxu0
  %1224 = vdwg.mxu0
  %1225 = vmatprep.subr.bf16.mxu0 0
  %1226 = vmatpush1.bf16.msra.mxu0 0
  %1227 = vmatprep.subr.bf16.mxu0 0
  %1228 = vmatpush1.bf16.msra.mxu0 0
  %1229 = vmatprep.subr.bf16.mxu0 0
  %1230 = vmatpush1.bf16.msra.mxu0 0
  %1231 = vmatprep.subr.bf16.mxu0 0
  %1232 = vmatpush1.bf16.msra.mxu0 0
  %1233 = vmatprep.subr.bf16.mxu0 0
  %1234 = vmatpush1.bf16.msra.mxu0 0
  %1235 = vmatprep.subr.bf16.mxu0 %v1012
  %1236 = vmatpush1.bf16.msra.mxu0 %v1009
  %1237 = vmatprep.subr.bf16.mxu0 %v836
  %1238 = vmatpush1.bf16.msra.mxu0 %v835
  %1239 = vmatprep.subr.bf16.mxu0 %v828
  %1240 = vmatpush1.bf16.msra.mxu0 %v827
  %1241 = vmatprep.subr.bf16.mxu0 0
  %1242 = vmatpush2.bf16.msra.mxu0 0
  %1243 = vmatprep.subr.bf16.mxu0 0
  %1244 = vmatpush2.bf16.msra.mxu0 0
  %1245 = vmatprep.subr.bf16.mxu0 0
  %1246 = vmatpush2.bf16.msra.mxu0 0
  %1247 = vmatprep.subr.bf16.mxu0 0
  %1248 = vmatpush2.bf16.msra.mxu0 0
  %1249 = vmatprep.subr.bf16.mxu0 0
  %1250 = vmatpush2.bf16.msra.mxu0 0
  %1251 = vmatprep.subr.bf16.mxu0 0
  %1252 = vmatpush2.bf16.msra.mxu0 0
  %1253 = vmatprep.subr.bf16.mxu0 0
  %1254 = vmatpush2.bf16.msra.mxu0 0
  %1255 = vmatprep.subr.bf16.mxu0 0
  %1256 = vmatpush2.bf16.msra.mxu0 0
  %1257 = vmatprep.mubr.bf16.mxu0 0
  %1258 = vmatmul.mubr.bf16.gmra.mxu0 %v993
  %v1259 = vpop.f32.mrf.mxu0
  %v1260 = vadd.f32 %v1219, %v1259
  %v1261 = vpop.f32.mrf.mxu0
  %v1262 = vadd.f32 %v1221, %v1261
  %v1263 = vpop.f32.mrf.mxu0
  %v1264 = vpop.f32.mrf.mxu0
  %1265 = vdwg.mxu0
  %1266 = vmatprep.subr.bf16.mxu0 %v758
  %1267 = vmatpush1.bf16.msra.mxu0 %v757
  %1268 = vmatprep.subr.bf16.mxu0 %v750
  %1269 = vmatpush1.bf16.msra.mxu0 %v749
  %1270 = vmatprep.subr.bf16.mxu0 %v742
  %1271 = vmatpush1.bf16.msra.mxu0 %v741
  %1272 = vmatprep.subr.bf16.mxu0 %v734
  %1273 = vmatpush1.bf16.msra.mxu0 %v733
  %1274 = vmatprep.subr.bf16.mxu0 %v726
  %1275 = vmatpush1.bf16.msra.mxu0 %v725
  %1276 = vmatprep.subr.bf16.mxu0 %v718
  %1277 = vmatpush1.bf16.msra.mxu0 %v717
  %1278 = vmatprep.subr.bf16.mxu0 %v710
  %1279 = vmatpush1.bf16.msra.mxu0 %v709
  %1280 = vmatprep.subr.bf16.mxu0 %v702
  %1281 = vmatpush1.bf16.msra.mxu0 %v701
  %1282 = vmatprep.subr.bf16.mxu0 %v822
  %1283 = vmatpush2.bf16.msra.mxu0 %v821
  %1284 = vmatprep.subr.bf16.mxu0 %v814
  %1285 = vmatpush2.bf16.msra.mxu0 %v813
  %1286 = vmatprep.subr.bf16.mxu0 %v806
  %1287 = vmatpush2.bf16.msra.mxu0 %v805
  %1288 = vmatprep.subr.bf16.mxu0 %v798
  %1289 = vmatpush2.bf16.msra.mxu0 %v797
  %1290 = vmatprep.subr.bf16.mxu0 %v790
  %1291 = vmatpush2.bf16.msra.mxu0 %v789
  %1292 = vmatprep.subr.bf16.mxu0 %v782
  %1293 = vmatpush2.bf16.msra.mxu0 %v781
  %1294 = vmatprep.subr.bf16.mxu0 %v774
  %1295 = vmatpush2.bf16.msra.mxu0 %v773
  %1296 = vmatprep.subr.bf16.mxu0 %v766
  %1297 = vmatpush2.bf16.msra.mxu0 %v765
  %1298 = vmatprep.mubr.bf16.mxu0 %v43
  %1299 = vmatmul.mubr.bf16.gmra.mxu0 %v42
  %v1300 = vpop.f32.mrf.mxu0
  %v1301 = vadd.f32 %v226, %v1300
  %v1302 = vpop.f32.mrf.mxu0
  %v1303 = vadd.f32 %v230, %v1302
  %v1304 = vpop.f32.mrf.mxu0
  %v1305 = vpop.f32.mrf.mxu0
  %1306 = vdwg.mxu0
  %1307 = vmatprep.subr.bf16.mxu0 0
  %1308 = vmatpush1.bf16.msra.mxu0 0
  %1309 = vmatprep.subr.bf16.mxu0 0
  %1310 = vmatpush1.bf16.msra.mxu0 0
  %1311 = vmatprep.subr.bf16.mxu0 0
  %1312 = vmatpush1.bf16.msra.mxu0 0
  %1313 = vmatprep.subr.bf16.mxu0 0
  %1314 = vmatpush1.bf16.msra.mxu0 0
  %1315 = vmatprep.subr.bf16.mxu0 0
  %1316 = vmatpush1.bf16.msra.mxu0 0
  %1317 = vmatprep.subr.bf16.mxu0 %v1018
  %1318 = vmatpush1.bf16.msra.mxu0 %v1015
  %1319 = vmatprep.subr.bf16.mxu0 %v838
  %1320 = vmatpush1.bf16.msra.mxu0 %v837
  %1321 = vmatprep.subr.bf16.mxu0 %v830
  %1322 = vmatpush1.bf16.msra.mxu0 %v829
  %1323 = vmatprep.subr.bf16.mxu0 0
  %1324 = vmatpush2.bf16.msra.mxu0 0
  %1325 = vmatprep.subr.bf16.mxu0 0
  %1326 = vmatpush2.bf16.msra.mxu0 0
  %1327 = vmatprep.subr.bf16.mxu0 0
  %1328 = vmatpush2.bf16.msra.mxu0 0
  %1329 = vmatprep.subr.bf16.mxu0 0
  %1330 = vmatpush2.bf16.msra.mxu0 0
  %1331 = vmatprep.subr.bf16.mxu0 0
  %1332 = vmatpush2.bf16.msra.mxu0 0
  %1333 = vmatprep.subr.bf16.mxu0 0
  %1334 = vmatpush2.bf16.msra.mxu0 0
  %1335 = vmatprep.subr.bf16.mxu0 0
  %1336 = vmatpush2.bf16.msra.mxu0 0
  %1337 = vmatprep.subr.bf16.mxu0 0
  %1338 = vmatpush2.bf16.msra.mxu0 0
  %1339 = vmatprep.mubr.bf16.mxu0 0
  %1340 = vmatmul.mubr.bf16.gmra.mxu0 %v993
  %v1341 = vpop.f32.mrf.mxu0
  %v1342 = vadd.f32 %v1301, %v1341
  %v1343 = vpop.f32.mrf.mxu0
  %v1344 = vadd.f32 %v1303, %v1343
  %v1345 = vpop.f32.mrf.mxu0
  %v1346 = vpop.f32.mrf.mxu0
  %1347 = vdwg.mxu0
  %1348 = vst [vmem:[#allocation2] sm:$0xff] %v1096
  %1349 = vst [vmem:[#allocation2 + $0x8] sm:$0xff] %v1098
  %1350 = vst [vmem:[#allocation2 + $0x10] sm:$0xff] %v1178
  %1351 = vst [vmem:[#allocation2 + $0x18] sm:$0xff] %v1180
  %1352 = vst [vmem:[#allocation2 + $0x20] sm:$0xff] %v1260
  %1353 = vst [vmem:[#allocation2 + $0x28] sm:$0xff] %v1262
  %1354 = vst [vmem:[#allocation2 + $0x30] sm:$0xff] %v1342
  %1355 = vst [vmem:[#allocation2 + $0x38] sm:$0xff] %v1344
  %v1356 = vld [vmem:[%s4] sm:$0xff]
  %v1357 = vld [vmem:[%s4 + $0x8] sm:$0xff]
  %v1358 = vld [vmem:[%s4 + $0x10] sm:$0xff]
  %v1359 = vld [vmem:[%s4 + $0x18] sm:$0xff]
  %v1360 = vld [vmem:[%s4 + $0x20] sm:$0xff]
  %v1361 = vld [vmem:[%s4 + $0x28] sm:$0xff]
  %v1362 = vld [vmem:[%s4 + $0x30] sm:$0xff]
  %v1363 = vld [vmem:[%s4 + $0x38] sm:$0xff]
  %v1364 = vld [vmem:[%s4 + $0x40] sm:$0xff]
  %v1365 = vld [vmem:[%s4 + $0x48] sm:$0xff]
  %v1366 = vld [vmem:[%s4 + $0x50] sm:$0xff]
  %v1367 = vld [vmem:[%s4 + $0x58] sm:$0xff]
  %v1368 = vld [vmem:[%s4 + $0x60] sm:$0xff]
  %v1369 = vld [vmem:[%s4 + $0x68] sm:$0xff]
  %v1370 = vld [vmem:[%s4 + $0x70] sm:$0xff]
  %v1371 = vld [vmem:[%s4 + $0x78] sm:$0xff]
  %v1372 = vld [vmem:[%s4 + $0x80] sm:$0xff]
  %v1373 = vld [vmem:[%s4 + $0x88] sm:$0xff]
  %v1374 = vld [vmem:[%s4 + $0x90] sm:$0xff]
  %v1375 = vld [vmem:[%s4 + $0x98] sm:$0xff]
  %v1376 = vld [vmem:[%s4 + $0xa0] sm:$0xff]
  %v1377 = vld [vmem:[%s4 + $0xa8] sm:$0xff]
  %v1378 = vld [vmem:[%s4 + $0xb0] sm:$0xff]
  %v1379 = vld [vmem:[%s4 + $0xb8] sm:$0xff]
  %v1380 = vld [vmem:[%s4 + $0xc0] sm:$0xff]
  %v1381 = vld [vmem:[%s4 + $0xc8] sm:$0xff]
  %v1382 = vld [vmem:[%s4 + $0xd0] sm:$0xff]
  %v1383 = vld [vmem:[%s4 + $0xd8] sm:$0xff]
  %v1384 = vld [vmem:[%s4 + $0xe0] sm:$0xff]
  %v1385 = vld [vmem:[%s4 + $0xe8] sm:$0xff]
  %v1386 = vld [vmem:[%s4 + $0xf0] sm:$0xff]
  %v1387 = vld [vmem:[%s4 + $0xf8] sm:$0xff]
  %v1388 = vld [vmem:[%s4 + $0x100] sm:$0xff]
  %v1389 = vld [vmem:[%s4 + $0x108] sm:$0xff]
  %v1390 = vld [vmem:[%s4 + $0x110] sm:$0xff]
  %v1391 = vld [vmem:[%s4 + $0x118] sm:$0xff]
  %v1392 = vld [vmem:[%s4 + $0x120] sm:$0xff]
  %v1393 = vld [vmem:[%s4 + $0x128] sm:$0xff]
  %v1394 = vld [vmem:[%s4 + $0x130] sm:$0xff]
  %v1395 = vld [vmem:[%s4 + $0x138] sm:$0xff]
  %v1396 = vld [vmem:[%s4 + $0x140] sm:$0xff]
  %v1397 = vld [vmem:[%s4 + $0x148] sm:$0xff]
  %v1398 = vld [vmem:[%s4 + $0x150] sm:$0xff]
  %v1399 = vld [vmem:[%s4 + $0x158] sm:$0xff]
  %v1400 = vld [vmem:[%s4 + $0x160] sm:$0xff]
  %v1401 = vld [vmem:[%s4 + $0x168] sm:$0xff]
  %v1402 = vld [vmem:[%s4 + $0x170] sm:$0xff]
  %v1403 = vld [vmem:[%s4 + $0x178] sm:$0xff]
  %v1404 = vld [vmem:[%s4 + $0x180] sm:$0xff]
  %v1405 = vld [vmem:[%s4 + $0x188] sm:$0xff]
  %v1406 = vld [vmem:[%s4 + $0x190] sm:$0xff]
  %v1407 = vld [vmem:[%s4 + $0x198] sm:$0xff]
  %v1408 = vld [vmem:[%s4 + $0x1a0] sm:$0xff]
  %v1409 = vld [vmem:[%s4 + $0x1a8] sm:$0xff]
  %v1410 = vld [vmem:[%s4 + $0x1b0] sm:$0xff]
  %v1411 = vld [vmem:[%s4 + $0x1b8] sm:$0xff]
  %v1412 = vld [vmem:[%s4 + $0x1c0] sm:$0xff]
  %v1413 = vld [vmem:[%s4 + $0x1c8] sm:$0xff]
  %v1414 = vld [vmem:[%s4 + $0x1d0] sm:$0xff]
  %v1415 = vld [vmem:[%s4 + $0x1d8] sm:$0xff]
  %v1416 = vld [vmem:[%s4 + $0x1e0] sm:$0xff]
  %v1417 = vld [vmem:[%s4 + $0x1e8] sm:$0xff]
  %v1418 = vld [vmem:[%s4 + $0x1f0] sm:$0xff]
  %v1419 = vld [vmem:[%s4 + $0x1f8] sm:$0xff]
  %v1420 = vld [vmem:[%s4 + $0x200] sm:$0xff]
  %v1421 = vld [vmem:[%s4 + $0x208] sm:$0xff]
  %v1422 = vld [vmem:[%s4 + $0x210] sm:$0xff]
  %v1423 = vld [vmem:[%s4 + $0x218] sm:$0xff]
  %v1424 = vld [vmem:[%s4 + $0x220] sm:$0xff]
  %v1425 = vld [vmem:[%s4 + $0x228] sm:$0xff]
  %v1426 = vld [vmem:[%s4 + $0x230] sm:$0xff]
  %v1427 = vld [vmem:[%s4 + $0x238] sm:$0xff]
  %v1428 = vld [vmem:[%s4 + $0x240] sm:$0xff]
  %v1429 = vld [vmem:[%s4 + $0x248] sm:$0xff]
  %v1430 = vld [vmem:[%s4 + $0x250] sm:$0xff]
  %v1431 = vld [vmem:[%s4 + $0x258] sm:$0xff]
  %v1432 = vld [vmem:[%s4 + $0x260] sm:$0xff]
  %v1433 = vld [vmem:[%s4 + $0x268] sm:$0xff]
  %v1434 = vld [vmem:[%s4 + $0x270] sm:$0xff]
  %v1435 = vld [vmem:[%s4 + $0x278] sm:$0xff]
  %v1436 = vld [vmem:[%s4 + $0x280] sm:$0xff]
  %v1437 = vld [vmem:[%s4 + $0x288] sm:$0xff]
  %v1438 = vld [vmem:[%s4 + $0x290] sm:$0xff]
  %v1439 = vld [vmem:[%s4 + $0x298] sm:$0xff]
  %v1440 = vld [vmem:[%s4 + $0x2a0] sm:$0xff]
  %v1441 = vld [vmem:[%s4 + $0x2a8] sm:$0xff]
  %v1442 = vld [vmem:[%s4 + $0x2b0] sm:$0xff]
  %v1443 = vld [vmem:[%s4 + $0x2b8] sm:$0xff]
  %v1444 = vld [vmem:[%s4 + $0x2c0] sm:$0xff]
  %v1445 = vld [vmem:[%s4 + $0x2c8] sm:$0xff]
  %v1446 = vld [vmem:[%s4 + $0x2d0] sm:$0xff]
  %v1447 = vld [vmem:[%s4 + $0x2d8] sm:$0xff]
  %v1448 = vld [vmem:[%s4 + $0x2e0] sm:$0xff]
  %v1449 = vld [vmem:[%s4 + $0x2e8] sm:$0xff]
  %v1450 = vld [vmem:[%s4 + $0x2f0] sm:$0xff]
  %v1451 = vld [vmem:[%s4 + $0x2f8] sm:$0xff]
  %v1452 = vld [vmem:[%s4 + $0x300] sm:$0xff]
  %v1453 = vld [vmem:[%s4 + $0x308] sm:$0xff]
  %v1454 = vld [vmem:[%s4 + $0x310] sm:$0xff]
  %v1455 = vld [vmem:[%s4 + $0x318] sm:$0xff]
  %v1456 = vld [vmem:[%s4 + $0x320] sm:$0xff]
  %v1457 = vld [vmem:[%s4 + $0x328] sm:$0xff]
  %v1458 = vld [vmem:[%s4 + $0x330] sm:$0xff]
  %v1459 = vld [vmem:[%s4 + $0x338] sm:$0xff]
  %v1460 = vld [vmem:[%s4 + $0x340] sm:$0xff]
  %v1461 = vld [vmem:[%s4 + $0x348] sm:$0xff]
  %v1462 = vld [vmem:[%s4 + $0x350] sm:$0xff]
  %v1463 = vld [vmem:[%s4 + $0x358] sm:$0xff]
  %v1464 = vld [vmem:[%s4 + $0x360] sm:$0xff]
  %v1465 = vld [vmem:[%s4 + $0x368] sm:$0xff]
  %v1466 = vld [vmem:[%s4 + $0x370] sm:$0xff]
  %v1467 = vld [vmem:[%s4 + $0x378] sm:$0xff]
  %v1468 = vld [vmem:[%s4 + $0x380] sm:$0xff]
  %v1469 = vld [vmem:[%s4 + $0x388] sm:$0xff]
  %v1470 = vld [vmem:[%s4 + $0x390] sm:$0xff]
  %v1471 = vld [vmem:[%s4 + $0x398] sm:$0xff]
  %v1472 = vld [vmem:[%s4 + $0x3a0] sm:$0xff]
  %v1473 = vld [vmem:[%s4 + $0x3a8] sm:$0xff]
  %v1474 = vld [vmem:[%s4 + $0x3b0] sm:$0xff]
  %v1475 = vld [vmem:[%s4 + $0x3b8] sm:$0xff]
  %v1476 = vld [vmem:[%s4 + $0x3c0] sm:$0xff]
  %v1477 = vld [vmem:[%s4 + $0x3c8] sm:$0xff]
  %v1478 = vld [vmem:[%s4 + $0x3d0] sm:$0xff]
  %v1479 = vld [vmem:[%s4 + $0x3d8] sm:$0xff]
  %v1480 = vld [vmem:[%s4 + $0x3e0] sm:$0xff]
  %v1481 = vld [vmem:[%s4 + $0x3e8] sm:$0xff]
  %v1482 = vld [vmem:[%s4 + $0x3f0] sm:$0xff]
  %v1483 = vld [vmem:[%s4 + $0x3f8] sm:$0xff]
  %v1484 = vld [vmem:[%s4 + $0x400] sm:$0xff]
  %v1485 = vld [vmem:[%s4 + $0x408] sm:$0xff]
  %v1486 = vld [vmem:[%s4 + $0x410] sm:$0xff]
  %v1487 = vld [vmem:[%s4 + $0x418] sm:$0xff]
  %v1488 = vld [vmem:[%s4 + $0x420] sm:$0xff]
  %v1489 = vld [vmem:[%s4 + $0x428] sm:$0xff]
  %v1490 = vld [vmem:[%s4 + $0x430] sm:$0xff]
  %v1491 = vld [vmem:[%s4 + $0x438] sm:$0xff]
  %v1492 = vld [vmem:[%s4 + $0x440] sm:$0xff]
  %v1493 = vld [vmem:[%s4 + $0x448] sm:$0xff]
  %v1494 = vld [vmem:[%s4 + $0x450] sm:$0xff]
  %v1495 = vld [vmem:[%s4 + $0x458] sm:$0xff]
  %v1496 = vld [vmem:[%s4 + $0x460] sm:$0xff]
  %v1497 = vld [vmem:[%s4 + $0x468] sm:$0xff]
  %v1498 = vld [vmem:[%s4 + $0x470] sm:$0xff]
  %v1499 = vld [vmem:[%s4 + $0x478] sm:$0xff]
  %v1500 = vld [vmem:[%s4 + $0x480] sm:$0xff]
  %v1501 = vld [vmem:[%s4 + $0x488] sm:$0xff]
  %v1502 = vld [vmem:[%s4 + $0x490] sm:$0xff]
  %v1503 = vld [vmem:[%s4 + $0x498] sm:$0xff]
  %v1504 = vld [vmem:[%s4 + $0x4a0] sm:$0x33]
  %v1505 = vld [vmem:[%s4 + $0x4a8] sm:$0x33]
  %v1506 = vld [vmem:[%s4 + $0x4b0] sm:$0x33]
  %v1507 = vld [vmem:[%s4 + $0x4b8] sm:$0x33]
  %v1508 = vld [vmem:[%s6] sm:$0xff]
  %v1510 = vlaneseq
  %v1511 = vshrl.u32 %v1510, 7
  %v1512 = vsub.s32 0, %v1511
  %v1513 = vrot.slane %v1508, %v1512
  %v1514 = vlaneseq
  %v1515 = vshrl.u32 %v1514, 7
  %v1516 = vsub.s32 1, %v1515
  %v1517 = vrot.slane %v1508, %v1516
  %v1518 = vlaneseq
  %v1519 = vshrl.u32 %v1518, 7
  %v1520 = vsub.s32 2, %v1519
  %v1521 = vrot.slane %v1508, %v1520
  %v1522 = vlaneseq
  %v1523 = vshrl.u32 %v1522, 7
  %v1524 = vsub.s32 3, %v1523
  %v1525 = vrot.slane %v1508, %v1524
  %v1526 = vlaneseq
  %v1527 = vshrl.u32 %v1526, 7
  %v1528 = vsub.s32 4, %v1527
  %v1529 = vrot.slane %v1508, %v1528
  %v1530 = vlaneseq
  %v1531 = vshrl.u32 %v1530, 7
  %v1532 = vsub.s32 5, %v1531
  %v1533 = vrot.slane %v1508, %v1532
  %v1534 = vlaneseq
  %v1535 = vshrl.u32 %v1534, 7
  %v1536 = vsub.s32 6, %v1535
  %v1537 = vrot.slane %v1508, %v1536
  %v1538 = vlaneseq
  %v1539 = vshrl.u32 %v1538, 7
  %v1540 = vsub.s32 7, %v1539
  %v1541 = vrot.slane %v1508, %v1540
  %v1702 = vunpack.c.l.b16 %v1356
  %v1703 = vunpack.c.h.b16 %v1356
  %v1704 = vunpack.c.l.b16 %v1357
  %v1705 = vunpack.c.h.b16 %v1357
  %v1706 = vunpack.c.l.b16 %v1358
  %v1707 = vunpack.c.h.b16 %v1358
  %v1708 = vunpack.c.l.b16 %v1359
  %v1709 = vunpack.c.h.b16 %v1359
  %v1710 = vunpack.c.l.b16 %v1360
  %v1711 = vunpack.c.h.b16 %v1360
  %v1712 = vunpack.c.l.b16 %v1361
  %v1713 = vunpack.c.h.b16 %v1361
  %v1714 = vunpack.c.l.b16 %v1362
  %v1715 = vunpack.c.h.b16 %v1362
  %v1716 = vunpack.c.l.b16 %v1363
  %v1717 = vunpack.c.h.b16 %v1363
  %v1718 = vunpack.c.l.b16 %v1364
  %v1719 = vunpack.c.h.b16 %v1364
  %v1720 = vunpack.c.l.b16 %v1365
  %v1721 = vunpack.c.h.b16 %v1365
  %v1722 = vunpack.c.l.b16 %v1366
  %v1723 = vunpack.c.h.b16 %v1366
  %v1724 = vunpack.c.l.b16 %v1367
  %v1725 = vunpack.c.h.b16 %v1367
  %v1726 = vunpack.c.l.b16 %v1368
  %v1727 = vunpack.c.h.b16 %v1368
  %v1728 = vunpack.c.l.b16 %v1369
  %v1729 = vunpack.c.h.b16 %v1369
  %v1730 = vunpack.c.l.b16 %v1370
  %v1731 = vunpack.c.h.b16 %v1370
  %v1732 = vunpack.c.l.b16 %v1371
  %v1733 = vunpack.c.h.b16 %v1371
  %v1734 = vunpack.c.l.b16 %v1372
  %v1735 = vunpack.c.h.b16 %v1372
  %v1736 = vunpack.c.l.b16 %v1373
  %v1737 = vunpack.c.h.b16 %v1373
  %v1738 = vunpack.c.l.b16 %v1374
  %v1739 = vunpack.c.h.b16 %v1374
  %v1740 = vunpack.c.l.b16 %v1375
  %v1741 = vunpack.c.h.b16 %v1375
  %v1742 = vunpack.c.l.b16 %v1376
  %v1743 = vunpack.c.h.b16 %v1376
  %v1744 = vunpack.c.l.b16 %v1377
  %v1745 = vunpack.c.h.b16 %v1377
  %v1746 = vunpack.c.l.b16 %v1378
  %v1747 = vunpack.c.h.b16 %v1378
  %v1748 = vunpack.c.l.b16 %v1379
  %v1749 = vunpack.c.h.b16 %v1379
  %v1750 = vunpack.c.l.b16 %v1380
  %v1751 = vunpack.c.h.b16 %v1380
  %v1752 = vunpack.c.l.b16 %v1381
  %v1753 = vunpack.c.h.b16 %v1381
  %v1754 = vunpack.c.l.b16 %v1382
  %v1755 = vunpack.c.h.b16 %v1382
  %v1756 = vunpack.c.l.b16 %v1383
  %v1757 = vunpack.c.h.b16 %v1383
  %v1758 = vunpack.c.l.b16 %v1384
  %v1759 = vunpack.c.h.b16 %v1384
  %v1760 = vunpack.c.l.b16 %v1385
  %v1761 = vunpack.c.h.b16 %v1385
  %v1762 = vunpack.c.l.b16 %v1386
  %v1763 = vunpack.c.h.b16 %v1386
  %v1764 = vunpack.c.l.b16 %v1387
  %v1765 = vunpack.c.h.b16 %v1387
  %v1766 = vunpack.c.l.b16 %v1388
  %v1767 = vunpack.c.h.b16 %v1388
  %v1768 = vunpack.c.l.b16 %v1389
  %v1769 = vunpack.c.h.b16 %v1389
  %v1770 = vunpack.c.l.b16 %v1390
  %v1771 = vunpack.c.h.b16 %v1390
  %v1772 = vunpack.c.l.b16 %v1391
  %v1773 = vunpack.c.h.b16 %v1391
  %v1774 = vunpack.c.l.b16 %v1392
  %v1775 = vunpack.c.h.b16 %v1392
  %v1776 = vunpack.c.l.b16 %v1393
  %v1777 = vunpack.c.h.b16 %v1393
  %v1778 = vunpack.c.l.b16 %v1394
  %v1779 = vunpack.c.h.b16 %v1394
  %v1780 = vunpack.c.l.b16 %v1395
  %v1781 = vunpack.c.h.b16 %v1395
  %v1782 = vunpack.c.l.b16 %v1396
  %v1783 = vunpack.c.h.b16 %v1396
  %v1784 = vunpack.c.l.b16 %v1397
  %v1785 = vunpack.c.h.b16 %v1397
  %v1786 = vunpack.c.l.b16 %v1398
  %v1787 = vunpack.c.h.b16 %v1398
  %v1788 = vunpack.c.l.b16 %v1399
  %v1789 = vunpack.c.h.b16 %v1399
  %v1790 = vunpack.c.l.b16 %v1400
  %v1791 = vunpack.c.h.b16 %v1400
  %v1792 = vunpack.c.l.b16 %v1401
  %v1793 = vunpack.c.h.b16 %v1401
  %v1794 = vunpack.c.l.b16 %v1402
  %v1795 = vunpack.c.h.b16 %v1402
  %v1796 = vunpack.c.l.b16 %v1403
  %v1797 = vunpack.c.h.b16 %v1403
  %v1798 = vunpack.c.l.b16 %v1404
  %v1799 = vunpack.c.h.b16 %v1404
  %v1800 = vunpack.c.l.b16 %v1405
  %v1801 = vunpack.c.h.b16 %v1405
  %v1802 = vunpack.c.l.b16 %v1406
  %v1803 = vunpack.c.h.b16 %v1406
  %v1804 = vunpack.c.l.b16 %v1407
  %v1805 = vunpack.c.h.b16 %v1407
  %v1806 = vunpack.c.l.b16 %v1408
  %v1807 = vunpack.c.h.b16 %v1408
  %v1808 = vunpack.c.l.b16 %v1409
  %v1809 = vunpack.c.h.b16 %v1409
  %v1810 = vunpack.c.l.b16 %v1410
  %v1811 = vunpack.c.h.b16 %v1410
  %v1812 = vunpack.c.l.b16 %v1411
  %v1813 = vunpack.c.h.b16 %v1411
  %v1814 = vunpack.c.l.b16 %v1412
  %v1815 = vunpack.c.h.b16 %v1412
  %v1816 = vunpack.c.l.b16 %v1413
  %v1817 = vunpack.c.h.b16 %v1413
  %v1818 = vunpack.c.l.b16 %v1414
  %v1819 = vunpack.c.h.b16 %v1414
  %v1820 = vunpack.c.l.b16 %v1415
  %v1821 = vunpack.c.h.b16 %v1415
  %v1822 = vunpack.c.l.b16 %v1416
  %v1823 = vunpack.c.h.b16 %v1416
  %v1824 = vunpack.c.l.b16 %v1417
  %v1825 = vunpack.c.h.b16 %v1417
  %v1826 = vunpack.c.l.b16 %v1418
  %v1827 = vunpack.c.h.b16 %v1418
  %v1828 = vunpack.c.l.b16 %v1419
  %v1829 = vunpack.c.h.b16 %v1419
  %v1830 = vunpack.c.l.b16 %v1420
  %v1831 = vunpack.c.h.b16 %v1420
  %v1832 = vunpack.c.l.b16 %v1421
  %v1833 = vunpack.c.h.b16 %v1421
  %v1834 = vunpack.c.l.b16 %v1422
  %v1835 = vunpack.c.h.b16 %v1422
  %v1836 = vunpack.c.l.b16 %v1423
  %v1837 = vunpack.c.h.b16 %v1423
  %v1838 = vunpack.c.l.b16 %v1424
  %v1839 = vunpack.c.h.b16 %v1424
  %v1840 = vunpack.c.l.b16 %v1425
  %v1841 = vunpack.c.h.b16 %v1425
  %v1842 = vunpack.c.l.b16 %v1426
  %v1843 = vunpack.c.h.b16 %v1426
  %v1844 = vunpack.c.l.b16 %v1427
  %v1845 = vunpack.c.h.b16 %v1427
  %v1846 = vunpack.c.l.b16 %v1428
  %v1847 = vunpack.c.h.b16 %v1428
  %v1848 = vunpack.c.l.b16 %v1429
  %v1849 = vunpack.c.h.b16 %v1429
  %v1850 = vunpack.c.l.b16 %v1430
  %v1851 = vunpack.c.h.b16 %v1430
  %v1852 = vunpack.c.l.b16 %v1431
  %v1853 = vunpack.c.h.b16 %v1431
  %v1854 = vunpack.c.l.b16 %v1432
  %v1855 = vunpack.c.h.b16 %v1432
  %v1856 = vunpack.c.l.b16 %v1433
  %v1857 = vunpack.c.h.b16 %v1433
  %v1858 = vunpack.c.l.b16 %v1434
  %v1859 = vunpack.c.h.b16 %v1434
  %v1860 = vunpack.c.l.b16 %v1435
  %v1861 = vunpack.c.h.b16 %v1435
  %v1862 = vunpack.c.l.b16 %v1436
  %v1863 = vunpack.c.h.b16 %v1436
  %v1864 = vunpack.c.l.b16 %v1437
  %v1865 = vunpack.c.h.b16 %v1437
  %v1866 = vunpack.c.l.b16 %v1438
  %v1867 = vunpack.c.h.b16 %v1438
  %v1868 = vunpack.c.l.b16 %v1439
  %v1869 = vunpack.c.h.b16 %v1439
  %v1870 = vunpack.c.l.b16 %v1440
  %v1871 = vunpack.c.h.b16 %v1440
  %v1872 = vunpack.c.l.b16 %v1441
  %v1873 = vunpack.c.h.b16 %v1441
  %v1874 = vunpack.c.l.b16 %v1442
  %v1875 = vunpack.c.h.b16 %v1442
  %v1876 = vunpack.c.l.b16 %v1443
  %v1877 = vunpack.c.h.b16 %v1443
  %v1878 = vunpack.c.l.b16 %v1444
  %v1879 = vunpack.c.h.b16 %v1444
  %v1880 = vunpack.c.l.b16 %v1445
  %v1881 = vunpack.c.h.b16 %v1445
  %v1882 = vunpack.c.l.b16 %v1446
  %v1883 = vunpack.c.h.b16 %v1446
  %v1884 = vunpack.c.l.b16 %v1447
  %v1885 = vunpack.c.h.b16 %v1447
  %v1886 = vunpack.c.l.b16 %v1448
  %v1887 = vunpack.c.h.b16 %v1448
  %v1888 = vunpack.c.l.b16 %v1449
  %v1889 = vunpack.c.h.b16 %v1449
  %v1890 = vunpack.c.l.b16 %v1450
  %v1891 = vunpack.c.h.b16 %v1450
  %v1892 = vunpack.c.l.b16 %v1451
  %v1893 = vunpack.c.h.b16 %v1451
  %v1894 = vunpack.c.l.b16 %v1452
  %v1895 = vunpack.c.h.b16 %v1452
  %v1896 = vunpack.c.l.b16 %v1453
  %v1897 = vunpack.c.h.b16 %v1453
  %v1898 = vunpack.c.l.b16 %v1454
  %v1899 = vunpack.c.h.b16 %v1454
  %v1900 = vunpack.c.l.b16 %v1455
  %v1901 = vunpack.c.h.b16 %v1455
  %v1902 = vunpack.c.l.b16 %v1456
  %v1903 = vunpack.c.h.b16 %v1456
  %v1904 = vunpack.c.l.b16 %v1457
  %v1905 = vunpack.c.h.b16 %v1457
  %v1906 = vunpack.c.l.b16 %v1458
  %v1907 = vunpack.c.h.b16 %v1458
  %v1908 = vunpack.c.l.b16 %v1459
  %v1909 = vunpack.c.h.b16 %v1459
  %v1910 = vunpack.c.l.b16 %v1460
  %v1911 = vunpack.c.h.b16 %v1460
  %v1912 = vunpack.c.l.b16 %v1461
  %v1913 = vunpack.c.h.b16 %v1461
  %v1914 = vunpack.c.l.b16 %v1462
  %v1915 = vunpack.c.h.b16 %v1462
  %v1916 = vunpack.c.l.b16 %v1463
  %v1917 = vunpack.c.h.b16 %v1463
  %v1918 = vunpack.c.l.b16 %v1464
  %v1919 = vunpack.c.h.b16 %v1464
  %v1920 = vunpack.c.l.b16 %v1465
  %v1921 = vunpack.c.h.b16 %v1465
  %v1922 = vunpack.c.l.b16 %v1466
  %v1923 = vunpack.c.h.b16 %v1466
  %v1924 = vunpack.c.l.b16 %v1467
  %v1925 = vunpack.c.h.b16 %v1467
  %v1926 = vunpack.c.l.b16 %v1468
  %v1927 = vunpack.c.h.b16 %v1468
  %v1928 = vunpack.c.l.b16 %v1469
  %v1929 = vunpack.c.h.b16 %v1469
  %v1930 = vunpack.c.l.b16 %v1470
  %v1931 = vunpack.c.h.b16 %v1470
  %v1932 = vunpack.c.l.b16 %v1471
  %v1933 = vunpack.c.h.b16 %v1471
  %v1934 = vunpack.c.l.b16 %v1472
  %v1935 = vunpack.c.h.b16 %v1472
  %v1936 = vunpack.c.l.b16 %v1473
  %v1937 = vunpack.c.h.b16 %v1473
  %v1938 = vunpack.c.l.b16 %v1474
  %v1939 = vunpack.c.h.b16 %v1474
  %v1940 = vunpack.c.l.b16 %v1475
  %v1941 = vunpack.c.h.b16 %v1475
  %v1942 = vunpack.c.l.b16 %v1476
  %v1943 = vunpack.c.h.b16 %v1476
  %v1944 = vunpack.c.l.b16 %v1477
  %v1945 = vunpack.c.h.b16 %v1477
  %v1946 = vunpack.c.l.b16 %v1478
  %v1947 = vunpack.c.h.b16 %v1478
  %v1948 = vunpack.c.l.b16 %v1479
  %v1949 = vunpack.c.h.b16 %v1479
  %v1950 = vunpack.c.l.b16 %v1480
  %v1951 = vunpack.c.h.b16 %v1480
  %v1952 = vunpack.c.l.b16 %v1481
  %v1953 = vunpack.c.h.b16 %v1481
  %v1954 = vunpack.c.l.b16 %v1482
  %v1955 = vunpack.c.h.b16 %v1482
  %v1956 = vunpack.c.l.b16 %v1483
  %v1957 = vunpack.c.h.b16 %v1483
  %v1958 = vunpack.c.l.b16 %v1484
  %v1959 = vunpack.c.h.b16 %v1484
  %v1960 = vunpack.c.l.b16 %v1485
  %v1961 = vunpack.c.h.b16 %v1485
  %v1962 = vunpack.c.l.b16 %v1486
  %v1963 = vunpack.c.h.b16 %v1486
  %v1964 = vunpack.c.l.b16 %v1487
  %v1965 = vunpack.c.h.b16 %v1487
  %v1966 = vunpack.c.l.b16 %v1488
  %v1967 = vunpack.c.h.b16 %v1488
  %v1968 = vunpack.c.l.b16 %v1489
  %v1969 = vunpack.c.h.b16 %v1489
  %v1970 = vunpack.c.l.b16 %v1490
  %v1971 = vunpack.c.h.b16 %v1490
  %v1972 = vunpack.c.l.b16 %v1491
  %v1973 = vunpack.c.h.b16 %v1491
  %v1974 = vunpack.c.l.b16 %v1492
  %v1975 = vunpack.c.h.b16 %v1492
  %v1976 = vunpack.c.l.b16 %v1493
  %v1977 = vunpack.c.h.b16 %v1493
  %v1978 = vunpack.c.l.b16 %v1494
  %v1979 = vunpack.c.h.b16 %v1494
  %v1980 = vunpack.c.l.b16 %v1495
  %v1981 = vunpack.c.h.b16 %v1495
  %v1982 = vunpack.c.l.b16 %v1496
  %v1983 = vunpack.c.h.b16 %v1496
  %v1984 = vunpack.c.l.b16 %v1497
  %v1985 = vunpack.c.h.b16 %v1497
  %v1986 = vunpack.c.l.b16 %v1498
  %v1987 = vunpack.c.h.b16 %v1498
  %v1988 = vunpack.c.l.b16 %v1499
  %v1989 = vunpack.c.h.b16 %v1499
  %v1990 = vunpack.c.l.b16 %v1500
  %v1991 = vunpack.c.h.b16 %v1500
  %v1992 = vunpack.c.l.b16 %v1501
  %v1993 = vunpack.c.h.b16 %v1501
  %v1994 = vunpack.c.l.b16 %v1502
  %v1995 = vunpack.c.h.b16 %v1502
  %v1996 = vunpack.c.l.b16 %v1503
  %v1997 = vunpack.c.h.b16 %v1503
  %v1998 = vunpack.c.l.b16 %v1504
  %v1999 = vunpack.c.h.b16 %v1504
  %v2000 = vunpack.c.l.b16 %v1505
  %v2001 = vunpack.c.h.b16 %v1505
  %v2002 = vunpack.c.l.b16 %v1506
  %v2003 = vunpack.c.h.b16 %v1506
  %v2004 = vunpack.c.l.b16 %v1507
  %v2005 = vunpack.c.h.b16 %v1507
  %v2006 = vpack.c.b16 %v1710, %v1702
  %v2007 = vpack.c.b16 %v1711, %v1703
  %v2008 = vpack.c.b16 %v1712, %v1704
  %v2009 = vpack.c.b16 %v1713, %v1705
  %v2010 = vpack.c.b16 %v1714, %v1706
  %v2011 = vpack.c.b16 %v1715, %v1707
  %v2012 = vpack.c.b16 %v1716, %v1708
  %v2013 = vpack.c.b16 %v1717, %v1709
  %v2014 = vpack.c.b16 %v1726, %v1718
  %v2015 = vpack.c.b16 %v1727, %v1719
  %v2016 = vpack.c.b16 %v1728, %v1720
  %v2017 = vpack.c.b16 %v1729, %v1721
  %v2018 = vpack.c.b16 %v1730, %v1722
  %v2019 = vpack.c.b16 %v1731, %v1723
  %v2020 = vpack.c.b16 %v1732, %v1724
  %v2021 = vpack.c.b16 %v1733, %v1725
  %v2022 = vpack.c.b16 %v1742, %v1734
  %v2023 = vpack.c.b16 %v1743, %v1735
  %v2024 = vpack.c.b16 %v1744, %v1736
  %v2025 = vpack.c.b16 %v1745, %v1737
  %v2026 = vpack.c.b16 %v1746, %v1738
  %v2027 = vpack.c.b16 %v1747, %v1739
  %v2028 = vpack.c.b16 %v1748, %v1740
  %v2029 = vpack.c.b16 %v1749, %v1741
  %v2030 = vpack.c.b16 %v1758, %v1750
  %v2031 = vpack.c.b16 %v1759, %v1751
  %v2032 = vpack.c.b16 %v1760, %v1752
  %v2033 = vpack.c.b16 %v1761, %v1753
  %v2034 = vpack.c.b16 %v1762, %v1754
  %v2035 = vpack.c.b16 %v1763, %v1755
  %v2036 = vpack.c.b16 %v1764, %v1756
  %v2037 = vpack.c.b16 %v1765, %v1757
  %v2038 = vpack.c.b16 %v1774, %v1766
  %v2039 = vpack.c.b16 %v1775, %v1767
  %v2040 = vpack.c.b16 %v1776, %v1768
  %v2041 = vpack.c.b16 %v1777, %v1769
  %v2042 = vpack.c.b16 %v1778, %v1770
  %v2043 = vpack.c.b16 %v1779, %v1771
  %v2044 = vpack.c.b16 %v1780, %v1772
  %v2045 = vpack.c.b16 %v1781, %v1773
  %v2046 = vpack.c.b16 %v1790, %v1782
  %v2047 = vpack.c.b16 %v1791, %v1783
  %v2048 = vpack.c.b16 %v1792, %v1784
  %v2049 = vpack.c.b16 %v1793, %v1785
  %v2050 = vpack.c.b16 %v1794, %v1786
  %v2051 = vpack.c.b16 %v1795, %v1787
  %v2052 = vpack.c.b16 %v1796, %v1788
  %v2053 = vpack.c.b16 %v1797, %v1789
  %v2054 = vpack.c.b16 %v1806, %v1798
  %v2055 = vpack.c.b16 %v1807, %v1799
  %v2056 = vpack.c.b16 %v1808, %v1800
  %v2057 = vpack.c.b16 %v1809, %v1801
  %v2058 = vpack.c.b16 %v1810, %v1802
  %v2059 = vpack.c.b16 %v1811, %v1803
  %v2060 = vpack.c.b16 %v1812, %v1804
  %v2061 = vpack.c.b16 %v1813, %v1805
  %v2062 = vpack.c.b16 %v1822, %v1814
  %v2063 = vpack.c.b16 %v1823, %v1815
  %v2064 = vpack.c.b16 %v1824, %v1816
  %v2065 = vpack.c.b16 %v1825, %v1817
  %v2066 = vpack.c.b16 %v1826, %v1818
  %v2067 = vpack.c.b16 %v1827, %v1819
  %v2068 = vpack.c.b16 %v1828, %v1820
  %v2069 = vpack.c.b16 %v1829, %v1821
  %v2070 = vpack.c.b16 %v1838, %v1830
  %v2071 = vpack.c.b16 %v1839, %v1831
  %v2072 = vpack.c.b16 %v1840, %v1832
  %v2073 = vpack.c.b16 %v1841, %v1833
  %v2074 = vpack.c.b16 %v1842, %v1834
  %v2075 = vpack.c.b16 %v1843, %v1835
  %v2076 = vpack.c.b16 %v1844, %v1836
  %v2077 = vpack.c.b16 %v1845, %v1837
  %v2078 = vpack.c.b16 %v1854, %v1846
  %v2079 = vpack.c.b16 %v1855, %v1847
  %v2080 = vpack.c.b16 %v1856, %v1848
  %v2081 = vpack.c.b16 %v1857, %v1849
  %v2082 = vpack.c.b16 %v1858, %v1850
  %v2083 = vpack.c.b16 %v1859, %v1851
  %v2084 = vpack.c.b16 %v1860, %v1852
  %v2085 = vpack.c.b16 %v1861, %v1853
  %v2086 = vpack.c.b16 %v1870, %v1862
  %v2087 = vpack.c.b16 %v1871, %v1863
  %v2088 = vpack.c.b16 %v1872, %v1864
  %v2089 = vpack.c.b16 %v1873, %v1865
  %v2090 = vpack.c.b16 %v1874, %v1866
  %v2091 = vpack.c.b16 %v1875, %v1867
  %v2092 = vpack.c.b16 %v1876, %v1868
  %v2093 = vpack.c.b16 %v1877, %v1869
  %v2094 = vpack.c.b16 %v1886, %v1878
  %v2095 = vpack.c.b16 %v1887, %v1879
  %v2096 = vpack.c.b16 %v1888, %v1880
  %v2097 = vpack.c.b16 %v1889, %v1881
  %v2098 = vpack.c.b16 %v1890, %v1882
  %v2099 = vpack.c.b16 %v1891, %v1883
  %v2100 = vpack.c.b16 %v1892, %v1884
  %v2101 = vpack.c.b16 %v1893, %v1885
  %v2102 = vpack.c.b16 %v1902, %v1894
  %v2103 = vpack.c.b16 %v1903, %v1895
  %v2104 = vpack.c.b16 %v1904, %v1896
  %v2105 = vpack.c.b16 %v1905, %v1897
  %v2106 = vpack.c.b16 %v1906, %v1898
  %v2107 = vpack.c.b16 %v1907, %v1899
  %v2108 = vpack.c.b16 %v1908, %v1900
  %v2109 = vpack.c.b16 %v1909, %v1901
  %v2110 = vpack.c.b16 %v1918, %v1910
  %v2111 = vpack.c.b16 %v1919, %v1911
  %v2112 = vpack.c.b16 %v1920, %v1912
  %v2113 = vpack.c.b16 %v1921, %v1913
  %v2114 = vpack.c.b16 %v1922, %v1914
  %v2115 = vpack.c.b16 %v1923, %v1915
  %v2116 = vpack.c.b16 %v1924, %v1916
  %v2117 = vpack.c.b16 %v1925, %v1917
  %v2118 = vpack.c.b16 %v1934, %v1926
  %v2119 = vpack.c.b16 %v1935, %v1927
  %v2120 = vpack.c.b16 %v1936, %v1928
  %v2121 = vpack.c.b16 %v1937, %v1929
  %v2122 = vpack.c.b16 %v1938, %v1930
  %v2123 = vpack.c.b16 %v1939, %v1931
  %v2124 = vpack.c.b16 %v1940, %v1932
  %v2125 = vpack.c.b16 %v1941, %v1933
  %v2126 = vpack.c.b16 %v1950, %v1942
  %v2127 = vpack.c.b16 %v1951, %v1943
  %v2128 = vpack.c.b16 %v1952, %v1944
  %v2129 = vpack.c.b16 %v1953, %v1945
  %v2130 = vpack.c.b16 %v1954, %v1946
  %v2131 = vpack.c.b16 %v1955, %v1947
  %v2132 = vpack.c.b16 %v1956, %v1948
  %v2133 = vpack.c.b16 %v1957, %v1949
  %v2134 = vpack.c.b16 %v1966, %v1958
  %v2135 = vpack.c.b16 %v1967, %v1959
  %v2136 = vpack.c.b16 %v1968, %v1960
  %v2137 = vpack.c.b16 %v1969, %v1961
  %v2138 = vpack.c.b16 %v1970, %v1962
  %v2139 = vpack.c.b16 %v1971, %v1963
  %v2140 = vpack.c.b16 %v1972, %v1964
  %v2141 = vpack.c.b16 %v1973, %v1965
  %v2142 = vpack.c.b16 %v1982, %v1974
  %v2143 = vpack.c.b16 %v1983, %v1975
  %v2144 = vpack.c.b16 %v1984, %v1976
  %v2145 = vpack.c.b16 %v1985, %v1977
  %v2146 = vpack.c.b16 %v1986, %v1978
  %v2147 = vpack.c.b16 %v1987, %v1979
  %v2148 = vpack.c.b16 %v1988, %v1980
  %v2149 = vpack.c.b16 %v1989, %v1981
  %v2150 = vpack.c.b16 %v1998, %v1990
  %v2151 = vpack.c.b16 %v1999, %v1991
  %v2152 = vpack.c.b16 %v2000, %v1992
  %v2153 = vpack.c.b16 %v2001, %v1993
  %v2154 = vpack.c.b16 %v2002, %v1994
  %v2155 = vpack.c.b16 %v2003, %v1995
  %v2156 = vpack.c.b16 %v2004, %v1996
  %v2157 = vpack.c.b16 %v2005, %v1997
  %v2303 = vsel %vm995, %v2150, 0
  %v2306 = vsel %vm995, %v2151, 0
  %v2309 = vsel %vm995, %v2152, 0
  %v2312 = vsel %vm995, %v2153, 0
  %v2315 = vsel %vm995, %v2154, 0
  %v2318 = vsel %vm995, %v2155, 0
  %v2321 = vsel %vm995, %v2156, 0
  %v2324 = vsel %vm995, %v2157, 0
  %2326 = vmatprep.subr.bf16.mxu0 %v2063
  %2327 = vmatpush1.bf16.msra.mxu0 %v2062
  %2328 = vmatprep.subr.bf16.mxu0 %v2055
  %2329 = vmatpush1.bf16.msra.mxu0 %v2054
  %2330 = vmatprep.subr.bf16.mxu0 %v2047
  %2331 = vmatpush1.bf16.msra.mxu0 %v2046
  %2332 = vmatprep.subr.bf16.mxu0 %v2039
  %2333 = vmatpush1.bf16.msra.mxu0 %v2038
  %2334 = vmatprep.subr.bf16.mxu0 %v2031
  %2335 = vmatpush1.bf16.msra.mxu0 %v2030
  %2336 = vmatprep.subr.bf16.mxu0 %v2023
  %2337 = vmatpush1.bf16.msra.mxu0 %v2022
  %2338 = vmatprep.subr.bf16.mxu0 %v2015
  %2339 = vmatpush1.bf16.msra.mxu0 %v2014
  %2340 = vmatprep.subr.bf16.mxu0 %v2007
  %2341 = vmatpush1.bf16.msra.mxu0 %v2006
  %2342 = vmatprep.subr.bf16.mxu0 %v2127
  %2343 = vmatpush2.bf16.msra.mxu0 %v2126
  %2344 = vmatprep.subr.bf16.mxu0 %v2119
  %2345 = vmatpush2.bf16.msra.mxu0 %v2118
  %2346 = vmatprep.subr.bf16.mxu0 %v2111
  %2347 = vmatpush2.bf16.msra.mxu0 %v2110
  %2348 = vmatprep.subr.bf16.mxu0 %v2103
  %2349 = vmatpush2.bf16.msra.mxu0 %v2102
  %2350 = vmatprep.subr.bf16.mxu0 %v2095
  %2351 = vmatpush2.bf16.msra.mxu0 %v2094
  %2352 = vmatprep.subr.bf16.mxu0 %v2087
  %2353 = vmatpush2.bf16.msra.mxu0 %v2086
  %2354 = vmatprep.subr.bf16.mxu0 %v2079
  %2355 = vmatpush2.bf16.msra.mxu0 %v2078
  %2356 = vmatprep.subr.bf16.mxu0 %v2071
  %2357 = vmatpush2.bf16.msra.mxu0 %v2070
  %2358 = vmatprep.mubr.bf16.mxu0 %v43
  %2359 = vmatmul.mubr.bf16.gmra.mxu0 %v42
  %v2360 = vpop.f32.mrf.mxu0
  %v2361 = vadd.f32 %v1513, %v2360
  %v2362 = vpop.f32.mrf.mxu0
  %v2363 = vadd.f32 %v1517, %v2362
  %v2364 = vpop.f32.mrf.mxu0
  %v2365 = vpop.f32.mrf.mxu0
  %2366 = vdwg.mxu0
  %2367 = vmatprep.subr.bf16.mxu0 0
  %2368 = vmatpush1.bf16.msra.mxu0 0
  %2369 = vmatprep.subr.bf16.mxu0 0
  %2370 = vmatpush1.bf16.msra.mxu0 0
  %2371 = vmatprep.subr.bf16.mxu0 0
  %2372 = vmatpush1.bf16.msra.mxu0 0
  %2373 = vmatprep.subr.bf16.mxu0 0
  %2374 = vmatpush1.bf16.msra.mxu0 0
  %2375 = vmatprep.subr.bf16.mxu0 0
  %2376 = vmatpush1.bf16.msra.mxu0 0
  %2377 = vmatprep.subr.bf16.mxu0 %v2306
  %2378 = vmatpush1.bf16.msra.mxu0 %v2303
  %2379 = vmatprep.subr.bf16.mxu0 %v2143
  %2380 = vmatpush1.bf16.msra.mxu0 %v2142
  %2381 = vmatprep.subr.bf16.mxu0 %v2135
  %2382 = vmatpush1.bf16.msra.mxu0 %v2134
  %2383 = vmatprep.subr.bf16.mxu0 0
  %2384 = vmatpush2.bf16.msra.mxu0 0
  %2385 = vmatprep.subr.bf16.mxu0 0
  %2386 = vmatpush2.bf16.msra.mxu0 0
  %2387 = vmatprep.subr.bf16.mxu0 0
  %2388 = vmatpush2.bf16.msra.mxu0 0
  %2389 = vmatprep.subr.bf16.mxu0 0
  %2390 = vmatpush2.bf16.msra.mxu0 0
  %2391 = vmatprep.subr.bf16.mxu0 0
  %2392 = vmatpush2.bf16.msra.mxu0 0
  %2393 = vmatprep.subr.bf16.mxu0 0
  %2394 = vmatpush2.bf16.msra.mxu0 0
  %2395 = vmatprep.subr.bf16.mxu0 0
  %2396 = vmatpush2.bf16.msra.mxu0 0
  %2397 = vmatprep.subr.bf16.mxu0 0
  %2398 = vmatpush2.bf16.msra.mxu0 0
  %2399 = vmatprep.mubr.bf16.mxu0 0
  %2400 = vmatmul.mubr.bf16.gmra.mxu0 %v993
  %v2401 = vpop.f32.mrf.mxu0
  %v2402 = vadd.f32 %v2361, %v2401
  %v2403 = vpop.f32.mrf.mxu0
  %v2404 = vadd.f32 %v2363, %v2403
  %v2405 = vpop.f32.mrf.mxu0
  %v2406 = vpop.f32.mrf.mxu0
  %2407 = vdwg.mxu0
  %2408 = vmatprep.subr.bf16.mxu0 %v2065
  %2409 = vmatpush1.bf16.msra.mxu0 %v2064
  %2410 = vmatprep.subr.bf16.mxu0 %v2057
  %2411 = vmatpush1.bf16.msra.mxu0 %v2056
  %2412 = vmatprep.subr.bf16.mxu0 %v2049
  %2413 = vmatpush1.bf16.msra.mxu0 %v2048
  %2414 = vmatprep.subr.bf16.mxu0 %v2041
  %2415 = vmatpush1.bf16.msra.mxu0 %v2040
  %2416 = vmatprep.subr.bf16.mxu0 %v2033
  %2417 = vmatpush1.bf16.msra.mxu0 %v2032
  %2418 = vmatprep.subr.bf16.mxu0 %v2025
  %2419 = vmatpush1.bf16.msra.mxu0 %v2024
  %2420 = vmatprep.subr.bf16.mxu0 %v2017
  %2421 = vmatpush1.bf16.msra.mxu0 %v2016
  %2422 = vmatprep.subr.bf16.mxu0 %v2009
  %2423 = vmatpush1.bf16.msra.mxu0 %v2008
  %2424 = vmatprep.subr.bf16.mxu0 %v2129
  %2425 = vmatpush2.bf16.msra.mxu0 %v2128
  %2426 = vmatprep.subr.bf16.mxu0 %v2121
  %2427 = vmatpush2.bf16.msra.mxu0 %v2120
  %2428 = vmatprep.subr.bf16.mxu0 %v2113
  %2429 = vmatpush2.bf16.msra.mxu0 %v2112
  %2430 = vmatprep.subr.bf16.mxu0 %v2105
  %2431 = vmatpush2.bf16.msra.mxu0 %v2104
  %2432 = vmatprep.subr.bf16.mxu0 %v2097
  %2433 = vmatpush2.bf16.msra.mxu0 %v2096
  %2434 = vmatprep.subr.bf16.mxu0 %v2089
  %2435 = vmatpush2.bf16.msra.mxu0 %v2088
  %2436 = vmatprep.subr.bf16.mxu0 %v2081
  %2437 = vmatpush2.bf16.msra.mxu0 %v2080
  %2438 = vmatprep.subr.bf16.mxu0 %v2073
  %2439 = vmatpush2.bf16.msra.mxu0 %v2072
  %2440 = vmatprep.mubr.bf16.mxu0 %v43
  %2441 = vmatmul.mubr.bf16.gmra.mxu0 %v42
  %v2442 = vpop.f32.mrf.mxu0
  %v2443 = vadd.f32 %v1521, %v2442
  %v2444 = vpop.f32.mrf.mxu0
  %v2445 = vadd.f32 %v1525, %v2444
  %v2446 = vpop.f32.mrf.mxu0
  %v2447 = vpop.f32.mrf.mxu0
  %2448 = vdwg.mxu0
  %2449 = vmatprep.subr.bf16.mxu0 0
  %2450 = vmatpush1.bf16.msra.mxu0 0
  %2451 = vmatprep.subr.bf16.mxu0 0
  %2452 = vmatpush1.bf16.msra.mxu0 0
  %2453 = vmatprep.subr.bf16.mxu0 0
  %2454 = vmatpush1.bf16.msra.mxu0 0
  %2455 = vmatprep.subr.bf16.mxu0 0
  %2456 = vmatpush1.bf16.msra.mxu0 0
  %2457 = vmatprep.subr.bf16.mxu0 0
  %2458 = vmatpush1.bf16.msra.mxu0 0
  %2459 = vmatprep.subr.bf16.mxu0 %v2312
  %2460 = vmatpush1.bf16.msra.mxu0 %v2309
  %2461 = vmatprep.subr.bf16.mxu0 %v2145
  %2462 = vmatpush1.bf16.msra.mxu0 %v2144
  %2463 = vmatprep.subr.bf16.mxu0 %v2137
  %2464 = vmatpush1.bf16.msra.mxu0 %v2136
  %2465 = vmatprep.subr.bf16.mxu0 0
  %2466 = vmatpush2.bf16.msra.mxu0 0
  %2467 = vmatprep.subr.bf16.mxu0 0
  %2468 = vmatpush2.bf16.msra.mxu0 0
  %2469 = vmatprep.subr.bf16.mxu0 0
  %2470 = vmatpush2.bf16.msra.mxu0 0
  %2471 = vmatprep.subr.bf16.mxu0 0
  %2472 = vmatpush2.bf16.msra.mxu0 0
  %2473 = vmatprep.subr.bf16.mxu0 0
  %2474 = vmatpush2.bf16.msra.mxu0 0
  %2475 = vmatprep.subr.bf16.mxu0 0
  %2476 = vmatpush2.bf16.msra.mxu0 0
  %2477 = vmatprep.subr.bf16.mxu0 0
  %2478 = vmatpush2.bf16.msra.mxu0 0
  %2479 = vmatprep.subr.bf16.mxu0 0
  %2480 = vmatpush2.bf16.msra.mxu0 0
  %2481 = vmatprep.mubr.bf16.mxu0 0
  %2482 = vmatmul.mubr.bf16.gmra.mxu0 %v993
  %v2483 = vpop.f32.mrf.mxu0
  %v2484 = vadd.f32 %v2443, %v2483
  %v2485 = vpop.f32.mrf.mxu0
  %v2486 = vadd.f32 %v2445, %v2485
  %v2487 = vpop.f32.mrf.mxu0
  %v2488 = vpop.f32.mrf.mxu0
  %2489 = vdwg.mxu0
  %2490 = vmatprep.subr.bf16.mxu0 %v2067
  %2491 = vmatpush1.bf16.msra.mxu0 %v2066
  %2492 = vmatprep.subr.bf16.mxu0 %v2059
  %2493 = vmatpush1.bf16.msra.mxu0 %v2058
  %2494 = vmatprep.subr.bf16.mxu0 %v2051
  %2495 = vmatpush1.bf16.msra.mxu0 %v2050
  %2496 = vmatprep.subr.bf16.mxu0 %v2043
  %2497 = vmatpush1.bf16.msra.mxu0 %v2042
  %2498 = vmatprep.subr.bf16.mxu0 %v2035
  %2499 = vmatpush1.bf16.msra.mxu0 %v2034
  %2500 = vmatprep.subr.bf16.mxu0 %v2027
  %2501 = vmatpush1.bf16.msra.mxu0 %v2026
  %2502 = vmatprep.subr.bf16.mxu0 %v2019
  %2503 = vmatpush1.bf16.msra.mxu0 %v2018
  %2504 = vmatprep.subr.bf16.mxu0 %v2011
  %2505 = vmatpush1.bf16.msra.mxu0 %v2010
  %2506 = vmatprep.subr.bf16.mxu0 %v2131
  %2507 = vmatpush2.bf16.msra.mxu0 %v2130
  %2508 = vmatprep.subr.bf16.mxu0 %v2123
  %2509 = vmatpush2.bf16.msra.mxu0 %v2122
  %2510 = vmatprep.subr.bf16.mxu0 %v2115
  %2511 = vmatpush2.bf16.msra.mxu0 %v2114
  %2512 = vmatprep.subr.bf16.mxu0 %v2107
  %2513 = vmatpush2.bf16.msra.mxu0 %v2106
  %2514 = vmatprep.subr.bf16.mxu0 %v2099
  %2515 = vmatpush2.bf16.msra.mxu0 %v2098
  %2516 = vmatprep.subr.bf16.mxu0 %v2091
  %2517 = vmatpush2.bf16.msra.mxu0 %v2090
  %2518 = vmatprep.subr.bf16.mxu0 %v2083
  %2519 = vmatpush2.bf16.msra.mxu0 %v2082
  %2520 = vmatprep.subr.bf16.mxu0 %v2075
  %2521 = vmatpush2.bf16.msra.mxu0 %v2074
  %2522 = vmatprep.mubr.bf16.mxu0 %v43
  %2523 = vmatmul.mubr.bf16.gmra.mxu0 %v42
  %v2524 = vpop.f32.mrf.mxu0
  %v2525 = vadd.f32 %v1529, %v2524
  %v2526 = vpop.f32.mrf.mxu0
  %v2527 = vadd.f32 %v1533, %v2526
  %v2528 = vpop.f32.mrf.mxu0
  %v2529 = vpop.f32.mrf.mxu0
  %2530 = vdwg.mxu0
  %2531 = vmatprep.subr.bf16.mxu0 0
  %2532 = vmatpush1.bf16.msra.mxu0 0
  %2533 = vmatprep.subr.bf16.mxu0 0
  %2534 = vmatpush1.bf16.msra.mxu0 0
  %2535 = vmatprep.subr.bf16.mxu0 0
  %2536 = vmatpush1.bf16.msra.mxu0 0
  %2537 = vmatprep.subr.bf16.mxu0 0
  %2538 = vmatpush1.bf16.msra.mxu0 0
  %2539 = vmatprep.subr.bf16.mxu0 0
  %2540 = vmatpush1.bf16.msra.mxu0 0
  %2541 = vmatprep.subr.bf16.mxu0 %v2318
  %2542 = vmatpush1.bf16.msra.mxu0 %v2315
  %2543 = vmatprep.subr.bf16.mxu0 %v2147
  %2544 = vmatpush1.bf16.msra.mxu0 %v2146
  %2545 = vmatprep.subr.bf16.mxu0 %v2139
  %2546 = vmatpush1.bf16.msra.mxu0 %v2138
  %2547 = vmatprep.subr.bf16.mxu0 0
  %2548 = vmatpush2.bf16.msra.mxu0 0
  %2549 = vmatprep.subr.bf16.mxu0 0
  %2550 = vmatpush2.bf16.msra.mxu0 0
  %2551 = vmatprep.subr.bf16.mxu0 0
  %2552 = vmatpush2.bf16.msra.mxu0 0
  %2553 = vmatprep.subr.bf16.mxu0 0
  %2554 = vmatpush2.bf16.msra.mxu0 0
  %2555 = vmatprep.subr.bf16.mxu0 0
  %2556 = vmatpush2.bf16.msra.mxu0 0
  %2557 = vmatprep.subr.bf16.mxu0 0
  %2558 = vmatpush2.bf16.msra.mxu0 0
  %2559 = vmatprep.subr.bf16.mxu0 0
  %2560 = vmatpush2.bf16.msra.mxu0 0
  %2561 = vmatprep.subr.bf16.mxu0 0
  %2562 = vmatpush2.bf16.msra.mxu0 0
  %2563 = vmatprep.mubr.bf16.mxu0 0
  %2564 = vmatmul.mubr.bf16.gmra.mxu0 %v993
  %v2565 = vpop.f32.mrf.mxu0
  %v2566 = vadd.f32 %v2525, %v2565
  %v2567 = vpop.f32.mrf.mxu0
  %v2568 = vadd.f32 %v2527, %v2567
  %v2569 = vpop.f32.mrf.mxu0
  %v2570 = vpop.f32.mrf.mxu0
  %2571 = vdwg.mxu0
  %2572 = vmatprep.subr.bf16.mxu0 %v2069
  %2573 = vmatpush1.bf16.msra.mxu0 %v2068
  %2574 = vmatprep.subr.bf16.mxu0 %v2061
  %2575 = vmatpush1.bf16.msra.mxu0 %v2060
  %2576 = vmatprep.subr.bf16.mxu0 %v2053
  %2577 = vmatpush1.bf16.msra.mxu0 %v2052
  %2578 = vmatprep.subr.bf16.mxu0 %v2045
  %2579 = vmatpush1.bf16.msra.mxu0 %v2044
  %2580 = vmatprep.subr.bf16.mxu0 %v2037
  %2581 = vmatpush1.bf16.msra.mxu0 %v2036
  %2582 = vmatprep.subr.bf16.mxu0 %v2029
  %2583 = vmatpush1.bf16.msra.mxu0 %v2028
  %2584 = vmatprep.subr.bf16.mxu0 %v2021
  %2585 = vmatpush1.bf16.msra.mxu0 %v2020
  %2586 = vmatprep.subr.bf16.mxu0 %v2013
  %2587 = vmatpush1.bf16.msra.mxu0 %v2012
  %2588 = vmatprep.subr.bf16.mxu0 %v2133
  %2589 = vmatpush2.bf16.msra.mxu0 %v2132
  %2590 = vmatprep.subr.bf16.mxu0 %v2125
  %2591 = vmatpush2.bf16.msra.mxu0 %v2124
  %2592 = vmatprep.subr.bf16.mxu0 %v2117
  %2593 = vmatpush2.bf16.msra.mxu0 %v2116
  %2594 = vmatprep.subr.bf16.mxu0 %v2109
  %2595 = vmatpush2.bf16.msra.mxu0 %v2108
  %2596 = vmatprep.subr.bf16.mxu0 %v2101
  %2597 = vmatpush2.bf16.msra.mxu0 %v2100
  %2598 = vmatprep.subr.bf16.mxu0 %v2093
  %2599 = vmatpush2.bf16.msra.mxu0 %v2092
  %2600 = vmatprep.subr.bf16.mxu0 %v2085
  %2601 = vmatpush2.bf16.msra.mxu0 %v2084
  %2602 = vmatprep.subr.bf16.mxu0 %v2077
  %2603 = vmatpush2.bf16.msra.mxu0 %v2076
  %2604 = vmatprep.mubr.bf16.mxu0 %v43
  %2605 = vmatmul.mubr.bf16.gmra.mxu0 %v42
  %v2606 = vpop.f32.mrf.mxu0
  %v2607 = vadd.f32 %v1537, %v2606
  %v2608 = vpop.f32.mrf.mxu0
  %v2609 = vadd.f32 %v1541, %v2608
  %v2610 = vpop.f32.mrf.mxu0
  %v2611 = vpop.f32.mrf.mxu0
  %2612 = vdwg.mxu0
  %2613 = vmatprep.subr.bf16.mxu0 0
  %2614 = vmatpush1.bf16.msra.mxu0 0
  %2615 = vmatprep.subr.bf16.mxu0 0
  %2616 = vmatpush1.bf16.msra.mxu0 0
  %2617 = vmatprep.subr.bf16.mxu0 0
  %2618 = vmatpush1.bf16.msra.mxu0 0
  %2619 = vmatprep.subr.bf16.mxu0 0
  %2620 = vmatpush1.bf16.msra.mxu0 0
  %2621 = vmatprep.subr.bf16.mxu0 0
  %2622 = vmatpush1.bf16.msra.mxu0 0
  %2623 = vmatprep.subr.bf16.mxu0 %v2324
  %2624 = vmatpush1.bf16.msra.mxu0 %v2321
  %2625 = vmatprep.subr.bf16.mxu0 %v2149
  %2626 = vmatpush1.bf16.msra.mxu0 %v2148
  %2627 = vmatprep.subr.bf16.mxu0 %v2141
  %2628 = vmatpush1.bf16.msra.mxu0 %v2140
  %2629 = vmatprep.subr.bf16.mxu0 0
  %2630 = vmatpush2.bf16.msra.mxu0 0
  %2631 = vmatprep.subr.bf16.mxu0 0
  %2632 = vmatpush2.bf16.msra.mxu0 0
  %2633 = vmatprep.subr.bf16.mxu0 0
  %2634 = vmatpush2.bf16.msra.mxu0 0
  %2635 = vmatprep.subr.bf16.mxu0 0
  %2636 = vmatpush2.bf16.msra.mxu0 0
  %2637 = vmatprep.subr.bf16.mxu0 0
  %2638 = vmatpush2.bf16.msra.mxu0 0
  %2639 = vmatprep.subr.bf16.mxu0 0
  %2640 = vmatpush2.bf16.msra.mxu0 0
  %2641 = vmatprep.subr.bf16.mxu0 0
  %2642 = vmatpush2.bf16.msra.mxu0 0
  %2643 = vmatprep.subr.bf16.mxu0 0
  %2644 = vmatpush2.bf16.msra.mxu0 0
  %2645 = vmatprep.mubr.bf16.mxu0 0
  %2646 = vmatmul.mubr.bf16.gmra.mxu0 %v993
  %v2647 = vpop.f32.mrf.mxu0
  %v2648 = vadd.f32 %v2607, %v2647
  %v2649 = vpop.f32.mrf.mxu0
  %v2650 = vadd.f32 %v2609, %v2649
  %v2651 = vpop.f32.mrf.mxu0
  %v2652 = vpop.f32.mrf.mxu0
  %2653 = vdwg.mxu0
  %2654 = vst [vmem:[#allocation3] sm:$0xff] %v2402
  %2655 = vst [vmem:[#allocation3 + $0x8] sm:$0xff] %v2404
  %2656 = vst [vmem:[#allocation3 + $0x10] sm:$0xff] %v2484
  %2657 = vst [vmem:[#allocation3 + $0x18] sm:$0xff] %v2486
  %2658 = vst [vmem:[#allocation3 + $0x20] sm:$0xff] %v2566
  %2659 = vst [vmem:[#allocation3 + $0x28] sm:$0xff] %v2568
  %2660 = vst [vmem:[#allocation3 + $0x30] sm:$0xff] %v2648
  %2661 = vst [vmem:[#allocation3 + $0x38] sm:$0xff] %v2650
  %v2662 = vld [vmem:[%s2] sm:$0xff]
  %v2663 = vld [vmem:[%s2 + $0x8] sm:$0xff]
  %v2664 = vld [vmem:[%s2 + $0x10] sm:$0xff]
  %v2665 = vld [vmem:[%s2 + $0x18] sm:$0xff]
  %v2666 = vld [vmem:[%s2 + $0x20] sm:$0xff]
  %v2667 = vld [vmem:[%s2 + $0x28] sm:$0xff]
  %v2668 = vld [vmem:[%s2 + $0x30] sm:$0xff]
  %v2669 = vld [vmem:[%s2 + $0x38] sm:$0xff]
  %v2670 = vld [vmem:[%s2 + $0x40] sm:$0xff]
  %v2671 = vld [vmem:[%s2 + $0x48] sm:$0xff]
  %v2672 = vld [vmem:[%s2 + $0x50] sm:$0xff]
  %v2673 = vld [vmem:[%s2 + $0x58] sm:$0xff]
  %v2674 = vld [vmem:[%s2 + $0x60] sm:$0xff]
  %v2675 = vld [vmem:[%s2 + $0x68] sm:$0xff]
  %v2676 = vld [vmem:[%s2 + $0x70] sm:$0xff]
  %v2677 = vld [vmem:[%s2 + $0x78] sm:$0xff]
  %v2678 = vld [vmem:[%s2 + $0x80] sm:$0xff]
  %v2679 = vld [vmem:[%s2 + $0x88] sm:$0xff]
  %v2680 = vld [vmem:[%s2 + $0x90] sm:$0xff]
  %v2681 = vld [vmem:[%s2 + $0x98] sm:$0xff]
  %v2682 = vld [vmem:[%s2 + $0xa0] sm:$0xff]
  %v2683 = vld [vmem:[%s2 + $0xa8] sm:$0xff]
  %v2684 = vld [vmem:[%s2 + $0xb0] sm:$0xff]
  %v2685 = vld [vmem:[%s2 + $0xb8] sm:$0xff]
  %v2686 = vld [vmem:[%s2 + $0xc0] sm:$0xff]
  %v2687 = vld [vmem:[%s2 + $0xc8] sm:$0xff]
  %v2688 = vld [vmem:[%s2 + $0xd0] sm:$0xff]
  %v2689 = vld [vmem:[%s2 + $0xd8] sm:$0xff]
  %v2690 = vld [vmem:[%s2 + $0xe0] sm:$0xff]
  %v2691 = vld [vmem:[%s2 + $0xe8] sm:$0xff]
  %v2692 = vld [vmem:[%s2 + $0xf0] sm:$0xff]
  %v2693 = vld [vmem:[%s2 + $0xf8] sm:$0xff]
  %v2694 = vld [vmem:[%s2 + $0x100] sm:$0xff]
  %v2695 = vld [vmem:[%s2 + $0x108] sm:$0xff]
  %v2696 = vld [vmem:[%s2 + $0x110] sm:$0xff]
  %v2697 = vld [vmem:[%s2 + $0x118] sm:$0xff]
  %v2698 = vld [vmem:[%s2 + $0x120] sm:$0xff]
  %v2699 = vld [vmem:[%s2 + $0x128] sm:$0xff]
  %v2700 = vld [vmem:[%s2 + $0x130] sm:$0xff]
  %v2701 = vld [vmem:[%s2 + $0x138] sm:$0xff]
  %v2702 = vld [vmem:[%s2 + $0x140] sm:$0xff]
  %v2703 = vld [vmem:[%s2 + $0x148] sm:$0xff]
  %v2704 = vld [vmem:[%s2 + $0x150] sm:$0xff]
  %v2705 = vld [vmem:[%s2 + $0x158] sm:$0xff]
  %v2706 = vld [vmem:[%s2 + $0x160] sm:$0xff]
  %v2707 = vld [vmem:[%s2 + $0x168] sm:$0xff]
  %v2708 = vld [vmem:[%s2 + $0x170] sm:$0xff]
  %v2709 = vld [vmem:[%s2 + $0x178] sm:$0xff]
  %v2710 = vld [vmem:[%s2 + $0x180] sm:$0xff]
  %v2711 = vld [vmem:[%s2 + $0x188] sm:$0xff]
  %v2712 = vld [vmem:[%s2 + $0x190] sm:$0xff]
  %v2713 = vld [vmem:[%s2 + $0x198] sm:$0xff]
  %v2714 = vld [vmem:[%s2 + $0x1a0] sm:$0xff]
  %v2715 = vld [vmem:[%s2 + $0x1a8] sm:$0xff]
  %v2716 = vld [vmem:[%s2 + $0x1b0] sm:$0xff]
  %v2717 = vld [vmem:[%s2 + $0x1b8] sm:$0xff]
  %v2718 = vld [vmem:[%s2 + $0x1c0] sm:$0xff]
  %v2719 = vld [vmem:[%s2 + $0x1c8] sm:$0xff]
  %v2720 = vld [vmem:[%s2 + $0x1d0] sm:$0xff]
  %v2721 = vld [vmem:[%s2 + $0x1d8] sm:$0xff]
  %v2722 = vld [vmem:[%s2 + $0x1e0] sm:$0xff]
  %v2723 = vld [vmem:[%s2 + $0x1e8] sm:$0xff]
  %v2724 = vld [vmem:[%s2 + $0x1f0] sm:$0xff]
  %v2725 = vld [vmem:[%s2 + $0x1f8] sm:$0xff]
  %v2726 = vld [vmem:[%s2 + $0x200] sm:$0xff]
  %v2727 = vld [vmem:[%s2 + $0x208] sm:$0xff]
  %v2728 = vld [vmem:[%s2 + $0x210] sm:$0xff]
  %v2729 = vld [vmem:[%s2 + $0x218] sm:$0xff]
  %v2730 = vld [vmem:[%s2 + $0x220] sm:$0xff]
  %v2731 = vld [vmem:[%s2 + $0x228] sm:$0xff]
  %v2732 = vld [vmem:[%s2 + $0x230] sm:$0xff]
  %v2733 = vld [vmem:[%s2 + $0x238] sm:$0xff]
  %v2734 = vld [vmem:[%s2 + $0x240] sm:$0xff]
  %v2735 = vld [vmem:[%s2 + $0x248] sm:$0xff]
  %v2736 = vld [vmem:[%s2 + $0x250] sm:$0xff]
  %v2737 = vld [vmem:[%s2 + $0x258] sm:$0xff]
  %v2738 = vld [vmem:[%s2 + $0x260] sm:$0xff]
  %v2739 = vld [vmem:[%s2 + $0x268] sm:$0xff]
  %v2740 = vld [vmem:[%s2 + $0x270] sm:$0xff]
  %v2741 = vld [vmem:[%s2 + $0x278] sm:$0xff]
  %v2742 = vld [vmem:[%s2 + $0x280] sm:$0xff]
  %v2743 = vld [vmem:[%s2 + $0x288] sm:$0xff]
  %v2744 = vld [vmem:[%s2 + $0x290] sm:$0xff]
  %v2745 = vld [vmem:[%s2 + $0x298] sm:$0xff]
  %v2746 = vld [vmem:[%s2 + $0x2a0] sm:$0xff]
  %v2747 = vld [vmem:[%s2 + $0x2a8] sm:$0xff]
  %v2748 = vld [vmem:[%s2 + $0x2b0] sm:$0xff]
  %v2749 = vld [vmem:[%s2 + $0x2b8] sm:$0xff]
  %v2750 = vld [vmem:[%s2 + $0x2c0] sm:$0xff]
  %v2751 = vld [vmem:[%s2 + $0x2c8] sm:$0xff]
  %v2752 = vld [vmem:[%s2 + $0x2d0] sm:$0xff]
  %v2753 = vld [vmem:[%s2 + $0x2d8] sm:$0xff]
  %v2754 = vld [vmem:[%s2 + $0x2e0] sm:$0xff]
  %v2755 = vld [vmem:[%s2 + $0x2e8] sm:$0xff]
  %v2756 = vld [vmem:[%s2 + $0x2f0] sm:$0xff]
  %v2757 = vld [vmem:[%s2 + $0x2f8] sm:$0xff]
  %v2758 = vld [vmem:[%s2 + $0x300] sm:$0xff]
  %v2759 = vld [vmem:[%s2 + $0x308] sm:$0xff]
  %v2760 = vld [vmem:[%s2 + $0x310] sm:$0xff]
  %v2761 = vld [vmem:[%s2 + $0x318] sm:$0xff]
  %v2762 = vld [vmem:[%s2 + $0x320] sm:$0xff]
  %v2763 = vld [vmem:[%s2 + $0x328] sm:$0xff]
  %v2764 = vld [vmem:[%s2 + $0x330] sm:$0xff]
  %v2765 = vld [vmem:[%s2 + $0x338] sm:$0xff]
  %v2766 = vld [vmem:[%s2 + $0x340] sm:$0xff]
  %v2767 = vld [vmem:[%s2 + $0x348] sm:$0xff]
  %v2768 = vld [vmem:[%s2 + $0x350] sm:$0xff]
  %v2769 = vld [vmem:[%s2 + $0x358] sm:$0xff]
  %v2770 = vld [vmem:[%s2 + $0x360] sm:$0xff]
  %v2771 = vld [vmem:[%s2 + $0x368] sm:$0xff]
  %v2772 = vld [vmem:[%s2 + $0x370] sm:$0xff]
  %v2773 = vld [vmem:[%s2 + $0x378] sm:$0xff]
  %v2774 = vld [vmem:[%s2 + $0x380] sm:$0xff]
  %v2775 = vld [vmem:[%s2 + $0x388] sm:$0xff]
  %v2776 = vld [vmem:[%s2 + $0x390] sm:$0xff]
  %v2777 = vld [vmem:[%s2 + $0x398] sm:$0xff]
  %v2778 = vld [vmem:[%s2 + $0x3a0] sm:$0xff]
  %v2779 = vld [vmem:[%s2 + $0x3a8] sm:$0xff]
  %v2780 = vld [vmem:[%s2 + $0x3b0] sm:$0xff]
  %v2781 = vld [vmem:[%s2 + $0x3b8] sm:$0xff]
  %v2782 = vld [vmem:[%s2 + $0x3c0] sm:$0xff]
  %v2783 = vld [vmem:[%s2 + $0x3c8] sm:$0xff]
  %v2784 = vld [vmem:[%s2 + $0x3d0] sm:$0xff]
  %v2785 = vld [vmem:[%s2 + $0x3d8] sm:$0xff]
  %v2786 = vld [vmem:[%s2 + $0x3e0] sm:$0xff]
  %v2787 = vld [vmem:[%s2 + $0x3e8] sm:$0xff]
  %v2788 = vld [vmem:[%s2 + $0x3f0] sm:$0xff]
  %v2789 = vld [vmem:[%s2 + $0x3f8] sm:$0xff]
  %v2790 = vld [vmem:[%s5] sm:$0xff]
  %v2791 = vld [vmem:[%s5 + $0x8] sm:$0xff]
  %v2792 = vld [vmem:[%s5 + $0x10] sm:$0xff]
  %v2793 = vld [vmem:[%s5 + $0x18] sm:$0xff]
  %v2794 = vld [vmem:[%s5 + $0x20] sm:$0xff]
  %v2795 = vld [vmem:[%s5 + $0x28] sm:$0xff]
  %v2796 = vld [vmem:[%s5 + $0x30] sm:$0xff]
  %v2797 = vld [vmem:[%s5 + $0x38] sm:$0xff]
  %v2798 = vld [vmem:[%s5 + $0x40] sm:$0xff]
  %v2799 = vld [vmem:[%s5 + $0x48] sm:$0xff]
  %v2800 = vld [vmem:[%s5 + $0x50] sm:$0xff]
  %v2801 = vld [vmem:[%s5 + $0x58] sm:$0xff]
  %v2802 = vld [vmem:[%s5 + $0x60] sm:$0xff]
  %v2803 = vld [vmem:[%s5 + $0x68] sm:$0xff]
  %v2804 = vld [vmem:[%s5 + $0x70] sm:$0xff]
  %v2805 = vld [vmem:[%s5 + $0x78] sm:$0xff]
  %v2806 = vld [vmem:[%s5 + $0x80] sm:$0xff]
  %v2807 = vld [vmem:[%s5 + $0x88] sm:$0xff]
  %v2808 = vld [vmem:[%s5 + $0x90] sm:$0xff]
  %v2809 = vld [vmem:[%s5 + $0x98] sm:$0xff]
  %v2810 = vld [vmem:[%s5 + $0xa0] sm:$0xff]
  %v2811 = vld [vmem:[%s5 + $0xa8] sm:$0xff]
  %v2812 = vld [vmem:[%s5 + $0xb0] sm:$0xff]
  %v2813 = vld [vmem:[%s5 + $0xb8] sm:$0xff]
  %v2814 = vld [vmem:[%s5 + $0xc0] sm:$0xff]
  %v2815 = vld [vmem:[%s5 + $0xc8] sm:$0xff]
  %v2816 = vld [vmem:[%s5 + $0xd0] sm:$0xff]
  %v2817 = vld [vmem:[%s5 + $0xd8] sm:$0xff]
  %v2818 = vld [vmem:[%s5 + $0xe0] sm:$0xff]
  %v2819 = vld [vmem:[%s5 + $0xe8] sm:$0xff]
  %v2820 = vld [vmem:[%s5 + $0xf0] sm:$0xff]
  %v2821 = vld [vmem:[%s5 + $0xf8] sm:$0xff]
  %v2822 = vld [vmem:[%s5 + $0x100] sm:$0xff]
  %v2823 = vld [vmem:[%s5 + $0x108] sm:$0xff]
  %v2824 = vld [vmem:[%s5 + $0x110] sm:$0xff]
  %v2825 = vld [vmem:[%s5 + $0x118] sm:$0xff]
  %v2826 = vld [vmem:[%s5 + $0x120] sm:$0xff]
  %v2827 = vld [vmem:[%s5 + $0x128] sm:$0xff]
  %v2828 = vld [vmem:[%s5 + $0x130] sm:$0xff]
  %v2829 = vld [vmem:[%s5 + $0x138] sm:$0xff]
  %v2830 = vld [vmem:[%s5 + $0x140] sm:$0xff]
  %v2831 = vld [vmem:[%s5 + $0x148] sm:$0xff]
  %v2832 = vld [vmem:[%s5 + $0x150] sm:$0xff]
  %v2833 = vld [vmem:[%s5 + $0x158] sm:$0xff]
  %v2834 = vld [vmem:[%s5 + $0x160] sm:$0xff]
  %v2835 = vld [vmem:[%s5 + $0x168] sm:$0xff]
  %v2836 = vld [vmem:[%s5 + $0x170] sm:$0xff]
  %v2837 = vld [vmem:[%s5 + $0x178] sm:$0xff]
  %v2838 = vld [vmem:[%s5 + $0x180] sm:$0xff]
  %v2839 = vld [vmem:[%s5 + $0x188] sm:$0xff]
  %v2840 = vld [vmem:[%s5 + $0x190] sm:$0xff]
  %v2841 = vld [vmem:[%s5 + $0x198] sm:$0xff]
  %v2842 = vld [vmem:[%s5 + $0x1a0] sm:$0xff]
  %v2843 = vld [vmem:[%s5 + $0x1a8] sm:$0xff]
  %v2844 = vld [vmem:[%s5 + $0x1b0] sm:$0xff]
  %v2845 = vld [vmem:[%s5 + $0x1b8] sm:$0xff]
  %v2846 = vld [vmem:[%s5 + $0x1c0] sm:$0xff]
  %v2847 = vld [vmem:[%s5 + $0x1c8] sm:$0xff]
  %v2848 = vld [vmem:[%s5 + $0x1d0] sm:$0xff]
  %v2849 = vld [vmem:[%s5 + $0x1d8] sm:$0xff]
  %v2850 = vld [vmem:[%s5 + $0x1e0] sm:$0xff]
  %v2851 = vld [vmem:[%s5 + $0x1e8] sm:$0xff]
  %v2852 = vld [vmem:[%s5 + $0x1f0] sm:$0xff]
  %v2853 = vld [vmem:[%s5 + $0x1f8] sm:$0xff]
  %v2854 = vld [vmem:[%s5 + $0x200] sm:$0xff]
  %v2855 = vld [vmem:[%s5 + $0x208] sm:$0xff]
  %v2856 = vld [vmem:[%s5 + $0x210] sm:$0xff]
  %v2857 = vld [vmem:[%s5 + $0x218] sm:$0xff]
  %v2858 = vld [vmem:[%s5 + $0x220] sm:$0xff]
  %v2859 = vld [vmem:[%s5 + $0x228] sm:$0xff]
  %v2860 = vld [vmem:[%s5 + $0x230] sm:$0xff]
  %v2861 = vld [vmem:[%s5 + $0x238] sm:$0xff]
  %v2862 = vld [vmem:[%s5 + $0x240] sm:$0xff]
  %v2863 = vld [vmem:[%s5 + $0x248] sm:$0xff]
  %v2864 = vld [vmem:[%s5 + $0x250] sm:$0xff]
  %v2865 = vld [vmem:[%s5 + $0x258] sm:$0xff]
  %v2866 = vld [vmem:[%s5 + $0x260] sm:$0xff]
  %v2867 = vld [vmem:[%s5 + $0x268] sm:$0xff]
  %v2868 = vld [vmem:[%s5 + $0x270] sm:$0xff]
  %v2869 = vld [vmem:[%s5 + $0x278] sm:$0xff]
  %v2870 = vld [vmem:[%s5 + $0x280] sm:$0xff]
  %v2871 = vld [vmem:[%s5 + $0x288] sm:$0xff]
  %v2872 = vld [vmem:[%s5 + $0x290] sm:$0xff]
  %v2873 = vld [vmem:[%s5 + $0x298] sm:$0xff]
  %v2874 = vld [vmem:[%s5 + $0x2a0] sm:$0xff]
  %v2875 = vld [vmem:[%s5 + $0x2a8] sm:$0xff]
  %v2876 = vld [vmem:[%s5 + $0x2b0] sm:$0xff]
  %v2877 = vld [vmem:[%s5 + $0x2b8] sm:$0xff]
  %v2878 = vld [vmem:[%s5 + $0x2c0] sm:$0xff]
  %v2879 = vld [vmem:[%s5 + $0x2c8] sm:$0xff]
  %v2880 = vld [vmem:[%s5 + $0x2d0] sm:$0xff]
  %v2881 = vld [vmem:[%s5 + $0x2d8] sm:$0xff]
  %v2882 = vld [vmem:[%s5 + $0x2e0] sm:$0xff]
  %v2883 = vld [vmem:[%s5 + $0x2e8] sm:$0xff]
  %v2884 = vld [vmem:[%s5 + $0x2f0] sm:$0xff]
  %v2885 = vld [vmem:[%s5 + $0x2f8] sm:$0xff]
  %v2886 = vld [vmem:[%s5 + $0x300] sm:$0xff]
  %v2887 = vld [vmem:[%s5 + $0x308] sm:$0xff]
  %v2888 = vld [vmem:[%s5 + $0x310] sm:$0xff]
  %v2889 = vld [vmem:[%s5 + $0x318] sm:$0xff]
  %v2890 = vld [vmem:[%s5 + $0x320] sm:$0xff]
  %v2891 = vld [vmem:[%s5 + $0x328] sm:$0xff]
  %v2892 = vld [vmem:[%s5 + $0x330] sm:$0xff]
  %v2893 = vld [vmem:[%s5 + $0x338] sm:$0xff]
  %v2894 = vld [vmem:[%s5 + $0x340] sm:$0xff]
  %v2895 = vld [vmem:[%s5 + $0x348] sm:$0xff]
  %v2896 = vld [vmem:[%s5 + $0x350] sm:$0xff]
  %v2897 = vld [vmem:[%s5 + $0x358] sm:$0xff]
  %v2898 = vld [vmem:[%s5 + $0x360] sm:$0xff]
  %v2899 = vld [vmem:[%s5 + $0x368] sm:$0xff]
  %v2900 = vld [vmem:[%s5 + $0x370] sm:$0xff]
  %v2901 = vld [vmem:[%s5 + $0x378] sm:$0xff]
  %v2902 = vld [vmem:[%s5 + $0x380] sm:$0xff]
  %v2903 = vld [vmem:[%s5 + $0x388] sm:$0xff]
  %v2904 = vld [vmem:[%s5 + $0x390] sm:$0xff]
  %v2905 = vld [vmem:[%s5 + $0x398] sm:$0xff]
  %v2906 = vld [vmem:[%s5 + $0x3a0] sm:$0xff]
  %v2907 = vld [vmem:[%s5 + $0x3a8] sm:$0xff]
  %v2908 = vld [vmem:[%s5 + $0x3b0] sm:$0xff]
  %v2909 = vld [vmem:[%s5 + $0x3b8] sm:$0xff]
  %v2910 = vld [vmem:[%s5 + $0x3c0] sm:$0xff]
  %v2911 = vld [vmem:[%s5 + $0x3c8] sm:$0xff]
  %v2912 = vld [vmem:[%s5 + $0x3d0] sm:$0xff]
  %v2913 = vld [vmem:[%s5 + $0x3d8] sm:$0xff]
  %v2914 = vld [vmem:[%s5 + $0x3e0] sm:$0xff]
  %v2915 = vld [vmem:[%s5 + $0x3e8] sm:$0xff]
  %v2916 = vld [vmem:[%s5 + $0x3f0] sm:$0xff]
  %v2917 = vld [vmem:[%s5 + $0x3f8] sm:$0xff]
  %v2918 = vld [vmem:[#allocation2] ss:$8 sm:$0xf]
  %v2919 = vld [vmem:[#allocation2] ss:$8 sm:$0xf0]
  %v2920 = vor.u32 %v2918, %v2919
  %v3049 = vunpack.c.l.b16 %v2662
  %v3050 = vunpack.c.h.b16 %v2662
  %v3051 = vunpack.c.l.b16 %v2663
  %v3052 = vunpack.c.h.b16 %v2663
  %v3053 = vunpack.c.l.b16 %v2664
  %v3054 = vunpack.c.h.b16 %v2664
  %v3055 = vunpack.c.l.b16 %v2665
  %v3056 = vunpack.c.h.b16 %v2665
  %v3057 = vunpack.c.l.b16 %v2666
  %v3058 = vunpack.c.h.b16 %v2666
  %v3059 = vunpack.c.l.b16 %v2667
  %v3060 = vunpack.c.h.b16 %v2667
  %v3061 = vunpack.c.l.b16 %v2668
  %v3062 = vunpack.c.h.b16 %v2668
  %v3063 = vunpack.c.l.b16 %v2669
  %v3064 = vunpack.c.h.b16 %v2669
  %v3065 = vunpack.c.l.b16 %v2670
  %v3066 = vunpack.c.h.b16 %v2670
  %v3067 = vunpack.c.l.b16 %v2671
  %v3068 = vunpack.c.h.b16 %v2671
  %v3069 = vunpack.c.l.b16 %v2672
  %v3070 = vunpack.c.h.b16 %v2672
  %v3071 = vunpack.c.l.b16 %v2673
  %v3072 = vunpack.c.h.b16 %v2673
  %v3073 = vunpack.c.l.b16 %v2674
  %v3074 = vunpack.c.h.b16 %v2674
  %v3075 = vunpack.c.l.b16 %v2675
  %v3076 = vunpack.c.h.b16 %v2675
  %v3077 = vunpack.c.l.b16 %v2676
  %v3078 = vunpack.c.h.b16 %v2676
  %v3079 = vunpack.c.l.b16 %v2677
  %v3080 = vunpack.c.h.b16 %v2677
  %v3081 = vunpack.c.l.b16 %v2678
  %v3082 = vunpack.c.h.b16 %v2678
  %v3083 = vunpack.c.l.b16 %v2679
  %v3084 = vunpack.c.h.b16 %v2679
  %v3085 = vunpack.c.l.b16 %v2680
  %v3086 = vunpack.c.h.b16 %v2680
  %v3087 = vunpack.c.l.b16 %v2681
  %v3088 = vunpack.c.h.b16 %v2681
  %v3089 = vunpack.c.l.b16 %v2682
  %v3090 = vunpack.c.h.b16 %v2682
  %v3091 = vunpack.c.l.b16 %v2683
  %v3092 = vunpack.c.h.b16 %v2683
  %v3093 = vunpack.c.l.b16 %v2684
  %v3094 = vunpack.c.h.b16 %v2684
  %v3095 = vunpack.c.l.b16 %v2685
  %v3096 = vunpack.c.h.b16 %v2685
  %v3097 = vunpack.c.l.b16 %v2686
  %v3098 = vunpack.c.h.b16 %v2686
  %v3099 = vunpack.c.l.b16 %v2687
  %v3100 = vunpack.c.h.b16 %v2687
  %v3101 = vunpack.c.l.b16 %v2688
  %v3102 = vunpack.c.h.b16 %v2688
  %v3103 = vunpack.c.l.b16 %v2689
  %v3104 = vunpack.c.h.b16 %v2689
  %v3105 = vunpack.c.l.b16 %v2690
  %v3106 = vunpack.c.h.b16 %v2690
  %v3107 = vunpack.c.l.b16 %v2691
  %v3108 = vunpack.c.h.b16 %v2691
  %v3109 = vunpack.c.l.b16 %v2692
  %v3110 = vunpack.c.h.b16 %v2692
  %v3111 = vunpack.c.l.b16 %v2693
  %v3112 = vunpack.c.h.b16 %v2693
  %v3113 = vunpack.c.l.b16 %v2694
  %v3114 = vunpack.c.h.b16 %v2694
  %v3115 = vunpack.c.l.b16 %v2695
  %v3116 = vunpack.c.h.b16 %v2695
  %v3117 = vunpack.c.l.b16 %v2696
  %v3118 = vunpack.c.h.b16 %v2696
  %v3119 = vunpack.c.l.b16 %v2697
  %v3120 = vunpack.c.h.b16 %v2697
  %v3121 = vunpack.c.l.b16 %v2698
  %v3122 = vunpack.c.h.b16 %v2698
  %v3123 = vunpack.c.l.b16 %v2699
  %v3124 = vunpack.c.h.b16 %v2699
  %v3125 = vunpack.c.l.b16 %v2700
  %v3126 = vunpack.c.h.b16 %v2700
  %v3127 = vunpack.c.l.b16 %v2701
  %v3128 = vunpack.c.h.b16 %v2701
  %v3129 = vunpack.c.l.b16 %v2702
  %v3130 = vunpack.c.h.b16 %v2702
  %v3131 = vunpack.c.l.b16 %v2703
  %v3132 = vunpack.c.h.b16 %v2703
  %v3133 = vunpack.c.l.b16 %v2704
  %v3134 = vunpack.c.h.b16 %v2704
  %v3135 = vunpack.c.l.b16 %v2705
  %v3136 = vunpack.c.h.b16 %v2705
  %v3137 = vunpack.c.l.b16 %v2706
  %v3138 = vunpack.c.h.b16 %v2706
  %v3139 = vunpack.c.l.b16 %v2707
  %v3140 = vunpack.c.h.b16 %v2707
  %v3141 = vunpack.c.l.b16 %v2708
  %v3142 = vunpack.c.h.b16 %v2708
  %v3143 = vunpack.c.l.b16 %v2709
  %v3144 = vunpack.c.h.b16 %v2709
  %v3145 = vunpack.c.l.b16 %v2710
  %v3146 = vunpack.c.h.b16 %v2710
  %v3147 = vunpack.c.l.b16 %v2711
  %v3148 = vunpack.c.h.b16 %v2711
  %v3149 = vunpack.c.l.b16 %v2712
  %v3150 = vunpack.c.h.b16 %v2712
  %v3151 = vunpack.c.l.b16 %v2713
  %v3152 = vunpack.c.h.b16 %v2713
  %v3153 = vunpack.c.l.b16 %v2714
  %v3154 = vunpack.c.h.b16 %v2714
  %v3155 = vunpack.c.l.b16 %v2715
  %v3156 = vunpack.c.h.b16 %v2715
  %v3157 = vunpack.c.l.b16 %v2716
  %v3158 = vunpack.c.h.b16 %v2716
  %v3159 = vunpack.c.l.b16 %v2717
  %v3160 = vunpack.c.h.b16 %v2717
  %v3161 = vunpack.c.l.b16 %v2718
  %v3162 = vunpack.c.h.b16 %v2718
  %v3163 = vunpack.c.l.b16 %v2719
  %v3164 = vunpack.c.h.b16 %v2719
  %v3165 = vunpack.c.l.b16 %v2720
  %v3166 = vunpack.c.h.b16 %v2720
  %v3167 = vunpack.c.l.b16 %v2721
  %v3168 = vunpack.c.h.b16 %v2721
  %v3169 = vunpack.c.l.b16 %v2722
  %v3170 = vunpack.c.h.b16 %v2722
  %v3171 = vunpack.c.l.b16 %v2723
  %v3172 = vunpack.c.h.b16 %v2723
  %v3173 = vunpack.c.l.b16 %v2724
  %v3174 = vunpack.c.h.b16 %v2724
  %v3175 = vunpack.c.l.b16 %v2725
  %v3176 = vunpack.c.h.b16 %v2725
  %v3177 = vunpack.c.l.b16 %v2726
  %v3178 = vunpack.c.h.b16 %v2726
  %v3179 = vunpack.c.l.b16 %v2727
  %v3180 = vunpack.c.h.b16 %v2727
  %v3181 = vunpack.c.l.b16 %v2728
  %v3182 = vunpack.c.h.b16 %v2728
  %v3183 = vunpack.c.l.b16 %v2729
  %v3184 = vunpack.c.h.b16 %v2729
  %v3185 = vunpack.c.l.b16 %v2730
  %v3186 = vunpack.c.h.b16 %v2730
  %v3187 = vunpack.c.l.b16 %v2731
  %v3188 = vunpack.c.h.b16 %v2731
  %v3189 = vunpack.c.l.b16 %v2732
  %v3190 = vunpack.c.h.b16 %v2732
  %v3191 = vunpack.c.l.b16 %v2733
  %v3192 = vunpack.c.h.b16 %v2733
  %v3193 = vunpack.c.l.b16 %v2734
  %v3194 = vunpack.c.h.b16 %v2734
  %v3195 = vunpack.c.l.b16 %v2735
  %v3196 = vunpack.c.h.b16 %v2735
  %v3197 = vunpack.c.l.b16 %v2736
  %v3198 = vunpack.c.h.b16 %v2736
  %v3199 = vunpack.c.l.b16 %v2737
  %v3200 = vunpack.c.h.b16 %v2737
  %v3201 = vunpack.c.l.b16 %v2738
  %v3202 = vunpack.c.h.b16 %v2738
  %v3203 = vunpack.c.l.b16 %v2739
  %v3204 = vunpack.c.h.b16 %v2739
  %v3205 = vunpack.c.l.b16 %v2740
  %v3206 = vunpack.c.h.b16 %v2740
  %v3207 = vunpack.c.l.b16 %v2741
  %v3208 = vunpack.c.h.b16 %v2741
  %v3209 = vunpack.c.l.b16 %v2742
  %v3210 = vunpack.c.h.b16 %v2742
  %v3211 = vunpack.c.l.b16 %v2743
  %v3212 = vunpack.c.h.b16 %v2743
  %v3213 = vunpack.c.l.b16 %v2744
  %v3214 = vunpack.c.h.b16 %v2744
  %v3215 = vunpack.c.l.b16 %v2745
  %v3216 = vunpack.c.h.b16 %v2745
  %v3217 = vunpack.c.l.b16 %v2746
  %v3218 = vunpack.c.h.b16 %v2746
  %v3219 = vunpack.c.l.b16 %v2747
  %v3220 = vunpack.c.h.b16 %v2747
  %v3221 = vunpack.c.l.b16 %v2748
  %v3222 = vunpack.c.h.b16 %v2748
  %v3223 = vunpack.c.l.b16 %v2749
  %v3224 = vunpack.c.h.b16 %v2749
  %v3225 = vunpack.c.l.b16 %v2750
  %v3226 = vunpack.c.h.b16 %v2750
  %v3227 = vunpack.c.l.b16 %v2751
  %v3228 = vunpack.c.h.b16 %v2751
  %v3229 = vunpack.c.l.b16 %v2752
  %v3230 = vunpack.c.h.b16 %v2752
  %v3231 = vunpack.c.l.b16 %v2753
  %v3232 = vunpack.c.h.b16 %v2753
  %v3233 = vunpack.c.l.b16 %v2754
  %v3234 = vunpack.c.h.b16 %v2754
  %v3235 = vunpack.c.l.b16 %v2755
  %v3236 = vunpack.c.h.b16 %v2755
  %v3237 = vunpack.c.l.b16 %v2756
  %v3238 = vunpack.c.h.b16 %v2756
  %v3239 = vunpack.c.l.b16 %v2757
  %v3240 = vunpack.c.h.b16 %v2757
  %v3241 = vunpack.c.l.b16 %v2758
  %v3242 = vunpack.c.h.b16 %v2758
  %v3243 = vunpack.c.l.b16 %v2759
  %v3244 = vunpack.c.h.b16 %v2759
  %v3245 = vunpack.c.l.b16 %v2760
  %v3246 = vunpack.c.h.b16 %v2760
  %v3247 = vunpack.c.l.b16 %v2761
  %v3248 = vunpack.c.h.b16 %v2761
  %v3249 = vunpack.c.l.b16 %v2762
  %v3250 = vunpack.c.h.b16 %v2762
  %v3251 = vunpack.c.l.b16 %v2763
  %v3252 = vunpack.c.h.b16 %v2763
  %v3253 = vunpack.c.l.b16 %v2764
  %v3254 = vunpack.c.h.b16 %v2764
  %v3255 = vunpack.c.l.b16 %v2765
  %v3256 = vunpack.c.h.b16 %v2765
  %v3257 = vunpack.c.l.b16 %v2766
  %v3258 = vunpack.c.h.b16 %v2766
  %v3259 = vunpack.c.l.b16 %v2767
  %v3260 = vunpack.c.h.b16 %v2767
  %v3261 = vunpack.c.l.b16 %v2768
  %v3262 = vunpack.c.h.b16 %v2768
  %v3263 = vunpack.c.l.b16 %v2769
  %v3264 = vunpack.c.h.b16 %v2769
  %v3265 = vunpack.c.l.b16 %v2770
  %v3266 = vunpack.c.h.b16 %v2770
  %v3267 = vunpack.c.l.b16 %v2771
  %v3268 = vunpack.c.h.b16 %v2771
  %v3269 = vunpack.c.l.b16 %v2772
  %v3270 = vunpack.c.h.b16 %v2772
  %v3271 = vunpack.c.l.b16 %v2773
  %v3272 = vunpack.c.h.b16 %v2773
  %v3273 = vunpack.c.l.b16 %v2774
  %v3274 = vunpack.c.h.b16 %v2774
  %v3275 = vunpack.c.l.b16 %v2775
  %v3276 = vunpack.c.h.b16 %v2775
  %v3277 = vunpack.c.l.b16 %v2776
  %v3278 = vunpack.c.h.b16 %v2776
  %v3279 = vunpack.c.l.b16 %v2777
  %v3280 = vunpack.c.h.b16 %v2777
  %v3281 = vunpack.c.l.b16 %v2778
  %v3282 = vunpack.c.h.b16 %v2778
  %v3283 = vunpack.c.l.b16 %v2779
  %v3284 = vunpack.c.h.b16 %v2779
  %v3285 = vunpack.c.l.b16 %v2780
  %v3286 = vunpack.c.h.b16 %v2780
  %v3287 = vunpack.c.l.b16 %v2781
  %v3288 = vunpack.c.h.b16 %v2781
  %v3289 = vunpack.c.l.b16 %v2782
  %v3290 = vunpack.c.h.b16 %v2782
  %v3291 = vunpack.c.l.b16 %v2783
  %v3292 = vunpack.c.h.b16 %v2783
  %v3293 = vunpack.c.l.b16 %v2784
  %v3294 = vunpack.c.h.b16 %v2784
  %v3295 = vunpack.c.l.b16 %v2785
  %v3296 = vunpack.c.h.b16 %v2785
  %v3297 = vunpack.c.l.b16 %v2786
  %v3298 = vunpack.c.h.b16 %v2786
  %v3299 = vunpack.c.l.b16 %v2787
  %v3300 = vunpack.c.h.b16 %v2787
  %v3301 = vunpack.c.l.b16 %v2788
  %v3302 = vunpack.c.h.b16 %v2788
  %v3303 = vunpack.c.l.b16 %v2789
  %v3304 = vunpack.c.h.b16 %v2789
  %v3305 = vpack.c.b16 %v3057, %v3049
  %v3306 = vpack.c.b16 %v3058, %v3050
  %v3307 = vpack.c.b16 %v3059, %v3051
  %v3308 = vpack.c.b16 %v3060, %v3052
  %v3309 = vpack.c.b16 %v3061, %v3053
  %v3310 = vpack.c.b16 %v3062, %v3054
  %v3311 = vpack.c.b16 %v3063, %v3055
  %v3312 = vpack.c.b16 %v3064, %v3056
  %v3313 = vpack.c.b16 %v3073, %v3065
  %v3314 = vpack.c.b16 %v3074, %v3066
  %v3315 = vpack.c.b16 %v3075, %v3067
  %v3316 = vpack.c.b16 %v3076, %v3068
  %v3317 = vpack.c.b16 %v3077, %v3069
  %v3318 = vpack.c.b16 %v3078, %v3070
  %v3319 = vpack.c.b16 %v3079, %v3071
  %v3320 = vpack.c.b16 %v3080, %v3072
  %v3321 = vpack.c.b16 %v3089, %v3081
  %v3322 = vpack.c.b16 %v3090, %v3082
  %v3323 = vpack.c.b16 %v3091, %v3083
  %v3324 = vpack.c.b16 %v3092, %v3084
  %v3325 = vpack.c.b16 %v3093, %v3085
  %v3326 = vpack.c.b16 %v3094, %v3086
  %v3327 = vpack.c.b16 %v3095, %v3087
  %v3328 = vpack.c.b16 %v3096, %v3088
  %v3329 = vpack.c.b16 %v3105, %v3097
  %v3330 = vpack.c.b16 %v3106, %v3098
  %v3331 = vpack.c.b16 %v3107, %v3099
  %v3332 = vpack.c.b16 %v3108, %v3100
  %v3333 = vpack.c.b16 %v3109, %v3101
  %v3334 = vpack.c.b16 %v3110, %v3102
  %v3335 = vpack.c.b16 %v3111, %v3103
  %v3336 = vpack.c.b16 %v3112, %v3104
  %v3337 = vpack.c.b16 %v3121, %v3113
  %v3338 = vpack.c.b16 %v3122, %v3114
  %v3339 = vpack.c.b16 %v3123, %v3115
  %v3340 = vpack.c.b16 %v3124, %v3116
  %v3341 = vpack.c.b16 %v3125, %v3117
  %v3342 = vpack.c.b16 %v3126, %v3118
  %v3343 = vpack.c.b16 %v3127, %v3119
  %v3344 = vpack.c.b16 %v3128, %v3120
  %v3345 = vpack.c.b16 %v3137, %v3129
  %v3346 = vpack.c.b16 %v3138, %v3130
  %v3347 = vpack.c.b16 %v3139, %v3131
  %v3348 = vpack.c.b16 %v3140, %v3132
  %v3349 = vpack.c.b16 %v3141, %v3133
  %v3350 = vpack.c.b16 %v3142, %v3134
  %v3351 = vpack.c.b16 %v3143, %v3135
  %v3352 = vpack.c.b16 %v3144, %v3136
  %v3353 = vpack.c.b16 %v3153, %v3145
  %v3354 = vpack.c.b16 %v3154, %v3146
  %v3355 = vpack.c.b16 %v3155, %v3147
  %v3356 = vpack.c.b16 %v3156, %v3148
  %v3357 = vpack.c.b16 %v3157, %v3149
  %v3358 = vpack.c.b16 %v3158, %v3150
  %v3359 = vpack.c.b16 %v3159, %v3151
  %v3360 = vpack.c.b16 %v3160, %v3152
  %v3361 = vpack.c.b16 %v3169, %v3161
  %v3362 = vpack.c.b16 %v3170, %v3162
  %v3363 = vpack.c.b16 %v3171, %v3163
  %v3364 = vpack.c.b16 %v3172, %v3164
  %v3365 = vpack.c.b16 %v3173, %v3165
  %v3366 = vpack.c.b16 %v3174, %v3166
  %v3367 = vpack.c.b16 %v3175, %v3167
  %v3368 = vpack.c.b16 %v3176, %v3168
  %v3369 = vpack.c.b16 %v3185, %v3177
  %v3370 = vpack.c.b16 %v3186, %v3178
  %v3371 = vpack.c.b16 %v3187, %v3179
  %v3372 = vpack.c.b16 %v3188, %v3180
  %v3373 = vpack.c.b16 %v3189, %v3181
  %v3374 = vpack.c.b16 %v3190, %v3182
  %v3375 = vpack.c.b16 %v3191, %v3183
  %v3376 = vpack.c.b16 %v3192, %v3184
  %v3377 = vpack.c.b16 %v3201, %v3193
  %v3378 = vpack.c.b16 %v3202, %v3194
  %v3379 = vpack.c.b16 %v3203, %v3195
  %v3380 = vpack.c.b16 %v3204, %v3196
  %v3381 = vpack.c.b16 %v3205, %v3197
  %v3382 = vpack.c.b16 %v3206, %v3198
  %v3383 = vpack.c.b16 %v3207, %v3199
  %v3384 = vpack.c.b16 %v3208, %v3200
  %v3385 = vpack.c.b16 %v3217, %v3209
  %v3386 = vpack.c.b16 %v3218, %v3210
  %v3387 = vpack.c.b16 %v3219, %v3211
  %v3388 = vpack.c.b16 %v3220, %v3212
  %v3389 = vpack.c.b16 %v3221, %v3213
  %v3390 = vpack.c.b16 %v3222, %v3214
  %v3391 = vpack.c.b16 %v3223, %v3215
  %v3392 = vpack.c.b16 %v3224, %v3216
  %v3393 = vpack.c.b16 %v3233, %v3225
  %v3394 = vpack.c.b16 %v3234, %v3226
  %v3395 = vpack.c.b16 %v3235, %v3227
  %v3396 = vpack.c.b16 %v3236, %v3228
  %v3397 = vpack.c.b16 %v3237, %v3229
  %v3398 = vpack.c.b16 %v3238, %v3230
  %v3399 = vpack.c.b16 %v3239, %v3231
  %v3400 = vpack.c.b16 %v3240, %v3232
  %v3401 = vpack.c.b16 %v3249, %v3241
  %v3402 = vpack.c.b16 %v3250, %v3242
  %v3403 = vpack.c.b16 %v3251, %v3243
  %v3404 = vpack.c.b16 %v3252, %v3244
  %v3405 = vpack.c.b16 %v3253, %v3245
  %v3406 = vpack.c.b16 %v3254, %v3246
  %v3407 = vpack.c.b16 %v3255, %v3247
  %v3408 = vpack.c.b16 %v3256, %v3248
  %v3409 = vpack.c.b16 %v3265, %v3257
  %v3410 = vpack.c.b16 %v3266, %v3258
  %v3411 = vpack.c.b16 %v3267, %v3259
  %v3412 = vpack.c.b16 %v3268, %v3260
  %v3413 = vpack.c.b16 %v3269, %v3261
  %v3414 = vpack.c.b16 %v3270, %v3262
  %v3415 = vpack.c.b16 %v3271, %v3263
  %v3416 = vpack.c.b16 %v3272, %v3264
  %v3417 = vpack.c.b16 %v3281, %v3273
  %v3418 = vpack.c.b16 %v3282, %v3274
  %v3419 = vpack.c.b16 %v3283, %v3275
  %v3420 = vpack.c.b16 %v3284, %v3276
  %v3421 = vpack.c.b16 %v3285, %v3277
  %v3422 = vpack.c.b16 %v3286, %v3278
  %v3423 = vpack.c.b16 %v3287, %v3279
  %v3424 = vpack.c.b16 %v3288, %v3280
  %v3425 = vpack.c.b16 %v3297, %v3289
  %v3426 = vpack.c.b16 %v3298, %v3290
  %v3427 = vpack.c.b16 %v3299, %v3291
  %v3428 = vpack.c.b16 %v3300, %v3292
  %v3429 = vpack.c.b16 %v3301, %v3293
  %v3430 = vpack.c.b16 %v3302, %v3294
  %v3431 = vpack.c.b16 %v3303, %v3295
  %v3432 = vpack.c.b16 %v3304, %v3296
  %3561 = vmatprep.subr.bf16.mxu0 %v3362
  %3562 = vmatpush1.bf16.msra.mxu0 %v3361
  %3563 = vmatprep.subr.bf16.mxu0 %v3354
  %3564 = vmatpush1.bf16.msra.mxu0 %v3353
  %3565 = vmatprep.subr.bf16.mxu0 %v3346
  %3566 = vmatpush1.bf16.msra.mxu0 %v3345
  %3567 = vmatprep.subr.bf16.mxu0 %v3338
  %3568 = vmatpush1.bf16.msra.mxu0 %v3337
  %3569 = vmatprep.subr.bf16.mxu0 %v3330
  %3570 = vmatpush1.bf16.msra.mxu0 %v3329
  %3571 = vmatprep.subr.bf16.mxu0 %v3322
  %3572 = vmatpush1.bf16.msra.mxu0 %v3321
  %3573 = vmatprep.subr.bf16.mxu0 %v3314
  %3574 = vmatpush1.bf16.msra.mxu0 %v3313
  %3575 = vmatprep.subr.bf16.mxu0 %v3306
  %3576 = vmatpush1.bf16.msra.mxu0 %v3305
  %3577 = vmatprep.subr.bf16.mxu0 %v3426
  %3578 = vmatpush2.bf16.msra.mxu0 %v3425
  %3579 = vmatprep.subr.bf16.mxu0 %v3418
  %3580 = vmatpush2.bf16.msra.mxu0 %v3417
  %3581 = vmatprep.subr.bf16.mxu0 %v3410
  %3582 = vmatpush2.bf16.msra.mxu0 %v3409
  %3583 = vmatprep.subr.bf16.mxu0 %v3402
  %3584 = vmatpush2.bf16.msra.mxu0 %v3401
  %3585 = vmatprep.subr.bf16.mxu0 %v3394
  %3586 = vmatpush2.bf16.msra.mxu0 %v3393
  %3587 = vmatprep.subr.bf16.mxu0 %v3386
  %3588 = vmatpush2.bf16.msra.mxu0 %v3385
  %3589 = vmatprep.subr.bf16.mxu0 %v3378
  %3590 = vmatpush2.bf16.msra.mxu0 %v3377
  %3591 = vmatprep.subr.bf16.mxu0 %v3370
  %3592 = vmatpush2.bf16.msra.mxu0 %v3369
  %3593 = vmatprep.mubr.bf16.mxu0 0
  %3594 = vmatmul.mubr.bf16.gmra.mxu0 0
  %v3595 = vpop.f32.mrf.mxu0
  %v3596 = vadd.f32 0.0, %v3595
  %v3597 = vpop.f32.mrf.mxu0
  %v3598 = vadd.f32 0.0, %v3597
  %v3599 = vpop.f32.mrf.mxu0
  %v3600 = vpop.f32.mrf.mxu0
  %3601 = vdwg.mxu0
  %3602 = vmatprep.subr.bf16.mxu0 %v3364
  %3603 = vmatpush1.bf16.msra.mxu0 %v3363
  %3604 = vmatprep.subr.bf16.mxu0 %v3356
  %3605 = vmatpush1.bf16.msra.mxu0 %v3355
  %3606 = vmatprep.subr.bf16.mxu0 %v3348
  %3607 = vmatpush1.bf16.msra.mxu0 %v3347
  %3608 = vmatprep.subr.bf16.mxu0 %v3340
  %3609 = vmatpush1.bf16.msra.mxu0 %v3339
  %3610 = vmatprep.subr.bf16.mxu0 %v3332
  %3611 = vmatpush1.bf16.msra.mxu0 %v3331
  %3612 = vmatprep.subr.bf16.mxu0 %v3324
  %3613 = vmatpush1.bf16.msra.mxu0 %v3323
  %3614 = vmatprep.subr.bf16.mxu0 %v3316
  %3615 = vmatpush1.bf16.msra.mxu0 %v3315
  %3616 = vmatprep.subr.bf16.mxu0 %v3308
  %3617 = vmatpush1.bf16.msra.mxu0 %v3307
  %3618 = vmatprep.subr.bf16.mxu0 %v3428
  %3619 = vmatpush2.bf16.msra.mxu0 %v3427
  %3620 = vmatprep.subr.bf16.mxu0 %v3420
  %3621 = vmatpush2.bf16.msra.mxu0 %v3419
  %3622 = vmatprep.subr.bf16.mxu0 %v3412
  %3623 = vmatpush2.bf16.msra.mxu0 %v3411
  %3624 = vmatprep.subr.bf16.mxu0 %v3404
  %3625 = vmatpush2.bf16.msra.mxu0 %v3403
  %3626 = vmatprep.subr.bf16.mxu0 %v3396
  %3627 = vmatpush2.bf16.msra.mxu0 %v3395
  %3628 = vmatprep.subr.bf16.mxu0 %v3388
  %3629 = vmatpush2.bf16.msra.mxu0 %v3387
  %3630 = vmatprep.subr.bf16.mxu0 %v3380
  %3631 = vmatpush2.bf16.msra.mxu0 %v3379
  %3632 = vmatprep.subr.bf16.mxu0 %v3372
  %3633 = vmatpush2.bf16.msra.mxu0 %v3371
  %3634 = vmatprep.mubr.bf16.mxu0 0
  %3635 = vmatmul.mubr.bf16.gmra.mxu0 0
  %v3636 = vpop.f32.mrf.mxu0
  %v3637 = vadd.f32 0.0, %v3636
  %v3638 = vpop.f32.mrf.mxu0
  %v3639 = vadd.f32 0.0, %v3638
  %v3640 = vpop.f32.mrf.mxu0
  %v3641 = vpop.f32.mrf.mxu0
  %3642 = vdwg.mxu0
  %3643 = vmatprep.subr.bf16.mxu0 %v3366
  %3644 = vmatpush1.bf16.msra.mxu0 %v3365
  %3645 = vmatprep.subr.bf16.mxu0 %v3358
  %3646 = vmatpush1.bf16.msra.mxu0 %v3357
  %3647 = vmatprep.subr.bf16.mxu0 %v3350
  %3648 = vmatpush1.bf16.msra.mxu0 %v3349
  %3649 = vmatprep.subr.bf16.mxu0 %v3342
  %3650 = vmatpush1.bf16.msra.mxu0 %v3341
  %3651 = vmatprep.subr.bf16.mxu0 %v3334
  %3652 = vmatpush1.bf16.msra.mxu0 %v3333
  %3653 = vmatprep.subr.bf16.mxu0 %v3326
  %3654 = vmatpush1.bf16.msra.mxu0 %v3325
  %3655 = vmatprep.subr.bf16.mxu0 %v3318
  %3656 = vmatpush1.bf16.msra.mxu0 %v3317
  %3657 = vmatprep.subr.bf16.mxu0 %v3310
  %3658 = vmatpush1.bf16.msra.mxu0 %v3309
  %3659 = vmatprep.subr.bf16.mxu0 %v3430
  %3660 = vmatpush2.bf16.msra.mxu0 %v3429
  %3661 = vmatprep.subr.bf16.mxu0 %v3422
  %3662 = vmatpush2.bf16.msra.mxu0 %v3421
  %3663 = vmatprep.subr.bf16.mxu0 %v3414
  %3664 = vmatpush2.bf16.msra.mxu0 %v3413
  %3665 = vmatprep.subr.bf16.mxu0 %v3406
  %3666 = vmatpush2.bf16.msra.mxu0 %v3405
  %3667 = vmatprep.subr.bf16.mxu0 %v3398
  %3668 = vmatpush2.bf16.msra.mxu0 %v3397
  %3669 = vmatprep.subr.bf16.mxu0 %v3390
  %3670 = vmatpush2.bf16.msra.mxu0 %v3389
  %3671 = vmatprep.subr.bf16.mxu0 %v3382
  %3672 = vmatpush2.bf16.msra.mxu0 %v3381
  %3673 = vmatprep.subr.bf16.mxu0 %v3374
  %3674 = vmatpush2.bf16.msra.mxu0 %v3373
  %3675 = vmatprep.mubr.bf16.mxu0 0
  %3676 = vmatmul.mubr.bf16.gmra.mxu0 0
  %v3677 = vpop.f32.mrf.mxu0
  %v3678 = vadd.f32 0.0, %v3677
  %v3679 = vpop.f32.mrf.mxu0
  %v3680 = vadd.f32 0.0, %v3679
  %v3681 = vpop.f32.mrf.mxu0
  %v3682 = vpop.f32.mrf.mxu0
  %3683 = vdwg.mxu0
  %3684 = vmatprep.subr.bf16.mxu0 %v3368
  %3685 = vmatpush1.bf16.msra.mxu0 %v3367
  %3686 = vmatprep.subr.bf16.mxu0 %v3360
  %3687 = vmatpush1.bf16.msra.mxu0 %v3359
  %3688 = vmatprep.subr.bf16.mxu0 %v3352
  %3689 = vmatpush1.bf16.msra.mxu0 %v3351
  %3690 = vmatprep.subr.bf16.mxu0 %v3344
  %3691 = vmatpush1.bf16.msra.mxu0 %v3343
  %3692 = vmatprep.subr.bf16.mxu0 %v3336
  %3693 = vmatpush1.bf16.msra.mxu0 %v3335
  %3694 = vmatprep.subr.bf16.mxu0 %v3328
  %3695 = vmatpush1.bf16.msra.mxu0 %v3327
  %3696 = vmatprep.subr.bf16.mxu0 %v3320
  %3697 = vmatpush1.bf16.msra.mxu0 %v3319
  %3698 = vmatprep.subr.bf16.mxu0 %v3312
  %3699 = vmatpush1.bf16.msra.mxu0 %v3311
  %3700 = vmatprep.subr.bf16.mxu0 %v3432
  %3701 = vmatpush2.bf16.msra.mxu0 %v3431
  %3702 = vmatprep.subr.bf16.mxu0 %v3424
  %3703 = vmatpush2.bf16.msra.mxu0 %v3423
  %3704 = vmatprep.subr.bf16.mxu0 %v3416
  %3705 = vmatpush2.bf16.msra.mxu0 %v3415
  %3706 = vmatprep.subr.bf16.mxu0 %v3408
  %3707 = vmatpush2.bf16.msra.mxu0 %v3407
  %3708 = vmatprep.subr.bf16.mxu0 %v3400
  %3709 = vmatpush2.bf16.msra.mxu0 %v3399
  %3710 = vmatprep.subr.bf16.mxu0 %v3392
  %3711 = vmatpush2.bf16.msra.mxu0 %v3391
  %3712 = vmatprep.subr.bf16.mxu0 %v3384
  %3713 = vmatpush2.bf16.msra.mxu0 %v3383
  %3714 = vmatprep.subr.bf16.mxu0 %v3376
  %3715 = vmatpush2.bf16.msra.mxu0 %v3375
  %3716 = vmatprep.mubr.bf16.mxu0 0
  %3717 = vmatmul.mubr.bf16.gmra.mxu0 0
  %v3718 = vpop.f32.mrf.mxu0
  %v3719 = vadd.f32 0.0, %v3718
  %v3720 = vpop.f32.mrf.mxu0
  %v3721 = vadd.f32 0.0, %v3720
  %v3722 = vpop.f32.mrf.mxu0
  %v3723 = vpop.f32.mrf.mxu0
  %3724 = vdwg.mxu0
  %v3733 = vcombine.low %v3596, %v3598
  %v3734 = vcombine.low %v3637, %v3639
  %v3735 = vcombine.low %v3678, %v3680
  %v3736 = vcombine.low %v3719, %v3721
  %v3738 = vunpack.c.l.s4 1966171168
  %v3739 = vunpack.c.0.s8 %v3738
  %v3740 = vlaneseq
  %v3741 = vshrl.u32 %v3740, 7
  %v3742 = vsub.s32 %v3739, %v3741
  %v3743 = vrot.slane %v3733, %v3742
  %v3745 = vunpack.c.l.s4 1966171168
  %v3746 = vunpack.c.0.s8 %v3745
  %v3747 = vlaneseq
  %v3748 = vshrl.u32 %v3747, 7
  %v3749 = vsub.s32 %v3746, %v3748
  %v3750 = vrot.slane %v3734, %v3749
  %v3752 = vunpack.c.l.s4 1966171168
  %v3753 = vunpack.c.0.s8 %v3752
  %v3754 = vlaneseq
  %v3755 = vshrl.u32 %v3754, 7
  %v3756 = vsub.s32 %v3753, %v3755
  %v3757 = vrot.slane %v3735, %v3756
  %v3759 = vunpack.c.l.s4 1966171168
  %v3760 = vunpack.c.0.s8 %v3759
  %v3761 = vlaneseq
  %v3762 = vshrl.u32 %v3761, 7
  %v3763 = vsub.s32 %v3760, %v3762
  %v3764 = vrot.slane %v3736, %v3763
  %v3765 = vcombine.low %v3743, %v3750
  %v3766 = vcombine.low %v3757, %v3764
  %v3768 = vunpack.c.l.s4 1966171168
  %v3769 = vunpack.c.0.s8 %v3768
  %v3770 = vlaneseq
  %v3771 = vshrl.u32 %v3770, 7
  %v3772 = vsub.s32 %v3769, %v3771
  %v3773 = vrot.slane %v3765, %v3772
  %v3775 = vunpack.c.l.s4 1966171168
  %v3776 = vunpack.c.0.s8 %v3775
  %v3777 = vlaneseq
  %v3778 = vshrl.u32 %v3777, 7
  %v3779 = vsub.s32 %v3776, %v3778
  %v3780 = vrot.slane %v3766, %v3779
  %v3781 = vcombine.low %v3773, %v3780
  %v3783 = vadd.f32 %v2920, %v3781
  %v3784 = vxor.u32 %v3783, 2147483648
  %v3785 = vmul.f32 %v3784, 1.442695
  %v3786 = vpow.pop %v3785
  %v3787 = vadd.f32 %v3786, 1.0
  %v3788 = vrcp.pop %v3787
  %v3789 = vmul.f32 1.0, %v3788
  %v3791 = vrot.slane %v3783, 2
  %v3793 = vxor.u32 %v3791, 2147483648
  %v3794 = vmul.f32 %v3793, 1.442695
  %v3795 = vpow.pop %v3794
  %v3796 = vadd.f32 %v3795, 1.0
  %v3797 = vrcp.pop %v3796
  %v3798 = vmul.f32 1.0, %v3797
  %v3799 = vrot.slane %v3783, 4
  %v3801 = vtanh.pop %v3799
  %v3802 = vrot.slane %v3783, 6
  %v3804 = vxor.u32 %v3802, 2147483648
  %v3805 = vmul.f32 %v3804, 1.442695
  %v3806 = vpow.pop %v3805
  %v3807 = vadd.f32 %v3806, 1.0
  %v3808 = vrcp.pop %v3807
  %v3809 = vmul.f32 1.0, %v3808
  %v3810 = vmul.f32 %v3798, 0.0
  %v3811 = vmul.f32 %v3789, %v3801
  %v3812 = vadd.f32 %v3810, %v3811
  %v3813 = vtanh.pop %v3812
  %v3814 = vmul.f32 %v3809, %v3813
  %s3815 = scalar_lea.vmem [#allocation3], 7
  %v3816 = vld [vmem:[%s3815] ss:$8 sm:$0xf]
  %v3817 = vld [vmem:[%s3815] ss:$8 sm:$0xf0]
  %v3818 = vor.u32 %v3816, %v3817
  %v3947 = vunpack.c.l.b16 %v2790
  %v3948 = vunpack.c.h.b16 %v2790
  %v3949 = vunpack.c.l.b16 %v2791
  %v3950 = vunpack.c.h.b16 %v2791
  %v3951 = vunpack.c.l.b16 %v2792
  %v3952 = vunpack.c.h.b16 %v2792
  %v3953 = vunpack.c.l.b16 %v2793
  %v3954 = vunpack.c.h.b16 %v2793
  %v3955 = vunpack.c.l.b16 %v2794
  %v3956 = vunpack.c.h.b16 %v2794
  %v3957 = vunpack.c.l.b16 %v2795
  %v3958 = vunpack.c.h.b16 %v2795
  %v3959 = vunpack.c.l.b16 %v2796
  %v3960 = vunpack.c.h.b16 %v2796
  %v3961 = vunpack.c.l.b16 %v2797
  %v3962 = vunpack.c.h.b16 %v2797
  %v3963 = vunpack.c.l.b16 %v2798
  %v3964 = vunpack.c.h.b16 %v2798
  %v3965 = vunpack.c.l.b16 %v2799
  %v3966 = vunpack.c.h.b16 %v2799
  %v3967 = vunpack.c.l.b16 %v2800
  %v3968 = vunpack.c.h.b16 %v2800
  %v3969 = vunpack.c.l.b16 %v2801
  %v3970 = vunpack.c.h.b16 %v2801
  %v3971 = vunpack.c.l.b16 %v2802
  %v3972 = vunpack.c.h.b16 %v2802
  %v3973 = vunpack.c.l.b16 %v2803
  %v3974 = vunpack.c.h.b16 %v2803
  %v3975 = vunpack.c.l.b16 %v2804
  %v3976 = vunpack.c.h.b16 %v2804
  %v3977 = vunpack.c.l.b16 %v2805
  %v3978 = vunpack.c.h.b16 %v2805
  %v3979 = vunpack.c.l.b16 %v2806
  %v3980 = vunpack.c.h.b16 %v2806
  %v3981 = vunpack.c.l.b16 %v2807
  %v3982 = vunpack.c.h.b16 %v2807
  %v3983 = vunpack.c.l.b16 %v2808
  %v3984 = vunpack.c.h.b16 %v2808
  %v3985 = vunpack.c.l.b16 %v2809
  %v3986 = vunpack.c.h.b16 %v2809
  %v3987 = vunpack.c.l.b16 %v2810
  %v3988 = vunpack.c.h.b16 %v2810
  %v3989 = vunpack.c.l.b16 %v2811
  %v3990 = vunpack.c.h.b16 %v2811
  %v3991 = vunpack.c.l.b16 %v2812
  %v3992 = vunpack.c.h.b16 %v2812
  %v3993 = vunpack.c.l.b16 %v2813
  %v3994 = vunpack.c.h.b16 %v2813
  %v3995 = vunpack.c.l.b16 %v2814
  %v3996 = vunpack.c.h.b16 %v2814
  %v3997 = vunpack.c.l.b16 %v2815
  %v3998 = vunpack.c.h.b16 %v2815
  %v3999 = vunpack.c.l.b16 %v2816
  %v4000 = vunpack.c.h.b16 %v2816
  %v4001 = vunpack.c.l.b16 %v2817
  %v4002 = vunpack.c.h.b16 %v2817
  %v4003 = vunpack.c.l.b16 %v2818
  %v4004 = vunpack.c.h.b16 %v2818
  %v4005 = vunpack.c.l.b16 %v2819
  %v4006 = vunpack.c.h.b16 %v2819
  %v4007 = vunpack.c.l.b16 %v2820
  %v4008 = vunpack.c.h.b16 %v2820
  %v4009 = vunpack.c.l.b16 %v2821
  %v4010 = vunpack.c.h.b16 %v2821
  %v4011 = vunpack.c.l.b16 %v2822
  %v4012 = vunpack.c.h.b16 %v2822
  %v4013 = vunpack.c.l.b16 %v2823
  %v4014 = vunpack.c.h.b16 %v2823
  %v4015 = vunpack.c.l.b16 %v2824
  %v4016 = vunpack.c.h.b16 %v2824
  %v4017 = vunpack.c.l.b16 %v2825
  %v4018 = vunpack.c.h.b16 %v2825
  %v4019 = vunpack.c.l.b16 %v2826
  %v4020 = vunpack.c.h.b16 %v2826
  %v4021 = vunpack.c.l.b16 %v2827
  %v4022 = vunpack.c.h.b16 %v2827
  %v4023 = vunpack.c.l.b16 %v2828
  %v4024 = vunpack.c.h.b16 %v2828
  %v4025 = vunpack.c.l.b16 %v2829
  %v4026 = vunpack.c.h.b16 %v2829
  %v4027 = vunpack.c.l.b16 %v2830
  %v4028 = vunpack.c.h.b16 %v2830
  %v4029 = vunpack.c.l.b16 %v2831
  %v4030 = vunpack.c.h.b16 %v2831
  %v4031 = vunpack.c.l.b16 %v2832
  %v4032 = vunpack.c.h.b16 %v2832
  %v4033 = vunpack.c.l.b16 %v2833
  %v4034 = vunpack.c.h.b16 %v2833
  %v4035 = vunpack.c.l.b16 %v2834
  %v4036 = vunpack.c.h.b16 %v2834
  %v4037 = vunpack.c.l.b16 %v2835
  %v4038 = vunpack.c.h.b16 %v2835
  %v4039 = vunpack.c.l.b16 %v2836
  %v4040 = vunpack.c.h.b16 %v2836
  %v4041 = vunpack.c.l.b16 %v2837
  %v4042 = vunpack.c.h.b16 %v2837
  %v4043 = vunpack.c.l.b16 %v2838
  %v4044 = vunpack.c.h.b16 %v2838
  %v4045 = vunpack.c.l.b16 %v2839
  %v4046 = vunpack.c.h.b16 %v2839
  %v4047 = vunpack.c.l.b16 %v2840
  %v4048 = vunpack.c.h.b16 %v2840
  %v4049 = vunpack.c.l.b16 %v2841
  %v4050 = vunpack.c.h.b16 %v2841
  %v4051 = vunpack.c.l.b16 %v2842
  %v4052 = vunpack.c.h.b16 %v2842
  %v4053 = vunpack.c.l.b16 %v2843
  %v4054 = vunpack.c.h.b16 %v2843
  %v4055 = vunpack.c.l.b16 %v2844
  %v4056 = vunpack.c.h.b16 %v2844
  %v4057 = vunpack.c.l.b16 %v2845
  %v4058 = vunpack.c.h.b16 %v2845
  %v4059 = vunpack.c.l.b16 %v2846
  %v4060 = vunpack.c.h.b16 %v2846
  %v4061 = vunpack.c.l.b16 %v2847
  %v4062 = vunpack.c.h.b16 %v2847
  %v4063 = vunpack.c.l.b16 %v2848
  %v4064 = vunpack.c.h.b16 %v2848
  %v4065 = vunpack.c.l.b16 %v2849
  %v4066 = vunpack.c.h.b16 %v2849
  %v4067 = vunpack.c.l.b16 %v2850
  %v4068 = vunpack.c.h.b16 %v2850
  %v4069 = vunpack.c.l.b16 %v2851
  %v4070 = vunpack.c.h.b16 %v2851
  %v4071 = vunpack.c.l.b16 %v2852
  %v4072 = vunpack.c.h.b16 %v2852
  %v4073 = vunpack.c.l.b16 %v2853
  %v4074 = vunpack.c.h.b16 %v2853
  %v4075 = vunpack.c.l.b16 %v2854
  %v4076 = vunpack.c.h.b16 %v2854
  %v4077 = vunpack.c.l.b16 %v2855
  %v4078 = vunpack.c.h.b16 %v2855
  %v4079 = vunpack.c.l.b16 %v2856
  %v4080 = vunpack.c.h.b16 %v2856
  %v4081 = vunpack.c.l.b16 %v2857
  %v4082 = vunpack.c.h.b16 %v2857
  %v4083 = vunpack.c.l.b16 %v2858
  %v4084 = vunpack.c.h.b16 %v2858
  %v4085 = vunpack.c.l.b16 %v2859
  %v4086 = vunpack.c.h.b16 %v2859
  %v4087 = vunpack.c.l.b16 %v2860
  %v4088 = vunpack.c.h.b16 %v2860
  %v4089 = vunpack.c.l.b16 %v2861
  %v4090 = vunpack.c.h.b16 %v2861
  %v4091 = vunpack.c.l.b16 %v2862
  %v4092 = vunpack.c.h.b16 %v2862
  %v4093 = vunpack.c.l.b16 %v2863
  %v4094 = vunpack.c.h.b16 %v2863
  %v4095 = vunpack.c.l.b16 %v2864
  %v4096 = vunpack.c.h.b16 %v2864
  %v4097 = vunpack.c.l.b16 %v2865
  %v4098 = vunpack.c.h.b16 %v2865
  %v4099 = vunpack.c.l.b16 %v2866
  %v4100 = vunpack.c.h.b16 %v2866
  %v4101 = vunpack.c.l.b16 %v2867
  %v4102 = vunpack.c.h.b16 %v2867
  %v4103 = vunpack.c.l.b16 %v2868
  %v4104 = vunpack.c.h.b16 %v2868
  %v4105 = vunpack.c.l.b16 %v2869
  %v4106 = vunpack.c.h.b16 %v2869
  %v4107 = vunpack.c.l.b16 %v2870
  %v4108 = vunpack.c.h.b16 %v2870
  %v4109 = vunpack.c.l.b16 %v2871
  %v4110 = vunpack.c.h.b16 %v2871
  %v4111 = vunpack.c.l.b16 %v2872
  %v4112 = vunpack.c.h.b16 %v2872
  %v4113 = vunpack.c.l.b16 %v2873
  %v4114 = vunpack.c.h.b16 %v2873
  %v4115 = vunpack.c.l.b16 %v2874
  %v4116 = vunpack.c.h.b16 %v2874
  %v4117 = vunpack.c.l.b16 %v2875
  %v4118 = vunpack.c.h.b16 %v2875
  %v4119 = vunpack.c.l.b16 %v2876
  %v4120 = vunpack.c.h.b16 %v2876
  %v4121 = vunpack.c.l.b16 %v2877
  %v4122 = vunpack.c.h.b16 %v2877
  %v4123 = vunpack.c.l.b16 %v2878
  %v4124 = vunpack.c.h.b16 %v2878
  %v4125 = vunpack.c.l.b16 %v2879
  %v4126 = vunpack.c.h.b16 %v2879
  %v4127 = vunpack.c.l.b16 %v2880
  %v4128 = vunpack.c.h.b16 %v2880
  %v4129 = vunpack.c.l.b16 %v2881
  %v4130 = vunpack.c.h.b16 %v2881
  %v4131 = vunpack.c.l.b16 %v2882
  %v4132 = vunpack.c.h.b16 %v2882
  %v4133 = vunpack.c.l.b16 %v2883
  %v4134 = vunpack.c.h.b16 %v2883
  %v4135 = vunpack.c.l.b16 %v2884
  %v4136 = vunpack.c.h.b16 %v2884
  %v4137 = vunpack.c.l.b16 %v2885
  %v4138 = vunpack.c.h.b16 %v2885
  %v4139 = vunpack.c.l.b16 %v2886
  %v4140 = vunpack.c.h.b16 %v2886
  %v4141 = vunpack.c.l.b16 %v2887
  %v4142 = vunpack.c.h.b16 %v2887
  %v4143 = vunpack.c.l.b16 %v2888
  %v4144 = vunpack.c.h.b16 %v2888
  %v4145 = vunpack.c.l.b16 %v2889
  %v4146 = vunpack.c.h.b16 %v2889
  %v4147 = vunpack.c.l.b16 %v2890
  %v4148 = vunpack.c.h.b16 %v2890
  %v4149 = vunpack.c.l.b16 %v2891
  %v4150 = vunpack.c.h.b16 %v2891
  %v4151 = vunpack.c.l.b16 %v2892
  %v4152 = vunpack.c.h.b16 %v2892
  %v4153 = vunpack.c.l.b16 %v2893
  %v4154 = vunpack.c.h.b16 %v2893
  %v4155 = vunpack.c.l.b16 %v2894
  %v4156 = vunpack.c.h.b16 %v2894
  %v4157 = vunpack.c.l.b16 %v2895
  %v4158 = vunpack.c.h.b16 %v2895
  %v4159 = vunpack.c.l.b16 %v2896
  %v4160 = vunpack.c.h.b16 %v2896
  %v4161 = vunpack.c.l.b16 %v2897
  %v4162 = vunpack.c.h.b16 %v2897
  %v4163 = vunpack.c.l.b16 %v2898
  %v4164 = vunpack.c.h.b16 %v2898
  %v4165 = vunpack.c.l.b16 %v2899
  %v4166 = vunpack.c.h.b16 %v2899
  %v4167 = vunpack.c.l.b16 %v2900
  %v4168 = vunpack.c.h.b16 %v2900
  %v4169 = vunpack.c.l.b16 %v2901
  %v4170 = vunpack.c.h.b16 %v2901
  %v4171 = vunpack.c.l.b16 %v2902
  %v4172 = vunpack.c.h.b16 %v2902
  %v4173 = vunpack.c.l.b16 %v2903
  %v4174 = vunpack.c.h.b16 %v2903
  %v4175 = vunpack.c.l.b16 %v2904
  %v4176 = vunpack.c.h.b16 %v2904
  %v4177 = vunpack.c.l.b16 %v2905
  %v4178 = vunpack.c.h.b16 %v2905
  %v4179 = vunpack.c.l.b16 %v2906
  %v4180 = vunpack.c.h.b16 %v2906
  %v4181 = vunpack.c.l.b16 %v2907
  %v4182 = vunpack.c.h.b16 %v2907
  %v4183 = vunpack.c.l.b16 %v2908
  %v4184 = vunpack.c.h.b16 %v2908
  %v4185 = vunpack.c.l.b16 %v2909
  %v4186 = vunpack.c.h.b16 %v2909
  %v4187 = vunpack.c.l.b16 %v2910
  %v4188 = vunpack.c.h.b16 %v2910
  %v4189 = vunpack.c.l.b16 %v2911
  %v4190 = vunpack.c.h.b16 %v2911
  %v4191 = vunpack.c.l.b16 %v2912
  %v4192 = vunpack.c.h.b16 %v2912
  %v4193 = vunpack.c.l.b16 %v2913
  %v4194 = vunpack.c.h.b16 %v2913
  %v4195 = vunpack.c.l.b16 %v2914
  %v4196 = vunpack.c.h.b16 %v2914
  %v4197 = vunpack.c.l.b16 %v2915
  %v4198 = vunpack.c.h.b16 %v2915
  %v4199 = vunpack.c.l.b16 %v2916
  %v4200 = vunpack.c.h.b16 %v2916
  %v4201 = vunpack.c.l.b16 %v2917
  %v4202 = vunpack.c.h.b16 %v2917
  %v4203 = vpack.c.b16 %v3955, %v3947
  %v4204 = vpack.c.b16 %v3956, %v3948
  %v4205 = vpack.c.b16 %v3957, %v3949
  %v4206 = vpack.c.b16 %v3958, %v3950
  %v4207 = vpack.c.b16 %v3959, %v3951
  %v4208 = vpack.c.b16 %v3960, %v3952
  %v4209 = vpack.c.b16 %v3961, %v3953
  %v4210 = vpack.c.b16 %v3962, %v3954
  %v4211 = vpack.c.b16 %v3971, %v3963
  %v4212 = vpack.c.b16 %v3972, %v3964
  %v4213 = vpack.c.b16 %v3973, %v3965
  %v4214 = vpack.c.b16 %v3974, %v3966
  %v4215 = vpack.c.b16 %v3975, %v3967
  %v4216 = vpack.c.b16 %v3976, %v3968
  %v4217 = vpack.c.b16 %v3977, %v3969
  %v4218 = vpack.c.b16 %v3978, %v3970
  %v4219 = vpack.c.b16 %v3987, %v3979
  %v4220 = vpack.c.b16 %v3988, %v3980
  %v4221 = vpack.c.b16 %v3989, %v3981
  %v4222 = vpack.c.b16 %v3990, %v3982
  %v4223 = vpack.c.b16 %v3991, %v3983
  %v4224 = vpack.c.b16 %v3992, %v3984
  %v4225 = vpack.c.b16 %v3993, %v3985
  %v4226 = vpack.c.b16 %v3994, %v3986
  %v4227 = vpack.c.b16 %v4003, %v3995
  %v4228 = vpack.c.b16 %v4004, %v3996
  %v4229 = vpack.c.b16 %v4005, %v3997
  %v4230 = vpack.c.b16 %v4006, %v3998
  %v4231 = vpack.c.b16 %v4007, %v3999
  %v4232 = vpack.c.b16 %v4008, %v4000
  %v4233 = vpack.c.b16 %v4009, %v4001
  %v4234 = vpack.c.b16 %v4010, %v4002
  %v4235 = vpack.c.b16 %v4019, %v4011
  %v4236 = vpack.c.b16 %v4020, %v4012
  %v4237 = vpack.c.b16 %v4021, %v4013
  %v4238 = vpack.c.b16 %v4022, %v4014
  %v4239 = vpack.c.b16 %v4023, %v4015
  %v4240 = vpack.c.b16 %v4024, %v4016
  %v4241 = vpack.c.b16 %v4025, %v4017
  %v4242 = vpack.c.b16 %v4026, %v4018
  %v4243 = vpack.c.b16 %v4035, %v4027
  %v4244 = vpack.c.b16 %v4036, %v4028
  %v4245 = vpack.c.b16 %v4037, %v4029
  %v4246 = vpack.c.b16 %v4038, %v4030
  %v4247 = vpack.c.b16 %v4039, %v4031
  %v4248 = vpack.c.b16 %v4040, %v4032
  %v4249 = vpack.c.b16 %v4041, %v4033
  %v4250 = vpack.c.b16 %v4042, %v4034
  %v4251 = vpack.c.b16 %v4051, %v4043
  %v4252 = vpack.c.b16 %v4052, %v4044
  %v4253 = vpack.c.b16 %v4053, %v4045
  %v4254 = vpack.c.b16 %v4054, %v4046
  %v4255 = vpack.c.b16 %v4055, %v4047
  %v4256 = vpack.c.b16 %v4056, %v4048
  %v4257 = vpack.c.b16 %v4057, %v4049
  %v4258 = vpack.c.b16 %v4058, %v4050
  %v4259 = vpack.c.b16 %v4067, %v4059
  %v4260 = vpack.c.b16 %v4068, %v4060
  %v4261 = vpack.c.b16 %v4069, %v4061
  %v4262 = vpack.c.b16 %v4070, %v4062
  %v4263 = vpack.c.b16 %v4071, %v4063
  %v4264 = vpack.c.b16 %v4072, %v4064
  %v4265 = vpack.c.b16 %v4073, %v4065
  %v4266 = vpack.c.b16 %v4074, %v4066
  %v4267 = vpack.c.b16 %v4083, %v4075
  %v4268 = vpack.c.b16 %v4084, %v4076
  %v4269 = vpack.c.b16 %v4085, %v4077
  %v4270 = vpack.c.b16 %v4086, %v4078
  %v4271 = vpack.c.b16 %v4087, %v4079
  %v4272 = vpack.c.b16 %v4088, %v4080
  %v4273 = vpack.c.b16 %v4089, %v4081
  %v4274 = vpack.c.b16 %v4090, %v4082
  %v4275 = vpack.c.b16 %v4099, %v4091
  %v4276 = vpack.c.b16 %v4100, %v4092
  %v4277 = vpack.c.b16 %v4101, %v4093
  %v4278 = vpack.c.b16 %v4102, %v4094
  %v4279 = vpack.c.b16 %v4103, %v4095
  %v4280 = vpack.c.b16 %v4104, %v4096
  %v4281 = vpack.c.b16 %v4105, %v4097
  %v4282 = vpack.c.b16 %v4106, %v4098
  %v4283 = vpack.c.b16 %v4115, %v4107
  %v4284 = vpack.c.b16 %v4116, %v4108
  %v4285 = vpack.c.b16 %v4117, %v4109
  %v4286 = vpack.c.b16 %v4118, %v4110
  %v4287 = vpack.c.b16 %v4119, %v4111
  %v4288 = vpack.c.b16 %v4120, %v4112
  %v4289 = vpack.c.b16 %v4121, %v4113
  %v4290 = vpack.c.b16 %v4122, %v4114
  %v4291 = vpack.c.b16 %v4131, %v4123
  %v4292 = vpack.c.b16 %v4132, %v4124
  %v4293 = vpack.c.b16 %v4133, %v4125
  %v4294 = vpack.c.b16 %v4134, %v4126
  %v4295 = vpack.c.b16 %v4135, %v4127
  %v4296 = vpack.c.b16 %v4136, %v4128
  %v4297 = vpack.c.b16 %v4137, %v4129
  %v4298 = vpack.c.b16 %v4138, %v4130
  %v4299 = vpack.c.b16 %v4147, %v4139
  %v4300 = vpack.c.b16 %v4148, %v4140
  %v4301 = vpack.c.b16 %v4149, %v4141
  %v4302 = vpack.c.b16 %v4150, %v4142
  %v4303 = vpack.c.b16 %v4151, %v4143
  %v4304 = vpack.c.b16 %v4152, %v4144
  %v4305 = vpack.c.b16 %v4153, %v4145
  %v4306 = vpack.c.b16 %v4154, %v4146
  %v4307 = vpack.c.b16 %v4163, %v4155
  %v4308 = vpack.c.b16 %v4164, %v4156
  %v4309 = vpack.c.b16 %v4165, %v4157
  %v4310 = vpack.c.b16 %v4166, %v4158
  %v4311 = vpack.c.b16 %v4167, %v4159
  %v4312 = vpack.c.b16 %v4168, %v4160
  %v4313 = vpack.c.b16 %v4169, %v4161
  %v4314 = vpack.c.b16 %v4170, %v4162
  %v4315 = vpack.c.b16 %v4179, %v4171
  %v4316 = vpack.c.b16 %v4180, %v4172
  %v4317 = vpack.c.b16 %v4181, %v4173
  %v4318 = vpack.c.b16 %v4182, %v4174
  %v4319 = vpack.c.b16 %v4183, %v4175
  %v4320 = vpack.c.b16 %v4184, %v4176
  %v4321 = vpack.c.b16 %v4185, %v4177
  %v4322 = vpack.c.b16 %v4186, %v4178
  %v4323 = vpack.c.b16 %v4195, %v4187
  %v4324 = vpack.c.b16 %v4196, %v4188
  %v4325 = vpack.c.b16 %v4197, %v4189
  %v4326 = vpack.c.b16 %v4198, %v4190
  %v4327 = vpack.c.b16 %v4199, %v4191
  %v4328 = vpack.c.b16 %v4200, %v4192
  %v4329 = vpack.c.b16 %v4201, %v4193
  %v4330 = vpack.c.b16 %v4202, %v4194
  %4459 = vmatprep.subr.bf16.mxu0 %v4260
  %4460 = vmatpush1.bf16.msra.mxu0 %v4259
  %4461 = vmatprep.subr.bf16.mxu0 %v4252
  %4462 = vmatpush1.bf16.msra.mxu0 %v4251
  %4463 = vmatprep.subr.bf16.mxu0 %v4244
  %4464 = vmatpush1.bf16.msra.mxu0 %v4243
  %4465 = vmatprep.subr.bf16.mxu0 %v4236
  %4466 = vmatpush1.bf16.msra.mxu0 %v4235
  %4467 = vmatprep.subr.bf16.mxu0 %v4228
  %4468 = vmatpush1.bf16.msra.mxu0 %v4227
  %4469 = vmatprep.subr.bf16.mxu0 %v4220
  %4470 = vmatpush1.bf16.msra.mxu0 %v4219
  %4471 = vmatprep.subr.bf16.mxu0 %v4212
  %4472 = vmatpush1.bf16.msra.mxu0 %v4211
  %4473 = vmatprep.subr.bf16.mxu0 %v4204
  %4474 = vmatpush1.bf16.msra.mxu0 %v4203
  %4475 = vmatprep.subr.bf16.mxu0 %v4324
  %4476 = vmatpush2.bf16.msra.mxu0 %v4323
  %4477 = vmatprep.subr.bf16.mxu0 %v4316
  %4478 = vmatpush2.bf16.msra.mxu0 %v4315
  %4479 = vmatprep.subr.bf16.mxu0 %v4308
  %4480 = vmatpush2.bf16.msra.mxu0 %v4307
  %4481 = vmatprep.subr.bf16.mxu0 %v4300
  %4482 = vmatpush2.bf16.msra.mxu0 %v4299
  %4483 = vmatprep.subr.bf16.mxu0 %v4292
  %4484 = vmatpush2.bf16.msra.mxu0 %v4291
  %4485 = vmatprep.subr.bf16.mxu0 %v4284
  %4486 = vmatpush2.bf16.msra.mxu0 %v4283
  %4487 = vmatprep.subr.bf16.mxu0 %v4276
  %4488 = vmatpush2.bf16.msra.mxu0 %v4275
  %4489 = vmatprep.subr.bf16.mxu0 %v4268
  %4490 = vmatpush2.bf16.msra.mxu0 %v4267
  %4491 = vmatprep.mubr.bf16.mxu0 0
  %4492 = vmatmul.mubr.bf16.gmra.mxu0 0
  %v4493 = vpop.f32.mrf.mxu0
  %v4494 = vadd.f32 0.0, %v4493
  %v4495 = vpop.f32.mrf.mxu0
  %v4496 = vadd.f32 0.0, %v4495
  %v4497 = vpop.f32.mrf.mxu0
  %v4498 = vpop.f32.mrf.mxu0
  %4499 = vdwg.mxu0
  %4500 = vmatprep.subr.bf16.mxu0 %v4262
  %4501 = vmatpush1.bf16.msra.mxu0 %v4261
  %4502 = vmatprep.subr.bf16.mxu0 %v4254
  %4503 = vmatpush1.bf16.msra.mxu0 %v4253
  %4504 = vmatprep.subr.bf16.mxu0 %v4246
  %4505 = vmatpush1.bf16.msra.mxu0 %v4245
  %4506 = vmatprep.subr.bf16.mxu0 %v4238
  %4507 = vmatpush1.bf16.msra.mxu0 %v4237
  %4508 = vmatprep.subr.bf16.mxu0 %v4230
  %4509 = vmatpush1.bf16.msra.mxu0 %v4229
  %4510 = vmatprep.subr.bf16.mxu0 %v4222
  %4511 = vmatpush1.bf16.msra.mxu0 %v4221
  %4512 = vmatprep.subr.bf16.mxu0 %v4214
  %4513 = vmatpush1.bf16.msra.mxu0 %v4213
  %4514 = vmatprep.subr.bf16.mxu0 %v4206
  %4515 = vmatpush1.bf16.msra.mxu0 %v4205
  %4516 = vmatprep.subr.bf16.mxu0 %v4326
  %4517 = vmatpush2.bf16.msra.mxu0 %v4325
  %4518 = vmatprep.subr.bf16.mxu0 %v4318
  %4519 = vmatpush2.bf16.msra.mxu0 %v4317
  %4520 = vmatprep.subr.bf16.mxu0 %v4310
  %4521 = vmatpush2.bf16.msra.mxu0 %v4309
  %4522 = vmatprep.subr.bf16.mxu0 %v4302
  %4523 = vmatpush2.bf16.msra.mxu0 %v4301
  %4524 = vmatprep.subr.bf16.mxu0 %v4294
  %4525 = vmatpush2.bf16.msra.mxu0 %v4293
  %4526 = vmatprep.subr.bf16.mxu0 %v4286
  %4527 = vmatpush2.bf16.msra.mxu0 %v4285
  %4528 = vmatprep.subr.bf16.mxu0 %v4278
  %4529 = vmatpush2.bf16.msra.mxu0 %v4277
  %4530 = vmatprep.subr.bf16.mxu0 %v4270
  %4531 = vmatpush2.bf16.msra.mxu0 %v4269
  %4532 = vmatprep.mubr.bf16.mxu0 0
  %4533 = vmatmul.mubr.bf16.gmra.mxu0 0
  %v4534 = vpop.f32.mrf.mxu0
  %v4535 = vadd.f32 0.0, %v4534
  %v4536 = vpop.f32.mrf.mxu0
  %v4537 = vadd.f32 0.0, %v4536
  %v4538 = vpop.f32.mrf.mxu0
  %v4539 = vpop.f32.mrf.mxu0
  %4540 = vdwg.mxu0
  %4541 = vmatprep.subr.bf16.mxu0 %v4264
  %4542 = vmatpush1.bf16.msra.mxu0 %v4263
  %4543 = vmatprep.subr.bf16.mxu0 %v4256
  %4544 = vmatpush1.bf16.msra.mxu0 %v4255
  %4545 = vmatprep.subr.bf16.mxu0 %v4248
  %4546 = vmatpush1.bf16.msra.mxu0 %v4247
  %4547 = vmatprep.subr.bf16.mxu0 %v4240
  %4548 = vmatpush1.bf16.msra.mxu0 %v4239
  %4549 = vmatprep.subr.bf16.mxu0 %v4232
  %4550 = vmatpush1.bf16.msra.mxu0 %v4231
  %4551 = vmatprep.subr.bf16.mxu0 %v4224
  %4552 = vmatpush1.bf16.msra.mxu0 %v4223
  %4553 = vmatprep.subr.bf16.mxu0 %v4216
  %4554 = vmatpush1.bf16.msra.mxu0 %v4215
  %4555 = vmatprep.subr.bf16.mxu0 %v4208
  %4556 = vmatpush1.bf16.msra.mxu0 %v4207
  %4557 = vmatprep.subr.bf16.mxu0 %v4328
  %4558 = vmatpush2.bf16.msra.mxu0 %v4327
  %4559 = vmatprep.subr.bf16.mxu0 %v4320
  %4560 = vmatpush2.bf16.msra.mxu0 %v4319
  %4561 = vmatprep.subr.bf16.mxu0 %v4312
  %4562 = vmatpush2.bf16.msra.mxu0 %v4311
  %4563 = vmatprep.subr.bf16.mxu0 %v4304
  %4564 = vmatpush2.bf16.msra.mxu0 %v4303
  %4565 = vmatprep.subr.bf16.mxu0 %v4296
  %4566 = vmatpush2.bf16.msra.mxu0 %v4295
  %4567 = vmatprep.subr.bf16.mxu0 %v4288
  %4568 = vmatpush2.bf16.msra.mxu0 %v4287
  %4569 = vmatprep.subr.bf16.mxu0 %v4280
  %4570 = vmatpush2.bf16.msra.mxu0 %v4279
  %4571 = vmatprep.subr.bf16.mxu0 %v4272
  %4572 = vmatpush2.bf16.msra.mxu0 %v4271
  %4573 = vmatprep.mubr.bf16.mxu0 0
  %4574 = vmatmul.mubr.bf16.gmra.mxu0 0
  %v4575 = vpop.f32.mrf.mxu0
  %v4576 = vadd.f32 0.0, %v4575
  %v4577 = vpop.f32.mrf.mxu0
  %v4578 = vadd.f32 0.0, %v4577
  %v4579 = vpop.f32.mrf.mxu0
  %v4580 = vpop.f32.mrf.mxu0
  %4581 = vdwg.mxu0
  %4582 = vmatprep.subr.bf16.mxu0 %v4266
  %4583 = vmatpush1.bf16.msra.mxu0 %v4265
  %4584 = vmatprep.subr.bf16.mxu0 %v4258
  %4585 = vmatpush1.bf16.msra.mxu0 %v4257
  %4586 = vmatprep.subr.bf16.mxu0 %v4250
  %4587 = vmatpush1.bf16.msra.mxu0 %v4249
  %4588 = vmatprep.subr.bf16.mxu0 %v4242
  %4589 = vmatpush1.bf16.msra.mxu0 %v4241
  %4590 = vmatprep.subr.bf16.mxu0 %v4234
  %4591 = vmatpush1.bf16.msra.mxu0 %v4233
  %4592 = vmatprep.subr.bf16.mxu0 %v4226
  %4593 = vmatpush1.bf16.msra.mxu0 %v4225
  %4594 = vmatprep.subr.bf16.mxu0 %v4218
  %4595 = vmatpush1.bf16.msra.mxu0 %v4217
  %4596 = vmatprep.subr.bf16.mxu0 %v4210
  %4597 = vmatpush1.bf16.msra.mxu0 %v4209
  %4598 = vmatprep.subr.bf16.mxu0 %v4330
  %4599 = vmatpush2.bf16.msra.mxu0 %v4329
  %4600 = vmatprep.subr.bf16.mxu0 %v4322
  %4601 = vmatpush2.bf16.msra.mxu0 %v4321
  %4602 = vmatprep.subr.bf16.mxu0 %v4314
  %4603 = vmatpush2.bf16.msra.mxu0 %v4313
  %4604 = vmatprep.subr.bf16.mxu0 %v4306
  %4605 = vmatpush2.bf16.msra.mxu0 %v4305
  %4606 = vmatprep.subr.bf16.mxu0 %v4298
  %4607 = vmatpush2.bf16.msra.mxu0 %v4297
  %4608 = vmatprep.subr.bf16.mxu0 %v4290
  %4609 = vmatpush2.bf16.msra.mxu0 %v4289
  %4610 = vmatprep.subr.bf16.mxu0 %v4282
  %4611 = vmatpush2.bf16.msra.mxu0 %v4281
  %4612 = vmatprep.subr.bf16.mxu0 %v4274
  %4613 = vmatpush2.bf16.msra.mxu0 %v4273
  %4614 = vmatprep.mubr.bf16.mxu0 0
  %4615 = vmatmul.mubr.bf16.gmra.mxu0 0
  %v4616 = vpop.f32.mrf.mxu0
  %v4617 = vadd.f32 0.0, %v4616
  %v4618 = vpop.f32.mrf.mxu0
  %v4619 = vadd.f32 0.0, %v4618
  %v4620 = vpop.f32.mrf.mxu0
  %v4621 = vpop.f32.mrf.mxu0
  %4622 = vdwg.mxu0
  %v4631 = vcombine.low %v4494, %v4496
  %v4632 = vcombine.low %v4535, %v4537
  %v4633 = vcombine.low %v4576, %v4578
  %v4634 = vcombine.low %v4617, %v4619
  %v4636 = vunpack.c.l.s4 1966171168
  %v4637 = vunpack.c.0.s8 %v4636
  %v4638 = vlaneseq
  %v4639 = vshrl.u32 %v4638, 7
  %v4640 = vsub.s32 %v4637, %v4639
  %v4641 = vrot.slane %v4631, %v4640
  %v4643 = vunpack.c.l.s4 1966171168
  %v4644 = vunpack.c.0.s8 %v4643
  %v4645 = vlaneseq
  %v4646 = vshrl.u32 %v4645, 7
  %v4647 = vsub.s32 %v4644, %v4646
  %v4648 = vrot.slane %v4632, %v4647
  %v4650 = vunpack.c.l.s4 1966171168
  %v4651 = vunpack.c.0.s8 %v4650
  %v4652 = vlaneseq
  %v4653 = vshrl.u32 %v4652, 7
  %v4654 = vsub.s32 %v4651, %v4653
  %v4655 = vrot.slane %v4633, %v4654
  %v4657 = vunpack.c.l.s4 1966171168
  %v4658 = vunpack.c.0.s8 %v4657
  %v4659 = vlaneseq
  %v4660 = vshrl.u32 %v4659, 7
  %v4661 = vsub.s32 %v4658, %v4660
  %v4662 = vrot.slane %v4634, %v4661
  %v4663 = vcombine.low %v4641, %v4648
  %v4664 = vcombine.low %v4655, %v4662
  %v4666 = vunpack.c.l.s4 1966171168
  %v4667 = vunpack.c.0.s8 %v4666
  %v4668 = vlaneseq
  %v4669 = vshrl.u32 %v4668, 7
  %v4670 = vsub.s32 %v4667, %v4669
  %v4671 = vrot.slane %v4663, %v4670
  %v4673 = vunpack.c.l.s4 1966171168
  %v4674 = vunpack.c.0.s8 %v4673
  %v4675 = vlaneseq
  %v4676 = vshrl.u32 %v4675, 7
  %v4677 = vsub.s32 %v4674, %v4676
  %v4678 = vrot.slane %v4664, %v4677
  %v4679 = vcombine.low %v4671, %v4678
  %v4681 = vadd.f32 %v3818, %v4679
  %v4682 = vxor.u32 %v4681, 2147483648
  %v4683 = vmul.f32 %v4682, 1.442695
  %v4684 = vpow.pop %v4683
  %v4685 = vadd.f32 %v4684, 1.0
  %v4686 = vrcp.pop %v4685
  %v4687 = vmul.f32 1.0, %v4686
  %v4689 = vrot.slane %v4681, 2
  %v4691 = vxor.u32 %v4689, 2147483648
  %v4692 = vmul.f32 %v4691, 1.442695
  %v4693 = vpow.pop %v4692
  %v4694 = vadd.f32 %v4693, 1.0
  %v4695 = vrcp.pop %v4694
  %v4696 = vmul.f32 1.0, %v4695
  %v4697 = vrot.slane %v4681, 4
  %v4699 = vtanh.pop %v4697
  %v4700 = vrot.slane %v4681, 6
  %v4702 = vxor.u32 %v4700, 2147483648
  %v4703 = vmul.f32 %v4702, 1.442695
  %v4704 = vpow.pop %v4703
  %v4705 = vadd.f32 %v4704, 1.0
  %v4706 = vrcp.pop %v4705
  %v4707 = vmul.f32 1.0, %v4706
  %v4708 = vmul.f32 %v4696, 0.0
  %v4709 = vmul.f32 %v4687, %v4699
  %v4710 = vadd.f32 %v4708, %v4709
  %v4711 = vtanh.pop %v4710
  %v4712 = vmul.f32 %v4707, %v4711
  %v4713 = vlaneseq
  %vm4714 = vcmp.ge.s32.totalorder %v4713, 0
  %vm4715 = vcmp.lt.s32.totalorder %v4713, 256
  %vm4716 = vmand %vm4714, %vm4715
  %4717 = vst.msk [vmem:[%s10] ss:$8 sm:$0x3] %vm4716, %v3814
  %4718 = vst.msk [vmem:[%s10] ss:$8 sm:$0x0] %vm4716, %v3814
  %s4719 = scalar_lea.vmem %s11, 7
  %4720 = vst.msk [vmem:[%s4719] ss:$8 sm:$0x3] %vm4716, %v4712
  %4721 = vst.msk [vmem:[%s4719] ss:$8 sm:$0x0] %vm4716, %v4712
  %s4722 = scalar_lea.vmem [#allocation2], 1
  %v4723 = vld [vmem:[%s4722] ss:$8 sm:$0xf]
  %v4724 = vld [vmem:[%s4722] ss:$8 sm:$0xf0]
  %v4725 = vor.u32 %v4723, %v4724
  %v4727 = vlaneseq
  %v4728 = vshrl.u32 %v4727, 7
  %v4729 = vsub.s32 0, %v4728
  %v4730 = vrot.slane %v3814, %v4729
  %v4731 = vlaneseq
  %v4732 = vshrl.u32 %v4731, 7
  %v4733 = vsub.s32 1, %v4732
  %v4734 = vrot.slane %v3814, %v4733
  %v4737 = vpack.c.bf16 %v4730, %v4730
  %v4738 = vpack.c.bf16 %v4734, %v4734
  %4739 = vmatprep.subr.bf16.mxu0 %v3362
  %4740 = vmatpush1.bf16.msra.mxu0 %v3361
  %4741 = vmatprep.subr.bf16.mxu0 %v3354
  %4742 = vmatpush1.bf16.msra.mxu0 %v3353
  %4743 = vmatprep.subr.bf16.mxu0 %v3346
  %4744 = vmatpush1.bf16.msra.mxu0 %v3345
  %4745 = vmatprep.subr.bf16.mxu0 %v3338
  %4746 = vmatpush1.bf16.msra.mxu0 %v3337
  %4747 = vmatprep.subr.bf16.mxu0 %v3330
  %4748 = vmatpush1.bf16.msra.mxu0 %v3329
  %4749 = vmatprep.subr.bf16.mxu0 %v3322
  %4750 = vmatpush1.bf16.msra.mxu0 %v3321
  %4751 = vmatprep.subr.bf16.mxu0 %v3314
  %4752 = vmatpush1.bf16.msra.mxu0 %v3313
  %4753 = vmatprep.subr.bf16.mxu0 %v3306
  %4754 = vmatpush1.bf16.msra.mxu0 %v3305
  %4755 = vmatprep.subr.bf16.mxu0 %v3426
  %4756 = vmatpush2.bf16.msra.mxu0 %v3425
  %4757 = vmatprep.subr.bf16.mxu0 %v3418
  %4758 = vmatpush2.bf16.msra.mxu0 %v3417
  %4759 = vmatprep.subr.bf16.mxu0 %v3410
  %4760 = vmatpush2.bf16.msra.mxu0 %v3409
  %4761 = vmatprep.subr.bf16.mxu0 %v3402
  %4762 = vmatpush2.bf16.msra.mxu0 %v3401
  %4763 = vmatprep.subr.bf16.mxu0 %v3394
  %4764 = vmatpush2.bf16.msra.mxu0 %v3393
  %4765 = vmatprep.subr.bf16.mxu0 %v3386
  %4766 = vmatpush2.bf16.msra.mxu0 %v3385
  %4767 = vmatprep.subr.bf16.mxu0 %v3378
  %4768 = vmatpush2.bf16.msra.mxu0 %v3377
  %4769 = vmatprep.subr.bf16.mxu0 %v3370
  %4770 = vmatpush2.bf16.msra.mxu0 %v3369
  %4771 = vmatprep.mubr.bf16.mxu0 %v4738
  %4772 = vmatmul.mubr.bf16.gmra.mxu0 %v4737
  %v4773 = vpop.f32.mrf.mxu0
  %v4774 = vadd.f32 0.0, %v4773
  %v4775 = vpop.f32.mrf.mxu0
  %v4776 = vadd.f32 0.0, %v4775
  %v4777 = vpop.f32.mrf.mxu0
  %v4778 = vpop.f32.mrf.mxu0
  %4779 = vdwg.mxu0
  %4780 = vmatprep.subr.bf16.mxu0 %v3364
  %4781 = vmatpush1.bf16.msra.mxu0 %v3363
  %4782 = vmatprep.subr.bf16.mxu0 %v3356
  %4783 = vmatpush1.bf16.msra.mxu0 %v3355
  %4784 = vmatprep.subr.bf16.mxu0 %v3348
  %4785 = vmatpush1.bf16.msra.mxu0 %v3347
  %4786 = vmatprep.subr.bf16.mxu0 %v3340
  %4787 = vmatpush1.bf16.msra.mxu0 %v3339
  %4788 = vmatprep.subr.bf16.mxu0 %v3332
  %4789 = vmatpush1.bf16.msra.mxu0 %v3331
  %4790 = vmatprep.subr.bf16.mxu0 %v3324
  %4791 = vmatpush1.bf16.msra.mxu0 %v3323
  %4792 = vmatprep.subr.bf16.mxu0 %v3316
  %4793 = vmatpush1.bf16.msra.mxu0 %v3315
  %4794 = vmatprep.subr.bf16.mxu0 %v3308
  %4795 = vmatpush1.bf16.msra.mxu0 %v3307
  %4796 = vmatprep.subr.bf16.mxu0 %v3428
  %4797 = vmatpush2.bf16.msra.mxu0 %v3427
  %4798 = vmatprep.subr.bf16.mxu0 %v3420
  %4799 = vmatpush2.bf16.msra.mxu0 %v3419
  %4800 = vmatprep.subr.bf16.mxu0 %v3412
  %4801 = vmatpush2.bf16.msra.mxu0 %v3411
  %4802 = vmatprep.subr.bf16.mxu0 %v3404
  %4803 = vmatpush2.bf16.msra.mxu0 %v3403
  %4804 = vmatprep.subr.bf16.mxu0 %v3396
  %4805 = vmatpush2.bf16.msra.mxu0 %v3395
  %4806 = vmatprep.subr.bf16.mxu0 %v3388
  %4807 = vmatpush2.bf16.msra.mxu0 %v3387
  %4808 = vmatprep.subr.bf16.mxu0 %v3380
  %4809 = vmatpush2.bf16.msra.mxu0 %v3379
  %4810 = vmatprep.subr.bf16.mxu0 %v3372
  %4811 = vmatpush2.bf16.msra.mxu0 %v3371
  %4812 = vmatprep.mubr.bf16.mxu0 %v4738
  %4813 = vmatmul.mubr.bf16.gmra.mxu0 %v4737
  %v4814 = vpop.f32.mrf.mxu0
  %v4815 = vadd.f32 0.0, %v4814
  %v4816 = vpop.f32.mrf.mxu0
  %v4817 = vadd.f32 0.0, %v4816
  %v4818 = vpop.f32.mrf.mxu0
  %v4819 = vpop.f32.mrf.mxu0
  %4820 = vdwg.mxu0
  %4821 = vmatprep.subr.bf16.mxu0 %v3366
  %4822 = vmatpush1.bf16.msra.mxu0 %v3365
  %4823 = vmatprep.subr.bf16.mxu0 %v3358
  %4824 = vmatpush1.bf16.msra.mxu0 %v3357
  %4825 = vmatprep.subr.bf16.mxu0 %v3350
  %4826 = vmatpush1.bf16.msra.mxu0 %v3349
  %4827 = vmatprep.subr.bf16.mxu0 %v3342
  %4828 = vmatpush1.bf16.msra.mxu0 %v3341
  %4829 = vmatprep.subr.bf16.mxu0 %v3334
  %4830 = vmatpush1.bf16.msra.mxu0 %v3333
  %4831 = vmatprep.subr.bf16.mxu0 %v3326
  %4832 = vmatpush1.bf16.msra.mxu0 %v3325
  %4833 = vmatprep.subr.bf16.mxu0 %v3318
  %4834 = vmatpush1.bf16.msra.mxu0 %v3317
  %4835 = vmatprep.subr.bf16.mxu0 %v3310
  %4836 = vmatpush1.bf16.msra.mxu0 %v3309
  %4837 = vmatprep.subr.bf16.mxu0 %v3430
  %4838 = vmatpush2.bf16.msra.mxu0 %v3429
  %4839 = vmatprep.subr.bf16.mxu0 %v3422
  %4840 = vmatpush2.bf16.msra.mxu0 %v3421
  %4841 = vmatprep.subr.bf16.mxu0 %v3414
  %4842 = vmatpush2.bf16.msra.mxu0 %v3413
  %4843 = vmatprep.subr.bf16.mxu0 %v3406
  %4844 = vmatpush2.bf16.msra.mxu0 %v3405
  %4845 = vmatprep.subr.bf16.mxu0 %v3398
  %4846 = vmatpush2.bf16.msra.mxu0 %v3397
  %4847 = vmatprep.subr.bf16.mxu0 %v3390
  %4848 = vmatpush2.bf16.msra.mxu0 %v3389
  %4849 = vmatprep.subr.bf16.mxu0 %v3382
  %4850 = vmatpush2.bf16.msra.mxu0 %v3381
  %4851 = vmatprep.subr.bf16.mxu0 %v3374
  %4852 = vmatpush2.bf16.msra.mxu0 %v3373
  %4853 = vmatprep.mubr.bf16.mxu0 %v4738
  %4854 = vmatmul.mubr.bf16.gmra.mxu0 %v4737
  %v4855 = vpop.f32.mrf.mxu0
  %v4856 = vadd.f32 0.0, %v4855
  %v4857 = vpop.f32.mrf.mxu0
  %v4858 = vadd.f32 0.0, %v4857
  %v4859 = vpop.f32.mrf.mxu0
  %v4860 = vpop.f32.mrf.mxu0
  %4861 = vdwg.mxu0
  %4862 = vmatprep.subr.bf16.mxu0 %v3368
  %4863 = vmatpush1.bf16.msra.mxu0 %v3367
  %4864 = vmatprep.subr.bf16.mxu0 %v3360
  %4865 = vmatpush1.bf16.msra.mxu0 %v3359
  %4866 = vmatprep.subr.bf16.mxu0 %v3352
  %4867 = vmatpush1.bf16.msra.mxu0 %v3351
  %4868 = vmatprep.subr.bf16.mxu0 %v3344
  %4869 = vmatpush1.bf16.msra.mxu0 %v3343
  %4870 = vmatprep.subr.bf16.mxu0 %v3336
  %4871 = vmatpush1.bf16.msra.mxu0 %v3335
  %4872 = vmatprep.subr.bf16.mxu0 %v3328
  %4873 = vmatpush1.bf16.msra.mxu0 %v3327
  %4874 = vmatprep.subr.bf16.mxu0 %v3320
  %4875 = vmatpush1.bf16.msra.mxu0 %v3319
  %4876 = vmatprep.subr.bf16.mxu0 %v3312
  %4877 = vmatpush1.bf16.msra.mxu0 %v3311
  %4878 = vmatprep.subr.bf16.mxu0 %v3432
  %4879 = vmatpush2.bf16.msra.mxu0 %v3431
  %4880 = vmatprep.subr.bf16.mxu0 %v3424
  %4881 = vmatpush2.bf16.msra.mxu0 %v3423
  %4882 = vmatprep.subr.bf16.mxu0 %v3416
  %4883 = vmatpush2.bf16.msra.mxu0 %v3415
  %4884 = vmatprep.subr.bf16.mxu0 %v3408
  %4885 = vmatpush2.bf16.msra.mxu0 %v3407
  %4886 = vmatprep.subr.bf16.mxu0 %v3400
  %4887 = vmatpush2.bf16.msra.mxu0 %v3399
  %4888 = vmatprep.subr.bf16.mxu0 %v3392
  %4889 = vmatpush2.bf16.msra.mxu0 %v3391
  %4890 = vmatprep.subr.bf16.mxu0 %v3384
  %4891 = vmatpush2.bf16.msra.mxu0 %v3383
  %4892 = vmatprep.subr.bf16.mxu0 %v3376
  %4893 = vmatpush2.bf16.msra.mxu0 %v3375
  %4894 = vmatprep.mubr.bf16.mxu0 %v4738
  %4895 = vmatmul.mubr.bf16.gmra.mxu0 %v4737
  %v4896 = vpop.f32.mrf.mxu0
  %v4897 = vadd.f32 0.0, %v4896
  %v4898 = vpop.f32.mrf.mxu0
  %v4899 = vadd.f32 0.0, %v4898
  %v4900 = vpop.f32.mrf.mxu0
  %v4901 = vpop.f32.mrf.mxu0
  %4902 = vdwg.mxu0
  %v4911 = vcombine.low %v4774, %v4776
  %v4912 = vcombine.low %v4815, %v4817
  %v4913 = vcombine.low %v4856, %v4858
  %v4914 = vcombine.low %v4897, %v4899
  %v4916 = vunpack.c.l.s4 1966171168
  %v4917 = vunpack.c.0.s8 %v4916
  %v4918 = vlaneseq
  %v4919 = vshrl.u32 %v4918, 7
  %v4920 = vsub.s32 %v4917, %v4919
  %v4921 = vrot.slane %v4911, %v4920
  %v4923 = vunpack.c.l.s4 1966171168
  %v4924 = vunpack.c.0.s8 %v4923
  %v4925 = vlaneseq
  %v4926 = vshrl.u32 %v4925, 7
  %v4927 = vsub.s32 %v4924, %v4926
  %v4928 = vrot.slane %v4912, %v4927
  %v4930 = vunpack.c.l.s4 1966171168
  %v4931 = vunpack.c.0.s8 %v4930
  %v4932 = vlaneseq
  %v4933 = vshrl.u32 %v4932, 7
  %v4934 = vsub.s32 %v4931, %v4933
  %v4935 = vrot.slane %v4913, %v4934
  %v4937 = vunpack.c.l.s4 1966171168
  %v4938 = vunpack.c.0.s8 %v4937
  %v4939 = vlaneseq
  %v4940 = vshrl.u32 %v4939, 7
  %v4941 = vsub.s32 %v4938, %v4940
  %v4942 = vrot.slane %v4914, %v4941
  %v4943 = vcombine.low %v4921, %v4928
  %v4944 = vcombine.low %v4935, %v4942
  %v4946 = vunpack.c.l.s4 1966171168
  %v4947 = vunpack.c.0.s8 %v4946
  %v4948 = vlaneseq
  %v4949 = vshrl.u32 %v4948, 7
  %v4950 = vsub.s32 %v4947, %v4949
  %v4951 = vrot.slane %v4943, %v4950
  %v4953 = vunpack.c.l.s4 1966171168
  %v4954 = vunpack.c.0.s8 %v4953
  %v4955 = vlaneseq
  %v4956 = vshrl.u32 %v4955, 7
  %v4957 = vsub.s32 %v4954, %v4956
  %v4958 = vrot.slane %v4944, %v4957
  %v4959 = vcombine.low %v4951, %v4958
  %v4961 = vadd.f32 %v4725, %v4959
  %v4962 = vxor.u32 %v4961, 2147483648
  %v4963 = vmul.f32 %v4962, 1.442695
  %v4964 = vpow.pop %v4963
  %v4965 = vadd.f32 %v4964, 1.0
  %v4966 = vrcp.pop %v4965
  %v4967 = vmul.f32 1.0, %v4966
  %v4969 = vrot.slane %v4961, 2
  %v4971 = vxor.u32 %v4969, 2147483648
  %v4972 = vmul.f32 %v4971, 1.442695
  %v4973 = vpow.pop %v4972
  %v4974 = vadd.f32 %v4973, 1.0
  %v4975 = vrcp.pop %v4974
  %v4976 = vmul.f32 1.0, %v4975
  %v4977 = vrot.slane %v4961, 4
  %v4979 = vtanh.pop %v4977
  %v4980 = vrot.slane %v4961, 6
  %v4982 = vxor.u32 %v4980, 2147483648
  %v4983 = vmul.f32 %v4982, 1.442695
  %v4984 = vpow.pop %v4983
  %v4985 = vadd.f32 %v4984, 1.0
  %v4986 = vrcp.pop %v4985
  %v4987 = vmul.f32 1.0, %v4986
  %v4988 = vmul.f32 %v4976, %v3812
  %v4989 = vmul.f32 %v4967, %v4979
  %v4990 = vadd.f32 %v4988, %v4989
  %v4991 = vtanh.pop %v4990
  %v4992 = vmul.f32 %v4987, %v4991
  %s4993 = scalar_lea.vmem [#allocation3], 6
  %v4994 = vld [vmem:[%s4993] ss:$8 sm:$0xf]
  %v4995 = vld [vmem:[%s4993] ss:$8 sm:$0xf0]
  %v4996 = vor.u32 %v4994, %v4995
  %v4998 = vlaneseq
  %v4999 = vshrl.u32 %v4998, 7
  %v5000 = vsub.s32 0, %v4999
  %v5001 = vrot.slane %v4712, %v5000
  %v5002 = vlaneseq
  %v5003 = vshrl.u32 %v5002, 7
  %v5004 = vsub.s32 1, %v5003
  %v5005 = vrot.slane %v4712, %v5004
  %v5008 = vpack.c.bf16 %v5001, %v5001
  %v5009 = vpack.c.bf16 %v5005, %v5005
  %5010 = vmatprep.subr.bf16.mxu0 %v4260
  %5011 = vmatpush1.bf16.msra.mxu0 %v4259
  %5012 = vmatprep.subr.bf16.mxu0 %v4252
  %5013 = vmatpush1.bf16.msra.mxu0 %v4251
  %5014 = vmatprep.subr.bf16.mxu0 %v4244
  %5015 = vmatpush1.bf16.msra.mxu0 %v4243
  %5016 = vmatprep.subr.bf16.mxu0 %v4236
  %5017 = vmatpush1.bf16.msra.mxu0 %v4235
  %5018 = vmatprep.subr.bf16.mxu0 %v4228
  %5019 = vmatpush1.bf16.msra.mxu0 %v4227
  %5020 = vmatprep.subr.bf16.mxu0 %v4220
  %5021 = vmatpush1.bf16.msra.mxu0 %v4219
  %5022 = vmatprep.subr.bf16.mxu0 %v4212
  %5023 = vmatpush1.bf16.msra.mxu0 %v4211
  %5024 = vmatprep.subr.bf16.mxu0 %v4204
  %5025 = vmatpush1.bf16.msra.mxu0 %v4203
  %5026 = vmatprep.subr.bf16.mxu0 %v4324
  %5027 = vmatpush2.bf16.msra.mxu0 %v4323
  %5028 = vmatprep.subr.bf16.mxu0 %v4316
  %5029 = vmatpush2.bf16.msra.mxu0 %v4315
  %5030 = vmatprep.subr.bf16.mxu0 %v4308
  %5031 = vmatpush2.bf16.msra.mxu0 %v4307
  %5032 = vmatprep.subr.bf16.mxu0 %v4300
  %5033 = vmatpush2.bf16.msra.mxu0 %v4299
  %5034 = vmatprep.subr.bf16.mxu0 %v4292
  %5035 = vmatpush2.bf16.msra.mxu0 %v4291
  %5036 = vmatprep.subr.bf16.mxu0 %v4284
  %5037 = vmatpush2.bf16.msra.mxu0 %v4283
  %5038 = vmatprep.subr.bf16.mxu0 %v4276
  %5039 = vmatpush2.bf16.msra.mxu0 %v4275
  %5040 = vmatprep.subr.bf16.mxu0 %v4268
  %5041 = vmatpush2.bf16.msra.mxu0 %v4267
  %5042 = vmatprep.mubr.bf16.mxu0 %v5009
  %5043 = vmatmul.mubr.bf16.gmra.mxu0 %v5008
  %v5044 = vpop.f32.mrf.mxu0
  %v5045 = vadd.f32 0.0, %v5044
  %v5046 = vpop.f32.mrf.mxu0
  %v5047 = vadd.f32 0.0, %v5046
  %v5048 = vpop.f32.mrf.mxu0
  %v5049 = vpop.f32.mrf.mxu0
  %5050 = vdwg.mxu0
  %5051 = vmatprep.subr.bf16.mxu0 %v4262
  %5052 = vmatpush1.bf16.msra.mxu0 %v4261
  %5053 = vmatprep.subr.bf16.mxu0 %v4254
  %5054 = vmatpush1.bf16.msra.mxu0 %v4253
  %5055 = vmatprep.subr.bf16.mxu0 %v4246
  %5056 = vmatpush1.bf16.msra.mxu0 %v4245
  %5057 = vmatprep.subr.bf16.mxu0 %v4238
  %5058 = vmatpush1.bf16.msra.mxu0 %v4237
  %5059 = vmatprep.subr.bf16.mxu0 %v4230
  %5060 = vmatpush1.bf16.msra.mxu0 %v4229
  %5061 = vmatprep.subr.bf16.mxu0 %v4222
  %5062 = vmatpush1.bf16.msra.mxu0 %v4221
  %5063 = vmatprep.subr.bf16.mxu0 %v4214
  %5064 = vmatpush1.bf16.msra.mxu0 %v4213
  %5065 = vmatprep.subr.bf16.mxu0 %v4206
  %5066 = vmatpush1.bf16.msra.mxu0 %v4205
  %5067 = vmatprep.subr.bf16.mxu0 %v4326
  %5068 = vmatpush2.bf16.msra.mxu0 %v4325
  %5069 = vmatprep.subr.bf16.mxu0 %v4318
  %5070 = vmatpush2.bf16.msra.mxu0 %v4317
  %5071 = vmatprep.subr.bf16.mxu0 %v4310
  %5072 = vmatpush2.bf16.msra.mxu0 %v4309
  %5073 = vmatprep.subr.bf16.mxu0 %v4302
  %5074 = vmatpush2.bf16.msra.mxu0 %v4301
  %5075 = vmatprep.subr.bf16.mxu0 %v4294
  %5076 = vmatpush2.bf16.msra.mxu0 %v4293
  %5077 = vmatprep.subr.bf16.mxu0 %v4286
  %5078 = vmatpush2.bf16.msra.mxu0 %v4285
  %5079 = vmatprep.subr.bf16.mxu0 %v4278
  %5080 = vmatpush2.bf16.msra.mxu0 %v4277
  %5081 = vmatprep.subr.bf16.mxu0 %v4270
  %5082 = vmatpush2.bf16.msra.mxu0 %v4269
  %5083 = vmatprep.mubr.bf16.mxu0 %v5009
  %5084 = vmatmul.mubr.bf16.gmra.mxu0 %v5008
  %v5085 = vpop.f32.mrf.mxu0
  %v5086 = vadd.f32 0.0, %v5085
  %v5087 = vpop.f32.mrf.mxu0
  %v5088 = vadd.f32 0.0, %v5087
  %v5089 = vpop.f32.mrf.mxu0
  %v5090 = vpop.f32.mrf.mxu0
  %5091 = vdwg.mxu0
  %5092 = vmatprep.subr.bf16.mxu0 %v4264
  %5093 = vmatpush1.bf16.msra.mxu0 %v4263
  %5094 = vmatprep.subr.bf16.mxu0 %v4256
  %5095 = vmatpush1.bf16.msra.mxu0 %v4255
  %5096 = vmatprep.subr.bf16.mxu0 %v4248
  %5097 = vmatpush1.bf16.msra.mxu0 %v4247
  %5098 = vmatprep.subr.bf16.mxu0 %v4240
  %5099 = vmatpush1.bf16.msra.mxu0 %v4239
  %5100 = vmatprep.subr.bf16.mxu0 %v4232
  %5101 = vmatpush1.bf16.msra.mxu0 %v4231
  %5102 = vmatprep.subr.bf16.mxu0 %v4224
  %5103 = vmatpush1.bf16.msra.mxu0 %v4223
  %5104 = vmatprep.subr.bf16.mxu0 %v4216
  %5105 = vmatpush1.bf16.msra.mxu0 %v4215
  %5106 = vmatprep.subr.bf16.mxu0 %v4208
  %5107 = vmatpush1.bf16.msra.mxu0 %v4207
  %5108 = vmatprep.subr.bf16.mxu0 %v4328
  %5109 = vmatpush2.bf16.msra.mxu0 %v4327
  %5110 = vmatprep.subr.bf16.mxu0 %v4320
  %5111 = vmatpush2.bf16.msra.mxu0 %v4319
  %5112 = vmatprep.subr.bf16.mxu0 %v4312
  %5113 = vmatpush2.bf16.msra.mxu0 %v4311
  %5114 = vmatprep.subr.bf16.mxu0 %v4304
  %5115 = vmatpush2.bf16.msra.mxu0 %v4303
  %5116 = vmatprep.subr.bf16.mxu0 %v4296
  %5117 = vmatpush2.bf16.msra.mxu0 %v4295
  %5118 = vmatprep.subr.bf16.mxu0 %v4288
  %5119 = vmatpush2.bf16.msra.mxu0 %v4287
  %5120 = vmatprep.subr.bf16.mxu0 %v4280
  %5121 = vmatpush2.bf16.msra.mxu0 %v4279
  %5122 = vmatprep.subr.bf16.mxu0 %v4272
  %5123 = vmatpush2.bf16.msra.mxu0 %v4271
  %5124 = vmatprep.mubr.bf16.mxu0 %v5009
  %5125 = vmatmul.mubr.bf16.gmra.mxu0 %v5008
  %v5126 = vpop.f32.mrf.mxu0
  %v5127 = vadd.f32 0.0, %v5126
  %v5128 = vpop.f32.mrf.mxu0
  %v5129 = vadd.f32 0.0, %v5128
  %v5130 = vpop.f32.mrf.mxu0
  %v5131 = vpop.f32.mrf.mxu0
  %5132 = vdwg.mxu0
  %5133 = vmatprep.subr.bf16.mxu0 %v4266
  %5134 = vmatpush1.bf16.msra.mxu0 %v4265
  %5135 = vmatprep.subr.bf16.mxu0 %v4258
  %5136 = vmatpush1.bf16.msra.mxu0 %v4257
  %5137 = vmatprep.subr.bf16.mxu0 %v4250
  %5138 = vmatpush1.bf16.msra.mxu0 %v4249
  %5139 = vmatprep.subr.bf16.mxu0 %v4242
  %5140 = vmatpush1.bf16.msra.mxu0 %v4241
  %5141 = vmatprep.subr.bf16.mxu0 %v4234
  %5142 = vmatpush1.bf16.msra.mxu0 %v4233
  %5143 = vmatprep.subr.bf16.mxu0 %v4226
  %5144 = vmatpush1.bf16.msra.mxu0 %v4225
  %5145 = vmatprep.subr.bf16.mxu0 %v4218
  %5146 = vmatpush1.bf16.msra.mxu0 %v4217
  %5147 = vmatprep.subr.bf16.mxu0 %v4210
  %5148 = vmatpush1.bf16.msra.mxu0 %v4209
  %5149 = vmatprep.subr.bf16.mxu0 %v4330
  %5150 = vmatpush2.bf16.msra.mxu0 %v4329
  %5151 = vmatprep.subr.bf16.mxu0 %v4322
  %5152 = vmatpush2.bf16.msra.mxu0 %v4321
  %5153 = vmatprep.subr.bf16.mxu0 %v4314
  %5154 = vmatpush2.bf16.msra.mxu0 %v4313
  %5155 = vmatprep.subr.bf16.mxu0 %v4306
  %5156 = vmatpush2.bf16.msra.mxu0 %v4305
  %5157 = vmatprep.subr.bf16.mxu0 %v4298
  %5158 = vmatpush2.bf16.msra.mxu0 %v4297
  %5159 = vmatprep.subr.bf16.mxu0 %v4290
  %5160 = vmatpush2.bf16.msra.mxu0 %v4289
  %5161 = vmatprep.subr.bf16.mxu0 %v4282
  %5162 = vmatpush2.bf16.msra.mxu0 %v4281
  %5163 = vmatprep.subr.bf16.mxu0 %v4274
  %5164 = vmatpush2.bf16.msra.mxu0 %v4273
  %5165 = vmatprep.mubr.bf16.mxu0 %v5009
  %5166 = vmatmul.mubr.bf16.gmra.mxu0 %v5008
  %v5167 = vpop.f32.mrf.mxu0
  %v5168 = vadd.f32 0.0, %v5167
  %v5169 = vpop.f32.mrf.mxu0
  %v5170 = vadd.f32 0.0, %v5169
  %v5171 = vpop.f32.mrf.mxu0
  %v5172 = vpop.f32.mrf.mxu0
  %5173 = vdwg.mxu0
  %v5182 = vcombine.low %v5045, %v5047
  %v5183 = vcombine.low %v5086, %v5088
  %v5184 = vcombine.low %v5127, %v5129
  %v5185 = vcombine.low %v5168, %v5170
  %v5187 = vunpack.c.l.s4 1966171168
  %v5188 = vunpack.c.0.s8 %v5187
  %v5189 = vlaneseq
  %v5190 = vshrl.u32 %v5189, 7
  %v5191 = vsub.s32 %v5188, %v5190
  %v5192 = vrot.slane %v5182, %v5191
  %v5194 = vunpack.c.l.s4 1966171168
  %v5195 = vunpack.c.0.s8 %v5194
  %v5196 = vlaneseq
  %v5197 = vshrl.u32 %v5196, 7
  %v5198 = vsub.s32 %v5195, %v5197
  %v5199 = vrot.slane %v5183, %v5198
  %v5201 = vunpack.c.l.s4 1966171168
  %v5202 = vunpack.c.0.s8 %v5201
  %v5203 = vlaneseq
  %v5204 = vshrl.u32 %v5203, 7
  %v5205 = vsub.s32 %v5202, %v5204
  %v5206 = vrot.slane %v5184, %v5205
  %v5208 = vunpack.c.l.s4 1966171168
  %v5209 = vunpack.c.0.s8 %v5208
  %v5210 = vlaneseq
  %v5211 = vshrl.u32 %v5210, 7
  %v5212 = vsub.s32 %v5209, %v5211
  %v5213 = vrot.slane %v5185, %v5212
  %v5214 = vcombine.low %v5192, %v5199
  %v5215 = vcombine.low %v5206, %v5213
  %v5217 = vunpack.c.l.s4 1966171168
  %v5218 = vunpack.c.0.s8 %v5217
  %v5219 = vlaneseq
  %v5220 = vshrl.u32 %v5219, 7
  %v5221 = vsub.s32 %v5218, %v5220
  %v5222 = vrot.slane %v5214, %v5221
  %v5224 = vunpack.c.l.s4 1966171168
  %v5225 = vunpack.c.0.s8 %v5224
  %v5226 = vlaneseq
  %v5227 = vshrl.u32 %v5226, 7
  %v5228 = vsub.s32 %v5225, %v5227
  %v5229 = vrot.slane %v5215, %v5228
  %v5230 = vcombine.low %v5222, %v5229
  %v5232 = vadd.f32 %v4996, %v5230
  %v5233 = vxor.u32 %v5232, 2147483648
  %v5234 = vmul.f32 %v5233, 1.442695
  %v5235 = vpow.pop %v5234
  %v5236 = vadd.f32 %v5235, 1.0
  %v5237 = vrcp.pop %v5236
  %v5238 = vmul.f32 1.0, %v5237
  %v5240 = vrot.slane %v5232, 2
  %v5242 = vxor.u32 %v5240, 2147483648
  %v5243 = vmul.f32 %v5242, 1.442695
  %v5244 = vpow.pop %v5243
  %v5245 = vadd.f32 %v5244, 1.0
  %v5246 = vrcp.pop %v5245
  %v5247 = vmul.f32 1.0, %v5246
  %v5248 = vrot.slane %v5232, 4
  %v5250 = vtanh.pop %v5248
  %v5251 = vrot.slane %v5232, 6
  %v5253 = vxor.u32 %v5251, 2147483648
  %v5254 = vmul.f32 %v5253, 1.442695
  %v5255 = vpow.pop %v5254
  %v5256 = vadd.f32 %v5255, 1.0
  %v5257 = vrcp.pop %v5256
  %v5258 = vmul.f32 1.0, %v5257
  %v5259 = vmul.f32 %v5247, %v4710
  %v5260 = vmul.f32 %v5238, %v5250
  %v5261 = vadd.f32 %v5259, %v5260
  %v5262 = vtanh.pop %v5261
  %v5263 = vmul.f32 %v5258, %v5262
  %s5264 = scalar_lea.vmem %s10, 1
  %5265 = vst.msk [vmem:[%s5264] ss:$8 sm:$0x3] %vm4716, %v4992
  %5266 = vst.msk [vmem:[%s5264] ss:$8 sm:$0x0] %vm4716, %v4992
  %s5267 = scalar_lea.vmem %s11, 6
  %5268 = vst.msk [vmem:[%s5267] ss:$8 sm:$0x3] %vm4716, %v5263
  %5269 = vst.msk [vmem:[%s5267] ss:$8 sm:$0x0] %vm4716, %v5263
  %s5270 = scalar_lea.vmem [#allocation2], 2
  %v5271 = vld [vmem:[%s5270] ss:$8 sm:$0xf]
  %v5272 = vld [vmem:[%s5270] ss:$8 sm:$0xf0]
  %v5273 = vor.u32 %v5271, %v5272
  %v5275 = vlaneseq
  %v5276 = vshrl.u32 %v5275, 7
  %v5277 = vsub.s32 0, %v5276
  %v5278 = vrot.slane %v4992, %v5277
  %v5279 = vlaneseq
  %v5280 = vshrl.u32 %v5279, 7
  %v5281 = vsub.s32 1, %v5280
  %v5282 = vrot.slane %v4992, %v5281
  %v5285 = vpack.c.bf16 %v5278, %v5278
  %v5286 = vpack.c.bf16 %v5282, %v5282
  %5287 = vmatprep.subr.bf16.mxu0 %v3362
  %5288 = vmatpush1.bf16.msra.mxu0 %v3361
  %5289 = vmatprep.subr.bf16.mxu0 %v3354
  %5290 = vmatpush1.bf16.msra.mxu0 %v3353
  %5291 = vmatprep.subr.bf16.mxu0 %v3346
  %5292 = vmatpush1.bf16.msra.mxu0 %v3345
  %5293 = vmatprep.subr.bf16.mxu0 %v3338
  %5294 = vmatpush1.bf16.msra.mxu0 %v3337
  %5295 = vmatprep.subr.bf16.mxu0 %v3330
  %5296 = vmatpush1.bf16.msra.mxu0 %v3329
  %5297 = vmatprep.subr.bf16.mxu0 %v3322
  %5298 = vmatpush1.bf16.msra.mxu0 %v3321
  %5299 = vmatprep.subr.bf16.mxu0 %v3314
  %5300 = vmatpush1.bf16.msra.mxu0 %v3313
  %5301 = vmatprep.subr.bf16.mxu0 %v3306
  %5302 = vmatpush1.bf16.msra.mxu0 %v3305
  %5303 = vmatprep.subr.bf16.mxu0 %v3426
  %5304 = vmatpush2.bf16.msra.mxu0 %v3425
  %5305 = vmatprep.subr.bf16.mxu0 %v3418
  %5306 = vmatpush2.bf16.msra.mxu0 %v3417
  %5307 = vmatprep.subr.bf16.mxu0 %v3410
  %5308 = vmatpush2.bf16.msra.mxu0 %v3409
  %5309 = vmatprep.subr.bf16.mxu0 %v3402
  %5310 = vmatpush2.bf16.msra.mxu0 %v3401
  %5311 = vmatprep.subr.bf16.mxu0 %v3394
  %5312 = vmatpush2.bf16.msra.mxu0 %v3393
  %5313 = vmatprep.subr.bf16.mxu0 %v3386
  %5314 = vmatpush2.bf16.msra.mxu0 %v3385
  %5315 = vmatprep.subr.bf16.mxu0 %v3378
  %5316 = vmatpush2.bf16.msra.mxu0 %v3377
  %5317 = vmatprep.subr.bf16.mxu0 %v3370
  %5318 = vmatpush2.bf16.msra.mxu0 %v3369
  %5319 = vmatprep.mubr.bf16.mxu0 %v5286
  %5320 = vmatmul.mubr.bf16.gmra.mxu0 %v5285
  %v5321 = vpop.f32.mrf.mxu0
  %v5322 = vadd.f32 0.0, %v5321
  %v5323 = vpop.f32.mrf.mxu0
  %v5324 = vadd.f32 0.0, %v5323
  %v5325 = vpop.f32.mrf.mxu0
  %v5326 = vpop.f32.mrf.mxu0
  %5327 = vdwg.mxu0
  %5328 = vmatprep.subr.bf16.mxu0 %v3364
  %5329 = vmatpush1.bf16.msra.mxu0 %v3363
  %5330 = vmatprep.subr.bf16.mxu0 %v3356
  %5331 = vmatpush1.bf16.msra.mxu0 %v3355
  %5332 = vmatprep.subr.bf16.mxu0 %v3348
  %5333 = vmatpush1.bf16.msra.mxu0 %v3347
  %5334 = vmatprep.subr.bf16.mxu0 %v3340
  %5335 = vmatpush1.bf16.msra.mxu0 %v3339
  %5336 = vmatprep.subr.bf16.mxu0 %v3332
  %5337 = vmatpush1.bf16.msra.mxu0 %v3331
  %5338 = vmatprep.subr.bf16.mxu0 %v3324
  %5339 = vmatpush1.bf16.msra.mxu0 %v3323
  %5340 = vmatprep.subr.bf16.mxu0 %v3316
  %5341 = vmatpush1.bf16.msra.mxu0 %v3315
  %5342 = vmatprep.subr.bf16.mxu0 %v3308
  %5343 = vmatpush1.bf16.msra.mxu0 %v3307
  %5344 = vmatprep.subr.bf16.mxu0 %v3428
  %5345 = vmatpush2.bf16.msra.mxu0 %v3427
  %5346 = vmatprep.subr.bf16.mxu0 %v3420
  %5347 = vmatpush2.bf16.msra.mxu0 %v3419
  %5348 = vmatprep.subr.bf16.mxu0 %v3412
  %5349 = vmatpush2.bf16.msra.mxu0 %v3411
  %5350 = vmatprep.subr.bf16.mxu0 %v3404
  %5351 = vmatpush2.bf16.msra.mxu0 %v3403
  %5352 = vmatprep.subr.bf16.mxu0 %v3396
  %5353 = vmatpush2.bf16.msra.mxu0 %v3395
  %5354 = vmatprep.subr.bf16.mxu0 %v3388
  %5355 = vmatpush2.bf16.msra.mxu0 %v3387
  %5356 = vmatprep.subr.bf16.mxu0 %v3380
  %5357 = vmatpush2.bf16.msra.mxu0 %v3379
  %5358 = vmatprep.subr.bf16.mxu0 %v3372
  %5359 = vmatpush2.bf16.msra.mxu0 %v3371
  %5360 = vmatprep.mubr.bf16.mxu0 %v5286
  %5361 = vmatmul.mubr.bf16.gmra.mxu0 %v5285
  %v5362 = vpop.f32.mrf.mxu0
  %v5363 = vadd.f32 0.0, %v5362
  %v5364 = vpop.f32.mrf.mxu0
  %v5365 = vadd.f32 0.0, %v5364
  %v5366 = vpop.f32.mrf.mxu0
  %v5367 = vpop.f32.mrf.mxu0
  %5368 = vdwg.mxu0
  %5369 = vmatprep.subr.bf16.mxu0 %v3366
  %5370 = vmatpush1.bf16.msra.mxu0 %v3365
  %5371 = vmatprep.subr.bf16.mxu0 %v3358
  %5372 = vmatpush1.bf16.msra.mxu0 %v3357
  %5373 = vmatprep.subr.bf16.mxu0 %v3350
  %5374 = vmatpush1.bf16.msra.mxu0 %v3349
  %5375 = vmatprep.subr.bf16.mxu0 %v3342
  %5376 = vmatpush1.bf16.msra.mxu0 %v3341
  %5377 = vmatprep.subr.bf16.mxu0 %v3334
  %5378 = vmatpush1.bf16.msra.mxu0 %v3333
  %5379 = vmatprep.subr.bf16.mxu0 %v3326
  %5380 = vmatpush1.bf16.msra.mxu0 %v3325
  %5381 = vmatprep.subr.bf16.mxu0 %v3318
  %5382 = vmatpush1.bf16.msra.mxu0 %v3317
  %5383 = vmatprep.subr.bf16.mxu0 %v3310
  %5384 = vmatpush1.bf16.msra.mxu0 %v3309
  %5385 = vmatprep.subr.bf16.mxu0 %v3430
  %5386 = vmatpush2.bf16.msra.mxu0 %v3429
  %5387 = vmatprep.subr.bf16.mxu0 %v3422
  %5388 = vmatpush2.bf16.msra.mxu0 %v3421
  %5389 = vmatprep.subr.bf16.mxu0 %v3414
  %5390 = vmatpush2.bf16.msra.mxu0 %v3413
  %5391 = vmatprep.subr.bf16.mxu0 %v3406
  %5392 = vmatpush2.bf16.msra.mxu0 %v3405
  %5393 = vmatprep.subr.bf16.mxu0 %v3398
  %5394 = vmatpush2.bf16.msra.mxu0 %v3397
  %5395 = vmatprep.subr.bf16.mxu0 %v3390
  %5396 = vmatpush2.bf16.msra.mxu0 %v3389
  %5397 = vmatprep.subr.bf16.mxu0 %v3382
  %5398 = vmatpush2.bf16.msra.mxu0 %v3381
  %5399 = vmatprep.subr.bf16.mxu0 %v3374
  %5400 = vmatpush2.bf16.msra.mxu0 %v3373
  %5401 = vmatprep.mubr.bf16.mxu0 %v5286
  %5402 = vmatmul.mubr.bf16.gmra.mxu0 %v5285
  %v5403 = vpop.f32.mrf.mxu0
  %v5404 = vadd.f32 0.0, %v5403
  %v5405 = vpop.f32.mrf.mxu0
  %v5406 = vadd.f32 0.0, %v5405
  %v5407 = vpop.f32.mrf.mxu0
  %v5408 = vpop.f32.mrf.mxu0
  %5409 = vdwg.mxu0
  %5410 = vmatprep.subr.bf16.mxu0 %v3368
  %5411 = vmatpush1.bf16.msra.mxu0 %v3367
  %5412 = vmatprep.subr.bf16.mxu0 %v3360
  %5413 = vmatpush1.bf16.msra.mxu0 %v3359
  %5414 = vmatprep.subr.bf16.mxu0 %v3352
  %5415 = vmatpush1.bf16.msra.mxu0 %v3351
  %5416 = vmatprep.subr.bf16.mxu0 %v3344
  %5417 = vmatpush1.bf16.msra.mxu0 %v3343
  %5418 = vmatprep.subr.bf16.mxu0 %v3336
  %5419 = vmatpush1.bf16.msra.mxu0 %v3335
  %5420 = vmatprep.subr.bf16.mxu0 %v3328
  %5421 = vmatpush1.bf16.msra.mxu0 %v3327
  %5422 = vmatprep.subr.bf16.mxu0 %v3320
  %5423 = vmatpush1.bf16.msra.mxu0 %v3319
  %5424 = vmatprep.subr.bf16.mxu0 %v3312
  %5425 = vmatpush1.bf16.msra.mxu0 %v3311
  %5426 = vmatprep.subr.bf16.mxu0 %v3432
  %5427 = vmatpush2.bf16.msra.mxu0 %v3431
  %5428 = vmatprep.subr.bf16.mxu0 %v3424
  %5429 = vmatpush2.bf16.msra.mxu0 %v3423
  %5430 = vmatprep.subr.bf16.mxu0 %v3416
  %5431 = vmatpush2.bf16.msra.mxu0 %v3415
  %5432 = vmatprep.subr.bf16.mxu0 %v3408
  %5433 = vmatpush2.bf16.msra.mxu0 %v3407
  %5434 = vmatprep.subr.bf16.mxu0 %v3400
  %5435 = vmatpush2.bf16.msra.mxu0 %v3399
  %5436 = vmatprep.subr.bf16.mxu0 %v3392
  %5437 = vmatpush2.bf16.msra.mxu0 %v3391
  %5438 = vmatprep.subr.bf16.mxu0 %v3384
  %5439 = vmatpush2.bf16.msra.mxu0 %v3383
  %5440 = vmatprep.subr.bf16.mxu0 %v3376
  %5441 = vmatpush2.bf16.msra.mxu0 %v3375
  %5442 = vmatprep.mubr.bf16.mxu0 %v5286
  %5443 = vmatmul.mubr.bf16.gmra.mxu0 %v5285
  %v5444 = vpop.f32.mrf.mxu0
  %v5445 = vadd.f32 0.0, %v5444
  %v5446 = vpop.f32.mrf.mxu0
  %v5447 = vadd.f32 0.0, %v5446
  %v5448 = vpop.f32.mrf.mxu0
  %v5449 = vpop.f32.mrf.mxu0
  %5450 = vdwg.mxu0
  %v5459 = vcombine.low %v5322, %v5324
  %v5460 = vcombine.low %v5363, %v5365
  %v5461 = vcombine.low %v5404, %v5406
  %v5462 = vcombine.low %v5445, %v5447
  %v5464 = vunpack.c.l.s4 1966171168
  %v5465 = vunpack.c.0.s8 %v5464
  %v5466 = vlaneseq
  %v5467 = vshrl.u32 %v5466, 7
  %v5468 = vsub.s32 %v5465, %v5467
  %v5469 = vrot.slane %v5459, %v5468
  %v5471 = vunpack.c.l.s4 1966171168
  %v5472 = vunpack.c.0.s8 %v5471
  %v5473 = vlaneseq
  %v5474 = vshrl.u32 %v5473, 7
  %v5475 = vsub.s32 %v5472, %v5474
  %v5476 = vrot.slane %v5460, %v5475
  %v5478 = vunpack.c.l.s4 1966171168
  %v5479 = vunpack.c.0.s8 %v5478
  %v5480 = vlaneseq
  %v5481 = vshrl.u32 %v5480, 7
  %v5482 = vsub.s32 %v5479, %v5481
  %v5483 = vrot.slane %v5461, %v5482
  %v5485 = vunpack.c.l.s4 1966171168
  %v5486 = vunpack.c.0.s8 %v5485
  %v5487 = vlaneseq
  %v5488 = vshrl.u32 %v5487, 7
  %v5489 = vsub.s32 %v5486, %v5488
  %v5490 = vrot.slane %v5462, %v5489
  %v5491 = vcombine.low %v5469, %v5476
  %v5492 = vcombine.low %v5483, %v5490
  %v5494 = vunpack.c.l.s4 1966171168
  %v5495 = vunpack.c.0.s8 %v5494
  %v5496 = vlaneseq
  %v5497 = vshrl.u32 %v5496, 7
  %v5498 = vsub.s32 %v5495, %v5497
  %v5499 = vrot.slane %v5491, %v5498
  %v5501 = vunpack.c.l.s4 1966171168
  %v5502 = vunpack.c.0.s8 %v5501
  %v5503 = vlaneseq
  %v5504 = vshrl.u32 %v5503, 7
  %v5505 = vsub.s32 %v5502, %v5504
  %v5506 = vrot.slane %v5492, %v5505
  %v5507 = vcombine.low %v5499, %v5506
  %v5509 = vadd.f32 %v5273, %v5507
  %v5510 = vxor.u32 %v5509, 2147483648
  %v5511 = vmul.f32 %v5510, 1.442695
  %v5512 = vpow.pop %v5511
  %v5513 = vadd.f32 %v5512, 1.0
  %v5514 = vrcp.pop %v5513
  %v5515 = vmul.f32 1.0, %v5514
  %v5517 = vrot.slane %v5509, 2
  %v5519 = vxor.u32 %v5517, 2147483648
  %v5520 = vmul.f32 %v5519, 1.442695
  %v5521 = vpow.pop %v5520
  %v5522 = vadd.f32 %v5521, 1.0
  %v5523 = vrcp.pop %v5522
  %v5524 = vmul.f32 1.0, %v5523
  %v5525 = vrot.slane %v5509, 4
  %v5527 = vtanh.pop %v5525
  %v5528 = vrot.slane %v5509, 6
  %v5530 = vxor.u32 %v5528, 2147483648
  %v5531 = vmul.f32 %v5530, 1.442695
  %v5532 = vpow.pop %v5531
  %v5533 = vadd.f32 %v5532, 1.0
  %v5534 = vrcp.pop %v5533
  %v5535 = vmul.f32 1.0, %v5534
  %v5536 = vmul.f32 %v5524, %v4990
  %v5537 = vmul.f32 %v5515, %v5527
  %v5538 = vadd.f32 %v5536, %v5537
  %v5539 = vtanh.pop %v5538
  %v5540 = vmul.f32 %v5535, %v5539
  %s5541 = scalar_lea.vmem [#allocation3], 5
  %v5542 = vld [vmem:[%s5541] ss:$8 sm:$0xf]
  %v5543 = vld [vmem:[%s5541] ss:$8 sm:$0xf0]
  %v5544 = vor.u32 %v5542, %v5543
  %v5546 = vlaneseq
  %v5547 = vshrl.u32 %v5546, 7
  %v5548 = vsub.s32 0, %v5547
  %v5549 = vrot.slane %v5263, %v5548
  %v5550 = vlaneseq
  %v5551 = vshrl.u32 %v5550, 7
  %v5552 = vsub.s32 1, %v5551
  %v5553 = vrot.slane %v5263, %v5552
  %v5556 = vpack.c.bf16 %v5549, %v5549
  %v5557 = vpack.c.bf16 %v5553, %v5553
  %5558 = vmatprep.subr.bf16.mxu0 %v4260
  %5559 = vmatpush1.bf16.msra.mxu0 %v4259
  %5560 = vmatprep.subr.bf16.mxu0 %v4252
  %5561 = vmatpush1.bf16.msra.mxu0 %v4251
  %5562 = vmatprep.subr.bf16.mxu0 %v4244
  %5563 = vmatpush1.bf16.msra.mxu0 %v4243
  %5564 = vmatprep.subr.bf16.mxu0 %v4236
  %5565 = vmatpush1.bf16.msra.mxu0 %v4235
  %5566 = vmatprep.subr.bf16.mxu0 %v4228
  %5567 = vmatpush1.bf16.msra.mxu0 %v4227
  %5568 = vmatprep.subr.bf16.mxu0 %v4220
  %5569 = vmatpush1.bf16.msra.mxu0 %v4219
  %5570 = vmatprep.subr.bf16.mxu0 %v4212
  %5571 = vmatpush1.bf16.msra.mxu0 %v4211
  %5572 = vmatprep.subr.bf16.mxu0 %v4204
  %5573 = vmatpush1.bf16.msra.mxu0 %v4203
  %5574 = vmatprep.subr.bf16.mxu0 %v4324
  %5575 = vmatpush2.bf16.msra.mxu0 %v4323
  %5576 = vmatprep.subr.bf16.mxu0 %v4316
  %5577 = vmatpush2.bf16.msra.mxu0 %v4315
  %5578 = vmatprep.subr.bf16.mxu0 %v4308
  %5579 = vmatpush2.bf16.msra.mxu0 %v4307
  %5580 = vmatprep.subr.bf16.mxu0 %v4300
  %5581 = vmatpush2.bf16.msra.mxu0 %v4299
  %5582 = vmatprep.subr.bf16.mxu0 %v4292
  %5583 = vmatpush2.bf16.msra.mxu0 %v4291
  %5584 = vmatprep.subr.bf16.mxu0 %v4284
  %5585 = vmatpush2.bf16.msra.mxu0 %v4283
  %5586 = vmatprep.subr.bf16.mxu0 %v4276
  %5587 = vmatpush2.bf16.msra.mxu0 %v4275
  %5588 = vmatprep.subr.bf16.mxu0 %v4268
  %5589 = vmatpush2.bf16.msra.mxu0 %v4267
  %5590 = vmatprep.mubr.bf16.mxu0 %v5557
  %5591 = vmatmul.mubr.bf16.gmra.mxu0 %v5556
  %v5592 = vpop.f32.mrf.mxu0
  %v5593 = vadd.f32 0.0, %v5592
  %v5594 = vpop.f32.mrf.mxu0
  %v5595 = vadd.f32 0.0, %v5594
  %v5596 = vpop.f32.mrf.mxu0
  %v5597 = vpop.f32.mrf.mxu0
  %5598 = vdwg.mxu0
  %5599 = vmatprep.subr.bf16.mxu0 %v4262
  %5600 = vmatpush1.bf16.msra.mxu0 %v4261
  %5601 = vmatprep.subr.bf16.mxu0 %v4254
  %5602 = vmatpush1.bf16.msra.mxu0 %v4253
  %5603 = vmatprep.subr.bf16.mxu0 %v4246
  %5604 = vmatpush1.bf16.msra.mxu0 %v4245
  %5605 = vmatprep.subr.bf16.mxu0 %v4238
  %5606 = vmatpush1.bf16.msra.mxu0 %v4237
  %5607 = vmatprep.subr.bf16.mxu0 %v4230
  %5608 = vmatpush1.bf16.msra.mxu0 %v4229
  %5609 = vmatprep.subr.bf16.mxu0 %v4222
  %5610 = vmatpush1.bf16.msra.mxu0 %v4221
  %5611 = vmatprep.subr.bf16.mxu0 %v4214
  %5612 = vmatpush1.bf16.msra.mxu0 %v4213
  %5613 = vmatprep.subr.bf16.mxu0 %v4206
  %5614 = vmatpush1.bf16.msra.mxu0 %v4205
  %5615 = vmatprep.subr.bf16.mxu0 %v4326
  %5616 = vmatpush2.bf16.msra.mxu0 %v4325
  %5617 = vmatprep.subr.bf16.mxu0 %v4318
  %5618 = vmatpush2.bf16.msra.mxu0 %v4317
  %5619 = vmatprep.subr.bf16.mxu0 %v4310
  %5620 = vmatpush2.bf16.msra.mxu0 %v4309
  %5621 = vmatprep.subr.bf16.mxu0 %v4302
  %5622 = vmatpush2.bf16.msra.mxu0 %v4301
  %5623 = vmatprep.subr.bf16.mxu0 %v4294
  %5624 = vmatpush2.bf16.msra.mxu0 %v4293
  %5625 = vmatprep.subr.bf16.mxu0 %v4286
  %5626 = vmatpush2.bf16.msra.mxu0 %v4285
  %5627 = vmatprep.subr.bf16.mxu0 %v4278
  %5628 = vmatpush2.bf16.msra.mxu0 %v4277
  %5629 = vmatprep.subr.bf16.mxu0 %v4270
  %5630 = vmatpush2.bf16.msra.mxu0 %v4269
  %5631 = vmatprep.mubr.bf16.mxu0 %v5557
  %5632 = vmatmul.mubr.bf16.gmra.mxu0 %v5556
  %v5633 = vpop.f32.mrf.mxu0
  %v5634 = vadd.f32 0.0, %v5633
  %v5635 = vpop.f32.mrf.mxu0
  %v5636 = vadd.f32 0.0, %v5635
  %v5637 = vpop.f32.mrf.mxu0
  %v5638 = vpop.f32.mrf.mxu0
  %5639 = vdwg.mxu0
  %5640 = vmatprep.subr.bf16.mxu0 %v4264
  %5641 = vmatpush1.bf16.msra.mxu0 %v4263
  %5642 = vmatprep.subr.bf16.mxu0 %v4256
  %5643 = vmatpush1.bf16.msra.mxu0 %v4255
  %5644 = vmatprep.subr.bf16.mxu0 %v4248
  %5645 = vmatpush1.bf16.msra.mxu0 %v4247
  %5646 = vmatprep.subr.bf16.mxu0 %v4240
  %5647 = vmatpush1.bf16.msra.mxu0 %v4239
  %5648 = vmatprep.subr.bf16.mxu0 %v4232
  %5649 = vmatpush1.bf16.msra.mxu0 %v4231
  %5650 = vmatprep.subr.bf16.mxu0 %v4224
  %5651 = vmatpush1.bf16.msra.mxu0 %v4223
  %5652 = vmatprep.subr.bf16.mxu0 %v4216
  %5653 = vmatpush1.bf16.msra.mxu0 %v4215
  %5654 = vmatprep.subr.bf16.mxu0 %v4208
  %5655 = vmatpush1.bf16.msra.mxu0 %v4207
  %5656 = vmatprep.subr.bf16.mxu0 %v4328
  %5657 = vmatpush2.bf16.msra.mxu0 %v4327
  %5658 = vmatprep.subr.bf16.mxu0 %v4320
  %5659 = vmatpush2.bf16.msra.mxu0 %v4319
  %5660 = vmatprep.subr.bf16.mxu0 %v4312
  %5661 = vmatpush2.bf16.msra.mxu0 %v4311
  %5662 = vmatprep.subr.bf16.mxu0 %v4304
  %5663 = vmatpush2.bf16.msra.mxu0 %v4303
  %5664 = vmatprep.subr.bf16.mxu0 %v4296
  %5665 = vmatpush2.bf16.msra.mxu0 %v4295
  %5666 = vmatprep.subr.bf16.mxu0 %v4288
  %5667 = vmatpush2.bf16.msra.mxu0 %v4287
  %5668 = vmatprep.subr.bf16.mxu0 %v4280
  %5669 = vmatpush2.bf16.msra.mxu0 %v4279
  %5670 = vmatprep.subr.bf16.mxu0 %v4272
  %5671 = vmatpush2.bf16.msra.mxu0 %v4271
  %5672 = vmatprep.mubr.bf16.mxu0 %v5557
  %5673 = vmatmul.mubr.bf16.gmra.mxu0 %v5556
  %v5674 = vpop.f32.mrf.mxu0
  %v5675 = vadd.f32 0.0, %v5674
  %v5676 = vpop.f32.mrf.mxu0
  %v5677 = vadd.f32 0.0, %v5676
  %v5678 = vpop.f32.mrf.mxu0
  %v5679 = vpop.f32.mrf.mxu0
  %5680 = vdwg.mxu0
  %5681 = vmatprep.subr.bf16.mxu0 %v4266
  %5682 = vmatpush1.bf16.msra.mxu0 %v4265
  %5683 = vmatprep.subr.bf16.mxu0 %v4258
  %5684 = vmatpush1.bf16.msra.mxu0 %v4257
  %5685 = vmatprep.subr.bf16.mxu0 %v4250
  %5686 = vmatpush1.bf16.msra.mxu0 %v4249
  %5687 = vmatprep.subr.bf16.mxu0 %v4242
  %5688 = vmatpush1.bf16.msra.mxu0 %v4241
  %5689 = vmatprep.subr.bf16.mxu0 %v4234
  %5690 = vmatpush1.bf16.msra.mxu0 %v4233
  %5691 = vmatprep.subr.bf16.mxu0 %v4226
  %5692 = vmatpush1.bf16.msra.mxu0 %v4225
  %5693 = vmatprep.subr.bf16.mxu0 %v4218
  %5694 = vmatpush1.bf16.msra.mxu0 %v4217
  %5695 = vmatprep.subr.bf16.mxu0 %v4210
  %5696 = vmatpush1.bf16.msra.mxu0 %v4209
  %5697 = vmatprep.subr.bf16.mxu0 %v4330
  %5698 = vmatpush2.bf16.msra.mxu0 %v4329
  %5699 = vmatprep.subr.bf16.mxu0 %v4322
  %5700 = vmatpush2.bf16.msra.mxu0 %v4321
  %5701 = vmatprep.subr.bf16.mxu0 %v4314
  %5702 = vmatpush2.bf16.msra.mxu0 %v4313
  %5703 = vmatprep.subr.bf16.mxu0 %v4306
  %5704 = vmatpush2.bf16.msra.mxu0 %v4305
  %5705 = vmatprep.subr.bf16.mxu0 %v4298
  %5706 = vmatpush2.bf16.msra.mxu0 %v4297
  %5707 = vmatprep.subr.bf16.mxu0 %v4290
  %5708 = vmatpush2.bf16.msra.mxu0 %v4289
  %5709 = vmatprep.subr.bf16.mxu0 %v4282
  %5710 = vmatpush2.bf16.msra.mxu0 %v4281
  %5711 = vmatprep.subr.bf16.mxu0 %v4274
  %5712 = vmatpush2.bf16.msra.mxu0 %v4273
  %5713 = vmatprep.mubr.bf16.mxu0 %v5557
  %5714 = vmatmul.mubr.bf16.gmra.mxu0 %v5556
  %v5715 = vpop.f32.mrf.mxu0
  %v5716 = vadd.f32 0.0, %v5715
  %v5717 = vpop.f32.mrf.mxu0
  %v5718 = vadd.f32 0.0, %v5717
  %v5719 = vpop.f32.mrf.mxu0
  %v5720 = vpop.f32.mrf.mxu0
  %5721 = vdwg.mxu0
  %v5730 = vcombine.low %v5593, %v5595
  %v5731 = vcombine.low %v5634, %v5636
  %v5732 = vcombine.low %v5675, %v5677
  %v5733 = vcombine.low %v5716, %v5718
  %v5735 = vunpack.c.l.s4 1966171168
  %v5736 = vunpack.c.0.s8 %v5735
  %v5737 = vlaneseq
  %v5738 = vshrl.u32 %v5737, 7
  %v5739 = vsub.s32 %v5736, %v5738
  %v5740 = vrot.slane %v5730, %v5739
  %v5742 = vunpack.c.l.s4 1966171168
  %v5743 = vunpack.c.0.s8 %v5742
  %v5744 = vlaneseq
  %v5745 = vshrl.u32 %v5744, 7
  %v5746 = vsub.s32 %v5743, %v5745
  %v5747 = vrot.slane %v5731, %v5746
  %v5749 = vunpack.c.l.s4 1966171168
  %v5750 = vunpack.c.0.s8 %v5749
  %v5751 = vlaneseq
  %v5752 = vshrl.u32 %v5751, 7
  %v5753 = vsub.s32 %v5750, %v5752
  %v5754 = vrot.slane %v5732, %v5753
  %v5756 = vunpack.c.l.s4 1966171168
  %v5757 = vunpack.c.0.s8 %v5756
  %v5758 = vlaneseq
  %v5759 = vshrl.u32 %v5758, 7
  %v5760 = vsub.s32 %v5757, %v5759
  %v5761 = vrot.slane %v5733, %v5760
  %v5762 = vcombine.low %v5740, %v5747
  %v5763 = vcombine.low %v5754, %v5761
  %v5765 = vunpack.c.l.s4 1966171168
  %v5766 = vunpack.c.0.s8 %v5765
  %v5767 = vlaneseq
  %v5768 = vshrl.u32 %v5767, 7
  %v5769 = vsub.s32 %v5766, %v5768
  %v5770 = vrot.slane %v5762, %v5769
  %v5772 = vunpack.c.l.s4 1966171168
  %v5773 = vunpack.c.0.s8 %v5772
  %v5774 = vlaneseq
  %v5775 = vshrl.u32 %v5774, 7
  %v5776 = vsub.s32 %v5773, %v5775
  %v5777 = vrot.slane %v5763, %v5776
  %v5778 = vcombine.low %v5770, %v5777
  %v5780 = vadd.f32 %v5544, %v5778
  %v5781 = vxor.u32 %v5780, 2147483648
  %v5782 = vmul.f32 %v5781, 1.442695
  %v5783 = vpow.pop %v5782
  %v5784 = vadd.f32 %v5783, 1.0
  %v5785 = vrcp.pop %v5784
  %v5786 = vmul.f32 1.0, %v5785
  %v5788 = vrot.slane %v5780, 2
  %v5790 = vxor.u32 %v5788, 2147483648
  %v5791 = vmul.f32 %v5790, 1.442695
  %v5792 = vpow.pop %v5791
  %v5793 = vadd.f32 %v5792, 1.0
  %v5794 = vrcp.pop %v5793
  %v5795 = vmul.f32 1.0, %v5794
  %v5796 = vrot.slane %v5780, 4
  %v5798 = vtanh.pop %v5796
  %v5799 = vrot.slane %v5780, 6
  %v5801 = vxor.u32 %v5799, 2147483648
  %v5802 = vmul.f32 %v5801, 1.442695
  %v5803 = vpow.pop %v5802
  %v5804 = vadd.f32 %v5803, 1.0
  %v5805 = vrcp.pop %v5804
  %v5806 = vmul.f32 1.0, %v5805
  %v5807 = vmul.f32 %v5795, %v5261
  %v5808 = vmul.f32 %v5786, %v5798
  %v5809 = vadd.f32 %v5807, %v5808
  %v5810 = vtanh.pop %v5809
  %v5811 = vmul.f32 %v5806, %v5810
  %s5812 = scalar_lea.vmem %s10, 2
  %5813 = vst.msk [vmem:[%s5812] ss:$8 sm:$0x3] %vm4716, %v5540
  %5814 = vst.msk [vmem:[%s5812] ss:$8 sm:$0x0] %vm4716, %v5540
  %s5815 = scalar_lea.vmem %s11, 5
  %5816 = vst.msk [vmem:[%s5815] ss:$8 sm:$0x3] %vm4716, %v5811
  %5817 = vst.msk [vmem:[%s5815] ss:$8 sm:$0x0] %vm4716, %v5811
  %s5818 = scalar_lea.vmem [#allocation2], 3
  %v5819 = vld [vmem:[%s5818] ss:$8 sm:$0xf]
  %v5820 = vld [vmem:[%s5818] ss:$8 sm:$0xf0]
  %v5821 = vor.u32 %v5819, %v5820
  %v5823 = vlaneseq
  %v5824 = vshrl.u32 %v5823, 7
  %v5825 = vsub.s32 0, %v5824
  %v5826 = vrot.slane %v5540, %v5825
  %v5827 = vlaneseq
  %v5828 = vshrl.u32 %v5827, 7
  %v5829 = vsub.s32 1, %v5828
  %v5830 = vrot.slane %v5540, %v5829
  %v5833 = vpack.c.bf16 %v5826, %v5826
  %v5834 = vpack.c.bf16 %v5830, %v5830
  %5835 = vmatprep.subr.bf16.mxu0 %v3362
  %5836 = vmatpush1.bf16.msra.mxu0 %v3361
  %5837 = vmatprep.subr.bf16.mxu0 %v3354
  %5838 = vmatpush1.bf16.msra.mxu0 %v3353
  %5839 = vmatprep.subr.bf16.mxu0 %v3346
  %5840 = vmatpush1.bf16.msra.mxu0 %v3345
  %5841 = vmatprep.subr.bf16.mxu0 %v3338
  %5842 = vmatpush1.bf16.msra.mxu0 %v3337
  %5843 = vmatprep.subr.bf16.mxu0 %v3330
  %5844 = vmatpush1.bf16.msra.mxu0 %v3329
  %5845 = vmatprep.subr.bf16.mxu0 %v3322
  %5846 = vmatpush1.bf16.msra.mxu0 %v3321
  %5847 = vmatprep.subr.bf16.mxu0 %v3314
  %5848 = vmatpush1.bf16.msra.mxu0 %v3313
  %5849 = vmatprep.subr.bf16.mxu0 %v3306
  %5850 = vmatpush1.bf16.msra.mxu0 %v3305
  %5851 = vmatprep.subr.bf16.mxu0 %v3426
  %5852 = vmatpush2.bf16.msra.mxu0 %v3425
  %5853 = vmatprep.subr.bf16.mxu0 %v3418
  %5854 = vmatpush2.bf16.msra.mxu0 %v3417
  %5855 = vmatprep.subr.bf16.mxu0 %v3410
  %5856 = vmatpush2.bf16.msra.mxu0 %v3409
  %5857 = vmatprep.subr.bf16.mxu0 %v3402
  %5858 = vmatpush2.bf16.msra.mxu0 %v3401
  %5859 = vmatprep.subr.bf16.mxu0 %v3394
  %5860 = vmatpush2.bf16.msra.mxu0 %v3393
  %5861 = vmatprep.subr.bf16.mxu0 %v3386
  %5862 = vmatpush2.bf16.msra.mxu0 %v3385
  %5863 = vmatprep.subr.bf16.mxu0 %v3378
  %5864 = vmatpush2.bf16.msra.mxu0 %v3377
  %5865 = vmatprep.subr.bf16.mxu0 %v3370
  %5866 = vmatpush2.bf16.msra.mxu0 %v3369
  %5867 = vmatprep.mubr.bf16.mxu0 %v5834
  %5868 = vmatmul.mubr.bf16.gmra.mxu0 %v5833
  %v5869 = vpop.f32.mrf.mxu0
  %v5870 = vadd.f32 0.0, %v5869
  %v5871 = vpop.f32.mrf.mxu0
  %v5872 = vadd.f32 0.0, %v5871
  %v5873 = vpop.f32.mrf.mxu0
  %v5874 = vpop.f32.mrf.mxu0
  %5875 = vdwg.mxu0
  %5876 = vmatprep.subr.bf16.mxu0 %v3364
  %5877 = vmatpush1.bf16.msra.mxu0 %v3363
  %5878 = vmatprep.subr.bf16.mxu0 %v3356
  %5879 = vmatpush1.bf16.msra.mxu0 %v3355
  %5880 = vmatprep.subr.bf16.mxu0 %v3348
  %5881 = vmatpush1.bf16.msra.mxu0 %v3347
  %5882 = vmatprep.subr.bf16.mxu0 %v3340
  %5883 = vmatpush1.bf16.msra.mxu0 %v3339
  %5884 = vmatprep.subr.bf16.mxu0 %v3332
  %5885 = vmatpush1.bf16.msra.mxu0 %v3331
  %5886 = vmatprep.subr.bf16.mxu0 %v3324
  %5887 = vmatpush1.bf16.msra.mxu0 %v3323
  %5888 = vmatprep.subr.bf16.mxu0 %v3316
  %5889 = vmatpush1.bf16.msra.mxu0 %v3315
  %5890 = vmatprep.subr.bf16.mxu0 %v3308
  %5891 = vmatpush1.bf16.msra.mxu0 %v3307
  %5892 = vmatprep.subr.bf16.mxu0 %v3428
  %5893 = vmatpush2.bf16.msra.mxu0 %v3427
  %5894 = vmatprep.subr.bf16.mxu0 %v3420
  %5895 = vmatpush2.bf16.msra.mxu0 %v3419
  %5896 = vmatprep.subr.bf16.mxu0 %v3412
  %5897 = vmatpush2.bf16.msra.mxu0 %v3411
  %5898 = vmatprep.subr.bf16.mxu0 %v3404
  %5899 = vmatpush2.bf16.msra.mxu0 %v3403
  %5900 = vmatprep.subr.bf16.mxu0 %v3396
  %5901 = vmatpush2.bf16.msra.mxu0 %v3395
  %5902 = vmatprep.subr.bf16.mxu0 %v3388
  %5903 = vmatpush2.bf16.msra.mxu0 %v3387
  %5904 = vmatprep.subr.bf16.mxu0 %v3380
  %5905 = vmatpush2.bf16.msra.mxu0 %v3379
  %5906 = vmatprep.subr.bf16.mxu0 %v3372
  %5907 = vmatpush2.bf16.msra.mxu0 %v3371
  %5908 = vmatprep.mubr.bf16.mxu0 %v5834
  %5909 = vmatmul.mubr.bf16.gmra.mxu0 %v5833
  %v5910 = vpop.f32.mrf.mxu0
  %v5911 = vadd.f32 0.0, %v5910
  %v5912 = vpop.f32.mrf.mxu0
  %v5913 = vadd.f32 0.0, %v5912
  %v5914 = vpop.f32.mrf.mxu0
  %v5915 = vpop.f32.mrf.mxu0
  %5916 = vdwg.mxu0
  %5917 = vmatprep.subr.bf16.mxu0 %v3366
  %5918 = vmatpush1.bf16.msra.mxu0 %v3365
  %5919 = vmatprep.subr.bf16.mxu0 %v3358
  %5920 = vmatpush1.bf16.msra.mxu0 %v3357
  %5921 = vmatprep.subr.bf16.mxu0 %v3350
  %5922 = vmatpush1.bf16.msra.mxu0 %v3349
  %5923 = vmatprep.subr.bf16.mxu0 %v3342
  %5924 = vmatpush1.bf16.msra.mxu0 %v3341
  %5925 = vmatprep.subr.bf16.mxu0 %v3334
  %5926 = vmatpush1.bf16.msra.mxu0 %v3333
  %5927 = vmatprep.subr.bf16.mxu0 %v3326
  %5928 = vmatpush1.bf16.msra.mxu0 %v3325
  %5929 = vmatprep.subr.bf16.mxu0 %v3318
  %5930 = vmatpush1.bf16.msra.mxu0 %v3317
  %5931 = vmatprep.subr.bf16.mxu0 %v3310
  %5932 = vmatpush1.bf16.msra.mxu0 %v3309
  %5933 = vmatprep.subr.bf16.mxu0 %v3430
  %5934 = vmatpush2.bf16.msra.mxu0 %v3429
  %5935 = vmatprep.subr.bf16.mxu0 %v3422
  %5936 = vmatpush2.bf16.msra.mxu0 %v3421
  %5937 = vmatprep.subr.bf16.mxu0 %v3414
  %5938 = vmatpush2.bf16.msra.mxu0 %v3413
  %5939 = vmatprep.subr.bf16.mxu0 %v3406
  %5940 = vmatpush2.bf16.msra.mxu0 %v3405
  %5941 = vmatprep.subr.bf16.mxu0 %v3398
  %5942 = vmatpush2.bf16.msra.mxu0 %v3397
  %5943 = vmatprep.subr.bf16.mxu0 %v3390
  %5944 = vmatpush2.bf16.msra.mxu0 %v3389
  %5945 = vmatprep.subr.bf16.mxu0 %v3382
  %5946 = vmatpush2.bf16.msra.mxu0 %v3381
  %5947 = vmatprep.subr.bf16.mxu0 %v3374
  %5948 = vmatpush2.bf16.msra.mxu0 %v3373
  %5949 = vmatprep.mubr.bf16.mxu0 %v5834
  %5950 = vmatmul.mubr.bf16.gmra.mxu0 %v5833
  %v5951 = vpop.f32.mrf.mxu0
  %v5952 = vadd.f32 0.0, %v5951
  %v5953 = vpop.f32.mrf.mxu0
  %v5954 = vadd.f32 0.0, %v5953
  %v5955 = vpop.f32.mrf.mxu0
  %v5956 = vpop.f32.mrf.mxu0
  %5957 = vdwg.mxu0
  %5958 = vmatprep.subr.bf16.mxu0 %v3368
  %5959 = vmatpush1.bf16.msra.mxu0 %v3367
  %5960 = vmatprep.subr.bf16.mxu0 %v3360
  %5961 = vmatpush1.bf16.msra.mxu0 %v3359
  %5962 = vmatprep.subr.bf16.mxu0 %v3352
  %5963 = vmatpush1.bf16.msra.mxu0 %v3351
  %5964 = vmatprep.subr.bf16.mxu0 %v3344
  %5965 = vmatpush1.bf16.msra.mxu0 %v3343
  %5966 = vmatprep.subr.bf16.mxu0 %v3336
  %5967 = vmatpush1.bf16.msra.mxu0 %v3335
  %5968 = vmatprep.subr.bf16.mxu0 %v3328
  %5969 = vmatpush1.bf16.msra.mxu0 %v3327
  %5970 = vmatprep.subr.bf16.mxu0 %v3320
  %5971 = vmatpush1.bf16.msra.mxu0 %v3319
  %5972 = vmatprep.subr.bf16.mxu0 %v3312
  %5973 = vmatpush1.bf16.msra.mxu0 %v3311
  %5974 = vmatprep.subr.bf16.mxu0 %v3432
  %5975 = vmatpush2.bf16.msra.mxu0 %v3431
  %5976 = vmatprep.subr.bf16.mxu0 %v3424
  %5977 = vmatpush2.bf16.msra.mxu0 %v3423
  %5978 = vmatprep.subr.bf16.mxu0 %v3416
  %5979 = vmatpush2.bf16.msra.mxu0 %v3415
  %5980 = vmatprep.subr.bf16.mxu0 %v3408
  %5981 = vmatpush2.bf16.msra.mxu0 %v3407
  %5982 = vmatprep.subr.bf16.mxu0 %v3400
  %5983 = vmatpush2.bf16.msra.mxu0 %v3399
  %5984 = vmatprep.subr.bf16.mxu0 %v3392
  %5985 = vmatpush2.bf16.msra.mxu0 %v3391
  %5986 = vmatprep.subr.bf16.mxu0 %v3384
  %5987 = vmatpush2.bf16.msra.mxu0 %v3383
  %5988 = vmatprep.subr.bf16.mxu0 %v3376
  %5989 = vmatpush2.bf16.msra.mxu0 %v3375
  %5990 = vmatprep.mubr.bf16.mxu0 %v5834
  %5991 = vmatmul.mubr.bf16.gmra.mxu0 %v5833
  %v5992 = vpop.f32.mrf.mxu0
  %v5993 = vadd.f32 0.0, %v5992
  %v5994 = vpop.f32.mrf.mxu0
  %v5995 = vadd.f32 0.0, %v5994
  %v5996 = vpop.f32.mrf.mxu0
  %v5997 = vpop.f32.mrf.mxu0
  %5998 = vdwg.mxu0
  %v6007 = vcombine.low %v5870, %v5872
  %v6008 = vcombine.low %v5911, %v5913
  %v6009 = vcombine.low %v5952, %v5954
  %v6010 = vcombine.low %v5993, %v5995
  %v6012 = vunpack.c.l.s4 1966171168
  %v6013 = vunpack.c.0.s8 %v6012
  %v6014 = vlaneseq
  %v6015 = vshrl.u32 %v6014, 7
  %v6016 = vsub.s32 %v6013, %v6015
  %v6017 = vrot.slane %v6007, %v6016
  %v6019 = vunpack.c.l.s4 1966171168
  %v6020 = vunpack.c.0.s8 %v6019
  %v6021 = vlaneseq
  %v6022 = vshrl.u32 %v6021, 7
  %v6023 = vsub.s32 %v6020, %v6022
  %v6024 = vrot.slane %v6008, %v6023
  %v6026 = vunpack.c.l.s4 1966171168
  %v6027 = vunpack.c.0.s8 %v6026
  %v6028 = vlaneseq
  %v6029 = vshrl.u32 %v6028, 7
  %v6030 = vsub.s32 %v6027, %v6029
  %v6031 = vrot.slane %v6009, %v6030
  %v6033 = vunpack.c.l.s4 1966171168
  %v6034 = vunpack.c.0.s8 %v6033
  %v6035 = vlaneseq
  %v6036 = vshrl.u32 %v6035, 7
  %v6037 = vsub.s32 %v6034, %v6036
  %v6038 = vrot.slane %v6010, %v6037
  %v6039 = vcombine.low %v6017, %v6024
  %v6040 = vcombine.low %v6031, %v6038
  %v6042 = vunpack.c.l.s4 1966171168
  %v6043 = vunpack.c.0.s8 %v6042
  %v6044 = vlaneseq
  %v6045 = vshrl.u32 %v6044, 7
  %v6046 = vsub.s32 %v6043, %v6045
  %v6047 = vrot.slane %v6039, %v6046
  %v6049 = vunpack.c.l.s4 1966171168
  %v6050 = vunpack.c.0.s8 %v6049
  %v6051 = vlaneseq
  %v6052 = vshrl.u32 %v6051, 7
  %v6053 = vsub.s32 %v6050, %v6052
  %v6054 = vrot.slane %v6040, %v6053
  %v6055 = vcombine.low %v6047, %v6054
  %v6057 = vadd.f32 %v5821, %v6055
  %v6058 = vxor.u32 %v6057, 2147483648
  %v6059 = vmul.f32 %v6058, 1.442695
  %v6060 = vpow.pop %v6059
  %v6061 = vadd.f32 %v6060, 1.0
  %v6062 = vrcp.pop %v6061
  %v6063 = vmul.f32 1.0, %v6062
  %v6065 = vrot.slane %v6057, 2
  %v6067 = vxor.u32 %v6065, 2147483648
  %v6068 = vmul.f32 %v6067, 1.442695
  %v6069 = vpow.pop %v6068
  %v6070 = vadd.f32 %v6069, 1.0
  %v6071 = vrcp.pop %v6070
  %v6072 = vmul.f32 1.0, %v6071
  %v6073 = vrot.slane %v6057, 4
  %v6075 = vtanh.pop %v6073
  %v6076 = vrot.slane %v6057, 6
  %v6078 = vxor.u32 %v6076, 2147483648
  %v6079 = vmul.f32 %v6078, 1.442695
  %v6080 = vpow.pop %v6079
  %v6081 = vadd.f32 %v6080, 1.0
  %v6082 = vrcp.pop %v6081
  %v6083 = vmul.f32 1.0, %v6082
  %v6084 = vmul.f32 %v6072, %v5538
  %v6085 = vmul.f32 %v6063, %v6075
  %v6086 = vadd.f32 %v6084, %v6085
  %v6087 = vtanh.pop %v6086
  %v6088 = vmul.f32 %v6083, %v6087
  %s6089 = scalar_lea.vmem [#allocation3], 4
  %v6090 = vld [vmem:[%s6089] ss:$8 sm:$0xf]
  %v6091 = vld [vmem:[%s6089] ss:$8 sm:$0xf0]
  %v6092 = vor.u32 %v6090, %v6091
  %v6094 = vlaneseq
  %v6095 = vshrl.u32 %v6094, 7
  %v6096 = vsub.s32 0, %v6095
  %v6097 = vrot.slane %v5811, %v6096
  %v6098 = vlaneseq
  %v6099 = vshrl.u32 %v6098, 7
  %v6100 = vsub.s32 1, %v6099
  %v6101 = vrot.slane %v5811, %v6100
  %v6104 = vpack.c.bf16 %v6097, %v6097
  %v6105 = vpack.c.bf16 %v6101, %v6101
  %6106 = vmatprep.subr.bf16.mxu0 %v4260
  %6107 = vmatpush1.bf16.msra.mxu0 %v4259
  %6108 = vmatprep.subr.bf16.mxu0 %v4252
  %6109 = vmatpush1.bf16.msra.mxu0 %v4251
  %6110 = vmatprep.subr.bf16.mxu0 %v4244
  %6111 = vmatpush1.bf16.msra.mxu0 %v4243
  %6112 = vmatprep.subr.bf16.mxu0 %v4236
  %6113 = vmatpush1.bf16.msra.mxu0 %v4235
  %6114 = vmatprep.subr.bf16.mxu0 %v4228
  %6115 = vmatpush1.bf16.msra.mxu0 %v4227
  %6116 = vmatprep.subr.bf16.mxu0 %v4220
  %6117 = vmatpush1.bf16.msra.mxu0 %v4219
  %6118 = vmatprep.subr.bf16.mxu0 %v4212
  %6119 = vmatpush1.bf16.msra.mxu0 %v4211
  %6120 = vmatprep.subr.bf16.mxu0 %v4204
  %6121 = vmatpush1.bf16.msra.mxu0 %v4203
  %6122 = vmatprep.subr.bf16.mxu0 %v4324
  %6123 = vmatpush2.bf16.msra.mxu0 %v4323
  %6124 = vmatprep.subr.bf16.mxu0 %v4316
  %6125 = vmatpush2.bf16.msra.mxu0 %v4315
  %6126 = vmatprep.subr.bf16.mxu0 %v4308
  %6127 = vmatpush2.bf16.msra.mxu0 %v4307
  %6128 = vmatprep.subr.bf16.mxu0 %v4300
  %6129 = vmatpush2.bf16.msra.mxu0 %v4299
  %6130 = vmatprep.subr.bf16.mxu0 %v4292
  %6131 = vmatpush2.bf16.msra.mxu0 %v4291
  %6132 = vmatprep.subr.bf16.mxu0 %v4284
  %6133 = vmatpush2.bf16.msra.mxu0 %v4283
  %6134 = vmatprep.subr.bf16.mxu0 %v4276
  %6135 = vmatpush2.bf16.msra.mxu0 %v4275
  %6136 = vmatprep.subr.bf16.mxu0 %v4268
  %6137 = vmatpush2.bf16.msra.mxu0 %v4267
  %6138 = vmatprep.mubr.bf16.mxu0 %v6105
  %6139 = vmatmul.mubr.bf16.gmra.mxu0 %v6104
  %v6140 = vpop.f32.mrf.mxu0
  %v6141 = vadd.f32 0.0, %v6140
  %v6142 = vpop.f32.mrf.mxu0
  %v6143 = vadd.f32 0.0, %v6142
  %v6144 = vpop.f32.mrf.mxu0
  %v6145 = vpop.f32.mrf.mxu0
  %6146 = vdwg.mxu0
  %6147 = vmatprep.subr.bf16.mxu0 %v4262
  %6148 = vmatpush1.bf16.msra.mxu0 %v4261
  %6149 = vmatprep.subr.bf16.mxu0 %v4254
  %6150 = vmatpush1.bf16.msra.mxu0 %v4253
  %6151 = vmatprep.subr.bf16.mxu0 %v4246
  %6152 = vmatpush1.bf16.msra.mxu0 %v4245
  %6153 = vmatprep.subr.bf16.mxu0 %v4238
  %6154 = vmatpush1.bf16.msra.mxu0 %v4237
  %6155 = vmatprep.subr.bf16.mxu0 %v4230
  %6156 = vmatpush1.bf16.msra.mxu0 %v4229
  %6157 = vmatprep.subr.bf16.mxu0 %v4222
  %6158 = vmatpush1.bf16.msra.mxu0 %v4221
  %6159 = vmatprep.subr.bf16.mxu0 %v4214
  %6160 = vmatpush1.bf16.msra.mxu0 %v4213
  %6161 = vmatprep.subr.bf16.mxu0 %v4206
  %6162 = vmatpush1.bf16.msra.mxu0 %v4205
  %6163 = vmatprep.subr.bf16.mxu0 %v4326
  %6164 = vmatpush2.bf16.msra.mxu0 %v4325
  %6165 = vmatprep.subr.bf16.mxu0 %v4318
  %6166 = vmatpush2.bf16.msra.mxu0 %v4317
  %6167 = vmatprep.subr.bf16.mxu0 %v4310
  %6168 = vmatpush2.bf16.msra.mxu0 %v4309
  %6169 = vmatprep.subr.bf16.mxu0 %v4302
  %6170 = vmatpush2.bf16.msra.mxu0 %v4301
  %6171 = vmatprep.subr.bf16.mxu0 %v4294
  %6172 = vmatpush2.bf16.msra.mxu0 %v4293
  %6173 = vmatprep.subr.bf16.mxu0 %v4286
  %6174 = vmatpush2.bf16.msra.mxu0 %v4285
  %6175 = vmatprep.subr.bf16.mxu0 %v4278
  %6176 = vmatpush2.bf16.msra.mxu0 %v4277
  %6177 = vmatprep.subr.bf16.mxu0 %v4270
  %6178 = vmatpush2.bf16.msra.mxu0 %v4269
  %6179 = vmatprep.mubr.bf16.mxu0 %v6105
  %6180 = vmatmul.mubr.bf16.gmra.mxu0 %v6104
  %v6181 = vpop.f32.mrf.mxu0
  %v6182 = vadd.f32 0.0, %v6181
  %v6183 = vpop.f32.mrf.mxu0
  %v6184 = vadd.f32 0.0, %v6183
  %v6185 = vpop.f32.mrf.mxu0
  %v6186 = vpop.f32.mrf.mxu0
  %6187 = vdwg.mxu0
  %6188 = vmatprep.subr.bf16.mxu0 %v4264
  %6189 = vmatpush1.bf16.msra.mxu0 %v4263
  %6190 = vmatprep.subr.bf16.mxu0 %v4256
  %6191 = vmatpush1.bf16.msra.mxu0 %v4255
  %6192 = vmatprep.subr.bf16.mxu0 %v4248
  %6193 = vmatpush1.bf16.msra.mxu0 %v4247
  %6194 = vmatprep.subr.bf16.mxu0 %v4240
  %6195 = vmatpush1.bf16.msra.mxu0 %v4239
  %6196 = vmatprep.subr.bf16.mxu0 %v4232
  %6197 = vmatpush1.bf16.msra.mxu0 %v4231
  %6198 = vmatprep.subr.bf16.mxu0 %v4224
  %6199 = vmatpush1.bf16.msra.mxu0 %v4223
  %6200 = vmatprep.subr.bf16.mxu0 %v4216
  %6201 = vmatpush1.bf16.msra.mxu0 %v4215
  %6202 = vmatprep.subr.bf16.mxu0 %v4208
  %6203 = vmatpush1.bf16.msra.mxu0 %v4207
  %6204 = vmatprep.subr.bf16.mxu0 %v4328
  %6205 = vmatpush2.bf16.msra.mxu0 %v4327
  %6206 = vmatprep.subr.bf16.mxu0 %v4320
  %6207 = vmatpush2.bf16.msra.mxu0 %v4319
  %6208 = vmatprep.subr.bf16.mxu0 %v4312
  %6209 = vmatpush2.bf16.msra.mxu0 %v4311
  %6210 = vmatprep.subr.bf16.mxu0 %v4304
  %6211 = vmatpush2.bf16.msra.mxu0 %v4303
  %6212 = vmatprep.subr.bf16.mxu0 %v4296
  %6213 = vmatpush2.bf16.msra.mxu0 %v4295
  %6214 = vmatprep.subr.bf16.mxu0 %v4288
  %6215 = vmatpush2.bf16.msra.mxu0 %v4287
  %6216 = vmatprep.subr.bf16.mxu0 %v4280
  %6217 = vmatpush2.bf16.msra.mxu0 %v4279
  %6218 = vmatprep.subr.bf16.mxu0 %v4272
  %6219 = vmatpush2.bf16.msra.mxu0 %v4271
  %6220 = vmatprep.mubr.bf16.mxu0 %v6105
  %6221 = vmatmul.mubr.bf16.gmra.mxu0 %v6104
  %v6222 = vpop.f32.mrf.mxu0
  %v6223 = vadd.f32 0.0, %v6222
  %v6224 = vpop.f32.mrf.mxu0
  %v6225 = vadd.f32 0.0, %v6224
  %v6226 = vpop.f32.mrf.mxu0
  %v6227 = vpop.f32.mrf.mxu0
  %6228 = vdwg.mxu0
  %6229 = vmatprep.subr.bf16.mxu0 %v4266
  %6230 = vmatpush1.bf16.msra.mxu0 %v4265
  %6231 = vmatprep.subr.bf16.mxu0 %v4258
  %6232 = vmatpush1.bf16.msra.mxu0 %v4257
  %6233 = vmatprep.subr.bf16.mxu0 %v4250
  %6234 = vmatpush1.bf16.msra.mxu0 %v4249
  %6235 = vmatprep.subr.bf16.mxu0 %v4242
  %6236 = vmatpush1.bf16.msra.mxu0 %v4241
  %6237 = vmatprep.subr.bf16.mxu0 %v4234
  %6238 = vmatpush1.bf16.msra.mxu0 %v4233
  %6239 = vmatprep.subr.bf16.mxu0 %v4226
  %6240 = vmatpush1.bf16.msra.mxu0 %v4225
  %6241 = vmatprep.subr.bf16.mxu0 %v4218
  %6242 = vmatpush1.bf16.msra.mxu0 %v4217
  %6243 = vmatprep.subr.bf16.mxu0 %v4210
  %6244 = vmatpush1.bf16.msra.mxu0 %v4209
  %6245 = vmatprep.subr.bf16.mxu0 %v4330
  %6246 = vmatpush2.bf16.msra.mxu0 %v4329
  %6247 = vmatprep.subr.bf16.mxu0 %v4322
  %6248 = vmatpush2.bf16.msra.mxu0 %v4321
  %6249 = vmatprep.subr.bf16.mxu0 %v4314
  %6250 = vmatpush2.bf16.msra.mxu0 %v4313
  %6251 = vmatprep.subr.bf16.mxu0 %v4306
  %6252 = vmatpush2.bf16.msra.mxu0 %v4305
  %6253 = vmatprep.subr.bf16.mxu0 %v4298
  %6254 = vmatpush2.bf16.msra.mxu0 %v4297
  %6255 = vmatprep.subr.bf16.mxu0 %v4290
  %6256 = vmatpush2.bf16.msra.mxu0 %v4289
  %6257 = vmatprep.subr.bf16.mxu0 %v4282
  %6258 = vmatpush2.bf16.msra.mxu0 %v4281
  %6259 = vmatprep.subr.bf16.mxu0 %v4274
  %6260 = vmatpush2.bf16.msra.mxu0 %v4273
  %6261 = vmatprep.mubr.bf16.mxu0 %v6105
  %6262 = vmatmul.mubr.bf16.gmra.mxu0 %v6104
  %v6263 = vpop.f32.mrf.mxu0
  %v6264 = vadd.f32 0.0, %v6263
  %v6265 = vpop.f32.mrf.mxu0
  %v6266 = vadd.f32 0.0, %v6265
  %v6267 = vpop.f32.mrf.mxu0
  %v6268 = vpop.f32.mrf.mxu0
  %6269 = vdwg.mxu0
  %v6278 = vcombine.low %v6141, %v6143
  %v6279 = vcombine.low %v6182, %v6184
  %v6280 = vcombine.low %v6223, %v6225
  %v6281 = vcombine.low %v6264, %v6266
  %v6283 = vunpack.c.l.s4 1966171168
  %v6284 = vunpack.c.0.s8 %v6283
  %v6285 = vlaneseq
  %v6286 = vshrl.u32 %v6285, 7
  %v6287 = vsub.s32 %v6284, %v6286
  %v6288 = vrot.slane %v6278, %v6287
  %v6290 = vunpack.c.l.s4 1966171168
  %v6291 = vunpack.c.0.s8 %v6290
  %v6292 = vlaneseq
  %v6293 = vshrl.u32 %v6292, 7
  %v6294 = vsub.s32 %v6291, %v6293
  %v6295 = vrot.slane %v6279, %v6294
  %v6297 = vunpack.c.l.s4 1966171168
  %v6298 = vunpack.c.0.s8 %v6297
  %v6299 = vlaneseq
  %v6300 = vshrl.u32 %v6299, 7
  %v6301 = vsub.s32 %v6298, %v6300
  %v6302 = vrot.slane %v6280, %v6301
  %v6304 = vunpack.c.l.s4 1966171168
  %v6305 = vunpack.c.0.s8 %v6304
  %v6306 = vlaneseq
  %v6307 = vshrl.u32 %v6306, 7
  %v6308 = vsub.s32 %v6305, %v6307
  %v6309 = vrot.slane %v6281, %v6308
  %v6310 = vcombine.low %v6288, %v6295
  %v6311 = vcombine.low %v6302, %v6309
  %v6313 = vunpack.c.l.s4 1966171168
  %v6314 = vunpack.c.0.s8 %v6313
  %v6315 = vlaneseq
  %v6316 = vshrl.u32 %v6315, 7
  %v6317 = vsub.s32 %v6314, %v6316
  %v6318 = vrot.slane %v6310, %v6317
  %v6320 = vunpack.c.l.s4 1966171168
  %v6321 = vunpack.c.0.s8 %v6320
  %v6322 = vlaneseq
  %v6323 = vshrl.u32 %v6322, 7
  %v6324 = vsub.s32 %v6321, %v6323
  %v6325 = vrot.slane %v6311, %v6324
  %v6326 = vcombine.low %v6318, %v6325
  %v6328 = vadd.f32 %v6092, %v6326
  %v6329 = vxor.u32 %v6328, 2147483648
  %v6330 = vmul.f32 %v6329, 1.442695
  %v6331 = vpow.pop %v6330
  %v6332 = vadd.f32 %v6331, 1.0
  %v6333 = vrcp.pop %v6332
  %v6334 = vmul.f32 1.0, %v6333
  %v6336 = vrot.slane %v6328, 2
  %v6338 = vxor.u32 %v6336, 2147483648
  %v6339 = vmul.f32 %v6338, 1.442695
  %v6340 = vpow.pop %v6339
  %v6341 = vadd.f32 %v6340, 1.0
  %v6342 = vrcp.pop %v6341
  %v6343 = vmul.f32 1.0, %v6342
  %v6344 = vrot.slane %v6328, 4
  %v6346 = vtanh.pop %v6344
  %v6347 = vrot.slane %v6328, 6
  %v6349 = vxor.u32 %v6347, 2147483648
  %v6350 = vmul.f32 %v6349, 1.442695
  %v6351 = vpow.pop %v6350
  %v6352 = vadd.f32 %v6351, 1.0
  %v6353 = vrcp.pop %v6352
  %v6354 = vmul.f32 1.0, %v6353
  %v6355 = vmul.f32 %v6343, %v5809
  %v6356 = vmul.f32 %v6334, %v6346
  %v6357 = vadd.f32 %v6355, %v6356
  %v6358 = vtanh.pop %v6357
  %v6359 = vmul.f32 %v6354, %v6358
  %s6360 = scalar_lea.vmem %s10, 3
  %6361 = vst.msk [vmem:[%s6360] ss:$8 sm:$0x3] %vm4716, %v6088
  %6362 = vst.msk [vmem:[%s6360] ss:$8 sm:$0x0] %vm4716, %v6088
  %s6363 = scalar_lea.vmem %s11, 4
  %6364 = vst.msk [vmem:[%s6363] ss:$8 sm:$0x3] %vm4716, %v6359
  %6365 = vst.msk [vmem:[%s6363] ss:$8 sm:$0x0] %vm4716, %v6359
  %s6366 = scalar_lea.vmem [#allocation2], 4
  %v6367 = vld [vmem:[%s6366] ss:$8 sm:$0xf]
  %v6368 = vld [vmem:[%s6366] ss:$8 sm:$0xf0]
  %v6369 = vor.u32 %v6367, %v6368
  %v6371 = vlaneseq
  %v6372 = vshrl.u32 %v6371, 7
  %v6373 = vsub.s32 0, %v6372
  %v6374 = vrot.slane %v6088, %v6373
  %v6375 = vlaneseq
  %v6376 = vshrl.u32 %v6375, 7
  %v6377 = vsub.s32 1, %v6376
  %v6378 = vrot.slane %v6088, %v6377
  %v6381 = vpack.c.bf16 %v6374, %v6374
  %v6382 = vpack.c.bf16 %v6378, %v6378
  %6383 = vmatprep.subr.bf16.mxu0 %v3362
  %6384 = vmatpush1.bf16.msra.mxu0 %v3361
  %6385 = vmatprep.subr.bf16.mxu0 %v3354
  %6386 = vmatpush1.bf16.msra.mxu0 %v3353
  %6387 = vmatprep.subr.bf16.mxu0 %v3346
  %6388 = vmatpush1.bf16.msra.mxu0 %v3345
  %6389 = vmatprep.subr.bf16.mxu0 %v3338
  %6390 = vmatpush1.bf16.msra.mxu0 %v3337
  %6391 = vmatprep.subr.bf16.mxu0 %v3330
  %6392 = vmatpush1.bf16.msra.mxu0 %v3329
  %6393 = vmatprep.subr.bf16.mxu0 %v3322
  %6394 = vmatpush1.bf16.msra.mxu0 %v3321
  %6395 = vmatprep.subr.bf16.mxu0 %v3314
  %6396 = vmatpush1.bf16.msra.mxu0 %v3313
  %6397 = vmatprep.subr.bf16.mxu0 %v3306
  %6398 = vmatpush1.bf16.msra.mxu0 %v3305
  %6399 = vmatprep.subr.bf16.mxu0 %v3426
  %6400 = vmatpush2.bf16.msra.mxu0 %v3425
  %6401 = vmatprep.subr.bf16.mxu0 %v3418
  %6402 = vmatpush2.bf16.msra.mxu0 %v3417
  %6403 = vmatprep.subr.bf16.mxu0 %v3410
  %6404 = vmatpush2.bf16.msra.mxu0 %v3409
  %6405 = vmatprep.subr.bf16.mxu0 %v3402
  %6406 = vmatpush2.bf16.msra.mxu0 %v3401
  %6407 = vmatprep.subr.bf16.mxu0 %v3394
  %6408 = vmatpush2.bf16.msra.mxu0 %v3393
  %6409 = vmatprep.subr.bf16.mxu0 %v3386
  %6410 = vmatpush2.bf16.msra.mxu0 %v3385
  %6411 = vmatprep.subr.bf16.mxu0 %v3378
  %6412 = vmatpush2.bf16.msra.mxu0 %v3377
  %6413 = vmatprep.subr.bf16.mxu0 %v3370
  %6414 = vmatpush2.bf16.msra.mxu0 %v3369
  %6415 = vmatprep.mubr.bf16.mxu0 %v6382
  %6416 = vmatmul.mubr.bf16.gmra.mxu0 %v6381
  %v6417 = vpop.f32.mrf.mxu0
  %v6418 = vadd.f32 0.0, %v6417
  %v6419 = vpop.f32.mrf.mxu0
  %v6420 = vadd.f32 0.0, %v6419
  %v6421 = vpop.f32.mrf.mxu0
  %v6422 = vpop.f32.mrf.mxu0
  %6423 = vdwg.mxu0
  %6424 = vmatprep.subr.bf16.mxu0 %v3364
  %6425 = vmatpush1.bf16.msra.mxu0 %v3363
  %6426 = vmatprep.subr.bf16.mxu0 %v3356
  %6427 = vmatpush1.bf16.msra.mxu0 %v3355
  %6428 = vmatprep.subr.bf16.mxu0 %v3348
  %6429 = vmatpush1.bf16.msra.mxu0 %v3347
  %6430 = vmatprep.subr.bf16.mxu0 %v3340
  %6431 = vmatpush1.bf16.msra.mxu0 %v3339
  %6432 = vmatprep.subr.bf16.mxu0 %v3332
  %6433 = vmatpush1.bf16.msra.mxu0 %v3331
  %6434 = vmatprep.subr.bf16.mxu0 %v3324
  %6435 = vmatpush1.bf16.msra.mxu0 %v3323
  %6436 = vmatprep.subr.bf16.mxu0 %v3316
  %6437 = vmatpush1.bf16.msra.mxu0 %v3315
  %6438 = vmatprep.subr.bf16.mxu0 %v3308
  %6439 = vmatpush1.bf16.msra.mxu0 %v3307
  %6440 = vmatprep.subr.bf16.mxu0 %v3428
  %6441 = vmatpush2.bf16.msra.mxu0 %v3427
  %6442 = vmatprep.subr.bf16.mxu0 %v3420
  %6443 = vmatpush2.bf16.msra.mxu0 %v3419
  %6444 = vmatprep.subr.bf16.mxu0 %v3412
  %6445 = vmatpush2.bf16.msra.mxu0 %v3411
  %6446 = vmatprep.subr.bf16.mxu0 %v3404
  %6447 = vmatpush2.bf16.msra.mxu0 %v3403
  %6448 = vmatprep.subr.bf16.mxu0 %v3396
  %6449 = vmatpush2.bf16.msra.mxu0 %v3395
  %6450 = vmatprep.subr.bf16.mxu0 %v3388
  %6451 = vmatpush2.bf16.msra.mxu0 %v3387
  %6452 = vmatprep.subr.bf16.mxu0 %v3380
  %6453 = vmatpush2.bf16.msra.mxu0 %v3379
  %6454 = vmatprep.subr.bf16.mxu0 %v3372
  %6455 = vmatpush2.bf16.msra.mxu0 %v3371
  %6456 = vmatprep.mubr.bf16.mxu0 %v6382
  %6457 = vmatmul.mubr.bf16.gmra.mxu0 %v6381
  %v6458 = vpop.f32.mrf.mxu0
  %v6459 = vadd.f32 0.0, %v6458
  %v6460 = vpop.f32.mrf.mxu0
  %v6461 = vadd.f32 0.0, %v6460
  %v6462 = vpop.f32.mrf.mxu0
  %v6463 = vpop.f32.mrf.mxu0
  %6464 = vdwg.mxu0
  %6465 = vmatprep.subr.bf16.mxu0 %v3366
  %6466 = vmatpush1.bf16.msra.mxu0 %v3365
  %6467 = vmatprep.subr.bf16.mxu0 %v3358
  %6468 = vmatpush1.bf16.msra.mxu0 %v3357
  %6469 = vmatprep.subr.bf16.mxu0 %v3350
  %6470 = vmatpush1.bf16.msra.mxu0 %v3349
  %6471 = vmatprep.subr.bf16.mxu0 %v3342
  %6472 = vmatpush1.bf16.msra.mxu0 %v3341
  %6473 = vmatprep.subr.bf16.mxu0 %v3334
  %6474 = vmatpush1.bf16.msra.mxu0 %v3333
  %6475 = vmatprep.subr.bf16.mxu0 %v3326
  %6476 = vmatpush1.bf16.msra.mxu0 %v3325
  %6477 = vmatprep.subr.bf16.mxu0 %v3318
  %6478 = vmatpush1.bf16.msra.mxu0 %v3317
  %6479 = vmatprep.subr.bf16.mxu0 %v3310
  %6480 = vmatpush1.bf16.msra.mxu0 %v3309
  %6481 = vmatprep.subr.bf16.mxu0 %v3430
  %6482 = vmatpush2.bf16.msra.mxu0 %v3429
  %6483 = vmatprep.subr.bf16.mxu0 %v3422
  %6484 = vmatpush2.bf16.msra.mxu0 %v3421
  %6485 = vmatprep.subr.bf16.mxu0 %v3414
  %6486 = vmatpush2.bf16.msra.mxu0 %v3413
  %6487 = vmatprep.subr.bf16.mxu0 %v3406
  %6488 = vmatpush2.bf16.msra.mxu0 %v3405
  %6489 = vmatprep.subr.bf16.mxu0 %v3398
  %6490 = vmatpush2.bf16.msra.mxu0 %v3397
  %6491 = vmatprep.subr.bf16.mxu0 %v3390
  %6492 = vmatpush2.bf16.msra.mxu0 %v3389
  %6493 = vmatprep.subr.bf16.mxu0 %v3382
  %6494 = vmatpush2.bf16.msra.mxu0 %v3381
  %6495 = vmatprep.subr.bf16.mxu0 %v3374
  %6496 = vmatpush2.bf16.msra.mxu0 %v3373
  %6497 = vmatprep.mubr.bf16.mxu0 %v6382
  %6498 = vmatmul.mubr.bf16.gmra.mxu0 %v6381
  %v6499 = vpop.f32.mrf.mxu0
  %v6500 = vadd.f32 0.0, %v6499
  %v6501 = vpop.f32.mrf.mxu0
  %v6502 = vadd.f32 0.0, %v6501
  %v6503 = vpop.f32.mrf.mxu0
  %v6504 = vpop.f32.mrf.mxu0
  %6505 = vdwg.mxu0
  %6506 = vmatprep.subr.bf16.mxu0 %v3368
  %6507 = vmatpush1.bf16.msra.mxu0 %v3367
  %6508 = vmatprep.subr.bf16.mxu0 %v3360
  %6509 = vmatpush1.bf16.msra.mxu0 %v3359
  %6510 = vmatprep.subr.bf16.mxu0 %v3352
  %6511 = vmatpush1.bf16.msra.mxu0 %v3351
  %6512 = vmatprep.subr.bf16.mxu0 %v3344
  %6513 = vmatpush1.bf16.msra.mxu0 %v3343
  %6514 = vmatprep.subr.bf16.mxu0 %v3336
  %6515 = vmatpush1.bf16.msra.mxu0 %v3335
  %6516 = vmatprep.subr.bf16.mxu0 %v3328
  %6517 = vmatpush1.bf16.msra.mxu0 %v3327
  %6518 = vmatprep.subr.bf16.mxu0 %v3320
  %6519 = vmatpush1.bf16.msra.mxu0 %v3319
  %6520 = vmatprep.subr.bf16.mxu0 %v3312
  %6521 = vmatpush1.bf16.msra.mxu0 %v3311
  %6522 = vmatprep.subr.bf16.mxu0 %v3432
  %6523 = vmatpush2.bf16.msra.mxu0 %v3431
  %6524 = vmatprep.subr.bf16.mxu0 %v3424
  %6525 = vmatpush2.bf16.msra.mxu0 %v3423
  %6526 = vmatprep.subr.bf16.mxu0 %v3416
  %6527 = vmatpush2.bf16.msra.mxu0 %v3415
  %6528 = vmatprep.subr.bf16.mxu0 %v3408
  %6529 = vmatpush2.bf16.msra.mxu0 %v3407
  %6530 = vmatprep.subr.bf16.mxu0 %v3400
  %6531 = vmatpush2.bf16.msra.mxu0 %v3399
  %6532 = vmatprep.subr.bf16.mxu0 %v3392
  %6533 = vmatpush2.bf16.msra.mxu0 %v3391
  %6534 = vmatprep.subr.bf16.mxu0 %v3384
  %6535 = vmatpush2.bf16.msra.mxu0 %v3383
  %6536 = vmatprep.subr.bf16.mxu0 %v3376
  %6537 = vmatpush2.bf16.msra.mxu0 %v3375
  %6538 = vmatprep.mubr.bf16.mxu0 %v6382
  %6539 = vmatmul.mubr.bf16.gmra.mxu0 %v6381
  %v6540 = vpop.f32.mrf.mxu0
  %v6541 = vadd.f32 0.0, %v6540
  %v6542 = vpop.f32.mrf.mxu0
  %v6543 = vadd.f32 0.0, %v6542
  %v6544 = vpop.f32.mrf.mxu0
  %v6545 = vpop.f32.mrf.mxu0
  %6546 = vdwg.mxu0
  %v6555 = vcombine.low %v6418, %v6420
  %v6556 = vcombine.low %v6459, %v6461
  %v6557 = vcombine.low %v6500, %v6502
  %v6558 = vcombine.low %v6541, %v6543
  %v6560 = vunpack.c.l.s4 1966171168
  %v6561 = vunpack.c.0.s8 %v6560
  %v6562 = vlaneseq
  %v6563 = vshrl.u32 %v6562, 7
  %v6564 = vsub.s32 %v6561, %v6563
  %v6565 = vrot.slane %v6555, %v6564
  %v6567 = vunpack.c.l.s4 1966171168
  %v6568 = vunpack.c.0.s8 %v6567
  %v6569 = vlaneseq
  %v6570 = vshrl.u32 %v6569, 7
  %v6571 = vsub.s32 %v6568, %v6570
  %v6572 = vrot.slane %v6556, %v6571
  %v6574 = vunpack.c.l.s4 1966171168
  %v6575 = vunpack.c.0.s8 %v6574
  %v6576 = vlaneseq
  %v6577 = vshrl.u32 %v6576, 7
  %v6578 = vsub.s32 %v6575, %v6577
  %v6579 = vrot.slane %v6557, %v6578
  %v6581 = vunpack.c.l.s4 1966171168
  %v6582 = vunpack.c.0.s8 %v6581
  %v6583 = vlaneseq
  %v6584 = vshrl.u32 %v6583, 7
  %v6585 = vsub.s32 %v6582, %v6584
  %v6586 = vrot.slane %v6558, %v6585
  %v6587 = vcombine.low %v6565, %v6572
  %v6588 = vcombine.low %v6579, %v6586
  %v6590 = vunpack.c.l.s4 1966171168
  %v6591 = vunpack.c.0.s8 %v6590
  %v6592 = vlaneseq
  %v6593 = vshrl.u32 %v6592, 7
  %v6594 = vsub.s32 %v6591, %v6593
  %v6595 = vrot.slane %v6587, %v6594
  %v6597 = vunpack.c.l.s4 1966171168
  %v6598 = vunpack.c.0.s8 %v6597
  %v6599 = vlaneseq
  %v6600 = vshrl.u32 %v6599, 7
  %v6601 = vsub.s32 %v6598, %v6600
  %v6602 = vrot.slane %v6588, %v6601
  %v6603 = vcombine.low %v6595, %v6602
  %v6605 = vadd.f32 %v6369, %v6603
  %v6606 = vxor.u32 %v6605, 2147483648
  %v6607 = vmul.f32 %v6606, 1.442695
  %v6608 = vpow.pop %v6607
  %v6609 = vadd.f32 %v6608, 1.0
  %v6610 = vrcp.pop %v6609
  %v6611 = vmul.f32 1.0, %v6610
  %v6613 = vrot.slane %v6605, 2
  %v6615 = vxor.u32 %v6613, 2147483648
  %v6616 = vmul.f32 %v6615, 1.442695
  %v6617 = vpow.pop %v6616
  %v6618 = vadd.f32 %v6617, 1.0
  %v6619 = vrcp.pop %v6618
  %v6620 = vmul.f32 1.0, %v6619
  %v6621 = vrot.slane %v6605, 4
  %v6623 = vtanh.pop %v6621
  %v6624 = vrot.slane %v6605, 6
  %v6626 = vxor.u32 %v6624, 2147483648
  %v6627 = vmul.f32 %v6626, 1.442695
  %v6628 = vpow.pop %v6627
  %v6629 = vadd.f32 %v6628, 1.0
  %v6630 = vrcp.pop %v6629
  %v6631 = vmul.f32 1.0, %v6630
  %v6632 = vmul.f32 %v6620, %v6086
  %v6633 = vmul.f32 %v6611, %v6623
  %v6634 = vadd.f32 %v6632, %v6633
  %v6635 = vtanh.pop %v6634
  %v6636 = vmul.f32 %v6631, %v6635
  %s6637 = scalar_lea.vmem [#allocation3], 3
  %v6638 = vld [vmem:[%s6637] ss:$8 sm:$0xf]
  %v6639 = vld [vmem:[%s6637] ss:$8 sm:$0xf0]
  %v6640 = vor.u32 %v6638, %v6639
  %v6642 = vlaneseq
  %v6643 = vshrl.u32 %v6642, 7
  %v6644 = vsub.s32 0, %v6643
  %v6645 = vrot.slane %v6359, %v6644
  %v6646 = vlaneseq
  %v6647 = vshrl.u32 %v6646, 7
  %v6648 = vsub.s32 1, %v6647
  %v6649 = vrot.slane %v6359, %v6648
  %v6652 = vpack.c.bf16 %v6645, %v6645
  %v6653 = vpack.c.bf16 %v6649, %v6649
  %6654 = vmatprep.subr.bf16.mxu0 %v4260
  %6655 = vmatpush1.bf16.msra.mxu0 %v4259
  %6656 = vmatprep.subr.bf16.mxu0 %v4252
  %6657 = vmatpush1.bf16.msra.mxu0 %v4251
  %6658 = vmatprep.subr.bf16.mxu0 %v4244
  %6659 = vmatpush1.bf16.msra.mxu0 %v4243
  %6660 = vmatprep.subr.bf16.mxu0 %v4236
  %6661 = vmatpush1.bf16.msra.mxu0 %v4235
  %6662 = vmatprep.subr.bf16.mxu0 %v4228
  %6663 = vmatpush1.bf16.msra.mxu0 %v4227
  %6664 = vmatprep.subr.bf16.mxu0 %v4220
  %6665 = vmatpush1.bf16.msra.mxu0 %v4219
  %6666 = vmatprep.subr.bf16.mxu0 %v4212
  %6667 = vmatpush1.bf16.msra.mxu0 %v4211
  %6668 = vmatprep.subr.bf16.mxu0 %v4204
  %6669 = vmatpush1.bf16.msra.mxu0 %v4203
  %6670 = vmatprep.subr.bf16.mxu0 %v4324
  %6671 = vmatpush2.bf16.msra.mxu0 %v4323
  %6672 = vmatprep.subr.bf16.mxu0 %v4316
  %6673 = vmatpush2.bf16.msra.mxu0 %v4315
  %6674 = vmatprep.subr.bf16.mxu0 %v4308
  %6675 = vmatpush2.bf16.msra.mxu0 %v4307
  %6676 = vmatprep.subr.bf16.mxu0 %v4300
  %6677 = vmatpush2.bf16.msra.mxu0 %v4299
  %6678 = vmatprep.subr.bf16.mxu0 %v4292
  %6679 = vmatpush2.bf16.msra.mxu0 %v4291
  %6680 = vmatprep.subr.bf16.mxu0 %v4284
  %6681 = vmatpush2.bf16.msra.mxu0 %v4283
  %6682 = vmatprep.subr.bf16.mxu0 %v4276
  %6683 = vmatpush2.bf16.msra.mxu0 %v4275
  %6684 = vmatprep.subr.bf16.mxu0 %v4268
  %6685 = vmatpush2.bf16.msra.mxu0 %v4267
  %6686 = vmatprep.mubr.bf16.mxu0 %v6653
  %6687 = vmatmul.mubr.bf16.gmra.mxu0 %v6652
  %v6688 = vpop.f32.mrf.mxu0
  %v6689 = vadd.f32 0.0, %v6688
  %v6690 = vpop.f32.mrf.mxu0
  %v6691 = vadd.f32 0.0, %v6690
  %v6692 = vpop.f32.mrf.mxu0
  %v6693 = vpop.f32.mrf.mxu0
  %6694 = vdwg.mxu0
  %6695 = vmatprep.subr.bf16.mxu0 %v4262
  %6696 = vmatpush1.bf16.msra.mxu0 %v4261
  %6697 = vmatprep.subr.bf16.mxu0 %v4254
  %6698 = vmatpush1.bf16.msra.mxu0 %v4253
  %6699 = vmatprep.subr.bf16.mxu0 %v4246
  %6700 = vmatpush1.bf16.msra.mxu0 %v4245
  %6701 = vmatprep.subr.bf16.mxu0 %v4238
  %6702 = vmatpush1.bf16.msra.mxu0 %v4237
  %6703 = vmatprep.subr.bf16.mxu0 %v4230
  %6704 = vmatpush1.bf16.msra.mxu0 %v4229
  %6705 = vmatprep.subr.bf16.mxu0 %v4222
  %6706 = vmatpush1.bf16.msra.mxu0 %v4221
  %6707 = vmatprep.subr.bf16.mxu0 %v4214
  %6708 = vmatpush1.bf16.msra.mxu0 %v4213
  %6709 = vmatprep.subr.bf16.mxu0 %v4206
  %6710 = vmatpush1.bf16.msra.mxu0 %v4205
  %6711 = vmatprep.subr.bf16.mxu0 %v4326
  %6712 = vmatpush2.bf16.msra.mxu0 %v4325
  %6713 = vmatprep.subr.bf16.mxu0 %v4318
  %6714 = vmatpush2.bf16.msra.mxu0 %v4317
  %6715 = vmatprep.subr.bf16.mxu0 %v4310
  %6716 = vmatpush2.bf16.msra.mxu0 %v4309
  %6717 = vmatprep.subr.bf16.mxu0 %v4302
  %6718 = vmatpush2.bf16.msra.mxu0 %v4301
  %6719 = vmatprep.subr.bf16.mxu0 %v4294
  %6720 = vmatpush2.bf16.msra.mxu0 %v4293
  %6721 = vmatprep.subr.bf16.mxu0 %v4286
  %6722 = vmatpush2.bf16.msra.mxu0 %v4285
  %6723 = vmatprep.subr.bf16.mxu0 %v4278
  %6724 = vmatpush2.bf16.msra.mxu0 %v4277
  %6725 = vmatprep.subr.bf16.mxu0 %v4270
  %6726 = vmatpush2.bf16.msra.mxu0 %v4269
  %6727 = vmatprep.mubr.bf16.mxu0 %v6653
  %6728 = vmatmul.mubr.bf16.gmra.mxu0 %v6652
  %v6729 = vpop.f32.mrf.mxu0
  %v6730 = vadd.f32 0.0, %v6729
  %v6731 = vpop.f32.mrf.mxu0
  %v6732 = vadd.f32 0.0, %v6731
  %v6733 = vpop.f32.mrf.mxu0
  %v6734 = vpop.f32.mrf.mxu0
  %6735 = vdwg.mxu0
  %6736 = vmatprep.subr.bf16.mxu0 %v4264
  %6737 = vmatpush1.bf16.msra.mxu0 %v4263
  %6738 = vmatprep.subr.bf16.mxu0 %v4256
  %6739 = vmatpush1.bf16.msra.mxu0 %v4255
  %6740 = vmatprep.subr.bf16.mxu0 %v4248
  %6741 = vmatpush1.bf16.msra.mxu0 %v4247
  %6742 = vmatprep.subr.bf16.mxu0 %v4240
  %6743 = vmatpush1.bf16.msra.mxu0 %v4239
  %6744 = vmatprep.subr.bf16.mxu0 %v4232
  %6745 = vmatpush1.bf16.msra.mxu0 %v4231
  %6746 = vmatprep.subr.bf16.mxu0 %v4224
  %6747 = vmatpush1.bf16.msra.mxu0 %v4223
  %6748 = vmatprep.subr.bf16.mxu0 %v4216
  %6749 = vmatpush1.bf16.msra.mxu0 %v4215
  %6750 = vmatprep.subr.bf16.mxu0 %v4208
  %6751 = vmatpush1.bf16.msra.mxu0 %v4207
  %6752 = vmatprep.subr.bf16.mxu0 %v4328
  %6753 = vmatpush2.bf16.msra.mxu0 %v4327
  %6754 = vmatprep.subr.bf16.mxu0 %v4320
  %6755 = vmatpush2.bf16.msra.mxu0 %v4319
  %6756 = vmatprep.subr.bf16.mxu0 %v4312
  %6757 = vmatpush2.bf16.msra.mxu0 %v4311
  %6758 = vmatprep.subr.bf16.mxu0 %v4304
  %6759 = vmatpush2.bf16.msra.mxu0 %v4303
  %6760 = vmatprep.subr.bf16.mxu0 %v4296
  %6761 = vmatpush2.bf16.msra.mxu0 %v4295
  %6762 = vmatprep.subr.bf16.mxu0 %v4288
  %6763 = vmatpush2.bf16.msra.mxu0 %v4287
  %6764 = vmatprep.subr.bf16.mxu0 %v4280
  %6765 = vmatpush2.bf16.msra.mxu0 %v4279
  %6766 = vmatprep.subr.bf16.mxu0 %v4272
  %6767 = vmatpush2.bf16.msra.mxu0 %v4271
  %6768 = vmatprep.mubr.bf16.mxu0 %v6653
  %6769 = vmatmul.mubr.bf16.gmra.mxu0 %v6652
  %v6770 = vpop.f32.mrf.mxu0
  %v6771 = vadd.f32 0.0, %v6770
  %v6772 = vpop.f32.mrf.mxu0
  %v6773 = vadd.f32 0.0, %v6772
  %v6774 = vpop.f32.mrf.mxu0
  %v6775 = vpop.f32.mrf.mxu0
  %6776 = vdwg.mxu0
  %6777 = vmatprep.subr.bf16.mxu0 %v4266
  %6778 = vmatpush1.bf16.msra.mxu0 %v4265
  %6779 = vmatprep.subr.bf16.mxu0 %v4258
  %6780 = vmatpush1.bf16.msra.mxu0 %v4257
  %6781 = vmatprep.subr.bf16.mxu0 %v4250
  %6782 = vmatpush1.bf16.msra.mxu0 %v4249
  %6783 = vmatprep.subr.bf16.mxu0 %v4242
  %6784 = vmatpush1.bf16.msra.mxu0 %v4241
  %6785 = vmatprep.subr.bf16.mxu0 %v4234
  %6786 = vmatpush1.bf16.msra.mxu0 %v4233
  %6787 = vmatprep.subr.bf16.mxu0 %v4226
  %6788 = vmatpush1.bf16.msra.mxu0 %v4225
  %6789 = vmatprep.subr.bf16.mxu0 %v4218
  %6790 = vmatpush1.bf16.msra.mxu0 %v4217
  %6791 = vmatprep.subr.bf16.mxu0 %v4210
  %6792 = vmatpush1.bf16.msra.mxu0 %v4209
  %6793 = vmatprep.subr.bf16.mxu0 %v4330
  %6794 = vmatpush2.bf16.msra.mxu0 %v4329
  %6795 = vmatprep.subr.bf16.mxu0 %v4322
  %6796 = vmatpush2.bf16.msra.mxu0 %v4321
  %6797 = vmatprep.subr.bf16.mxu0 %v4314
  %6798 = vmatpush2.bf16.msra.mxu0 %v4313
  %6799 = vmatprep.subr.bf16.mxu0 %v4306
  %6800 = vmatpush2.bf16.msra.mxu0 %v4305
  %6801 = vmatprep.subr.bf16.mxu0 %v4298
  %6802 = vmatpush2.bf16.msra.mxu0 %v4297
  %6803 = vmatprep.subr.bf16.mxu0 %v4290
  %6804 = vmatpush2.bf16.msra.mxu0 %v4289
  %6805 = vmatprep.subr.bf16.mxu0 %v4282
  %6806 = vmatpush2.bf16.msra.mxu0 %v4281
  %6807 = vmatprep.subr.bf16.mxu0 %v4274
  %6808 = vmatpush2.bf16.msra.mxu0 %v4273
  %6809 = vmatprep.mubr.bf16.mxu0 %v6653
  %6810 = vmatmul.mubr.bf16.gmra.mxu0 %v6652
  %v6811 = vpop.f32.mrf.mxu0
  %v6812 = vadd.f32 0.0, %v6811
  %v6813 = vpop.f32.mrf.mxu0
  %v6814 = vadd.f32 0.0, %v6813
  %v6815 = vpop.f32.mrf.mxu0
  %v6816 = vpop.f32.mrf.mxu0
  %6817 = vdwg.mxu0
  %v6826 = vcombine.low %v6689, %v6691
  %v6827 = vcombine.low %v6730, %v6732
  %v6828 = vcombine.low %v6771, %v6773
  %v6829 = vcombine.low %v6812, %v6814
  %v6831 = vunpack.c.l.s4 1966171168
  %v6832 = vunpack.c.0.s8 %v6831
  %v6833 = vlaneseq
  %v6834 = vshrl.u32 %v6833, 7
  %v6835 = vsub.s32 %v6832, %v6834
  %v6836 = vrot.slane %v6826, %v6835
  %v6838 = vunpack.c.l.s4 1966171168
  %v6839 = vunpack.c.0.s8 %v6838
  %v6840 = vlaneseq
  %v6841 = vshrl.u32 %v6840, 7
  %v6842 = vsub.s32 %v6839, %v6841
  %v6843 = vrot.slane %v6827, %v6842
  %v6845 = vunpack.c.l.s4 1966171168
  %v6846 = vunpack.c.0.s8 %v6845
  %v6847 = vlaneseq
  %v6848 = vshrl.u32 %v6847, 7
  %v6849 = vsub.s32 %v6846, %v6848
  %v6850 = vrot.slane %v6828, %v6849
  %v6852 = vunpack.c.l.s4 1966171168
  %v6853 = vunpack.c.0.s8 %v6852
  %v6854 = vlaneseq
  %v6855 = vshrl.u32 %v6854, 7
  %v6856 = vsub.s32 %v6853, %v6855
  %v6857 = vrot.slane %v6829, %v6856
  %v6858 = vcombine.low %v6836, %v6843
  %v6859 = vcombine.low %v6850, %v6857
  %v6861 = vunpack.c.l.s4 1966171168
  %v6862 = vunpack.c.0.s8 %v6861
  %v6863 = vlaneseq
  %v6864 = vshrl.u32 %v6863, 7
  %v6865 = vsub.s32 %v6862, %v6864
  %v6866 = vrot.slane %v6858, %v6865
  %v6868 = vunpack.c.l.s4 1966171168
  %v6869 = vunpack.c.0.s8 %v6868
  %v6870 = vlaneseq
  %v6871 = vshrl.u32 %v6870, 7
  %v6872 = vsub.s32 %v6869, %v6871
  %v6873 = vrot.slane %v6859, %v6872
  %v6874 = vcombine.low %v6866, %v6873
  %v6876 = vadd.f32 %v6640, %v6874
  %v6877 = vxor.u32 %v6876, 2147483648
  %v6878 = vmul.f32 %v6877, 1.442695
  %v6879 = vpow.pop %v6878
  %v6880 = vadd.f32 %v6879, 1.0
  %v6881 = vrcp.pop %v6880
  %v6882 = vmul.f32 1.0, %v6881
  %v6884 = vrot.slane %v6876, 2
  %v6886 = vxor.u32 %v6884, 2147483648
  %v6887 = vmul.f32 %v6886, 1.442695
  %v6888 = vpow.pop %v6887
  %v6889 = vadd.f32 %v6888, 1.0
  %v6890 = vrcp.pop %v6889
  %v6891 = vmul.f32 1.0, %v6890
  %v6892 = vrot.slane %v6876, 4
  %v6894 = vtanh.pop %v6892
  %v6895 = vrot.slane %v6876, 6
  %v6897 = vxor.u32 %v6895, 2147483648
  %v6898 = vmul.f32 %v6897, 1.442695
  %v6899 = vpow.pop %v6898
  %v6900 = vadd.f32 %v6899, 1.0
  %v6901 = vrcp.pop %v6900
  %v6902 = vmul.f32 1.0, %v6901
  %v6903 = vmul.f32 %v6891, %v6357
  %v6904 = vmul.f32 %v6882, %v6894
  %v6905 = vadd.f32 %v6903, %v6904
  %v6906 = vtanh.pop %v6905
  %v6907 = vmul.f32 %v6902, %v6906
  %s6908 = scalar_lea.vmem %s10, 4
  %6909 = vst.msk [vmem:[%s6908] ss:$8 sm:$0x3] %vm4716, %v6636
  %6910 = vst.msk [vmem:[%s6908] ss:$8 sm:$0x0] %vm4716, %v6636
  %s6911 = scalar_lea.vmem %s11, 3
  %6912 = vst.msk [vmem:[%s6911] ss:$8 sm:$0x3] %vm4716, %v6907
  %6913 = vst.msk [vmem:[%s6911] ss:$8 sm:$0x0] %vm4716, %v6907
  %s6914 = scalar_lea.vmem [#allocation2], 5
  %v6915 = vld [vmem:[%s6914] ss:$8 sm:$0xf]
  %v6916 = vld [vmem:[%s6914] ss:$8 sm:$0xf0]
  %v6917 = vor.u32 %v6915, %v6916
  %v6919 = vlaneseq
  %v6920 = vshrl.u32 %v6919, 7
  %v6921 = vsub.s32 0, %v6920
  %v6922 = vrot.slane %v6636, %v6921
  %v6923 = vlaneseq
  %v6924 = vshrl.u32 %v6923, 7
  %v6925 = vsub.s32 1, %v6924
  %v6926 = vrot.slane %v6636, %v6925
  %v6929 = vpack.c.bf16 %v6922, %v6922
  %v6930 = vpack.c.bf16 %v6926, %v6926
  %6931 = vmatprep.subr.bf16.mxu0 %v3362
  %6932 = vmatpush1.bf16.msra.mxu0 %v3361
  %6933 = vmatprep.subr.bf16.mxu0 %v3354
  %6934 = vmatpush1.bf16.msra.mxu0 %v3353
  %6935 = vmatprep.subr.bf16.mxu0 %v3346
  %6936 = vmatpush1.bf16.msra.mxu0 %v3345
  %6937 = vmatprep.subr.bf16.mxu0 %v3338
  %6938 = vmatpush1.bf16.msra.mxu0 %v3337
  %6939 = vmatprep.subr.bf16.mxu0 %v3330
  %6940 = vmatpush1.bf16.msra.mxu0 %v3329
  %6941 = vmatprep.subr.bf16.mxu0 %v3322
  %6942 = vmatpush1.bf16.msra.mxu0 %v3321
  %6943 = vmatprep.subr.bf16.mxu0 %v3314
  %6944 = vmatpush1.bf16.msra.mxu0 %v3313
  %6945 = vmatprep.subr.bf16.mxu0 %v3306
  %6946 = vmatpush1.bf16.msra.mxu0 %v3305
  %6947 = vmatprep.subr.bf16.mxu0 %v3426
  %6948 = vmatpush2.bf16.msra.mxu0 %v3425
  %6949 = vmatprep.subr.bf16.mxu0 %v3418
  %6950 = vmatpush2.bf16.msra.mxu0 %v3417
  %6951 = vmatprep.subr.bf16.mxu0 %v3410
  %6952 = vmatpush2.bf16.msra.mxu0 %v3409
  %6953 = vmatprep.subr.bf16.mxu0 %v3402
  %6954 = vmatpush2.bf16.msra.mxu0 %v3401
  %6955 = vmatprep.subr.bf16.mxu0 %v3394
  %6956 = vmatpush2.bf16.msra.mxu0 %v3393
  %6957 = vmatprep.subr.bf16.mxu0 %v3386
  %6958 = vmatpush2.bf16.msra.mxu0 %v3385
  %6959 = vmatprep.subr.bf16.mxu0 %v3378
  %6960 = vmatpush2.bf16.msra.mxu0 %v3377
  %6961 = vmatprep.subr.bf16.mxu0 %v3370
  %6962 = vmatpush2.bf16.msra.mxu0 %v3369
  %6963 = vmatprep.mubr.bf16.mxu0 %v6930
  %6964 = vmatmul.mubr.bf16.gmra.mxu0 %v6929
  %v6965 = vpop.f32.mrf.mxu0
  %v6966 = vadd.f32 0.0, %v6965
  %v6967 = vpop.f32.mrf.mxu0
  %v6968 = vadd.f32 0.0, %v6967
  %v6969 = vpop.f32.mrf.mxu0
  %v6970 = vpop.f32.mrf.mxu0
  %6971 = vdwg.mxu0
  %6972 = vmatprep.subr.bf16.mxu0 %v3364
  %6973 = vmatpush1.bf16.msra.mxu0 %v3363
  %6974 = vmatprep.subr.bf16.mxu0 %v3356
  %6975 = vmatpush1.bf16.msra.mxu0 %v3355
  %6976 = vmatprep.subr.bf16.mxu0 %v3348
  %6977 = vmatpush1.bf16.msra.mxu0 %v3347
  %6978 = vmatprep.subr.bf16.mxu0 %v3340
  %6979 = vmatpush1.bf16.msra.mxu0 %v3339
  %6980 = vmatprep.subr.bf16.mxu0 %v3332
  %6981 = vmatpush1.bf16.msra.mxu0 %v3331
  %6982 = vmatprep.subr.bf16.mxu0 %v3324
  %6983 = vmatpush1.bf16.msra.mxu0 %v3323
  %6984 = vmatprep.subr.bf16.mxu0 %v3316
  %6985 = vmatpush1.bf16.msra.mxu0 %v3315
  %6986 = vmatprep.subr.bf16.mxu0 %v3308
  %6987 = vmatpush1.bf16.msra.mxu0 %v3307
  %6988 = vmatprep.subr.bf16.mxu0 %v3428
  %6989 = vmatpush2.bf16.msra.mxu0 %v3427
  %6990 = vmatprep.subr.bf16.mxu0 %v3420
  %6991 = vmatpush2.bf16.msra.mxu0 %v3419
  %6992 = vmatprep.subr.bf16.mxu0 %v3412
  %6993 = vmatpush2.bf16.msra.mxu0 %v3411
  %6994 = vmatprep.subr.bf16.mxu0 %v3404
  %6995 = vmatpush2.bf16.msra.mxu0 %v3403
  %6996 = vmatprep.subr.bf16.mxu0 %v3396
  %6997 = vmatpush2.bf16.msra.mxu0 %v3395
  %6998 = vmatprep.subr.bf16.mxu0 %v3388
  %6999 = vmatpush2.bf16.msra.mxu0 %v3387
  %7000 = vmatprep.subr.bf16.mxu0 %v3380
  %7001 = vmatpush2.bf16.msra.mxu0 %v3379
  %7002 = vmatprep.subr.bf16.mxu0 %v3372
  %7003 = vmatpush2.bf16.msra.mxu0 %v3371
  %7004 = vmatprep.mubr.bf16.mxu0 %v6930
  %7005 = vmatmul.mubr.bf16.gmra.mxu0 %v6929
  %v7006 = vpop.f32.mrf.mxu0
  %v7007 = vadd.f32 0.0, %v7006
  %v7008 = vpop.f32.mrf.mxu0
  %v7009 = vadd.f32 0.0, %v7008
  %v7010 = vpop.f32.mrf.mxu0
  %v7011 = vpop.f32.mrf.mxu0
  %7012 = vdwg.mxu0
  %7013 = vmatprep.subr.bf16.mxu0 %v3366
  %7014 = vmatpush1.bf16.msra.mxu0 %v3365
  %7015 = vmatprep.subr.bf16.mxu0 %v3358
  %7016 = vmatpush1.bf16.msra.mxu0 %v3357
  %7017 = vmatprep.subr.bf16.mxu0 %v3350
  %7018 = vmatpush1.bf16.msra.mxu0 %v3349
  %7019 = vmatprep.subr.bf16.mxu0 %v3342
  %7020 = vmatpush1.bf16.msra.mxu0 %v3341
  %7021 = vmatprep.subr.bf16.mxu0 %v3334
  %7022 = vmatpush1.bf16.msra.mxu0 %v3333
  %7023 = vmatprep.subr.bf16.mxu0 %v3326
  %7024 = vmatpush1.bf16.msra.mxu0 %v3325
  %7025 = vmatprep.subr.bf16.mxu0 %v3318
  %7026 = vmatpush1.bf16.msra.mxu0 %v3317
  %7027 = vmatprep.subr.bf16.mxu0 %v3310
  %7028 = vmatpush1.bf16.msra.mxu0 %v3309
  %7029 = vmatprep.subr.bf16.mxu0 %v3430
  %7030 = vmatpush2.bf16.msra.mxu0 %v3429
  %7031 = vmatprep.subr.bf16.mxu0 %v3422
  %7032 = vmatpush2.bf16.msra.mxu0 %v3421
  %7033 = vmatprep.subr.bf16.mxu0 %v3414
  %7034 = vmatpush2.bf16.msra.mxu0 %v3413
  %7035 = vmatprep.subr.bf16.mxu0 %v3406
  %7036 = vmatpush2.bf16.msra.mxu0 %v3405
  %7037 = vmatprep.subr.bf16.mxu0 %v3398
  %7038 = vmatpush2.bf16.msra.mxu0 %v3397
  %7039 = vmatprep.subr.bf16.mxu0 %v3390
  %7040 = vmatpush2.bf16.msra.mxu0 %v3389
  %7041 = vmatprep.subr.bf16.mxu0 %v3382
  %7042 = vmatpush2.bf16.msra.mxu0 %v3381
  %7043 = vmatprep.subr.bf16.mxu0 %v3374
  %7044 = vmatpush2.bf16.msra.mxu0 %v3373
  %7045 = vmatprep.mubr.bf16.mxu0 %v6930
  %7046 = vmatmul.mubr.bf16.gmra.mxu0 %v6929
  %v7047 = vpop.f32.mrf.mxu0
  %v7048 = vadd.f32 0.0, %v7047
  %v7049 = vpop.f32.mrf.mxu0
  %v7050 = vadd.f32 0.0, %v7049
  %v7051 = vpop.f32.mrf.mxu0
  %v7052 = vpop.f32.mrf.mxu0
  %7053 = vdwg.mxu0
  %7054 = vmatprep.subr.bf16.mxu0 %v3368
  %7055 = vmatpush1.bf16.msra.mxu0 %v3367
  %7056 = vmatprep.subr.bf16.mxu0 %v3360
  %7057 = vmatpush1.bf16.msra.mxu0 %v3359
  %7058 = vmatprep.subr.bf16.mxu0 %v3352
  %7059 = vmatpush1.bf16.msra.mxu0 %v3351
  %7060 = vmatprep.subr.bf16.mxu0 %v3344
  %7061 = vmatpush1.bf16.msra.mxu0 %v3343
  %7062 = vmatprep.subr.bf16.mxu0 %v3336
  %7063 = vmatpush1.bf16.msra.mxu0 %v3335
  %7064 = vmatprep.subr.bf16.mxu0 %v3328
  %7065 = vmatpush1.bf16.msra.mxu0 %v3327
  %7066 = vmatprep.subr.bf16.mxu0 %v3320
  %7067 = vmatpush1.bf16.msra.mxu0 %v3319
  %7068 = vmatprep.subr.bf16.mxu0 %v3312
  %7069 = vmatpush1.bf16.msra.mxu0 %v3311
  %7070 = vmatprep.subr.bf16.mxu0 %v3432
  %7071 = vmatpush2.bf16.msra.mxu0 %v3431
  %7072 = vmatprep.subr.bf16.mxu0 %v3424
  %7073 = vmatpush2.bf16.msra.mxu0 %v3423
  %7074 = vmatprep.subr.bf16.mxu0 %v3416
  %7075 = vmatpush2.bf16.msra.mxu0 %v3415
  %7076 = vmatprep.subr.bf16.mxu0 %v3408
  %7077 = vmatpush2.bf16.msra.mxu0 %v3407
  %7078 = vmatprep.subr.bf16.mxu0 %v3400
  %7079 = vmatpush2.bf16.msra.mxu0 %v3399
  %7080 = vmatprep.subr.bf16.mxu0 %v3392
  %7081 = vmatpush2.bf16.msra.mxu0 %v3391
  %7082 = vmatprep.subr.bf16.mxu0 %v3384
  %7083 = vmatpush2.bf16.msra.mxu0 %v3383
  %7084 = vmatprep.subr.bf16.mxu0 %v3376
  %7085 = vmatpush2.bf16.msra.mxu0 %v3375
  %7086 = vmatprep.mubr.bf16.mxu0 %v6930
  %7087 = vmatmul.mubr.bf16.gmra.mxu0 %v6929
  %v7088 = vpop.f32.mrf.mxu0
  %v7089 = vadd.f32 0.0, %v7088
  %v7090 = vpop.f32.mrf.mxu0
  %v7091 = vadd.f32 0.0, %v7090
  %v7092 = vpop.f32.mrf.mxu0
  %v7093 = vpop.f32.mrf.mxu0
  %7094 = vdwg.mxu0
  %v7103 = vcombine.low %v6966, %v6968
  %v7104 = vcombine.low %v7007, %v7009
  %v7105 = vcombine.low %v7048, %v7050
  %v7106 = vcombine.low %v7089, %v7091
  %v7108 = vunpack.c.l.s4 1966171168
  %v7109 = vunpack.c.0.s8 %v7108
  %v7110 = vlaneseq
  %v7111 = vshrl.u32 %v7110, 7
  %v7112 = vsub.s32 %v7109, %v7111
  %v7113 = vrot.slane %v7103, %v7112
  %v7115 = vunpack.c.l.s4 1966171168
  %v7116 = vunpack.c.0.s8 %v7115
  %v7117 = vlaneseq
  %v7118 = vshrl.u32 %v7117, 7
  %v7119 = vsub.s32 %v7116, %v7118
  %v7120 = vrot.slane %v7104, %v7119
  %v7122 = vunpack.c.l.s4 1966171168
  %v7123 = vunpack.c.0.s8 %v7122
  %v7124 = vlaneseq
  %v7125 = vshrl.u32 %v7124, 7
  %v7126 = vsub.s32 %v7123, %v7125
  %v7127 = vrot.slane %v7105, %v7126
  %v7129 = vunpack.c.l.s4 1966171168
  %v7130 = vunpack.c.0.s8 %v7129
  %v7131 = vlaneseq
  %v7132 = vshrl.u32 %v7131, 7
  %v7133 = vsub.s32 %v7130, %v7132
  %v7134 = vrot.slane %v7106, %v7133
  %v7135 = vcombine.low %v7113, %v7120
  %v7136 = vcombine.low %v7127, %v7134
  %v7138 = vunpack.c.l.s4 1966171168
  %v7139 = vunpack.c.0.s8 %v7138
  %v7140 = vlaneseq
  %v7141 = vshrl.u32 %v7140, 7
  %v7142 = vsub.s32 %v7139, %v7141
  %v7143 = vrot.slane %v7135, %v7142
  %v7145 = vunpack.c.l.s4 1966171168
  %v7146 = vunpack.c.0.s8 %v7145
  %v7147 = vlaneseq
  %v7148 = vshrl.u32 %v7147, 7
  %v7149 = vsub.s32 %v7146, %v7148
  %v7150 = vrot.slane %v7136, %v7149
  %v7151 = vcombine.low %v7143, %v7150
  %v7153 = vadd.f32 %v6917, %v7151
  %v7154 = vxor.u32 %v7153, 2147483648
  %v7155 = vmul.f32 %v7154, 1.442695
  %v7156 = vpow.pop %v7155
  %v7157 = vadd.f32 %v7156, 1.0
  %v7158 = vrcp.pop %v7157
  %v7159 = vmul.f32 1.0, %v7158
  %v7161 = vrot.slane %v7153, 2
  %v7163 = vxor.u32 %v7161, 2147483648
  %v7164 = vmul.f32 %v7163, 1.442695
  %v7165 = vpow.pop %v7164
  %v7166 = vadd.f32 %v7165, 1.0
  %v7167 = vrcp.pop %v7166
  %v7168 = vmul.f32 1.0, %v7167
  %v7169 = vrot.slane %v7153, 4
  %v7171 = vtanh.pop %v7169
  %v7172 = vrot.slane %v7153, 6
  %v7174 = vxor.u32 %v7172, 2147483648
  %v7175 = vmul.f32 %v7174, 1.442695
  %v7176 = vpow.pop %v7175
  %v7177 = vadd.f32 %v7176, 1.0
  %v7178 = vrcp.pop %v7177
  %v7179 = vmul.f32 1.0, %v7178
  %v7180 = vmul.f32 %v7168, %v6634
  %v7181 = vmul.f32 %v7159, %v7171
  %v7182 = vadd.f32 %v7180, %v7181
  %v7183 = vtanh.pop %v7182
  %v7184 = vmul.f32 %v7179, %v7183
  %s7185 = scalar_lea.vmem [#allocation3], 2
  %v7186 = vld [vmem:[%s7185] ss:$8 sm:$0xf]
  %v7187 = vld [vmem:[%s7185] ss:$8 sm:$0xf0]
  %v7188 = vor.u32 %v7186, %v7187
  %v7190 = vlaneseq
  %v7191 = vshrl.u32 %v7190, 7
  %v7192 = vsub.s32 0, %v7191
  %v7193 = vrot.slane %v6907, %v7192
  %v7194 = vlaneseq
  %v7195 = vshrl.u32 %v7194, 7
  %v7196 = vsub.s32 1, %v7195
  %v7197 = vrot.slane %v6907, %v7196
  %v7200 = vpack.c.bf16 %v7193, %v7193
  %v7201 = vpack.c.bf16 %v7197, %v7197
  %7202 = vmatprep.subr.bf16.mxu0 %v4260
  %7203 = vmatpush1.bf16.msra.mxu0 %v4259
  %7204 = vmatprep.subr.bf16.mxu0 %v4252
  %7205 = vmatpush1.bf16.msra.mxu0 %v4251
  %7206 = vmatprep.subr.bf16.mxu0 %v4244
  %7207 = vmatpush1.bf16.msra.mxu0 %v4243
  %7208 = vmatprep.subr.bf16.mxu0 %v4236
  %7209 = vmatpush1.bf16.msra.mxu0 %v4235
  %7210 = vmatprep.subr.bf16.mxu0 %v4228
  %7211 = vmatpush1.bf16.msra.mxu0 %v4227
  %7212 = vmatprep.subr.bf16.mxu0 %v4220
  %7213 = vmatpush1.bf16.msra.mxu0 %v4219
  %7214 = vmatprep.subr.bf16.mxu0 %v4212
  %7215 = vmatpush1.bf16.msra.mxu0 %v4211
  %7216 = vmatprep.subr.bf16.mxu0 %v4204
  %7217 = vmatpush1.bf16.msra.mxu0 %v4203
  %7218 = vmatprep.subr.bf16.mxu0 %v4324
  %7219 = vmatpush2.bf16.msra.mxu0 %v4323
  %7220 = vmatprep.subr.bf16.mxu0 %v4316
  %7221 = vmatpush2.bf16.msra.mxu0 %v4315
  %7222 = vmatprep.subr.bf16.mxu0 %v4308
  %7223 = vmatpush2.bf16.msra.mxu0 %v4307
  %7224 = vmatprep.subr.bf16.mxu0 %v4300
  %7225 = vmatpush2.bf16.msra.mxu0 %v4299
  %7226 = vmatprep.subr.bf16.mxu0 %v4292
  %7227 = vmatpush2.bf16.msra.mxu0 %v4291
  %7228 = vmatprep.subr.bf16.mxu0 %v4284
  %7229 = vmatpush2.bf16.msra.mxu0 %v4283
  %7230 = vmatprep.subr.bf16.mxu0 %v4276
  %7231 = vmatpush2.bf16.msra.mxu0 %v4275
  %7232 = vmatprep.subr.bf16.mxu0 %v4268
  %7233 = vmatpush2.bf16.msra.mxu0 %v4267
  %7234 = vmatprep.mubr.bf16.mxu0 %v7201
  %7235 = vmatmul.mubr.bf16.gmra.mxu0 %v7200
  %v7236 = vpop.f32.mrf.mxu0
  %v7237 = vadd.f32 0.0, %v7236
  %v7238 = vpop.f32.mrf.mxu0
  %v7239 = vadd.f32 0.0, %v7238
  %v7240 = vpop.f32.mrf.mxu0
  %v7241 = vpop.f32.mrf.mxu0
  %7242 = vdwg.mxu0
  %7243 = vmatprep.subr.bf16.mxu0 %v4262
  %7244 = vmatpush1.bf16.msra.mxu0 %v4261
  %7245 = vmatprep.subr.bf16.mxu0 %v4254
  %7246 = vmatpush1.bf16.msra.mxu0 %v4253
  %7247 = vmatprep.subr.bf16.mxu0 %v4246
  %7248 = vmatpush1.bf16.msra.mxu0 %v4245
  %7249 = vmatprep.subr.bf16.mxu0 %v4238
  %7250 = vmatpush1.bf16.msra.mxu0 %v4237
  %7251 = vmatprep.subr.bf16.mxu0 %v4230
  %7252 = vmatpush1.bf16.msra.mxu0 %v4229
  %7253 = vmatprep.subr.bf16.mxu0 %v4222
  %7254 = vmatpush1.bf16.msra.mxu0 %v4221
  %7255 = vmatprep.subr.bf16.mxu0 %v4214
  %7256 = vmatpush1.bf16.msra.mxu0 %v4213
  %7257 = vmatprep.subr.bf16.mxu0 %v4206
  %7258 = vmatpush1.bf16.msra.mxu0 %v4205
  %7259 = vmatprep.subr.bf16.mxu0 %v4326
  %7260 = vmatpush2.bf16.msra.mxu0 %v4325
  %7261 = vmatprep.subr.bf16.mxu0 %v4318
  %7262 = vmatpush2.bf16.msra.mxu0 %v4317
  %7263 = vmatprep.subr.bf16.mxu0 %v4310
  %7264 = vmatpush2.bf16.msra.mxu0 %v4309
  %7265 = vmatprep.subr.bf16.mxu0 %v4302
  %7266 = vmatpush2.bf16.msra.mxu0 %v4301
  %7267 = vmatprep.subr.bf16.mxu0 %v4294
  %7268 = vmatpush2.bf16.msra.mxu0 %v4293
  %7269 = vmatprep.subr.bf16.mxu0 %v4286
  %7270 = vmatpush2.bf16.msra.mxu0 %v4285
  %7271 = vmatprep.subr.bf16.mxu0 %v4278
  %7272 = vmatpush2.bf16.msra.mxu0 %v4277
  %7273 = vmatprep.subr.bf16.mxu0 %v4270
  %7274 = vmatpush2.bf16.msra.mxu0 %v4269
  %7275 = vmatprep.mubr.bf16.mxu0 %v7201
  %7276 = vmatmul.mubr.bf16.gmra.mxu0 %v7200
  %v7277 = vpop.f32.mrf.mxu0
  %v7278 = vadd.f32 0.0, %v7277
  %v7279 = vpop.f32.mrf.mxu0
  %v7280 = vadd.f32 0.0, %v7279
  %v7281 = vpop.f32.mrf.mxu0
  %v7282 = vpop.f32.mrf.mxu0
  %7283 = vdwg.mxu0
  %7284 = vmatprep.subr.bf16.mxu0 %v4264
  %7285 = vmatpush1.bf16.msra.mxu0 %v4263
  %7286 = vmatprep.subr.bf16.mxu0 %v4256
  %7287 = vmatpush1.bf16.msra.mxu0 %v4255
  %7288 = vmatprep.subr.bf16.mxu0 %v4248
  %7289 = vmatpush1.bf16.msra.mxu0 %v4247
  %7290 = vmatprep.subr.bf16.mxu0 %v4240
  %7291 = vmatpush1.bf16.msra.mxu0 %v4239
  %7292 = vmatprep.subr.bf16.mxu0 %v4232
  %7293 = vmatpush1.bf16.msra.mxu0 %v4231
  %7294 = vmatprep.subr.bf16.mxu0 %v4224
  %7295 = vmatpush1.bf16.msra.mxu0 %v4223
  %7296 = vmatprep.subr.bf16.mxu0 %v4216
  %7297 = vmatpush1.bf16.msra.mxu0 %v4215
  %7298 = vmatprep.subr.bf16.mxu0 %v4208
  %7299 = vmatpush1.bf16.msra.mxu0 %v4207
  %7300 = vmatprep.subr.bf16.mxu0 %v4328
  %7301 = vmatpush2.bf16.msra.mxu0 %v4327
  %7302 = vmatprep.subr.bf16.mxu0 %v4320
  %7303 = vmatpush2.bf16.msra.mxu0 %v4319
  %7304 = vmatprep.subr.bf16.mxu0 %v4312
  %7305 = vmatpush2.bf16.msra.mxu0 %v4311
  %7306 = vmatprep.subr.bf16.mxu0 %v4304
  %7307 = vmatpush2.bf16.msra.mxu0 %v4303
  %7308 = vmatprep.subr.bf16.mxu0 %v4296
  %7309 = vmatpush2.bf16.msra.mxu0 %v4295
  %7310 = vmatprep.subr.bf16.mxu0 %v4288
  %7311 = vmatpush2.bf16.msra.mxu0 %v4287
  %7312 = vmatprep.subr.bf16.mxu0 %v4280
  %7313 = vmatpush2.bf16.msra.mxu0 %v4279
  %7314 = vmatprep.subr.bf16.mxu0 %v4272
  %7315 = vmatpush2.bf16.msra.mxu0 %v4271
  %7316 = vmatprep.mubr.bf16.mxu0 %v7201
  %7317 = vmatmul.mubr.bf16.gmra.mxu0 %v7200
  %v7318 = vpop.f32.mrf.mxu0
  %v7319 = vadd.f32 0.0, %v7318
  %v7320 = vpop.f32.mrf.mxu0
  %v7321 = vadd.f32 0.0, %v7320
  %v7322 = vpop.f32.mrf.mxu0
  %v7323 = vpop.f32.mrf.mxu0
  %7324 = vdwg.mxu0
  %7325 = vmatprep.subr.bf16.mxu0 %v4266
  %7326 = vmatpush1.bf16.msra.mxu0 %v4265
  %7327 = vmatprep.subr.bf16.mxu0 %v4258
  %7328 = vmatpush1.bf16.msra.mxu0 %v4257
  %7329 = vmatprep.subr.bf16.mxu0 %v4250
  %7330 = vmatpush1.bf16.msra.mxu0 %v4249
  %7331 = vmatprep.subr.bf16.mxu0 %v4242
  %7332 = vmatpush1.bf16.msra.mxu0 %v4241
  %7333 = vmatprep.subr.bf16.mxu0 %v4234
  %7334 = vmatpush1.bf16.msra.mxu0 %v4233
  %7335 = vmatprep.subr.bf16.mxu0 %v4226
  %7336 = vmatpush1.bf16.msra.mxu0 %v4225
  %7337 = vmatprep.subr.bf16.mxu0 %v4218
  %7338 = vmatpush1.bf16.msra.mxu0 %v4217
  %7339 = vmatprep.subr.bf16.mxu0 %v4210
  %7340 = vmatpush1.bf16.msra.mxu0 %v4209
  %7341 = vmatprep.subr.bf16.mxu0 %v4330
  %7342 = vmatpush2.bf16.msra.mxu0 %v4329
  %7343 = vmatprep.subr.bf16.mxu0 %v4322
  %7344 = vmatpush2.bf16.msra.mxu0 %v4321
  %7345 = vmatprep.subr.bf16.mxu0 %v4314
  %7346 = vmatpush2.bf16.msra.mxu0 %v4313
  %7347 = vmatprep.subr.bf16.mxu0 %v4306
  %7348 = vmatpush2.bf16.msra.mxu0 %v4305
  %7349 = vmatprep.subr.bf16.mxu0 %v4298
  %7350 = vmatpush2.bf16.msra.mxu0 %v4297
  %7351 = vmatprep.subr.bf16.mxu0 %v4290
  %7352 = vmatpush2.bf16.msra.mxu0 %v4289
  %7353 = vmatprep.subr.bf16.mxu0 %v4282
  %7354 = vmatpush2.bf16.msra.mxu0 %v4281
  %7355 = vmatprep.subr.bf16.mxu0 %v4274
  %7356 = vmatpush2.bf16.msra.mxu0 %v4273
  %7357 = vmatprep.mubr.bf16.mxu0 %v7201
  %7358 = vmatmul.mubr.bf16.gmra.mxu0 %v7200
  %v7359 = vpop.f32.mrf.mxu0
  %v7360 = vadd.f32 0.0, %v7359
  %v7361 = vpop.f32.mrf.mxu0
  %v7362 = vadd.f32 0.0, %v7361
  %v7363 = vpop.f32.mrf.mxu0
  %v7364 = vpop.f32.mrf.mxu0
  %7365 = vdwg.mxu0
  %v7374 = vcombine.low %v7237, %v7239
  %v7375 = vcombine.low %v7278, %v7280
  %v7376 = vcombine.low %v7319, %v7321
  %v7377 = vcombine.low %v7360, %v7362
  %v7379 = vunpack.c.l.s4 1966171168
  %v7380 = vunpack.c.0.s8 %v7379
  %v7381 = vlaneseq
  %v7382 = vshrl.u32 %v7381, 7
  %v7383 = vsub.s32 %v7380, %v7382
  %v7384 = vrot.slane %v7374, %v7383
  %v7386 = vunpack.c.l.s4 1966171168
  %v7387 = vunpack.c.0.s8 %v7386
  %v7388 = vlaneseq
  %v7389 = vshrl.u32 %v7388, 7
  %v7390 = vsub.s32 %v7387, %v7389
  %v7391 = vrot.slane %v7375, %v7390
  %v7393 = vunpack.c.l.s4 1966171168
  %v7394 = vunpack.c.0.s8 %v7393
  %v7395 = vlaneseq
  %v7396 = vshrl.u32 %v7395, 7
  %v7397 = vsub.s32 %v7394, %v7396
  %v7398 = vrot.slane %v7376, %v7397
  %v7400 = vunpack.c.l.s4 1966171168
  %v7401 = vunpack.c.0.s8 %v7400
  %v7402 = vlaneseq
  %v7403 = vshrl.u32 %v7402, 7
  %v7404 = vsub.s32 %v7401, %v7403
  %v7405 = vrot.slane %v7377, %v7404
  %v7406 = vcombine.low %v7384, %v7391
  %v7407 = vcombine.low %v7398, %v7405
  %v7409 = vunpack.c.l.s4 1966171168
  %v7410 = vunpack.c.0.s8 %v7409
  %v7411 = vlaneseq
  %v7412 = vshrl.u32 %v7411, 7
  %v7413 = vsub.s32 %v7410, %v7412
  %v7414 = vrot.slane %v7406, %v7413
  %v7416 = vunpack.c.l.s4 1966171168
  %v7417 = vunpack.c.0.s8 %v7416
  %v7418 = vlaneseq
  %v7419 = vshrl.u32 %v7418, 7
  %v7420 = vsub.s32 %v7417, %v7419
  %v7421 = vrot.slane %v7407, %v7420
  %v7422 = vcombine.low %v7414, %v7421
  %v7424 = vadd.f32 %v7188, %v7422
  %v7425 = vxor.u32 %v7424, 2147483648
  %v7426 = vmul.f32 %v7425, 1.442695
  %v7427 = vpow.pop %v7426
  %v7428 = vadd.f32 %v7427, 1.0
  %v7429 = vrcp.pop %v7428
  %v7430 = vmul.f32 1.0, %v7429
  %v7432 = vrot.slane %v7424, 2
  %v7434 = vxor.u32 %v7432, 2147483648
  %v7435 = vmul.f32 %v7434, 1.442695
  %v7436 = vpow.pop %v7435
  %v7437 = vadd.f32 %v7436, 1.0
  %v7438 = vrcp.pop %v7437
  %v7439 = vmul.f32 1.0, %v7438
  %v7440 = vrot.slane %v7424, 4
  %v7442 = vtanh.pop %v7440
  %v7443 = vrot.slane %v7424, 6
  %v7445 = vxor.u32 %v7443, 2147483648
  %v7446 = vmul.f32 %v7445, 1.442695
  %v7447 = vpow.pop %v7446
  %v7448 = vadd.f32 %v7447, 1.0
  %v7449 = vrcp.pop %v7448
  %v7450 = vmul.f32 1.0, %v7449
  %v7451 = vmul.f32 %v7439, %v6905
  %v7452 = vmul.f32 %v7430, %v7442
  %v7453 = vadd.f32 %v7451, %v7452
  %v7454 = vtanh.pop %v7453
  %v7455 = vmul.f32 %v7450, %v7454
  %s7456 = scalar_lea.vmem %s10, 5
  %7457 = vst.msk [vmem:[%s7456] ss:$8 sm:$0x3] %vm4716, %v7184
  %7458 = vst.msk [vmem:[%s7456] ss:$8 sm:$0x0] %vm4716, %v7184
  %s7459 = scalar_lea.vmem %s11, 2
  %7460 = vst.msk [vmem:[%s7459] ss:$8 sm:$0x3] %vm4716, %v7455
  %7461 = vst.msk [vmem:[%s7459] ss:$8 sm:$0x0] %vm4716, %v7455
  %s7462 = scalar_lea.vmem [#allocation2], 6
  %v7463 = vld [vmem:[%s7462] ss:$8 sm:$0xf]
  %v7464 = vld [vmem:[%s7462] ss:$8 sm:$0xf0]
  %v7465 = vor.u32 %v7463, %v7464
  %v7467 = vlaneseq
  %v7468 = vshrl.u32 %v7467, 7
  %v7469 = vsub.s32 0, %v7468
  %v7470 = vrot.slane %v7184, %v7469
  %v7471 = vlaneseq
  %v7472 = vshrl.u32 %v7471, 7
  %v7473 = vsub.s32 1, %v7472
  %v7474 = vrot.slane %v7184, %v7473
  %v7477 = vpack.c.bf16 %v7470, %v7470
  %v7478 = vpack.c.bf16 %v7474, %v7474
  %7479 = vmatprep.subr.bf16.mxu0 %v3362
  %7480 = vmatpush1.bf16.msra.mxu0 %v3361
  %7481 = vmatprep.subr.bf16.mxu0 %v3354
  %7482 = vmatpush1.bf16.msra.mxu0 %v3353
  %7483 = vmatprep.subr.bf16.mxu0 %v3346
  %7484 = vmatpush1.bf16.msra.mxu0 %v3345
  %7485 = vmatprep.subr.bf16.mxu0 %v3338
  %7486 = vmatpush1.bf16.msra.mxu0 %v3337
  %7487 = vmatprep.subr.bf16.mxu0 %v3330
  %7488 = vmatpush1.bf16.msra.mxu0 %v3329
  %7489 = vmatprep.subr.bf16.mxu0 %v3322
  %7490 = vmatpush1.bf16.msra.mxu0 %v3321
  %7491 = vmatprep.subr.bf16.mxu0 %v3314
  %7492 = vmatpush1.bf16.msra.mxu0 %v3313
  %7493 = vmatprep.subr.bf16.mxu0 %v3306
  %7494 = vmatpush1.bf16.msra.mxu0 %v3305
  %7495 = vmatprep.subr.bf16.mxu0 %v3426
  %7496 = vmatpush2.bf16.msra.mxu0 %v3425
  %7497 = vmatprep.subr.bf16.mxu0 %v3418
  %7498 = vmatpush2.bf16.msra.mxu0 %v3417
  %7499 = vmatprep.subr.bf16.mxu0 %v3410
  %7500 = vmatpush2.bf16.msra.mxu0 %v3409
  %7501 = vmatprep.subr.bf16.mxu0 %v3402
  %7502 = vmatpush2.bf16.msra.mxu0 %v3401
  %7503 = vmatprep.subr.bf16.mxu0 %v3394
  %7504 = vmatpush2.bf16.msra.mxu0 %v3393
  %7505 = vmatprep.subr.bf16.mxu0 %v3386
  %7506 = vmatpush2.bf16.msra.mxu0 %v3385
  %7507 = vmatprep.subr.bf16.mxu0 %v3378
  %7508 = vmatpush2.bf16.msra.mxu0 %v3377
  %7509 = vmatprep.subr.bf16.mxu0 %v3370
  %7510 = vmatpush2.bf16.msra.mxu0 %v3369
  %7511 = vmatprep.mubr.bf16.mxu0 %v7478
  %7512 = vmatmul.mubr.bf16.gmra.mxu0 %v7477
  %v7513 = vpop.f32.mrf.mxu0
  %v7514 = vadd.f32 0.0, %v7513
  %v7515 = vpop.f32.mrf.mxu0
  %v7516 = vadd.f32 0.0, %v7515
  %v7517 = vpop.f32.mrf.mxu0
  %v7518 = vpop.f32.mrf.mxu0
  %7519 = vdwg.mxu0
  %7520 = vmatprep.subr.bf16.mxu0 %v3364
  %7521 = vmatpush1.bf16.msra.mxu0 %v3363
  %7522 = vmatprep.subr.bf16.mxu0 %v3356
  %7523 = vmatpush1.bf16.msra.mxu0 %v3355
  %7524 = vmatprep.subr.bf16.mxu0 %v3348
  %7525 = vmatpush1.bf16.msra.mxu0 %v3347
  %7526 = vmatprep.subr.bf16.mxu0 %v3340
  %7527 = vmatpush1.bf16.msra.mxu0 %v3339
  %7528 = vmatprep.subr.bf16.mxu0 %v3332
  %7529 = vmatpush1.bf16.msra.mxu0 %v3331
  %7530 = vmatprep.subr.bf16.mxu0 %v3324
  %7531 = vmatpush1.bf16.msra.mxu0 %v3323
  %7532 = vmatprep.subr.bf16.mxu0 %v3316
  %7533 = vmatpush1.bf16.msra.mxu0 %v3315
  %7534 = vmatprep.subr.bf16.mxu0 %v3308
  %7535 = vmatpush1.bf16.msra.mxu0 %v3307
  %7536 = vmatprep.subr.bf16.mxu0 %v3428
  %7537 = vmatpush2.bf16.msra.mxu0 %v3427
  %7538 = vmatprep.subr.bf16.mxu0 %v3420
  %7539 = vmatpush2.bf16.msra.mxu0 %v3419
  %7540 = vmatprep.subr.bf16.mxu0 %v3412
  %7541 = vmatpush2.bf16.msra.mxu0 %v3411
  %7542 = vmatprep.subr.bf16.mxu0 %v3404
  %7543 = vmatpush2.bf16.msra.mxu0 %v3403
  %7544 = vmatprep.subr.bf16.mxu0 %v3396
  %7545 = vmatpush2.bf16.msra.mxu0 %v3395
  %7546 = vmatprep.subr.bf16.mxu0 %v3388
  %7547 = vmatpush2.bf16.msra.mxu0 %v3387
  %7548 = vmatprep.subr.bf16.mxu0 %v3380
  %7549 = vmatpush2.bf16.msra.mxu0 %v3379
  %7550 = vmatprep.subr.bf16.mxu0 %v3372
  %7551 = vmatpush2.bf16.msra.mxu0 %v3371
  %7552 = vmatprep.mubr.bf16.mxu0 %v7478
  %7553 = vmatmul.mubr.bf16.gmra.mxu0 %v7477
  %v7554 = vpop.f32.mrf.mxu0
  %v7555 = vadd.f32 0.0, %v7554
  %v7556 = vpop.f32.mrf.mxu0
  %v7557 = vadd.f32 0.0, %v7556
  %v7558 = vpop.f32.mrf.mxu0
  %v7559 = vpop.f32.mrf.mxu0
  %7560 = vdwg.mxu0
  %7561 = vmatprep.subr.bf16.mxu0 %v3366
  %7562 = vmatpush1.bf16.msra.mxu0 %v3365
  %7563 = vmatprep.subr.bf16.mxu0 %v3358
  %7564 = vmatpush1.bf16.msra.mxu0 %v3357
  %7565 = vmatprep.subr.bf16.mxu0 %v3350
  %7566 = vmatpush1.bf16.msra.mxu0 %v3349
  %7567 = vmatprep.subr.bf16.mxu0 %v3342
  %7568 = vmatpush1.bf16.msra.mxu0 %v3341
  %7569 = vmatprep.subr.bf16.mxu0 %v3334
  %7570 = vmatpush1.bf16.msra.mxu0 %v3333
  %7571 = vmatprep.subr.bf16.mxu0 %v3326
  %7572 = vmatpush1.bf16.msra.mxu0 %v3325
  %7573 = vmatprep.subr.bf16.mxu0 %v3318
  %7574 = vmatpush1.bf16.msra.mxu0 %v3317
  %7575 = vmatprep.subr.bf16.mxu0 %v3310
  %7576 = vmatpush1.bf16.msra.mxu0 %v3309
  %7577 = vmatprep.subr.bf16.mxu0 %v3430
  %7578 = vmatpush2.bf16.msra.mxu0 %v3429
  %7579 = vmatprep.subr.bf16.mxu0 %v3422
  %7580 = vmatpush2.bf16.msra.mxu0 %v3421
  %7581 = vmatprep.subr.bf16.mxu0 %v3414
  %7582 = vmatpush2.bf16.msra.mxu0 %v3413
  %7583 = vmatprep.subr.bf16.mxu0 %v3406
  %7584 = vmatpush2.bf16.msra.mxu0 %v3405
  %7585 = vmatprep.subr.bf16.mxu0 %v3398
  %7586 = vmatpush2.bf16.msra.mxu0 %v3397
  %7587 = vmatprep.subr.bf16.mxu0 %v3390
  %7588 = vmatpush2.bf16.msra.mxu0 %v3389
  %7589 = vmatprep.subr.bf16.mxu0 %v3382
  %7590 = vmatpush2.bf16.msra.mxu0 %v3381
  %7591 = vmatprep.subr.bf16.mxu0 %v3374
  %7592 = vmatpush2.bf16.msra.mxu0 %v3373
  %7593 = vmatprep.mubr.bf16.mxu0 %v7478
  %7594 = vmatmul.mubr.bf16.gmra.mxu0 %v7477
  %v7595 = vpop.f32.mrf.mxu0
  %v7596 = vadd.f32 0.0, %v7595
  %v7597 = vpop.f32.mrf.mxu0
  %v7598 = vadd.f32 0.0, %v7597
  %v7599 = vpop.f32.mrf.mxu0
  %v7600 = vpop.f32.mrf.mxu0
  %7601 = vdwg.mxu0
  %7602 = vmatprep.subr.bf16.mxu0 %v3368
  %7603 = vmatpush1.bf16.msra.mxu0 %v3367
  %7604 = vmatprep.subr.bf16.mxu0 %v3360
  %7605 = vmatpush1.bf16.msra.mxu0 %v3359
  %7606 = vmatprep.subr.bf16.mxu0 %v3352
  %7607 = vmatpush1.bf16.msra.mxu0 %v3351
  %7608 = vmatprep.subr.bf16.mxu0 %v3344
  %7609 = vmatpush1.bf16.msra.mxu0 %v3343
  %7610 = vmatprep.subr.bf16.mxu0 %v3336
  %7611 = vmatpush1.bf16.msra.mxu0 %v3335
  %7612 = vmatprep.subr.bf16.mxu0 %v3328
  %7613 = vmatpush1.bf16.msra.mxu0 %v3327
  %7614 = vmatprep.subr.bf16.mxu0 %v3320
  %7615 = vmatpush1.bf16.msra.mxu0 %v3319
  %7616 = vmatprep.subr.bf16.mxu0 %v3312
  %7617 = vmatpush1.bf16.msra.mxu0 %v3311
  %7618 = vmatprep.subr.bf16.mxu0 %v3432
  %7619 = vmatpush2.bf16.msra.mxu0 %v3431
  %7620 = vmatprep.subr.bf16.mxu0 %v3424
  %7621 = vmatpush2.bf16.msra.mxu0 %v3423
  %7622 = vmatprep.subr.bf16.mxu0 %v3416
  %7623 = vmatpush2.bf16.msra.mxu0 %v3415
  %7624 = vmatprep.subr.bf16.mxu0 %v3408
  %7625 = vmatpush2.bf16.msra.mxu0 %v3407
  %7626 = vmatprep.subr.bf16.mxu0 %v3400
  %7627 = vmatpush2.bf16.msra.mxu0 %v3399
  %7628 = vmatprep.subr.bf16.mxu0 %v3392
  %7629 = vmatpush2.bf16.msra.mxu0 %v3391
  %7630 = vmatprep.subr.bf16.mxu0 %v3384
  %7631 = vmatpush2.bf16.msra.mxu0 %v3383
  %7632 = vmatprep.subr.bf16.mxu0 %v3376
  %7633 = vmatpush2.bf16.msra.mxu0 %v3375
  %7634 = vmatprep.mubr.bf16.mxu0 %v7478
  %7635 = vmatmul.mubr.bf16.gmra.mxu0 %v7477
  %v7636 = vpop.f32.mrf.mxu0
  %v7637 = vadd.f32 0.0, %v7636
  %v7638 = vpop.f32.mrf.mxu0
  %v7639 = vadd.f32 0.0, %v7638
  %v7640 = vpop.f32.mrf.mxu0
  %v7641 = vpop.f32.mrf.mxu0
  %7642 = vdwg.mxu0
  %v7651 = vcombine.low %v7514, %v7516
  %v7652 = vcombine.low %v7555, %v7557
  %v7653 = vcombine.low %v7596, %v7598
  %v7654 = vcombine.low %v7637, %v7639
  %v7656 = vunpack.c.l.s4 1966171168
  %v7657 = vunpack.c.0.s8 %v7656
  %v7658 = vlaneseq
  %v7659 = vshrl.u32 %v7658, 7
  %v7660 = vsub.s32 %v7657, %v7659
  %v7661 = vrot.slane %v7651, %v7660
  %v7663 = vunpack.c.l.s4 1966171168
  %v7664 = vunpack.c.0.s8 %v7663
  %v7665 = vlaneseq
  %v7666 = vshrl.u32 %v7665, 7
  %v7667 = vsub.s32 %v7664, %v7666
  %v7668 = vrot.slane %v7652, %v7667
  %v7670 = vunpack.c.l.s4 1966171168
  %v7671 = vunpack.c.0.s8 %v7670
  %v7672 = vlaneseq
  %v7673 = vshrl.u32 %v7672, 7
  %v7674 = vsub.s32 %v7671, %v7673
  %v7675 = vrot.slane %v7653, %v7674
  %v7677 = vunpack.c.l.s4 1966171168
  %v7678 = vunpack.c.0.s8 %v7677
  %v7679 = vlaneseq
  %v7680 = vshrl.u32 %v7679, 7
  %v7681 = vsub.s32 %v7678, %v7680
  %v7682 = vrot.slane %v7654, %v7681
  %v7683 = vcombine.low %v7661, %v7668
  %v7684 = vcombine.low %v7675, %v7682
  %v7686 = vunpack.c.l.s4 1966171168
  %v7687 = vunpack.c.0.s8 %v7686
  %v7688 = vlaneseq
  %v7689 = vshrl.u32 %v7688, 7
  %v7690 = vsub.s32 %v7687, %v7689
  %v7691 = vrot.slane %v7683, %v7690
  %v7693 = vunpack.c.l.s4 1966171168
  %v7694 = vunpack.c.0.s8 %v7693
  %v7695 = vlaneseq
  %v7696 = vshrl.u32 %v7695, 7
  %v7697 = vsub.s32 %v7694, %v7696
  %v7698 = vrot.slane %v7684, %v7697
  %v7699 = vcombine.low %v7691, %v7698
  %v7701 = vadd.f32 %v7465, %v7699
  %v7702 = vxor.u32 %v7701, 2147483648
  %v7703 = vmul.f32 %v7702, 1.442695
  %v7704 = vpow.pop %v7703
  %v7705 = vadd.f32 %v7704, 1.0
  %v7706 = vrcp.pop %v7705
  %v7707 = vmul.f32 1.0, %v7706
  %v7709 = vrot.slane %v7701, 2
  %v7711 = vxor.u32 %v7709, 2147483648
  %v7712 = vmul.f32 %v7711, 1.442695
  %v7713 = vpow.pop %v7712
  %v7714 = vadd.f32 %v7713, 1.0
  %v7715 = vrcp.pop %v7714
  %v7716 = vmul.f32 1.0, %v7715
  %v7717 = vrot.slane %v7701, 4
  %v7719 = vtanh.pop %v7717
  %v7720 = vrot.slane %v7701, 6
  %v7722 = vxor.u32 %v7720, 2147483648
  %v7723 = vmul.f32 %v7722, 1.442695
  %v7724 = vpow.pop %v7723
  %v7725 = vadd.f32 %v7724, 1.0
  %v7726 = vrcp.pop %v7725
  %v7727 = vmul.f32 1.0, %v7726
  %v7728 = vmul.f32 %v7716, %v7182
  %v7729 = vmul.f32 %v7707, %v7719
  %v7730 = vadd.f32 %v7728, %v7729
  %v7731 = vtanh.pop %v7730
  %v7732 = vmul.f32 %v7727, %v7731
  %s7733 = scalar_lea.vmem [#allocation3], 1
  %v7734 = vld [vmem:[%s7733] ss:$8 sm:$0xf]
  %v7735 = vld [vmem:[%s7733] ss:$8 sm:$0xf0]
  %v7736 = vor.u32 %v7734, %v7735
  %v7738 = vlaneseq
  %v7739 = vshrl.u32 %v7738, 7
  %v7740 = vsub.s32 0, %v7739
  %v7741 = vrot.slane %v7455, %v7740
  %v7742 = vlaneseq
  %v7743 = vshrl.u32 %v7742, 7
  %v7744 = vsub.s32 1, %v7743
  %v7745 = vrot.slane %v7455, %v7744
  %v7748 = vpack.c.bf16 %v7741, %v7741
  %v7749 = vpack.c.bf16 %v7745, %v7745
  %7750 = vmatprep.subr.bf16.mxu0 %v4260
  %7751 = vmatpush1.bf16.msra.mxu0 %v4259
  %7752 = vmatprep.subr.bf16.mxu0 %v4252
  %7753 = vmatpush1.bf16.msra.mxu0 %v4251
  %7754 = vmatprep.subr.bf16.mxu0 %v4244
  %7755 = vmatpush1.bf16.msra.mxu0 %v4243
  %7756 = vmatprep.subr.bf16.mxu0 %v4236
  %7757 = vmatpush1.bf16.msra.mxu0 %v4235
  %7758 = vmatprep.subr.bf16.mxu0 %v4228
  %7759 = vmatpush1.bf16.msra.mxu0 %v4227
  %7760 = vmatprep.subr.bf16.mxu0 %v4220
  %7761 = vmatpush1.bf16.msra.mxu0 %v4219
  %7762 = vmatprep.subr.bf16.mxu0 %v4212
  %7763 = vmatpush1.bf16.msra.mxu0 %v4211
  %7764 = vmatprep.subr.bf16.mxu0 %v4204
  %7765 = vmatpush1.bf16.msra.mxu0 %v4203
  %7766 = vmatprep.subr.bf16.mxu0 %v4324
  %7767 = vmatpush2.bf16.msra.mxu0 %v4323
  %7768 = vmatprep.subr.bf16.mxu0 %v4316
  %7769 = vmatpush2.bf16.msra.mxu0 %v4315
  %7770 = vmatprep.subr.bf16.mxu0 %v4308
  %7771 = vmatpush2.bf16.msra.mxu0 %v4307
  %7772 = vmatprep.subr.bf16.mxu0 %v4300
  %7773 = vmatpush2.bf16.msra.mxu0 %v4299
  %7774 = vmatprep.subr.bf16.mxu0 %v4292
  %7775 = vmatpush2.bf16.msra.mxu0 %v4291
  %7776 = vmatprep.subr.bf16.mxu0 %v4284
  %7777 = vmatpush2.bf16.msra.mxu0 %v4283
  %7778 = vmatprep.subr.bf16.mxu0 %v4276
  %7779 = vmatpush2.bf16.msra.mxu0 %v4275
  %7780 = vmatprep.subr.bf16.mxu0 %v4268
  %7781 = vmatpush2.bf16.msra.mxu0 %v4267
  %7782 = vmatprep.mubr.bf16.mxu0 %v7749
  %7783 = vmatmul.mubr.bf16.gmra.mxu0 %v7748
  %v7784 = vpop.f32.mrf.mxu0
  %v7785 = vadd.f32 0.0, %v7784
  %v7786 = vpop.f32.mrf.mxu0
  %v7787 = vadd.f32 0.0, %v7786
  %v7788 = vpop.f32.mrf.mxu0
  %v7789 = vpop.f32.mrf.mxu0
  %7790 = vdwg.mxu0
  %7791 = vmatprep.subr.bf16.mxu0 %v4262
  %7792 = vmatpush1.bf16.msra.mxu0 %v4261
  %7793 = vmatprep.subr.bf16.mxu0 %v4254
  %7794 = vmatpush1.bf16.msra.mxu0 %v4253
  %7795 = vmatprep.subr.bf16.mxu0 %v4246
  %7796 = vmatpush1.bf16.msra.mxu0 %v4245
  %7797 = vmatprep.subr.bf16.mxu0 %v4238
  %7798 = vmatpush1.bf16.msra.mxu0 %v4237
  %7799 = vmatprep.subr.bf16.mxu0 %v4230
  %7800 = vmatpush1.bf16.msra.mxu0 %v4229
  %7801 = vmatprep.subr.bf16.mxu0 %v4222
  %7802 = vmatpush1.bf16.msra.mxu0 %v4221
  %7803 = vmatprep.subr.bf16.mxu0 %v4214
  %7804 = vmatpush1.bf16.msra.mxu0 %v4213
  %7805 = vmatprep.subr.bf16.mxu0 %v4206
  %7806 = vmatpush1.bf16.msra.mxu0 %v4205
  %7807 = vmatprep.subr.bf16.mxu0 %v4326
  %7808 = vmatpush2.bf16.msra.mxu0 %v4325
  %7809 = vmatprep.subr.bf16.mxu0 %v4318
  %7810 = vmatpush2.bf16.msra.mxu0 %v4317
  %7811 = vmatprep.subr.bf16.mxu0 %v4310
  %7812 = vmatpush2.bf16.msra.mxu0 %v4309
  %7813 = vmatprep.subr.bf16.mxu0 %v4302
  %7814 = vmatpush2.bf16.msra.mxu0 %v4301
  %7815 = vmatprep.subr.bf16.mxu0 %v4294
  %7816 = vmatpush2.bf16.msra.mxu0 %v4293
  %7817 = vmatprep.subr.bf16.mxu0 %v4286
  %7818 = vmatpush2.bf16.msra.mxu0 %v4285
  %7819 = vmatprep.subr.bf16.mxu0 %v4278
  %7820 = vmatpush2.bf16.msra.mxu0 %v4277
  %7821 = vmatprep.subr.bf16.mxu0 %v4270
  %7822 = vmatpush2.bf16.msra.mxu0 %v4269
  %7823 = vmatprep.mubr.bf16.mxu0 %v7749
  %7824 = vmatmul.mubr.bf16.gmra.mxu0 %v7748
  %v7825 = vpop.f32.mrf.mxu0
  %v7826 = vadd.f32 0.0, %v7825
  %v7827 = vpop.f32.mrf.mxu0
  %v7828 = vadd.f32 0.0, %v7827
  %v7829 = vpop.f32.mrf.mxu0
  %v7830 = vpop.f32.mrf.mxu0
  %7831 = vdwg.mxu0
  %7832 = vmatprep.subr.bf16.mxu0 %v4264
  %7833 = vmatpush1.bf16.msra.mxu0 %v4263
  %7834 = vmatprep.subr.bf16.mxu0 %v4256
  %7835 = vmatpush1.bf16.msra.mxu0 %v4255
  %7836 = vmatprep.subr.bf16.mxu0 %v4248
  %7837 = vmatpush1.bf16.msra.mxu0 %v4247
  %7838 = vmatprep.subr.bf16.mxu0 %v4240
  %7839 = vmatpush1.bf16.msra.mxu0 %v4239
  %7840 = vmatprep.subr.bf16.mxu0 %v4232
  %7841 = vmatpush1.bf16.msra.mxu0 %v4231
  %7842 = vmatprep.subr.bf16.mxu0 %v4224
  %7843 = vmatpush1.bf16.msra.mxu0 %v4223
  %7844 = vmatprep.subr.bf16.mxu0 %v4216
  %7845 = vmatpush1.bf16.msra.mxu0 %v4215
  %7846 = vmatprep.subr.bf16.mxu0 %v4208
  %7847 = vmatpush1.bf16.msra.mxu0 %v4207
  %7848 = vmatprep.subr.bf16.mxu0 %v4328
  %7849 = vmatpush2.bf16.msra.mxu0 %v4327
  %7850 = vmatprep.subr.bf16.mxu0 %v4320
  %7851 = vmatpush2.bf16.msra.mxu0 %v4319
  %7852 = vmatprep.subr.bf16.mxu0 %v4312
  %7853 = vmatpush2.bf16.msra.mxu0 %v4311
  %7854 = vmatprep.subr.bf16.mxu0 %v4304
  %7855 = vmatpush2.bf16.msra.mxu0 %v4303
  %7856 = vmatprep.subr.bf16.mxu0 %v4296
  %7857 = vmatpush2.bf16.msra.mxu0 %v4295
  %7858 = vmatprep.subr.bf16.mxu0 %v4288
  %7859 = vmatpush2.bf16.msra.mxu0 %v4287
  %7860 = vmatprep.subr.bf16.mxu0 %v4280
  %7861 = vmatpush2.bf16.msra.mxu0 %v4279
  %7862 = vmatprep.subr.bf16.mxu0 %v4272
  %7863 = vmatpush2.bf16.msra.mxu0 %v4271
  %7864 = vmatprep.mubr.bf16.mxu0 %v7749
  %7865 = vmatmul.mubr.bf16.gmra.mxu0 %v7748
  %v7866 = vpop.f32.mrf.mxu0
  %v7867 = vadd.f32 0.0, %v7866
  %v7868 = vpop.f32.mrf.mxu0
  %v7869 = vadd.f32 0.0, %v7868
  %v7870 = vpop.f32.mrf.mxu0
  %v7871 = vpop.f32.mrf.mxu0
  %7872 = vdwg.mxu0
  %7873 = vmatprep.subr.bf16.mxu0 %v4266
  %7874 = vmatpush1.bf16.msra.mxu0 %v4265
  %7875 = vmatprep.subr.bf16.mxu0 %v4258
  %7876 = vmatpush1.bf16.msra.mxu0 %v4257
  %7877 = vmatprep.subr.bf16.mxu0 %v4250
  %7878 = vmatpush1.bf16.msra.mxu0 %v4249
  %7879 = vmatprep.subr.bf16.mxu0 %v4242
  %7880 = vmatpush1.bf16.msra.mxu0 %v4241
  %7881 = vmatprep.subr.bf16.mxu0 %v4234
  %7882 = vmatpush1.bf16.msra.mxu0 %v4233
  %7883 = vmatprep.subr.bf16.mxu0 %v4226
  %7884 = vmatpush1.bf16.msra.mxu0 %v4225
  %7885 = vmatprep.subr.bf16.mxu0 %v4218
  %7886 = vmatpush1.bf16.msra.mxu0 %v4217
  %7887 = vmatprep.subr.bf16.mxu0 %v4210
  %7888 = vmatpush1.bf16.msra.mxu0 %v4209
  %7889 = vmatprep.subr.bf16.mxu0 %v4330
  %7890 = vmatpush2.bf16.msra.mxu0 %v4329
  %7891 = vmatprep.subr.bf16.mxu0 %v4322
  %7892 = vmatpush2.bf16.msra.mxu0 %v4321
  %7893 = vmatprep.subr.bf16.mxu0 %v4314
  %7894 = vmatpush2.bf16.msra.mxu0 %v4313
  %7895 = vmatprep.subr.bf16.mxu0 %v4306
  %7896 = vmatpush2.bf16.msra.mxu0 %v4305
  %7897 = vmatprep.subr.bf16.mxu0 %v4298
  %7898 = vmatpush2.bf16.msra.mxu0 %v4297
  %7899 = vmatprep.subr.bf16.mxu0 %v4290
  %7900 = vmatpush2.bf16.msra.mxu0 %v4289
  %7901 = vmatprep.subr.bf16.mxu0 %v4282
  %7902 = vmatpush2.bf16.msra.mxu0 %v4281
  %7903 = vmatprep.subr.bf16.mxu0 %v4274
  %7904 = vmatpush2.bf16.msra.mxu0 %v4273
  %7905 = vmatprep.mubr.bf16.mxu0 %v7749
  %7906 = vmatmul.mubr.bf16.gmra.mxu0 %v7748
  %v7907 = vpop.f32.mrf.mxu0
  %v7908 = vadd.f32 0.0, %v7907
  %v7909 = vpop.f32.mrf.mxu0
  %v7910 = vadd.f32 0.0, %v7909
  %v7911 = vpop.f32.mrf.mxu0
  %v7912 = vpop.f32.mrf.mxu0
  %7913 = vdwg.mxu0
  %v7922 = vcombine.low %v7785, %v7787
  %v7923 = vcombine.low %v7826, %v7828
  %v7924 = vcombine.low %v7867, %v7869
  %v7925 = vcombine.low %v7908, %v7910
  %v7927 = vunpack.c.l.s4 1966171168
  %v7928 = vunpack.c.0.s8 %v7927
  %v7929 = vlaneseq
  %v7930 = vshrl.u32 %v7929, 7
  %v7931 = vsub.s32 %v7928, %v7930
  %v7932 = vrot.slane %v7922, %v7931
  %v7934 = vunpack.c.l.s4 1966171168
  %v7935 = vunpack.c.0.s8 %v7934
  %v7936 = vlaneseq
  %v7937 = vshrl.u32 %v7936, 7
  %v7938 = vsub.s32 %v7935, %v7937
  %v7939 = vrot.slane %v7923, %v7938
  %v7941 = vunpack.c.l.s4 1966171168
  %v7942 = vunpack.c.0.s8 %v7941
  %v7943 = vlaneseq
  %v7944 = vshrl.u32 %v7943, 7
  %v7945 = vsub.s32 %v7942, %v7944
  %v7946 = vrot.slane %v7924, %v7945
  %v7948 = vunpack.c.l.s4 1966171168
  %v7949 = vunpack.c.0.s8 %v7948
  %v7950 = vlaneseq
  %v7951 = vshrl.u32 %v7950, 7
  %v7952 = vsub.s32 %v7949, %v7951
  %v7953 = vrot.slane %v7925, %v7952
  %v7954 = vcombine.low %v7932, %v7939
  %v7955 = vcombine.low %v7946, %v7953
  %v7957 = vunpack.c.l.s4 1966171168
  %v7958 = vunpack.c.0.s8 %v7957
  %v7959 = vlaneseq
  %v7960 = vshrl.u32 %v7959, 7
  %v7961 = vsub.s32 %v7958, %v7960
  %v7962 = vrot.slane %v7954, %v7961
  %v7964 = vunpack.c.l.s4 1966171168
  %v7965 = vunpack.c.0.s8 %v7964
  %v7966 = vlaneseq
  %v7967 = vshrl.u32 %v7966, 7
  %v7968 = vsub.s32 %v7965, %v7967
  %v7969 = vrot.slane %v7955, %v7968
  %v7970 = vcombine.low %v7962, %v7969
  %v7972 = vadd.f32 %v7736, %v7970
  %v7973 = vxor.u32 %v7972, 2147483648
  %v7974 = vmul.f32 %v7973, 1.442695
  %v7975 = vpow.pop %v7974
  %v7976 = vadd.f32 %v7975, 1.0
  %v7977 = vrcp.pop %v7976
  %v7978 = vmul.f32 1.0, %v7977
  %v7980 = vrot.slane %v7972, 2
  %v7982 = vxor.u32 %v7980, 2147483648
  %v7983 = vmul.f32 %v7982, 1.442695
  %v7984 = vpow.pop %v7983
  %v7985 = vadd.f32 %v7984, 1.0
  %v7986 = vrcp.pop %v7985
  %v7987 = vmul.f32 1.0, %v7986
  %v7988 = vrot.slane %v7972, 4
  %v7990 = vtanh.pop %v7988
  %v7991 = vrot.slane %v7972, 6
  %v7993 = vxor.u32 %v7991, 2147483648
  %v7994 = vmul.f32 %v7993, 1.442695
  %v7995 = vpow.pop %v7994
  %v7996 = vadd.f32 %v7995, 1.0
  %v7997 = vrcp.pop %v7996
  %v7998 = vmul.f32 1.0, %v7997
  %v7999 = vmul.f32 %v7987, %v7453
  %v8000 = vmul.f32 %v7978, %v7990
  %v8001 = vadd.f32 %v7999, %v8000
  %v8002 = vtanh.pop %v8001
  %v8003 = vmul.f32 %v7998, %v8002
  %s8004 = scalar_lea.vmem %s10, 6
  %8005 = vst.msk [vmem:[%s8004] ss:$8 sm:$0x3] %vm4716, %v7732
  %8006 = vst.msk [vmem:[%s8004] ss:$8 sm:$0x0] %vm4716, %v7732
  %s8007 = scalar_lea.vmem %s11, 1
  %8008 = vst.msk [vmem:[%s8007] ss:$8 sm:$0x3] %vm4716, %v8003
  %8009 = vst.msk [vmem:[%s8007] ss:$8 sm:$0x0] %vm4716, %v8003
  %s8010 = scalar_lea.vmem [#allocation2], 7
  %v8011 = vld [vmem:[%s8010] ss:$8 sm:$0xf]
  %v8012 = vld [vmem:[%s8010] ss:$8 sm:$0xf0]
  %v8013 = vor.u32 %v8011, %v8012
  %v8015 = vlaneseq
  %v8016 = vshrl.u32 %v8015, 7
  %v8017 = vsub.s32 0, %v8016
  %v8018 = vrot.slane %v7732, %v8017
  %v8019 = vlaneseq
  %v8020 = vshrl.u32 %v8019, 7
  %v8021 = vsub.s32 1, %v8020
  %v8022 = vrot.slane %v7732, %v8021
  %v8025 = vpack.c.bf16 %v8018, %v8018
  %v8026 = vpack.c.bf16 %v8022, %v8022
  %8027 = vmatprep.subr.bf16.mxu0 %v3362
  %8028 = vmatpush1.bf16.msra.mxu0 %v3361
  %8029 = vmatprep.subr.bf16.mxu0 %v3354
  %8030 = vmatpush1.bf16.msra.mxu0 %v3353
  %8031 = vmatprep.subr.bf16.mxu0 %v3346
  %8032 = vmatpush1.bf16.msra.mxu0 %v3345
  %8033 = vmatprep.subr.bf16.mxu0 %v3338
  %8034 = vmatpush1.bf16.msra.mxu0 %v3337
  %8035 = vmatprep.subr.bf16.mxu0 %v3330
  %8036 = vmatpush1.bf16.msra.mxu0 %v3329
  %8037 = vmatprep.subr.bf16.mxu0 %v3322
  %8038 = vmatpush1.bf16.msra.mxu0 %v3321
  %8039 = vmatprep.subr.bf16.mxu0 %v3314
  %8040 = vmatpush1.bf16.msra.mxu0 %v3313
  %8041 = vmatprep.subr.bf16.mxu0 %v3306
  %8042 = vmatpush1.bf16.msra.mxu0 %v3305
  %8043 = vmatprep.subr.bf16.mxu0 %v3426
  %8044 = vmatpush2.bf16.msra.mxu0 %v3425
  %8045 = vmatprep.subr.bf16.mxu0 %v3418
  %8046 = vmatpush2.bf16.msra.mxu0 %v3417
  %8047 = vmatprep.subr.bf16.mxu0 %v3410
  %8048 = vmatpush2.bf16.msra.mxu0 %v3409
  %8049 = vmatprep.subr.bf16.mxu0 %v3402
  %8050 = vmatpush2.bf16.msra.mxu0 %v3401
  %8051 = vmatprep.subr.bf16.mxu0 %v3394
  %8052 = vmatpush2.bf16.msra.mxu0 %v3393
  %8053 = vmatprep.subr.bf16.mxu0 %v3386
  %8054 = vmatpush2.bf16.msra.mxu0 %v3385
  %8055 = vmatprep.subr.bf16.mxu0 %v3378
  %8056 = vmatpush2.bf16.msra.mxu0 %v3377
  %8057 = vmatprep.subr.bf16.mxu0 %v3370
  %8058 = vmatpush2.bf16.msra.mxu0 %v3369
  %8059 = vmatprep.mubr.bf16.mxu0 %v8026
  %8060 = vmatmul.mubr.bf16.gmra.mxu0 %v8025
  %v8061 = vpop.f32.mrf.mxu0
  %v8062 = vadd.f32 0.0, %v8061
  %v8063 = vpop.f32.mrf.mxu0
  %v8064 = vadd.f32 0.0, %v8063
  %v8065 = vpop.f32.mrf.mxu0
  %v8066 = vpop.f32.mrf.mxu0
  %8067 = vdwg.mxu0
  %8068 = vmatprep.subr.bf16.mxu0 %v3364
  %8069 = vmatpush1.bf16.msra.mxu0 %v3363
  %8070 = vmatprep.subr.bf16.mxu0 %v3356
  %8071 = vmatpush1.bf16.msra.mxu0 %v3355
  %8072 = vmatprep.subr.bf16.mxu0 %v3348
  %8073 = vmatpush1.bf16.msra.mxu0 %v3347
  %8074 = vmatprep.subr.bf16.mxu0 %v3340
  %8075 = vmatpush1.bf16.msra.mxu0 %v3339
  %8076 = vmatprep.subr.bf16.mxu0 %v3332
  %8077 = vmatpush1.bf16.msra.mxu0 %v3331
  %8078 = vmatprep.subr.bf16.mxu0 %v3324
  %8079 = vmatpush1.bf16.msra.mxu0 %v3323
  %8080 = vmatprep.subr.bf16.mxu0 %v3316
  %8081 = vmatpush1.bf16.msra.mxu0 %v3315
  %8082 = vmatprep.subr.bf16.mxu0 %v3308
  %8083 = vmatpush1.bf16.msra.mxu0 %v3307
  %8084 = vmatprep.subr.bf16.mxu0 %v3428
  %8085 = vmatpush2.bf16.msra.mxu0 %v3427
  %8086 = vmatprep.subr.bf16.mxu0 %v3420
  %8087 = vmatpush2.bf16.msra.mxu0 %v3419
  %8088 = vmatprep.subr.bf16.mxu0 %v3412
  %8089 = vmatpush2.bf16.msra.mxu0 %v3411
  %8090 = vmatprep.subr.bf16.mxu0 %v3404
  %8091 = vmatpush2.bf16.msra.mxu0 %v3403
  %8092 = vmatprep.subr.bf16.mxu0 %v3396
  %8093 = vmatpush2.bf16.msra.mxu0 %v3395
  %8094 = vmatprep.subr.bf16.mxu0 %v3388
  %8095 = vmatpush2.bf16.msra.mxu0 %v3387
  %8096 = vmatprep.subr.bf16.mxu0 %v3380
  %8097 = vmatpush2.bf16.msra.mxu0 %v3379
  %8098 = vmatprep.subr.bf16.mxu0 %v3372
  %8099 = vmatpush2.bf16.msra.mxu0 %v3371
  %8100 = vmatprep.mubr.bf16.mxu0 %v8026
  %8101 = vmatmul.mubr.bf16.gmra.mxu0 %v8025
  %v8102 = vpop.f32.mrf.mxu0
  %v8103 = vadd.f32 0.0, %v8102
  %v8104 = vpop.f32.mrf.mxu0
  %v8105 = vadd.f32 0.0, %v8104
  %v8106 = vpop.f32.mrf.mxu0
  %v8107 = vpop.f32.mrf.mxu0
  %8108 = vdwg.mxu0
  %8109 = vmatprep.subr.bf16.mxu0 %v3366
  %8110 = vmatpush1.bf16.msra.mxu0 %v3365
  %8111 = vmatprep.subr.bf16.mxu0 %v3358
  %8112 = vmatpush1.bf16.msra.mxu0 %v3357
  %8113 = vmatprep.subr.bf16.mxu0 %v3350
  %8114 = vmatpush1.bf16.msra.mxu0 %v3349
  %8115 = vmatprep.subr.bf16.mxu0 %v3342
  %8116 = vmatpush1.bf16.msra.mxu0 %v3341
  %8117 = vmatprep.subr.bf16.mxu0 %v3334
  %8118 = vmatpush1.bf16.msra.mxu0 %v3333
  %8119 = vmatprep.subr.bf16.mxu0 %v3326
  %8120 = vmatpush1.bf16.msra.mxu0 %v3325
  %8121 = vmatprep.subr.bf16.mxu0 %v3318
  %8122 = vmatpush1.bf16.msra.mxu0 %v3317
  %8123 = vmatprep.subr.bf16.mxu0 %v3310
  %8124 = vmatpush1.bf16.msra.mxu0 %v3309
  %8125 = vmatprep.subr.bf16.mxu0 %v3430
  %8126 = vmatpush2.bf16.msra.mxu0 %v3429
  %8127 = vmatprep.subr.bf16.mxu0 %v3422
  %8128 = vmatpush2.bf16.msra.mxu0 %v3421
  %8129 = vmatprep.subr.bf16.mxu0 %v3414
  %8130 = vmatpush2.bf16.msra.mxu0 %v3413
  %8131 = vmatprep.subr.bf16.mxu0 %v3406
  %8132 = vmatpush2.bf16.msra.mxu0 %v3405
  %8133 = vmatprep.subr.bf16.mxu0 %v3398
  %8134 = vmatpush2.bf16.msra.mxu0 %v3397
  %8135 = vmatprep.subr.bf16.mxu0 %v3390
  %8136 = vmatpush2.bf16.msra.mxu0 %v3389
  %8137 = vmatprep.subr.bf16.mxu0 %v3382
  %8138 = vmatpush2.bf16.msra.mxu0 %v3381
  %8139 = vmatprep.subr.bf16.mxu0 %v3374
  %8140 = vmatpush2.bf16.msra.mxu0 %v3373
  %8141 = vmatprep.mubr.bf16.mxu0 %v8026
  %8142 = vmatmul.mubr.bf16.gmra.mxu0 %v8025
  %v8143 = vpop.f32.mrf.mxu0
  %v8144 = vadd.f32 0.0, %v8143
  %v8145 = vpop.f32.mrf.mxu0
  %v8146 = vadd.f32 0.0, %v8145
  %v8147 = vpop.f32.mrf.mxu0
  %v8148 = vpop.f32.mrf.mxu0
  %8149 = vdwg.mxu0
  %8150 = vmatprep.subr.bf16.mxu0 %v3368
  %8151 = vmatpush1.bf16.msra.mxu0 %v3367
  %8152 = vmatprep.subr.bf16.mxu0 %v3360
  %8153 = vmatpush1.bf16.msra.mxu0 %v3359
  %8154 = vmatprep.subr.bf16.mxu0 %v3352
  %8155 = vmatpush1.bf16.msra.mxu0 %v3351
  %8156 = vmatprep.subr.bf16.mxu0 %v3344
  %8157 = vmatpush1.bf16.msra.mxu0 %v3343
  %8158 = vmatprep.subr.bf16.mxu0 %v3336
  %8159 = vmatpush1.bf16.msra.mxu0 %v3335
  %8160 = vmatprep.subr.bf16.mxu0 %v3328
  %8161 = vmatpush1.bf16.msra.mxu0 %v3327
  %8162 = vmatprep.subr.bf16.mxu0 %v3320
  %8163 = vmatpush1.bf16.msra.mxu0 %v3319
  %8164 = vmatprep.subr.bf16.mxu0 %v3312
  %8165 = vmatpush1.bf16.msra.mxu0 %v3311
  %8166 = vmatprep.subr.bf16.mxu0 %v3432
  %8167 = vmatpush2.bf16.msra.mxu0 %v3431
  %8168 = vmatprep.subr.bf16.mxu0 %v3424
  %8169 = vmatpush2.bf16.msra.mxu0 %v3423
  %8170 = vmatprep.subr.bf16.mxu0 %v3416
  %8171 = vmatpush2.bf16.msra.mxu0 %v3415
  %8172 = vmatprep.subr.bf16.mxu0 %v3408
  %8173 = vmatpush2.bf16.msra.mxu0 %v3407
  %8174 = vmatprep.subr.bf16.mxu0 %v3400
  %8175 = vmatpush2.bf16.msra.mxu0 %v3399
  %8176 = vmatprep.subr.bf16.mxu0 %v3392
  %8177 = vmatpush2.bf16.msra.mxu0 %v3391
  %8178 = vmatprep.subr.bf16.mxu0 %v3384
  %8179 = vmatpush2.bf16.msra.mxu0 %v3383
  %8180 = vmatprep.subr.bf16.mxu0 %v3376
  %8181 = vmatpush2.bf16.msra.mxu0 %v3375
  %8182 = vmatprep.mubr.bf16.mxu0 %v8026
  %8183 = vmatmul.mubr.bf16.gmra.mxu0 %v8025
  %v8184 = vpop.f32.mrf.mxu0
  %v8185 = vadd.f32 0.0, %v8184
  %v8186 = vpop.f32.mrf.mxu0
  %v8187 = vadd.f32 0.0, %v8186
  %v8188 = vpop.f32.mrf.mxu0
  %v8189 = vpop.f32.mrf.mxu0
  %8190 = vdwg.mxu0
  %v8199 = vcombine.low %v8062, %v8064
  %v8200 = vcombine.low %v8103, %v8105
  %v8201 = vcombine.low %v8144, %v8146
  %v8202 = vcombine.low %v8185, %v8187
  %v8204 = vunpack.c.l.s4 1966171168
  %v8205 = vunpack.c.0.s8 %v8204
  %v8206 = vlaneseq
  %v8207 = vshrl.u32 %v8206, 7
  %v8208 = vsub.s32 %v8205, %v8207
  %v8209 = vrot.slane %v8199, %v8208
  %v8211 = vunpack.c.l.s4 1966171168
  %v8212 = vunpack.c.0.s8 %v8211
  %v8213 = vlaneseq
  %v8214 = vshrl.u32 %v8213, 7
  %v8215 = vsub.s32 %v8212, %v8214
  %v8216 = vrot.slane %v8200, %v8215
  %v8218 = vunpack.c.l.s4 1966171168
  %v8219 = vunpack.c.0.s8 %v8218
  %v8220 = vlaneseq
  %v8221 = vshrl.u32 %v8220, 7
  %v8222 = vsub.s32 %v8219, %v8221
  %v8223 = vrot.slane %v8201, %v8222
  %v8225 = vunpack.c.l.s4 1966171168
  %v8226 = vunpack.c.0.s8 %v8225
  %v8227 = vlaneseq
  %v8228 = vshrl.u32 %v8227, 7
  %v8229 = vsub.s32 %v8226, %v8228
  %v8230 = vrot.slane %v8202, %v8229
  %v8231 = vcombine.low %v8209, %v8216
  %v8232 = vcombine.low %v8223, %v8230
  %v8234 = vunpack.c.l.s4 1966171168
  %v8235 = vunpack.c.0.s8 %v8234
  %v8236 = vlaneseq
  %v8237 = vshrl.u32 %v8236, 7
  %v8238 = vsub.s32 %v8235, %v8237
  %v8239 = vrot.slane %v8231, %v8238
  %v8241 = vunpack.c.l.s4 1966171168
  %v8242 = vunpack.c.0.s8 %v8241
  %v8243 = vlaneseq
  %v8244 = vshrl.u32 %v8243, 7
  %v8245 = vsub.s32 %v8242, %v8244
  %v8246 = vrot.slane %v8232, %v8245
  %v8247 = vcombine.low %v8239, %v8246
  %v8249 = vadd.f32 %v8013, %v8247
  %v8250 = vxor.u32 %v8249, 2147483648
  %v8251 = vmul.f32 %v8250, 1.442695
  %v8252 = vpow.pop %v8251
  %v8253 = vadd.f32 %v8252, 1.0
  %v8254 = vrcp.pop %v8253
  %v8255 = vmul.f32 1.0, %v8254
  %v8257 = vrot.slane %v8249, 2
  %v8259 = vxor.u32 %v8257, 2147483648
  %v8260 = vmul.f32 %v8259, 1.442695
  %v8261 = vpow.pop %v8260
  %v8262 = vadd.f32 %v8261, 1.0
  %v8263 = vrcp.pop %v8262
  %v8264 = vmul.f32 1.0, %v8263
  %v8265 = vrot.slane %v8249, 4
  %v8267 = vtanh.pop %v8265
  %v8268 = vrot.slane %v8249, 6
  %v8270 = vxor.u32 %v8268, 2147483648
  %v8271 = vmul.f32 %v8270, 1.442695
  %v8272 = vpow.pop %v8271
  %v8273 = vadd.f32 %v8272, 1.0
  %v8274 = vrcp.pop %v8273
  %v8275 = vmul.f32 1.0, %v8274
  %v8276 = vmul.f32 %v8264, %v7730
  %v8277 = vmul.f32 %v8255, %v8267
  %v8278 = vadd.f32 %v8276, %v8277
  %v8279 = vtanh.pop %v8278
  %v8280 = vmul.f32 %v8275, %v8279
  %v8281 = vld [vmem:[#allocation3] ss:$8 sm:$0xf]
  %v8282 = vld [vmem:[#allocation3] ss:$8 sm:$0xf0]
  %v8283 = vor.u32 %v8281, %v8282
  %v8285 = vlaneseq
  %v8286 = vshrl.u32 %v8285, 7
  %v8287 = vsub.s32 0, %v8286
  %v8288 = vrot.slane %v8003, %v8287
  %v8289 = vlaneseq
  %v8290 = vshrl.u32 %v8289, 7
  %v8291 = vsub.s32 1, %v8290
  %v8292 = vrot.slane %v8003, %v8291
  %v8295 = vpack.c.bf16 %v8288, %v8288
  %v8296 = vpack.c.bf16 %v8292, %v8292
  %8297 = vmatprep.subr.bf16.mxu0 %v4260
  %8298 = vmatpush1.bf16.msra.mxu0 %v4259
  %8299 = vmatprep.subr.bf16.mxu0 %v4252
  %8300 = vmatpush1.bf16.msra.mxu0 %v4251
  %8301 = vmatprep.subr.bf16.mxu0 %v4244
  %8302 = vmatpush1.bf16.msra.mxu0 %v4243
  %8303 = vmatprep.subr.bf16.mxu0 %v4236
  %8304 = vmatpush1.bf16.msra.mxu0 %v4235
  %8305 = vmatprep.subr.bf16.mxu0 %v4228
  %8306 = vmatpush1.bf16.msra.mxu0 %v4227
  %8307 = vmatprep.subr.bf16.mxu0 %v4220
  %8308 = vmatpush1.bf16.msra.mxu0 %v4219
  %8309 = vmatprep.subr.bf16.mxu0 %v4212
  %8310 = vmatpush1.bf16.msra.mxu0 %v4211
  %8311 = vmatprep.subr.bf16.mxu0 %v4204
  %8312 = vmatpush1.bf16.msra.mxu0 %v4203
  %8313 = vmatprep.subr.bf16.mxu0 %v4324
  %8314 = vmatpush2.bf16.msra.mxu0 %v4323
  %8315 = vmatprep.subr.bf16.mxu0 %v4316
  %8316 = vmatpush2.bf16.msra.mxu0 %v4315
  %8317 = vmatprep.subr.bf16.mxu0 %v4308
  %8318 = vmatpush2.bf16.msra.mxu0 %v4307
  %8319 = vmatprep.subr.bf16.mxu0 %v4300
  %8320 = vmatpush2.bf16.msra.mxu0 %v4299
  %8321 = vmatprep.subr.bf16.mxu0 %v4292
  %8322 = vmatpush2.bf16.msra.mxu0 %v4291
  %8323 = vmatprep.subr.bf16.mxu0 %v4284
  %8324 = vmatpush2.bf16.msra.mxu0 %v4283
  %8325 = vmatprep.subr.bf16.mxu0 %v4276
  %8326 = vmatpush2.bf16.msra.mxu0 %v4275
  %8327 = vmatprep.subr.bf16.mxu0 %v4268
  %8328 = vmatpush2.bf16.msra.mxu0 %v4267
  %8329 = vmatprep.mubr.bf16.mxu0 %v8296
  %8330 = vmatmul.mubr.bf16.gmra.mxu0 %v8295
  %v8331 = vpop.f32.mrf.mxu0
  %v8332 = vadd.f32 0.0, %v8331
  %v8333 = vpop.f32.mrf.mxu0
  %v8334 = vadd.f32 0.0, %v8333
  %v8335 = vpop.f32.mrf.mxu0
  %v8336 = vpop.f32.mrf.mxu0
  %8337 = vdwg.mxu0
  %8338 = vmatprep.subr.bf16.mxu0 %v4262
  %8339 = vmatpush1.bf16.msra.mxu0 %v4261
  %8340 = vmatprep.subr.bf16.mxu0 %v4254
  %8341 = vmatpush1.bf16.msra.mxu0 %v4253
  %8342 = vmatprep.subr.bf16.mxu0 %v4246
  %8343 = vmatpush1.bf16.msra.mxu0 %v4245
  %8344 = vmatprep.subr.bf16.mxu0 %v4238
  %8345 = vmatpush1.bf16.msra.mxu0 %v4237
  %8346 = vmatprep.subr.bf16.mxu0 %v4230
  %8347 = vmatpush1.bf16.msra.mxu0 %v4229
  %8348 = vmatprep.subr.bf16.mxu0 %v4222
  %8349 = vmatpush1.bf16.msra.mxu0 %v4221
  %8350 = vmatprep.subr.bf16.mxu0 %v4214
  %8351 = vmatpush1.bf16.msra.mxu0 %v4213
  %8352 = vmatprep.subr.bf16.mxu0 %v4206
  %8353 = vmatpush1.bf16.msra.mxu0 %v4205
  %8354 = vmatprep.subr.bf16.mxu0 %v4326
  %8355 = vmatpush2.bf16.msra.mxu0 %v4325
  %8356 = vmatprep.subr.bf16.mxu0 %v4318
  %8357 = vmatpush2.bf16.msra.mxu0 %v4317
  %8358 = vmatprep.subr.bf16.mxu0 %v4310
  %8359 = vmatpush2.bf16.msra.mxu0 %v4309
  %8360 = vmatprep.subr.bf16.mxu0 %v4302
  %8361 = vmatpush2.bf16.msra.mxu0 %v4301
  %8362 = vmatprep.subr.bf16.mxu0 %v4294
  %8363 = vmatpush2.bf16.msra.mxu0 %v4293
  %8364 = vmatprep.subr.bf16.mxu0 %v4286
  %8365 = vmatpush2.bf16.msra.mxu0 %v4285
  %8366 = vmatprep.subr.bf16.mxu0 %v4278
  %8367 = vmatpush2.bf16.msra.mxu0 %v4277
  %8368 = vmatprep.subr.bf16.mxu0 %v4270
  %8369 = vmatpush2.bf16.msra.mxu0 %v4269
  %8370 = vmatprep.mubr.bf16.mxu0 %v8296
  %8371 = vmatmul.mubr.bf16.gmra.mxu0 %v8295
  %v8372 = vpop.f32.mrf.mxu0
  %v8373 = vadd.f32 0.0, %v8372
  %v8374 = vpop.f32.mrf.mxu0
  %v8375 = vadd.f32 0.0, %v8374
  %v8376 = vpop.f32.mrf.mxu0
  %v8377 = vpop.f32.mrf.mxu0
  %8378 = vdwg.mxu0
  %8379 = vmatprep.subr.bf16.mxu0 %v4264
  %8380 = vmatpush1.bf16.msra.mxu0 %v4263
  %8381 = vmatprep.subr.bf16.mxu0 %v4256
  %8382 = vmatpush1.bf16.msra.mxu0 %v4255
  %8383 = vmatprep.subr.bf16.mxu0 %v4248
  %8384 = vmatpush1.bf16.msra.mxu0 %v4247
  %8385 = vmatprep.subr.bf16.mxu0 %v4240
  %8386 = vmatpush1.bf16.msra.mxu0 %v4239
  %8387 = vmatprep.subr.bf16.mxu0 %v4232
  %8388 = vmatpush1.bf16.msra.mxu0 %v4231
  %8389 = vmatprep.subr.bf16.mxu0 %v4224
  %8390 = vmatpush1.bf16.msra.mxu0 %v4223
  %8391 = vmatprep.subr.bf16.mxu0 %v4216
  %8392 = vmatpush1.bf16.msra.mxu0 %v4215
  %8393 = vmatprep.subr.bf16.mxu0 %v4208
  %8394 = vmatpush1.bf16.msra.mxu0 %v4207
  %8395 = vmatprep.subr.bf16.mxu0 %v4328
  %8396 = vmatpush2.bf16.msra.mxu0 %v4327
  %8397 = vmatprep.subr.bf16.mxu0 %v4320
  %8398 = vmatpush2.bf16.msra.mxu0 %v4319
  %8399 = vmatprep.subr.bf16.mxu0 %v4312
  %8400 = vmatpush2.bf16.msra.mxu0 %v4311
  %8401 = vmatprep.subr.bf16.mxu0 %v4304
  %8402 = vmatpush2.bf16.msra.mxu0 %v4303
  %8403 = vmatprep.subr.bf16.mxu0 %v4296
  %8404 = vmatpush2.bf16.msra.mxu0 %v4295
  %8405 = vmatprep.subr.bf16.mxu0 %v4288
  %8406 = vmatpush2.bf16.msra.mxu0 %v4287
  %8407 = vmatprep.subr.bf16.mxu0 %v4280
  %8408 = vmatpush2.bf16.msra.mxu0 %v4279
  %8409 = vmatprep.subr.bf16.mxu0 %v4272
  %8410 = vmatpush2.bf16.msra.mxu0 %v4271
  %8411 = vmatprep.mubr.bf16.mxu0 %v8296
  %8412 = vmatmul.mubr.bf16.gmra.mxu0 %v8295
  %v8413 = vpop.f32.mrf.mxu0
  %v8414 = vadd.f32 0.0, %v8413
  %v8415 = vpop.f32.mrf.mxu0
  %v8416 = vadd.f32 0.0, %v8415
  %v8417 = vpop.f32.mrf.mxu0
  %v8418 = vpop.f32.mrf.mxu0
  %8419 = vdwg.mxu0
  %8420 = vmatprep.subr.bf16.mxu0 %v4266
  %8421 = vmatpush1.bf16.msra.mxu0 %v4265
  %8422 = vmatprep.subr.bf16.mxu0 %v4258
  %8423 = vmatpush1.bf16.msra.mxu0 %v4257
  %8424 = vmatprep.subr.bf16.mxu0 %v4250
  %8425 = vmatpush1.bf16.msra.mxu0 %v4249
  %8426 = vmatprep.subr.bf16.mxu0 %v4242
  %8427 = vmatpush1.bf16.msra.mxu0 %v4241
  %8428 = vmatprep.subr.bf16.mxu0 %v4234
  %8429 = vmatpush1.bf16.msra.mxu0 %v4233
  %8430 = vmatprep.subr.bf16.mxu0 %v4226
  %8431 = vmatpush1.bf16.msra.mxu0 %v4225
  %8432 = vmatprep.subr.bf16.mxu0 %v4218
  %8433 = vmatpush1.bf16.msra.mxu0 %v4217
  %8434 = vmatprep.subr.bf16.mxu0 %v4210
  %8435 = vmatpush1.bf16.msra.mxu0 %v4209
  %8436 = vmatprep.subr.bf16.mxu0 %v4330
  %8437 = vmatpush2.bf16.msra.mxu0 %v4329
  %8438 = vmatprep.subr.bf16.mxu0 %v4322
  %8439 = vmatpush2.bf16.msra.mxu0 %v4321
  %8440 = vmatprep.subr.bf16.mxu0 %v4314
  %8441 = vmatpush2.bf16.msra.mxu0 %v4313
  %8442 = vmatprep.subr.bf16.mxu0 %v4306
  %8443 = vmatpush2.bf16.msra.mxu0 %v4305
  %8444 = vmatprep.subr.bf16.mxu0 %v4298
  %8445 = vmatpush2.bf16.msra.mxu0 %v4297
  %8446 = vmatprep.subr.bf16.mxu0 %v4290
  %8447 = vmatpush2.bf16.msra.mxu0 %v4289
  %8448 = vmatprep.subr.bf16.mxu0 %v4282
  %8449 = vmatpush2.bf16.msra.mxu0 %v4281
  %8450 = vmatprep.subr.bf16.mxu0 %v4274
  %8451 = vmatpush2.bf16.msra.mxu0 %v4273
  %8452 = vmatprep.mubr.bf16.mxu0 %v8296
  %8453 = vmatmul.mubr.bf16.gmra.mxu0 %v8295
  %v8454 = vpop.f32.mrf.mxu0
  %v8455 = vadd.f32 0.0, %v8454
  %v8456 = vpop.f32.mrf.mxu0
  %v8457 = vadd.f32 0.0, %v8456
  %v8458 = vpop.f32.mrf.mxu0
  %v8459 = vpop.f32.mrf.mxu0
  %8460 = vdwg.mxu0
  %v8469 = vcombine.low %v8332, %v8334
  %v8470 = vcombine.low %v8373, %v8375
  %v8471 = vcombine.low %v8414, %v8416
  %v8472 = vcombine.low %v8455, %v8457
  %v8474 = vunpack.c.l.s4 1966171168
  %v8475 = vunpack.c.0.s8 %v8474
  %v8476 = vlaneseq
  %v8477 = vshrl.u32 %v8476, 7
  %v8478 = vsub.s32 %v8475, %v8477
  %v8479 = vrot.slane %v8469, %v8478
  %v8481 = vunpack.c.l.s4 1966171168
  %v8482 = vunpack.c.0.s8 %v8481
  %v8483 = vlaneseq
  %v8484 = vshrl.u32 %v8483, 7
  %v8485 = vsub.s32 %v8482, %v8484
  %v8486 = vrot.slane %v8470, %v8485
  %v8488 = vunpack.c.l.s4 1966171168
  %v8489 = vunpack.c.0.s8 %v8488
  %v8490 = vlaneseq
  %v8491 = vshrl.u32 %v8490, 7
  %v8492 = vsub.s32 %v8489, %v8491
  %v8493 = vrot.slane %v8471, %v8492
  %v8495 = vunpack.c.l.s4 1966171168
  %v8496 = vunpack.c.0.s8 %v8495
  %v8497 = vlaneseq
  %v8498 = vshrl.u32 %v8497, 7
  %v8499 = vsub.s32 %v8496, %v8498
  %v8500 = vrot.slane %v8472, %v8499
  %v8501 = vcombine.low %v8479, %v8486
  %v8502 = vcombine.low %v8493, %v8500
  %v8504 = vunpack.c.l.s4 1966171168
  %v8505 = vunpack.c.0.s8 %v8504
  %v8506 = vlaneseq
  %v8507 = vshrl.u32 %v8506, 7
  %v8508 = vsub.s32 %v8505, %v8507
  %v8509 = vrot.slane %v8501, %v8508
  %v8511 = vunpack.c.l.s4 1966171168
  %v8512 = vunpack.c.0.s8 %v8511
  %v8513 = vlaneseq
  %v8514 = vshrl.u32 %v8513, 7
  %v8515 = vsub.s32 %v8512, %v8514
  %v8516 = vrot.slane %v8502, %v8515
  %v8517 = vcombine.low %v8509, %v8516
  %v8519 = vadd.f32 %v8283, %v8517
  %v8520 = vxor.u32 %v8519, 2147483648
  %v8521 = vmul.f32 %v8520, 1.442695
  %v8522 = vpow.pop %v8521
  %v8523 = vadd.f32 %v8522, 1.0
  %v8524 = vrcp.pop %v8523
  %v8525 = vmul.f32 1.0, %v8524
  %v8527 = vrot.slane %v8519, 2
  %v8529 = vxor.u32 %v8527, 2147483648
  %v8530 = vmul.f32 %v8529, 1.442695
  %v8531 = vpow.pop %v8530
  %v8532 = vadd.f32 %v8531, 1.0
  %v8533 = vrcp.pop %v8532
  %v8534 = vmul.f32 1.0, %v8533
  %v8535 = vrot.slane %v8519, 4
  %v8537 = vtanh.pop %v8535
  %v8538 = vrot.slane %v8519, 6
  %v8540 = vxor.u32 %v8538, 2147483648
  %v8541 = vmul.f32 %v8540, 1.442695
  %v8542 = vpow.pop %v8541
  %v8543 = vadd.f32 %v8542, 1.0
  %v8544 = vrcp.pop %v8543
  %v8545 = vmul.f32 1.0, %v8544
  %v8546 = vmul.f32 %v8534, %v8001
  %v8547 = vmul.f32 %v8525, %v8537
  %v8548 = vadd.f32 %v8546, %v8547
  %v8549 = vtanh.pop %v8548
  %v8550 = vmul.f32 %v8545, %v8549
  %s8551 = scalar_lea.vmem %s10, 7
  %8552 = vst.msk [vmem:[%s8551] ss:$8 sm:$0x3] %vm4716, %v8280
  %8553 = vst.msk [vmem:[%s8551] ss:$8 sm:$0x0] %vm4716, %v8280
  %8554 = vst.msk [vmem:[%s11] ss:$8 sm:$0x3] %vm4716, %v8550
  %8555 = vst.msk [vmem:[%s11] ss:$8 sm:$0x0] %vm4716, %v8550
  %v8556 = vld [vmem:[%s10] sm:$0xff]
  %v8557 = vld [vmem:[%s10 + $0x8] sm:$0xff]
  %v8558 = vpack.c.bf16 %v8556, %v8556
  %v8559 = vpack.c.bf16 %v8557, %v8557
  %v8560 = vld [vmem:[%s11] sm:$0xff]
  %v8561 = vld [vmem:[%s11 + $0x8] sm:$0xff]
  %v8562 = vpack.c.bf16 %v8560, %v8560
  %v8563 = vpack.c.bf16 %v8561, %v8561
  %v8564 = vld [vmem:[%s7] sm:$0xf]
  %v8565 = vld [vmem:[%s7 + $0x4] sm:$0xf]
  %v8566 = vld [vmem:[%s7 + $0x8] sm:$0xf]
  %v8567 = vld [vmem:[%s7 + $0xc] sm:$0xf]
  %v8568 = vld [vmem:[%s7 + $0x10] sm:$0xf]
  %v8569 = vld [vmem:[%s7 + $0x14] sm:$0xf]
  %v8570 = vld [vmem:[%s7 + $0x18] sm:$0xf]
  %v8571 = vld [vmem:[%s7 + $0x1c] sm:$0xf]
  %v8572 = vld [vmem:[%s7 + $0x20] sm:$0xf]
  %v8573 = vld [vmem:[%s7 + $0x24] sm:$0xf]
  %v8574 = vld [vmem:[%s7 + $0x28] sm:$0xf]
  %v8575 = vld [vmem:[%s7 + $0x2c] sm:$0xf]
  %v8576 = vld [vmem:[%s7 + $0x30] sm:$0xf]
  %v8577 = vld [vmem:[%s7 + $0x34] sm:$0xf]
  %v8578 = vld [vmem:[%s7 + $0x38] sm:$0xf]
  %v8579 = vld [vmem:[%s7 + $0x3c] sm:$0xf]
  %v8580 = vld [vmem:[%s7 + $0x40] sm:$0xf]
  %v8581 = vld [vmem:[%s7 + $0x44] sm:$0xf]
  %v8582 = vld [vmem:[%s7 + $0x48] sm:$0xf]
  %v8583 = vld [vmem:[%s7 + $0x4c] sm:$0xf]
  %v8584 = vld [vmem:[%s7 + $0x50] sm:$0xf]
  %v8585 = vld [vmem:[%s7 + $0x54] sm:$0xf]
  %v8586 = vld [vmem:[%s7 + $0x58] sm:$0xf]
  %v8587 = vld [vmem:[%s7 + $0x5c] sm:$0xf]
  %v8588 = vld [vmem:[%s7 + $0x60] sm:$0xf]
  %v8589 = vld [vmem:[%s7 + $0x64] sm:$0xf]
  %v8590 = vld [vmem:[%s7 + $0x68] sm:$0xf]
  %v8591 = vld [vmem:[%s7 + $0x6c] sm:$0xf]
  %v8592 = vld [vmem:[%s7 + $0x70] sm:$0xf]
  %v8593 = vld [vmem:[%s7 + $0x74] sm:$0xf]
  %v8594 = vld [vmem:[%s7 + $0x78] sm:$0xf]
  %v8595 = vld [vmem:[%s7 + $0x7c] sm:$0xf]
  %v8596 = vld [vmem:[%s8] sm:$0xf]
  %v8597 = vld [vmem:[%s8 + $0x4] sm:$0xf]
  %v8598 = vld [vmem:[%s8 + $0x8] sm:$0xf]
  %v8599 = vld [vmem:[%s8 + $0xc] sm:$0xf]
  %v8600 = vld [vmem:[%s8 + $0x10] sm:$0xf]
  %v8601 = vld [vmem:[%s8 + $0x14] sm:$0xf]
  %v8602 = vld [vmem:[%s8 + $0x18] sm:$0xf]
  %v8603 = vld [vmem:[%s8 + $0x1c] sm:$0xf]
  %v8604 = vld [vmem:[%s8 + $0x20] sm:$0xf]
  %v8605 = vld [vmem:[%s8 + $0x24] sm:$0xf]
  %v8606 = vld [vmem:[%s8 + $0x28] sm:$0xf]
  %v8607 = vld [vmem:[%s8 + $0x2c] sm:$0xf]
  %v8608 = vld [vmem:[%s8 + $0x30] sm:$0xf]
  %v8609 = vld [vmem:[%s8 + $0x34] sm:$0xf]
  %v8610 = vld [vmem:[%s8 + $0x38] sm:$0xf]
  %v8611 = vld [vmem:[%s8 + $0x3c] sm:$0xf]
  %v8612 = vld [vmem:[%s8 + $0x40] sm:$0xf]
  %v8613 = vld [vmem:[%s8 + $0x44] sm:$0xf]
  %v8614 = vld [vmem:[%s8 + $0x48] sm:$0xf]
  %v8615 = vld [vmem:[%s8 + $0x4c] sm:$0xf]
  %v8616 = vld [vmem:[%s8 + $0x50] sm:$0xf]
  %v8617 = vld [vmem:[%s8 + $0x54] sm:$0xf]
  %v8618 = vld [vmem:[%s8 + $0x58] sm:$0xf]
  %v8619 = vld [vmem:[%s8 + $0x5c] sm:$0xf]
  %v8620 = vld [vmem:[%s8 + $0x60] sm:$0xf]
  %v8621 = vld [vmem:[%s8 + $0x64] sm:$0xf]
  %v8622 = vld [vmem:[%s8 + $0x68] sm:$0xf]
  %v8623 = vld [vmem:[%s8 + $0x6c] sm:$0xf]
  %v8624 = vld [vmem:[%s8 + $0x70] sm:$0xf]
  %v8625 = vld [vmem:[%s8 + $0x74] sm:$0xf]
  %v8626 = vld [vmem:[%s8 + $0x78] sm:$0xf]
  %v8627 = vld [vmem:[%s8 + $0x7c] sm:$0xf]
  %v8660 = vunpack.c.l.b16 %v8596
  %v8661 = vunpack.c.l.b16 %v8597
  %v8662 = vunpack.c.l.b16 %v8598
  %v8663 = vunpack.c.l.b16 %v8599
  %v8664 = vunpack.c.l.b16 %v8600
  %v8665 = vunpack.c.l.b16 %v8601
  %v8666 = vunpack.c.l.b16 %v8602
  %v8667 = vunpack.c.l.b16 %v8603
  %v8668 = vunpack.c.l.b16 %v8604
  %v8669 = vunpack.c.l.b16 %v8605
  %v8670 = vunpack.c.l.b16 %v8606
  %v8671 = vunpack.c.l.b16 %v8607
  %v8672 = vunpack.c.l.b16 %v8608
  %v8673 = vunpack.c.l.b16 %v8609
  %v8674 = vunpack.c.l.b16 %v8610
  %v8675 = vunpack.c.l.b16 %v8611
  %v8676 = vunpack.c.l.b16 %v8612
  %v8677 = vunpack.c.l.b16 %v8613
  %v8678 = vunpack.c.l.b16 %v8614
  %v8679 = vunpack.c.l.b16 %v8615
  %v8680 = vunpack.c.l.b16 %v8616
  %v8681 = vunpack.c.l.b16 %v8617
  %v8682 = vunpack.c.l.b16 %v8618
  %v8683 = vunpack.c.l.b16 %v8619
  %v8684 = vunpack.c.l.b16 %v8620
  %v8685 = vunpack.c.l.b16 %v8621
  %v8686 = vunpack.c.l.b16 %v8622
  %v8687 = vunpack.c.l.b16 %v8623
  %v8688 = vunpack.c.l.b16 %v8624
  %v8689 = vunpack.c.l.b16 %v8625
  %v8690 = vunpack.c.l.b16 %v8626
  %v8691 = vunpack.c.l.b16 %v8627
  %v8692 = vpack.c.b16 %v8661, %v8660
  %v8693 = vpack.c.b16 %v8663, %v8662
  %v8694 = vpack.c.b16 %v8665, %v8664
  %v8695 = vpack.c.b16 %v8667, %v8666
  %v8696 = vpack.c.b16 %v8669, %v8668
  %v8697 = vpack.c.b16 %v8671, %v8670
  %v8698 = vpack.c.b16 %v8673, %v8672
  %v8699 = vpack.c.b16 %v8675, %v8674
  %v8700 = vpack.c.b16 %v8677, %v8676
  %v8701 = vpack.c.b16 %v8679, %v8678
  %v8702 = vpack.c.b16 %v8681, %v8680
  %v8703 = vpack.c.b16 %v8683, %v8682
  %v8704 = vpack.c.b16 %v8685, %v8684
  %v8705 = vpack.c.b16 %v8687, %v8686
  %v8706 = vpack.c.b16 %v8689, %v8688
  %v8707 = vpack.c.b16 %v8691, %v8690
  %8724 = vmatprep.subr.bf16.mxu0 0
  %8725 = vmatpush1.bf16.msra.mxu0 %v8699
  %8726 = vmatprep.subr.bf16.mxu0 0
  %8727 = vmatpush1.bf16.msra.mxu0 %v8698
  %8728 = vmatprep.subr.bf16.mxu0 0
  %8729 = vmatpush1.bf16.msra.mxu0 %v8697
  %8730 = vmatprep.subr.bf16.mxu0 0
  %8731 = vmatpush1.bf16.msra.mxu0 %v8696
  %8732 = vmatprep.subr.bf16.mxu0 0
  %8733 = vmatpush1.bf16.msra.mxu0 %v8695
  %8734 = vmatprep.subr.bf16.mxu0 0
  %8735 = vmatpush1.bf16.msra.mxu0 %v8694
  %8736 = vmatprep.subr.bf16.mxu0 0
  %8737 = vmatpush1.bf16.msra.mxu0 %v8693
  %8738 = vmatprep.subr.bf16.mxu0 0
  %8739 = vmatpush1.bf16.msra.mxu0 %v8692
  %8740 = vmatprep.subr.bf16.mxu0 0
  %8741 = vmatpush2.bf16.msra.mxu0 %v8707
  %8742 = vmatprep.subr.bf16.mxu0 0
  %8743 = vmatpush2.bf16.msra.mxu0 %v8706
  %8744 = vmatprep.subr.bf16.mxu0 0
  %8745 = vmatpush2.bf16.msra.mxu0 %v8705
  %8746 = vmatprep.subr.bf16.mxu0 0
  %8747 = vmatpush2.bf16.msra.mxu0 %v8704
  %8748 = vmatprep.subr.bf16.mxu0 0
  %8749 = vmatpush2.bf16.msra.mxu0 %v8703
  %8750 = vmatprep.subr.bf16.mxu0 0
  %8751 = vmatpush2.bf16.msra.mxu0 %v8702
  %8752 = vmatprep.subr.bf16.mxu0 0
  %8753 = vmatpush2.bf16.msra.mxu0 %v8701
  %8754 = vmatprep.subr.bf16.mxu0 0
  %8755 = vmatpush2.bf16.msra.mxu0 %v8700
  %8756 = vmatprep.mubr.bf16.mxu0 %v8563
  %8757 = vmatmul.mubr.bf16.gmra.mxu0 %v8562
  %v8758 = vpop.f32.mrf.mxu0
  %v8759 = vadd.f32 0.0, %v8758
  %v8760 = vpop.f32.mrf.mxu0
  %v8761 = vpop.f32.mrf.mxu0
  %v8762 = vpop.f32.mrf.mxu0
  %8763 = vdwg.mxu0
  %v8796 = vunpack.c.l.b16 %v8564
  %v8797 = vunpack.c.l.b16 %v8565
  %v8798 = vunpack.c.l.b16 %v8566
  %v8799 = vunpack.c.l.b16 %v8567
  %v8800 = vunpack.c.l.b16 %v8568
  %v8801 = vunpack.c.l.b16 %v8569
  %v8802 = vunpack.c.l.b16 %v8570
  %v8803 = vunpack.c.l.b16 %v8571
  %v8804 = vunpack.c.l.b16 %v8572
  %v8805 = vunpack.c.l.b16 %v8573
  %v8806 = vunpack.c.l.b16 %v8574
  %v8807 = vunpack.c.l.b16 %v8575
  %v8808 = vunpack.c.l.b16 %v8576
  %v8809 = vunpack.c.l.b16 %v8577
  %v8810 = vunpack.c.l.b16 %v8578
  %v8811 = vunpack.c.l.b16 %v8579
  %v8812 = vunpack.c.l.b16 %v8580
  %v8813 = vunpack.c.l.b16 %v8581
  %v8814 = vunpack.c.l.b16 %v8582
  %v8815 = vunpack.c.l.b16 %v8583
  %v8816 = vunpack.c.l.b16 %v8584
  %v8817 = vunpack.c.l.b16 %v8585
  %v8818 = vunpack.c.l.b16 %v8586
  %v8819 = vunpack.c.l.b16 %v8587
  %v8820 = vunpack.c.l.b16 %v8588
  %v8821 = vunpack.c.l.b16 %v8589
  %v8822 = vunpack.c.l.b16 %v8590
  %v8823 = vunpack.c.l.b16 %v8591
  %v8824 = vunpack.c.l.b16 %v8592
  %v8825 = vunpack.c.l.b16 %v8593
  %v8826 = vunpack.c.l.b16 %v8594
  %v8827 = vunpack.c.l.b16 %v8595
  %v8828 = vpack.c.b16 %v8797, %v8796
  %v8829 = vpack.c.b16 %v8799, %v8798
  %v8830 = vpack.c.b16 %v8801, %v8800
  %v8831 = vpack.c.b16 %v8803, %v8802
  %v8832 = vpack.c.b16 %v8805, %v8804
  %v8833 = vpack.c.b16 %v8807, %v8806
  %v8834 = vpack.c.b16 %v8809, %v8808
  %v8835 = vpack.c.b16 %v8811, %v8810
  %v8836 = vpack.c.b16 %v8813, %v8812
  %v8837 = vpack.c.b16 %v8815, %v8814
  %v8838 = vpack.c.b16 %v8817, %v8816
  %v8839 = vpack.c.b16 %v8819, %v8818
  %v8840 = vpack.c.b16 %v8821, %v8820
  %v8841 = vpack.c.b16 %v8823, %v8822
  %v8842 = vpack.c.b16 %v8825, %v8824
  %v8843 = vpack.c.b16 %v8827, %v8826
  %8860 = vmatprep.subr.bf16.mxu0 0
  %8861 = vmatpush1.bf16.msra.mxu0 %v8835
  %8862 = vmatprep.subr.bf16.mxu0 0
  %8863 = vmatpush1.bf16.msra.mxu0 %v8834
  %8864 = vmatprep.subr.bf16.mxu0 0
  %8865 = vmatpush1.bf16.msra.mxu0 %v8833
  %8866 = vmatprep.subr.bf16.mxu0 0
  %8867 = vmatpush1.bf16.msra.mxu0 %v8832
  %8868 = vmatprep.subr.bf16.mxu0 0
  %8869 = vmatpush1.bf16.msra.mxu0 %v8831
  %8870 = vmatprep.subr.bf16.mxu0 0
  %8871 = vmatpush1.bf16.msra.mxu0 %v8830
  %8872 = vmatprep.subr.bf16.mxu0 0
  %8873 = vmatpush1.bf16.msra.mxu0 %v8829
  %8874 = vmatprep.subr.bf16.mxu0 0
  %8875 = vmatpush1.bf16.msra.mxu0 %v8828
  %8876 = vmatprep.subr.bf16.mxu0 0
  %8877 = vmatpush2.bf16.msra.mxu0 %v8843
  %8878 = vmatprep.subr.bf16.mxu0 0
  %8879 = vmatpush2.bf16.msra.mxu0 %v8842
  %8880 = vmatprep.subr.bf16.mxu0 0
  %8881 = vmatpush2.bf16.msra.mxu0 %v8841
  %8882 = vmatprep.subr.bf16.mxu0 0
  %8883 = vmatpush2.bf16.msra.mxu0 %v8840
  %8884 = vmatprep.subr.bf16.mxu0 0
  %8885 = vmatpush2.bf16.msra.mxu0 %v8839
  %8886 = vmatprep.subr.bf16.mxu0 0
  %8887 = vmatpush2.bf16.msra.mxu0 %v8838
  %8888 = vmatprep.subr.bf16.mxu0 0
  %8889 = vmatpush2.bf16.msra.mxu0 %v8837
  %8890 = vmatprep.subr.bf16.mxu0 0
  %8891 = vmatpush2.bf16.msra.mxu0 %v8836
  %8892 = vmatprep.mubr.bf16.mxu0 %v8559
  %8893 = vmatmul.mubr.bf16.gmra.mxu0 %v8558
  %v8894 = vpop.f32.mrf.mxu0
  %v8895 = vadd.f32 %v8759, %v8894
  %v8896 = vpop.f32.mrf.mxu0
  %v8897 = vpop.f32.mrf.mxu0
  %v8898 = vpop.f32.mrf.mxu0
  %8899 = vdwg.mxu0
  %v8900 = vld [vmem:[%s9] sm:$0x1]
  %v8902 = vlaneseq
  %v8903 = vshrl.u32 %v8902, 7
  %v8904 = vsub.s32 0, %v8903
  %v8905 = vrot.slane %v8900, %v8904
  %v8907 = vadd.f32 %v8895, %v8905
  %v8908 = vlaneseq
  %v8909 = vand.u32 %v8908, 127
  %vm8910 = vcmp.lt.s32.totalorder %v8909, 7
  %v8911 = vsel %vm8910, %v8907, -1e+30
  %8912 = vmax.xlane.f32.xlu0 %v8911
  %v8913 = vpop.xlane.xlu0 %8912
  %v8914 = vsub.f32 %v8911, %v8913
  %v8915 = vmul.f32 %v8914, 1.442695
  %v8916 = vpow.pop %v8915
  %8917 = vadd.xlane.f32.xlu0 %v8916
  %v8918 = vpop.xlane.xlu0 %8917
  %v8919 = vlog2.pop %v8918
  %v8920 = vmul.f32 %v8919, 0.6931472
  %v8921 = vadd.f32 %v8920, %v8913
  %v8922 = vsub.f32 %v8911, %v8921
  %8923 = vst [vmem:[%s12] sm:$0xff] %v8922
  // Predicated region
  $region42: #{paragraph_bilstm_forward.1} parent=0 // pred_check
    _
  $region43: #{paragraph_bilstm_forward.1} parent=0 // pred_check_branch
    %8925 = sbr.rel (0) target = $region45
  $region44: #{paragraph_bilstm_forward.1} parent=0 // pred_region
    _
  $region45: #{paragraph_bilstm_forward.1} parent=0 // pred_fallthru
    _
  // Predicated region
  $region46: #{paragraph_bilstm_forward.1} parent=0 // pred_check
    _
  $region47: #{paragraph_bilstm_forward.1} parent=0 // pred_check_branch
    %8927 = sbr.rel (0) target = $region49
  $region48: #{paragraph_bilstm_forward.1} parent=0 // pred_region
    _
  $region49: #{paragraph_bilstm_forward.1} parent=0 // pred_fallthru
    _
  // Predicated region
  $region50: #{paragraph_bilstm_forward.1} parent=0 // pred_check
    _
  $region51: #{paragraph_bilstm_forward.1} parent=0 // pred_check_branch
    %8929 = sbr.rel (0) target = $region53
  $region52: #{paragraph_bilstm_forward.1} parent=0 // pred_region
    _
  $region53: #{paragraph_bilstm_forward.1} parent=0 // pred_fallthru
    _
  // Predicated region
  $region54: #{paragraph_bilstm_forward.1} parent=0 // pred_check
    _
  $region55: #{paragraph_bilstm_forward.1} parent=0 // pred_check_branch
    %8931 = sbr.rel (0) target = $region57
  $region56: #{paragraph_bilstm_forward.1} parent=0 // pred_region
    _
  $region57: #{paragraph_bilstm_forward.1} parent=0 // pred_fallthru
    _
  // Predicated region
  $region58: #{paragraph_bilstm_forward.1} parent=0 // pred_check
    _
  $region59: #{paragraph_bilstm_forward.1} parent=0 // pred_check_branch
    %8933 = sbr.rel (0) target = $region61
  $region60: #{paragraph_bilstm_forward.1} parent=0 // pred_region
    _
  $region61: #{paragraph_bilstm_forward.1} parent=0 // pred_fallthru
    _
  // Predicated region
  $region62: #{paragraph_bilstm_forward.1} parent=0 // pred_check
    _
  $region63: #{paragraph_bilstm_forward.1} parent=0 // pred_check_branch
    %8935 = sbr.rel (0) target = $region65
  $region64: #{paragraph_bilstm_forward.1} parent=0 // pred_region
    _
  $region65: #{paragraph_bilstm_forward.1} parent=0 // pred_fallthru
    _

</llo_original>
